<compile_context>
chip_gen: v7x
topology: tpu7x:2x2x1
jax: 0.10.0
libtpu: 0.0.40
codegen_flags: <defaults>
</compile_context>

<pallas_src>
import jax
import jax.numpy as jnp
import numpy as np
from jax.experimental import pallas as pl
from jax.experimental.pallas import tpu as pltpu

NEG_SLOPE = 0.2
BN_EPS = 1e-5


# ------------------------- fused forward kernel ------------------------------

def _disc_fused_kernel(
    x_ref, t1_ref, b1_ref,
    t2_ref, g2_ref, be2_ref, r2_ref, rt2_ref,
    t3_ref, g3_ref, be3_ref, r3_ref, rt3_ref,
    t4_ref, g4_ref, be4_ref, r4_ref, rt4_ref,
    wl_ref, bl_ref,
    o_ref,
):
    def lrelu(y):
        return jnp.where(y >= 0, y, NEG_SLOPE * y)

    def conv(h, t_ref, k_chunk=256):
        # 4x4/s2/p1 conv as a block-Toeplitz matmul (im2col folded into the
        # weight layout at init).  K is chunked so no single VMEM->vreg operand
        # value exceeds ~512 KiB; bf16 operands, f32 accumulation on the MXU.
        kdim, ndim = t_ref.shape
        acc = jnp.zeros((h.shape[0], ndim), jnp.float32)
        for k0 in range(0, kdim, k_chunk):
            ck = min(k_chunk, kdim - k0)
            acc += jnp.dot(h[:, k0:k0 + ck].astype(jnp.bfloat16),
                           t_ref[k0:k0 + ck, :],
                           preferred_element_type=jnp.float32)
        return acc

    def batchnorm(y, g_ref, be_ref, r_ref, rt_ref):
        # Training-mode batch stats per channel, single pass.
        # Columns of y are NCHW-flat: contiguous blocks of S = OH*OW per channel.
        # R ([C*S, C], 0/1) folds the per-channel reduction into an MXU op;
        # R^T broadcasts the per-channel scale/shift back to every position.
        cs, c = r_ref.shape
        inv_count = 1.0 / float(y.shape[0] * (cs // c))
        s1 = jnp.sum(y, axis=0, keepdims=True)           # [1, C*S]
        s2 = jnp.sum(y * y, axis=0, keepdims=True)       # [1, C*S]
        mean_c = jnp.dot(s1, r_ref[...], preferred_element_type=jnp.float32) * inv_count
        ex2_c = jnp.dot(s2, r_ref[...], preferred_element_type=jnp.float32) * inv_count
        var_c = jnp.maximum(ex2_c - mean_c * mean_c, 0.0)          # biased variance
        scale_c = g_ref[...] * jax.lax.rsqrt(var_c + BN_EPS)       # [1, C]
        shift_c = be_ref[...] - mean_c * scale_c                   # [1, C]
        scale = jnp.dot(scale_c, rt_ref[...], preferred_element_type=jnp.float32)
        shift = jnp.dot(shift_c, rt_ref[...], preferred_element_type=jnp.float32)
        return y * scale + shift

    x = x_ref[...]                                                  # [N, 3*H*W] f32
    h = lrelu(conv(x, t1_ref) + b1_ref[...])                        # conv1 + bias + lrelu
    h = lrelu(batchnorm(conv(h, t2_ref), g2_ref, be2_ref, r2_ref, rt2_ref))
    h = lrelu(batchnorm(conv(h, t3_ref), g3_ref, be3_ref, r3_ref, rt3_ref))
    h = lrelu(batchnorm(conv(h, t4_ref), g4_ref, be4_ref, r4_ref, rt4_ref))
    # h is already the NCHW-flat [N, 8d * s_h16 * s_w16] vector -> no transpose.
    y = jnp.dot(h.astype(jnp.bfloat16), wl_ref[...],
                preferred_element_type=jnp.float32) + bl_ref[...]
    o_ref[...] = 1.0 / (1.0 + jnp.exp(-y))                          # sigmoid


# ------------------------------ wrapper ---------------------------------------

_PARAM_ORDER = ("t1", "b1",
                "t2", "g2", "be2", "r2", "rt2",
                "t3", "g3", "be3", "r3", "rt3",
                "t4", "g4", "be4", "r4", "rt4",
                "wl", "bl")


@jax.jit
def discriminator_forward(x_nchw, params):
    n = x_nchw.shape[0]
    x_flat = x_nchw.reshape(n, -1).astype(jnp.float32)   # NCHW-flat, matches T1 rows

    flops = 2 * n * sum(int(params[k].shape[0]) * int(params[k].shape[1])
                        for k in ("t1", "t2", "t3", "t4", "wl"))
    transcendentals = n + sum(int(params[k].shape[1]) for k in ("g2", "g3", "g4"))
    bytes_accessed = (int(x_flat.size) * 4 + n * 4 +
                      sum(int(v.size) * int(v.dtype.itemsize) for v in params.values()))

    out = pl.pallas_call(
        _disc_fused_kernel,
        out_shape=jax.ShapeDtypeStruct((n, 1), jnp.float32),
        in_specs=[pl.BlockSpec(memory_space=pltpu.MemorySpace.VMEM)
                  for _ in range(1 + len(_PARAM_ORDER))],
        out_specs=pl.BlockSpec(memory_space=pltpu.MemorySpace.VMEM),
        compiler_params=pltpu.CompilerParams(vmem_limit_bytes=32 * 1024 * 1024),
        cost_estimate=pl.CostEstimate(flops=flops,
                                      transcendentals=transcendentals,
                                      bytes_accessed=bytes_accessed),
    )(x_flat, *[params[k] for k in _PARAM_ORDER])

    return jnp.squeeze(out, axis=-1)        # matches x.squeeze() for batch > 1


# --------------------- init: conv -> block-Toeplitz weights -------------------

def _conv4x4s2p1_toeplitz(w, h_in, w_in):
    """w: numpy [4,4,cin,cout].  Returns (T, oh, ow) with
    T: [cin*h_in*w_in, cout*oh*ow] so that  y_flat = x_flat @ T  equals a
    4x4 / stride-2 / pad-1 conv in NCHW-flat layout (padding taps dropped)."""
    k, s, p = 4, 2, 1
    _, _, cin, cout = w.shape
    oh = (h_in + 2 * p - k) // s + 1
    ow = (w_in + 2 * p - k) // s + 1
    t = np.zeros((cin * h_in * w_in, cout * oh * ow), np.float32)
    ci = np.arange(cin)
    co = np.arange(cout)
    for i in range(oh):
        for j in range(ow):
            cols = co * (oh * ow) + i * ow + j
            for kh in range(k):
                ih = s * i + kh - p
                if ih < 0 or ih >= h_in:
                    continue
                for kw in range(k):
                    iw = s * j + kw - p
                    if iw < 0 or iw >= w_in:
                        continue
                    rows = ci * (h_in * w_in) + ih * w_in + iw
                    t[np.ix_(rows, cols)] = w[kh, kw]
    return t, oh, ow


def init_params(key, d=16, input_shape=(16, 16)):
    h0, w0 = input_shape
    ks = jax.random.split(key, 8)

    def conv_w(k, cin, cout):                       # DCGAN init: N(0, 0.02)
        return np.asarray(0.02 * jax.random.normal(k, (4, 4, cin, cout), jnp.float32))

    def bn_p(k, c):                                 # gamma ~ N(0.1, 0.02), beta = 0
        gamma = 0.1 + 0.02 * jax.random.normal(k, (1, c), jnp.float32)
        return gamma.astype(jnp.float32), jnp.zeros((1, c), jnp.float32)

    def reduce_mats(c, s):                          # 0/1 channel-reduce / broadcast mats
        r = np.kron(np.eye(c, dtype=np.float32), np.ones((s, 1), np.float32))
        return jnp.asarray(r), jnp.asarray(np.ascontiguousarray(r.T))

    p = {}

    # layer 1: conv(3 -> d) + bias (no BN); bias broadcast per spatial position
    t1, oh, ow = _conv4x4s2p1_toeplitz(conv_w(ks[0], 3, d), h0, w0)
    p["t1"] = jnp.asarray(t1, jnp.bfloat16)
    p["b1"] = jnp.zeros((1, d * oh * ow), jnp.float32)

    # layers 2-4: conv bias omitted (exactly cancelled by training-mode BN mean)
    t2, oh, ow = _conv4x4s2p1_toeplitz(conv_w(ks[1], d, 2 * d), oh, ow)
    p["t2"] = jnp.asarray(t2, jnp.bfloat16)
    p["g2"], p["be2"] = bn_p(ks[2], 2 * d)
    p["r2"], p["rt2"] = reduce_mats(2 * d, oh * ow)

    t3, oh, ow = _conv4x4s2p1_toeplitz(conv_w(ks[3], 2 * d, 4 * d), oh, ow)
    p["t3"] = jnp.asarray(t3, jnp.bfloat16)
    p["g3"], p["be3"] = bn_p(ks[4], 4 * d)
    p["r3"], p["rt3"] = reduce_mats(4 * d, oh * ow)

    t4, oh, ow = _conv4x4s2p1_toeplitz(conv_w(ks[5], 4 * d, 8 * d), oh, ow)
    p["t4"] = jnp.asarray(t4, jnp.bfloat16)
    p["g4"], p["be4"] = bn_p(ks[6], 8 * d)
    p["r4"], p["rt4"] = reduce_mats(8 * d, oh * ow)

    # linear (s_h16 * s_w16 * 8d -> 1) + sigmoid
    in_features = oh * ow * 8 * d
    p["wl"] = jnp.asarray(
        0.02 * jax.random.normal(ks[7], (in_features, 1), jnp.float32), jnp.bfloat16)
    p["bl"] = jnp.zeros((1, 1), jnp.float32)
    return p


# --------------------------------- main ---------------------------------------

if __name__ == "__main__":
    d = 16
    input_hw = (16, 16)
    batch = 2

    key = jax.random.PRNGKey(0)
    k_params, k_x = jax.random.split(key)

    params = init_params(k_params, d=d, input_shape=input_hw)
    x = jax.random.normal(k_x, (batch, 3, input_hw[0], input_hw[1]), jnp.float32)

    out = discriminator_forward(x, params)
    out = jax.block_until_ready(out)

    assert out.shape == (batch,)
    assert bool(jnp.all(jnp.isfinite(out)))
    assert bool(jnp.all((out >= 0.0) & (out <= 1.0)))
    print("KERNEL_OK")
</pallas_src>

<mosaic_0001>
module attributes {stable_mosaic.version = 11 : i64} {
  func.func @_disc_fused_kernel(%arg0: memref<2x768xf32, #tpu.memory_space<vmem>>, %arg1: memref<768x1024xbf16, #tpu.memory_space<vmem>>, %arg2: memref<1x1024xf32, #tpu.memory_space<vmem>>, %arg3: memref<1024x512xbf16, #tpu.memory_space<vmem>>, %arg4: memref<1x32xf32, #tpu.memory_space<vmem>>, %arg5: memref<1x32xf32, #tpu.memory_space<vmem>>, %arg6: memref<512x32xf32, #tpu.memory_space<vmem>>, %arg7: memref<32x512xf32, #tpu.memory_space<vmem>>, %arg8: memref<512x256xbf16, #tpu.memory_space<vmem>>, %arg9: memref<1x64xf32, #tpu.memory_space<vmem>>, %arg10: memref<1x64xf32, #tpu.memory_space<vmem>>, %arg11: memref<256x64xf32, #tpu.memory_space<vmem>>, %arg12: memref<64x256xf32, #tpu.memory_space<vmem>>, %arg13: memref<256x128xbf16, #tpu.memory_space<vmem>>, %arg14: memref<1x128xf32, #tpu.memory_space<vmem>>, %arg15: memref<1x128xf32, #tpu.memory_space<vmem>>, %arg16: memref<128x128xf32, #tpu.memory_space<vmem>>, %arg17: memref<128x128xf32, #tpu.memory_space<vmem>>, %arg18: memref<128x1xbf16, #tpu.memory_space<vmem>>, %arg19: memref<1x1xf32, #tpu.memory_space<vmem>>, %arg20: memref<2x1xf32, #tpu.memory_space<vmem>>) attributes {dimension_semantics = [], scalar_prefetch = 0 : i64, scratch_operands = 0 : i64, tpu.core_type = #tpu.core_type<tc>} {
    %c0 = arith.constant 0 : index
    %c0_0 = arith.constant 0 : index
    %0 = vector.load %arg0[%c0, %c0_0] : memref<2x768xf32, #tpu.memory_space<vmem>>, vector<2x768xf32>
    %cst = arith.constant 0.000000e+00 : f32
    %1 = vector.broadcast %cst : f32 to vector<2x1024xf32>
    %2 = vector.extract_strided_slice %0 {offsets = [0, 0], sizes = [2, 256], strides = [1, 1]} : vector<2x768xf32> to vector<2x256xf32>
    %3 = arith.truncf %2 : vector<2x256xf32> to vector<2x256xbf16>
    %c0_1 = arith.constant 0 : index
    %c0_2 = arith.constant 0 : index
    %4 = vector.load %arg1[%c0_1, %c0_2] : memref<768x1024xbf16, #tpu.memory_space<vmem>>, vector<256x1024xbf16>
    %cst_3 = arith.constant dense<0.000000e+00> : vector<2x1024xf32>
    %5 = tpu.matmul %3, %4, %cst_3 {dimension_numbers = #tpu.dot_dimension_numbers<[1], [0], [0], [1], [0, 0, 1, 1], [], []>} : vector<2x256xbf16>, vector<256x1024xbf16>, vector<2x1024xf32> -> vector<2x1024xf32>
    %6 = arith.addf %1, %5 : vector<2x1024xf32>
    %7 = vector.extract_strided_slice %0 {offsets = [0, 256], sizes = [2, 256], strides = [1, 1]} : vector<2x768xf32> to vector<2x256xf32>
    %8 = arith.truncf %7 : vector<2x256xf32> to vector<2x256xbf16>
    %c256 = arith.constant 256 : index
    %c0_4 = arith.constant 0 : index
    %9 = vector.load %arg1[%c256, %c0_4] : memref<768x1024xbf16, #tpu.memory_space<vmem>>, vector<256x1024xbf16>
    %cst_5 = arith.constant dense<0.000000e+00> : vector<2x1024xf32>
    %10 = tpu.matmul %8, %9, %cst_5 {dimension_numbers = #tpu.dot_dimension_numbers<[1], [0], [0], [1], [0, 0, 1, 1], [], []>} : vector<2x256xbf16>, vector<256x1024xbf16>, vector<2x1024xf32> -> vector<2x1024xf32>
    %11 = arith.addf %6, %10 : vector<2x1024xf32>
    %12 = vector.extract_strided_slice %0 {offsets = [0, 512], sizes = [2, 256], strides = [1, 1]} : vector<2x768xf32> to vector<2x256xf32>
    %13 = arith.truncf %12 : vector<2x256xf32> to vector<2x256xbf16>
    %c512 = arith.constant 512 : index
    %c0_6 = arith.constant 0 : index
    %14 = vector.load %arg1[%c512, %c0_6] : memref<768x1024xbf16, #tpu.memory_space<vmem>>, vector<256x1024xbf16>
    %cst_7 = arith.constant dense<0.000000e+00> : vector<2x1024xf32>
    %15 = tpu.matmul %13, %14, %cst_7 {dimension_numbers = #tpu.dot_dimension_numbers<[1], [0], [0], [1], [0, 0, 1, 1], [], []>} : vector<2x256xbf16>, vector<256x1024xbf16>, vector<2x1024xf32> -> vector<2x1024xf32>
    %16 = arith.addf %11, %15 : vector<2x1024xf32>
    %c0_8 = arith.constant 0 : index
    %c0_9 = arith.constant 0 : index
    %17 = vector.load %arg2[%c0_8, %c0_9] : memref<1x1024xf32, #tpu.memory_space<vmem>>, vector<1x1024xf32>
    %18 = vector.broadcast %17 : vector<1x1024xf32> to vector<2x1024xf32>
    %19 = arith.addf %16, %18 : vector<2x1024xf32>
    %cst_10 = arith.constant 0.000000e+00 : f32
    %20 = vector.broadcast %cst_10 : f32 to vector<2x1024xf32>
    %21 = arith.cmpf oge, %19, %20 : vector<2x1024xf32>
    %cst_11 = arith.constant 2.000000e-01 : f32
    %22 = vector.broadcast %cst_11 : f32 to vector<2x1024xf32>
    %23 = arith.mulf %22, %19 : vector<2x1024xf32>
    %24 = arith.select %21, %19, %23 : vector<2x1024xi1>, vector<2x1024xf32>
    %cst_12 = arith.constant 0.000000e+00 : f32
    %25 = vector.broadcast %cst_12 : f32 to vector<2x512xf32>
    %26 = vector.extract_strided_slice %24 {offsets = [0, 0], sizes = [2, 256], strides = [1, 1]} : vector<2x1024xf32> to vector<2x256xf32>
    %27 = arith.truncf %26 : vector<2x256xf32> to vector<2x256xbf16>
    %c0_13 = arith.constant 0 : index
    %c0_14 = arith.constant 0 : index
    %28 = vector.load %arg3[%c0_13, %c0_14] : memref<1024x512xbf16, #tpu.memory_space<vmem>>, vector<256x512xbf16>
    %cst_15 = arith.constant dense<0.000000e+00> : vector<2x512xf32>
    %29 = tpu.matmul %27, %28, %cst_15 {dimension_numbers = #tpu.dot_dimension_numbers<[1], [0], [0], [1], [0, 0, 1, 1], [], []>} : vector<2x256xbf16>, vector<256x512xbf16>, vector<2x512xf32> -> vector<2x512xf32>
    %30 = arith.addf %25, %29 : vector<2x512xf32>
    %31 = vector.extract_strided_slice %24 {offsets = [0, 256], sizes = [2, 256], strides = [1, 1]} : vector<2x1024xf32> to vector<2x256xf32>
    %32 = arith.truncf %31 : vector<2x256xf32> to vector<2x256xbf16>
    %c256_16 = arith.constant 256 : index
    %c0_17 = arith.constant 0 : index
    %33 = vector.load %arg3[%c256_16, %c0_17] : memref<1024x512xbf16, #tpu.memory_space<vmem>>, vector<256x512xbf16>
    %cst_18 = arith.constant dense<0.000000e+00> : vector<2x512xf32>
    %34 = tpu.matmul %32, %33, %cst_18 {dimension_numbers = #tpu.dot_dimension_numbers<[1], [0], [0], [1], [0, 0, 1, 1], [], []>} : vector<2x256xbf16>, vector<256x512xbf16>, vector<2x512xf32> -> vector<2x512xf32>
    %35 = arith.addf %30, %34 : vector<2x512xf32>
    %36 = vector.extract_strided_slice %24 {offsets = [0, 512], sizes = [2, 256], strides = [1, 1]} : vector<2x1024xf32> to vector<2x256xf32>
    %37 = arith.truncf %36 : vector<2x256xf32> to vector<2x256xbf16>
    %c512_19 = arith.constant 512 : index
    %c0_20 = arith.constant 0 : index
    %38 = vector.load %arg3[%c512_19, %c0_20] : memref<1024x512xbf16, #tpu.memory_space<vmem>>, vector<256x512xbf16>
    %cst_21 = arith.constant dense<0.000000e+00> : vector<2x512xf32>
    %39 = tpu.matmul %37, %38, %cst_21 {dimension_numbers = #tpu.dot_dimension_numbers<[1], [0], [0], [1], [0, 0, 1, 1], [], []>} : vector<2x256xbf16>, vector<256x512xbf16>, vector<2x512xf32> -> vector<2x512xf32>
    %40 = arith.addf %35, %39 : vector<2x512xf32>
    %41 = vector.extract_strided_slice %24 {offsets = [0, 768], sizes = [2, 256], strides = [1, 1]} : vector<2x1024xf32> to vector<2x256xf32>
    %42 = arith.truncf %41 : vector<2x256xf32> to vector<2x256xbf16>
    %c768 = arith.constant 768 : index
    %c0_22 = arith.constant 0 : index
    %43 = vector.load %arg3[%c768, %c0_22] : memref<1024x512xbf16, #tpu.memory_space<vmem>>, vector<256x512xbf16>
    %cst_23 = arith.constant dense<0.000000e+00> : vector<2x512xf32>
    %44 = tpu.matmul %42, %43, %cst_23 {dimension_numbers = #tpu.dot_dimension_numbers<[1], [0], [0], [1], [0, 0, 1, 1], [], []>} : vector<2x256xbf16>, vector<256x512xbf16>, vector<2x512xf32> -> vector<2x512xf32>
    %45 = arith.addf %40, %44 : vector<2x512xf32>
    %cst_24 = arith.constant dense<0.000000e+00> : vector<512xf32>
    %46 = vector.multi_reduction <add>, %45, %cst_24 [0] : vector<2x512xf32> to vector<512xf32>
    %47 = vector.shape_cast %46 : vector<512xf32> to vector<1x512xf32>
    %48 = arith.mulf %45, %45 : vector<2x512xf32>
    %cst_25 = arith.constant dense<0.000000e+00> : vector<512xf32>
    %49 = vector.multi_reduction <add>, %48, %cst_25 [0] : vector<2x512xf32> to vector<512xf32>
    %50 = vector.shape_cast %49 : vector<512xf32> to vector<1x512xf32>
    %c0_26 = arith.constant 0 : index
    %c0_27 = arith.constant 0 : index
    %51 = vector.load %arg6[%c0_26, %c0_27] : memref<512x32xf32, #tpu.memory_space<vmem>>, vector<512x32xf32>
    %cst_28 = arith.constant dense<0.000000e+00> : vector<1x32xf32>
    %52 = tpu.matmul %47, %51, %cst_28 {dimension_numbers = #tpu.dot_dimension_numbers<[1], [0], [0], [1], [0, 0, 1, 1], [], []>} : vector<1x512xf32>, vector<512x32xf32>, vector<1x32xf32> -> vector<1x32xf32>
    %cst_29 = arith.constant 3.125000e-02 : f32
    %53 = vector.broadcast %cst_29 : f32 to vector<1x32xf32>
    %54 = arith.mulf %52, %53 : vector<1x32xf32>
    %c0_30 = arith.constant 0 : index
    %c0_31 = arith.constant 0 : index
    %55 = vector.load %arg6[%c0_30, %c0_31] : memref<512x32xf32, #tpu.memory_space<vmem>>, vector<512x32xf32>
    %cst_32 = arith.constant dense<0.000000e+00> : vector<1x32xf32>
    %56 = tpu.matmul %50, %55, %cst_32 {dimension_numbers = #tpu.dot_dimension_numbers<[1], [0], [0], [1], [0, 0, 1, 1], [], []>} : vector<1x512xf32>, vector<512x32xf32>, vector<1x32xf32> -> vector<1x32xf32>
    %cst_33 = arith.constant 3.125000e-02 : f32
    %57 = vector.broadcast %cst_33 : f32 to vector<1x32xf32>
    %58 = arith.mulf %56, %57 : vector<1x32xf32>
    %59 = arith.mulf %54, %54 : vector<1x32xf32>
    %60 = arith.subf %58, %59 : vector<1x32xf32>
    %cst_34 = arith.constant 0.000000e+00 : f32
    %61 = vector.broadcast %cst_34 : f32 to vector<1x32xf32>
    %62 = arith.maximumf %60, %61 : vector<1x32xf32>
    %c0_35 = arith.constant 0 : index
    %c0_36 = arith.constant 0 : index
    %63 = vector.load %arg4[%c0_35, %c0_36] : memref<1x32xf32, #tpu.memory_space<vmem>>, vector<1x32xf32>
    %cst_37 = arith.constant 9.99999974E-6 : f32
    %64 = vector.broadcast %cst_37 : f32 to vector<1x32xf32>
    %65 = arith.addf %62, %64 : vector<1x32xf32>
    %66 = math.rsqrt %65 : vector<1x32xf32>
    %67 = arith.mulf %63, %66 : vector<1x32xf32>
    %c0_38 = arith.constant 0 : index
    %c0_39 = arith.constant 0 : index
    %68 = vector.load %arg5[%c0_38, %c0_39] : memref<1x32xf32, #tpu.memory_space<vmem>>, vector<1x32xf32>
    %69 = arith.mulf %54, %67 : vector<1x32xf32>
    %70 = arith.subf %68, %69 : vector<1x32xf32>
    %c0_40 = arith.constant 0 : index
    %c0_41 = arith.constant 0 : index
    %71 = vector.load %arg7[%c0_40, %c0_41] : memref<32x512xf32, #tpu.memory_space<vmem>>, vector<32x512xf32>
    %cst_42 = arith.constant dense<0.000000e+00> : vector<1x512xf32>
    %72 = tpu.matmul %67, %71, %cst_42 {dimension_numbers = #tpu.dot_dimension_numbers<[1], [0], [0], [1], [0, 0, 1, 1], [], []>} : vector<1x32xf32>, vector<32x512xf32>, vector<1x512xf32> -> vector<1x512xf32>
    %c0_43 = arith.constant 0 : index
    %c0_44 = arith.constant 0 : index
    %73 = vector.load %arg7[%c0_43, %c0_44] : memref<32x512xf32, #tpu.memory_space<vmem>>, vector<32x512xf32>
    %cst_45 = arith.constant dense<0.000000e+00> : vector<1x512xf32>
    %74 = tpu.matmul %70, %73, %cst_45 {dimension_numbers = #tpu.dot_dimension_numbers<[1], [0], [0], [1], [0, 0, 1, 1], [], []>} : vector<1x32xf32>, vector<32x512xf32>, vector<1x512xf32> -> vector<1x512xf32>
    %75 = vector.broadcast %72 : vector<1x512xf32> to vector<2x512xf32>
    %76 = arith.mulf %45, %75 : vector<2x512xf32>
    %77 = vector.broadcast %74 : vector<1x512xf32> to vector<2x512xf32>
    %78 = arith.addf %76, %77 : vector<2x512xf32>
    %cst_46 = arith.constant 0.000000e+00 : f32
    %79 = vector.broadcast %cst_46 : f32 to vector<2x512xf32>
    %80 = arith.cmpf oge, %78, %79 : vector<2x512xf32>
    %cst_47 = arith.constant 2.000000e-01 : f32
    %81 = vector.broadcast %cst_47 : f32 to vector<2x512xf32>
    %82 = arith.mulf %81, %78 : vector<2x512xf32>
    %83 = arith.select %80, %78, %82 : vector<2x512xi1>, vector<2x512xf32>
    %cst_48 = arith.constant 0.000000e+00 : f32
    %84 = vector.broadcast %cst_48 : f32 to vector<2x256xf32>
    %85 = vector.extract_strided_slice %83 {offsets = [0, 0], sizes = [2, 256], strides = [1, 1]} : vector<2x512xf32> to vector<2x256xf32>
    %86 = arith.truncf %85 : vector<2x256xf32> to vector<2x256xbf16>
    %c0_49 = arith.constant 0 : index
    %c0_50 = arith.constant 0 : index
    %87 = vector.load %arg8[%c0_49, %c0_50] : memref<512x256xbf16, #tpu.memory_space<vmem>>, vector<256x256xbf16>
    %cst_51 = arith.constant dense<0.000000e+00> : vector<2x256xf32>
    %88 = tpu.matmul %86, %87, %cst_51 {dimension_numbers = #tpu.dot_dimension_numbers<[1], [0], [0], [1], [0, 0, 1, 1], [], []>} : vector<2x256xbf16>, vector<256x256xbf16>, vector<2x256xf32> -> vector<2x256xf32>
    %89 = arith.addf %84, %88 : vector<2x256xf32>
    %90 = vector.extract_strided_slice %83 {offsets = [0, 256], sizes = [2, 256], strides = [1, 1]} : vector<2x512xf32> to vector<2x256xf32>
    %91 = arith.truncf %90 : vector<2x256xf32> to vector<2x256xbf16>
    %c256_52 = arith.constant 256 : index
    %c0_53 = arith.constant 0 : index
    %92 = vector.load %arg8[%c256_52, %c0_53] : memref<512x256xbf16, #tpu.memory_space<vmem>>, vector<256x256xbf16>
    %cst_54 = arith.constant dense<0.000000e+00> : vector<2x256xf32>
    %93 = tpu.matmul %91, %92, %cst_54 {dimension_numbers = #tpu.dot_dimension_numbers<[1], [0], [0], [1], [0, 0, 1, 1], [], []>} : vector<2x256xbf16>, vector<256x256xbf16>, vector<2x256xf32> -> vector<2x256xf32>
    %94 = arith.addf %89, %93 : vector<2x256xf32>
    %cst_55 = arith.constant dense<0.000000e+00> : vector<256xf32>
    %95 = vector.multi_reduction <add>, %94, %cst_55 [0] : vector<2x256xf32> to vector<256xf32>
    %96 = vector.shape_cast %95 : vector<256xf32> to vector<1x256xf32>
    %97 = arith.mulf %94, %94 : vector<2x256xf32>
    %cst_56 = arith.constant dense<0.000000e+00> : vector<256xf32>
    %98 = vector.multi_reduction <add>, %97, %cst_56 [0] : vector<2x256xf32> to vector<256xf32>
    %99 = vector.shape_cast %98 : vector<256xf32> to vector<1x256xf32>
    %c0_57 = arith.constant 0 : index
    %c0_58 = arith.constant 0 : index
    %100 = vector.load %arg11[%c0_57, %c0_58] : memref<256x64xf32, #tpu.memory_space<vmem>>, vector<256x64xf32>
    %cst_59 = arith.constant dense<0.000000e+00> : vector<1x64xf32>
    %101 = tpu.matmul %96, %100, %cst_59 {dimension_numbers = #tpu.dot_dimension_numbers<[1], [0], [0], [1], [0, 0, 1, 1], [], []>} : vector<1x256xf32>, vector<256x64xf32>, vector<1x64xf32> -> vector<1x64xf32>
    %cst_60 = arith.constant 1.250000e-01 : f32
    %102 = vector.broadcast %cst_60 : f32 to vector<1x64xf32>
    %103 = arith.mulf %101, %102 : vector<1x64xf32>
    %c0_61 = arith.constant 0 : index
    %c0_62 = arith.constant 0 : index
    %104 = vector.load %arg11[%c0_61, %c0_62] : memref<256x64xf32, #tpu.memory_space<vmem>>, vector<256x64xf32>
    %cst_63 = arith.constant dense<0.000000e+00> : vector<1x64xf32>
    %105 = tpu.matmul %99, %104, %cst_63 {dimension_numbers = #tpu.dot_dimension_numbers<[1], [0], [0], [1], [0, 0, 1, 1], [], []>} : vector<1x256xf32>, vector<256x64xf32>, vector<1x64xf32> -> vector<1x64xf32>
    %cst_64 = arith.constant 1.250000e-01 : f32
    %106 = vector.broadcast %cst_64 : f32 to vector<1x64xf32>
    %107 = arith.mulf %105, %106 : vector<1x64xf32>
    %108 = arith.mulf %103, %103 : vector<1x64xf32>
    %109 = arith.subf %107, %108 : vector<1x64xf32>
    %cst_65 = arith.constant 0.000000e+00 : f32
    %110 = vector.broadcast %cst_65 : f32 to vector<1x64xf32>
    %111 = arith.maximumf %109, %110 : vector<1x64xf32>
    %c0_66 = arith.constant 0 : index
    %c0_67 = arith.constant 0 : index
    %112 = vector.load %arg9[%c0_66, %c0_67] : memref<1x64xf32, #tpu.memory_space<vmem>>, vector<1x64xf32>
    %cst_68 = arith.constant 9.99999974E-6 : f32
    %113 = vector.broadcast %cst_68 : f32 to vector<1x64xf32>
    %114 = arith.addf %111, %113 : vector<1x64xf32>
    %115 = math.rsqrt %114 : vector<1x64xf32>
    %116 = arith.mulf %112, %115 : vector<1x64xf32>
    %c0_69 = arith.constant 0 : index
    %c0_70 = arith.constant 0 : index
    %117 = vector.load %arg10[%c0_69, %c0_70] : memref<1x64xf32, #tpu.memory_space<vmem>>, vector<1x64xf32>
    %118 = arith.mulf %103, %116 : vector<1x64xf32>
    %119 = arith.subf %117, %118 : vector<1x64xf32>
    %c0_71 = arith.constant 0 : index
    %c0_72 = arith.constant 0 : index
    %120 = vector.load %arg12[%c0_71, %c0_72] : memref<64x256xf32, #tpu.memory_space<vmem>>, vector<64x256xf32>
    %cst_73 = arith.constant dense<0.000000e+00> : vector<1x256xf32>
    %121 = tpu.matmul %116, %120, %cst_73 {dimension_numbers = #tpu.dot_dimension_numbers<[1], [0], [0], [1], [0, 0, 1, 1], [], []>} : vector<1x64xf32>, vector<64x256xf32>, vector<1x256xf32> -> vector<1x256xf32>
    %c0_74 = arith.constant 0 : index
    %c0_75 = arith.constant 0 : index
    %122 = vector.load %arg12[%c0_74, %c0_75] : memref<64x256xf32, #tpu.memory_space<vmem>>, vector<64x256xf32>
    %cst_76 = arith.constant dense<0.000000e+00> : vector<1x256xf32>
    %123 = tpu.matmul %119, %122, %cst_76 {dimension_numbers = #tpu.dot_dimension_numbers<[1], [0], [0], [1], [0, 0, 1, 1], [], []>} : vector<1x64xf32>, vector<64x256xf32>, vector<1x256xf32> -> vector<1x256xf32>
    %124 = vector.broadcast %121 : vector<1x256xf32> to vector<2x256xf32>
    %125 = arith.mulf %94, %124 : vector<2x256xf32>
    %126 = vector.broadcast %123 : vector<1x256xf32> to vector<2x256xf32>
    %127 = arith.addf %125, %126 : vector<2x256xf32>
    %cst_77 = arith.constant 0.000000e+00 : f32
    %128 = vector.broadcast %cst_77 : f32 to vector<2x256xf32>
    %129 = arith.cmpf oge, %127, %128 : vector<2x256xf32>
    %cst_78 = arith.constant 2.000000e-01 : f32
    %130 = vector.broadcast %cst_78 : f32 to vector<2x256xf32>
    %131 = arith.mulf %130, %127 : vector<2x256xf32>
    %132 = arith.select %129, %127, %131 : vector<2x256xi1>, vector<2x256xf32>
    %cst_79 = arith.constant 0.000000e+00 : f32
    %133 = vector.broadcast %cst_79 : f32 to vector<2x128xf32>
    %134 = arith.truncf %132 : vector<2x256xf32> to vector<2x256xbf16>
    %c0_80 = arith.constant 0 : index
    %c0_81 = arith.constant 0 : index
    %135 = vector.load %arg13[%c0_80, %c0_81] : memref<256x128xbf16, #tpu.memory_space<vmem>>, vector<256x128xbf16>
    %cst_82 = arith.constant dense<0.000000e+00> : vector<2x128xf32>
    %136 = tpu.matmul %134, %135, %cst_82 {dimension_numbers = #tpu.dot_dimension_numbers<[1], [0], [0], [1], [0, 0, 1, 1], [], []>} : vector<2x256xbf16>, vector<256x128xbf16>, vector<2x128xf32> -> vector<2x128xf32>
    %137 = arith.addf %133, %136 : vector<2x128xf32>
    %cst_83 = arith.constant dense<0.000000e+00> : vector<128xf32>
    %138 = vector.multi_reduction <add>, %137, %cst_83 [0] : vector<2x128xf32> to vector<128xf32>
    %139 = vector.shape_cast %138 : vector<128xf32> to vector<1x128xf32>
    %140 = arith.mulf %137, %137 : vector<2x128xf32>
    %cst_84 = arith.constant dense<0.000000e+00> : vector<128xf32>
    %141 = vector.multi_reduction <add>, %140, %cst_84 [0] : vector<2x128xf32> to vector<128xf32>
    %142 = vector.shape_cast %141 : vector<128xf32> to vector<1x128xf32>
    %c0_85 = arith.constant 0 : index
    %c0_86 = arith.constant 0 : index
    %143 = vector.load %arg16[%c0_85, %c0_86] : memref<128x128xf32, #tpu.memory_space<vmem>>, vector<128x128xf32>
    %cst_87 = arith.constant dense<0.000000e+00> : vector<1x128xf32>
    %144 = tpu.matmul %139, %143, %cst_87 {dimension_numbers = #tpu.dot_dimension_numbers<[1], [0], [0], [1], [0, 0, 1, 1], [], []>} : vector<1x128xf32>, vector<128x128xf32>, vector<1x128xf32> -> vector<1x128xf32>
    %cst_88 = arith.constant 5.000000e-01 : f32
    %145 = vector.broadcast %cst_88 : f32 to vector<1x128xf32>
    %146 = arith.mulf %144, %145 : vector<1x128xf32>
    %c0_89 = arith.constant 0 : index
    %c0_90 = arith.constant 0 : index
    %147 = vector.load %arg16[%c0_89, %c0_90] : memref<128x128xf32, #tpu.memory_space<vmem>>, vector<128x128xf32>
    %cst_91 = arith.constant dense<0.000000e+00> : vector<1x128xf32>
    %148 = tpu.matmul %142, %147, %cst_91 {dimension_numbers = #tpu.dot_dimension_numbers<[1], [0], [0], [1], [0, 0, 1, 1], [], []>} : vector<1x128xf32>, vector<128x128xf32>, vector<1x128xf32> -> vector<1x128xf32>
    %cst_92 = arith.constant 5.000000e-01 : f32
    %149 = vector.broadcast %cst_92 : f32 to vector<1x128xf32>
    %150 = arith.mulf %148, %149 : vector<1x128xf32>
    %151 = arith.mulf %146, %146 : vector<1x128xf32>
    %152 = arith.subf %150, %151 : vector<1x128xf32>
    %cst_93 = arith.constant 0.000000e+00 : f32
    %153 = vector.broadcast %cst_93 : f32 to vector<1x128xf32>
    %154 = arith.maximumf %152, %153 : vector<1x128xf32>
    %c0_94 = arith.constant 0 : index
    %c0_95 = arith.constant 0 : index
    %155 = vector.load %arg14[%c0_94, %c0_95] : memref<1x128xf32, #tpu.memory_space<vmem>>, vector<1x128xf32>
    %cst_96 = arith.constant 9.99999974E-6 : f32
    %156 = vector.broadcast %cst_96 : f32 to vector<1x128xf32>
    %157 = arith.addf %154, %156 : vector<1x128xf32>
    %158 = math.rsqrt %157 : vector<1x128xf32>
    %159 = arith.mulf %155, %158 : vector<1x128xf32>
    %c0_97 = arith.constant 0 : index
    %c0_98 = arith.constant 0 : index
    %160 = vector.load %arg15[%c0_97, %c0_98] : memref<1x128xf32, #tpu.memory_space<vmem>>, vector<1x128xf32>
    %161 = arith.mulf %146, %159 : vector<1x128xf32>
    %162 = arith.subf %160, %161 : vector<1x128xf32>
    %c0_99 = arith.constant 0 : index
    %c0_100 = arith.constant 0 : index
    %163 = vector.load %arg17[%c0_99, %c0_100] : memref<128x128xf32, #tpu.memory_space<vmem>>, vector<128x128xf32>
    %cst_101 = arith.constant dense<0.000000e+00> : vector<1x128xf32>
    %164 = tpu.matmul %159, %163, %cst_101 {dimension_numbers = #tpu.dot_dimension_numbers<[1], [0], [0], [1], [0, 0, 1, 1], [], []>} : vector<1x128xf32>, vector<128x128xf32>, vector<1x128xf32> -> vector<1x128xf32>
    %c0_102 = arith.constant 0 : index
    %c0_103 = arith.constant 0 : index
    %165 = vector.load %arg17[%c0_102, %c0_103] : memref<128x128xf32, #tpu.memory_space<vmem>>, vector<128x128xf32>
    %cst_104 = arith.constant dense<0.000000e+00> : vector<1x128xf32>
    %166 = tpu.matmul %162, %165, %cst_104 {dimension_numbers = #tpu.dot_dimension_numbers<[1], [0], [0], [1], [0, 0, 1, 1], [], []>} : vector<1x128xf32>, vector<128x128xf32>, vector<1x128xf32> -> vector<1x128xf32>
    %167 = vector.broadcast %164 : vector<1x128xf32> to vector<2x128xf32>
    %168 = arith.mulf %137, %167 : vector<2x128xf32>
    %169 = vector.broadcast %166 : vector<1x128xf32> to vector<2x128xf32>
    %170 = arith.addf %168, %169 : vector<2x128xf32>
    %cst_105 = arith.constant 0.000000e+00 : f32
    %171 = vector.broadcast %cst_105 : f32 to vector<2x128xf32>
    %172 = arith.cmpf oge, %170, %171 : vector<2x128xf32>
    %cst_106 = arith.constant 2.000000e-01 : f32
    %173 = vector.broadcast %cst_106 : f32 to vector<2x128xf32>
    %174 = arith.mulf %173, %170 : vector<2x128xf32>
    %175 = arith.select %172, %170, %174 : vector<2x128xi1>, vector<2x128xf32>
    %176 = arith.truncf %175 : vector<2x128xf32> to vector<2x128xbf16>
    %c0_107 = arith.constant 0 : index
    %c0_108 = arith.constant 0 : index
    %177 = vector.load %arg18[%c0_107, %c0_108] : memref<128x1xbf16, #tpu.memory_space<vmem>>, vector<128x1xbf16>
    %cst_109 = arith.constant dense<0.000000e+00> : vector<2x1xf32>
    %178 = tpu.matmul %176, %177, %cst_109 {dimension_numbers = #tpu.dot_dimension_numbers<[1], [0], [0], [1], [0, 0, 1, 1], [], []>} : vector<2x128xbf16>, vector<128x1xbf16>, vector<2x1xf32> -> vector<2x1xf32>
    %c0_110 = arith.constant 0 : index
    %c0_111 = arith.constant 0 : index
    %179 = vector.load %arg19[%c0_110, %c0_111] : memref<1x1xf32, #tpu.memory_space<vmem>>, vector<1x1xf32>
    %180 = vector.broadcast %179 : vector<1x1xf32> to vector<2x1xf32>
    %181 = arith.addf %178, %180 : vector<2x1xf32>
    %cst_112 = arith.constant 0.000000e+00 : f32
    %182 = vector.broadcast %cst_112 : f32 to vector<2x1xf32>
    %183 = arith.subf %182, %181 : vector<2x1xf32>
    %184 = math.exp %183 : vector<2x1xf32>
    %cst_113 = arith.constant 1.000000e+00 : f32
    %185 = vector.broadcast %cst_113 : f32 to vector<2x1xf32>
    %186 = arith.addf %185, %184 : vector<2x1xf32>
    %cst_114 = arith.constant 1.000000e+00 : f32
    %187 = vector.broadcast %cst_114 : f32 to vector<2x1xf32>
    %188 = arith.divf %187, %186 : vector<2x1xf32>
    %c0_115 = arith.constant 0 : index
    %c0_116 = arith.constant 0 : index
    %189 = vector.load %arg20[%c0_115, %c0_116] : memref<2x1xf32, #tpu.memory_space<vmem>>, vector<2x1xf32>
    tpu.vector_store %arg20[%c0_115, %c0_116], %188 {strides = array<i32>} : memref<2x1xf32, #tpu.memory_space<vmem>>, vector<2x1xf32>,
    return
  }
}

</mosaic_0001>

<llo_original>
// kernel: discriminator_forward.1
$region0: #{discriminator_forward.1}
  #allocation0 [shape = 'u32[]', space=smem, size = 0x4, offset = 0x4, fixed_abs, tag = 'smem constant byte address 0x4 - core index']
  #allocation1 [shape = 'u32[144,128]{1,0:T(1,128)}', space=vmem, size = 0x12000, scoped, tag = 'internal scratch']
  #allocation2 [shape = 'f32[1,1]{1,0:T(1,128)S(1)}', space=vmem, size = 0x200, scoped, tag = 'scoped memory for discriminator_forward.1']
  %s0 = inlined_call_operand.vmem [shape: f32[2,768], index: 0, kind: input, shape index: {}]
  %s1 = inlined_call_operand.hbm [shape: bf16[768,1024], index: 1, kind: input, shape index: {}]
  %s2 = inlined_call_operand.hbm [shape: f32[1,1024], index: 2, kind: input, shape index: {}]
  %s3 = inlined_call_operand.hbm [shape: bf16[1024,512], index: 3, kind: input, shape index: {}]
  %s4 = inlined_call_operand.hbm [shape: f32[1,32], index: 4, kind: input, shape index: {}]
  %s5 = inlined_call_operand.hbm [shape: f32[1,32], index: 5, kind: input, shape index: {}]
  %s6 = inlined_call_operand.vmem [shape: f32[512,32], index: 6, kind: input, shape index: {}]
  %s7 = inlined_call_operand.hbm [shape: f32[32,512], index: 7, kind: input, shape index: {}]
  %s8 = inlined_call_operand.hbm [shape: bf16[512,256], index: 8, kind: input, shape index: {}]
  %s9 = inlined_call_operand.hbm [shape: f32[1,64], index: 9, kind: input, shape index: {}]
  %s10 = inlined_call_operand.hbm [shape: f32[1,64], index: 10, kind: input, shape index: {}]
  %s11 = inlined_call_operand.vmem [shape: f32[256,64], index: 11, kind: input, shape index: {}]
  %s12 = inlined_call_operand.hbm [shape: f32[64,256], index: 12, kind: input, shape index: {}]
  %s13 = inlined_call_operand.hbm [shape: bf16[256,128], index: 13, kind: input, shape index: {}]
  %s14 = inlined_call_operand.hbm [shape: f32[1,128], index: 14, kind: input, shape index: {}]
  %s15 = inlined_call_operand.hbm [shape: f32[1,128], index: 15, kind: input, shape index: {}]
  %s16 = inlined_call_operand.hbm [shape: f32[128,128], index: 16, kind: input, shape index: {}]
  %s17 = inlined_call_operand.hbm [shape: f32[128,128], index: 17, kind: input, shape index: {}]
  %s18 = inlined_call_operand.vmem [shape: bf16[128,1], index: 18, kind: input, shape index: {}]
  %s19 = inlined_call_operand.<no memory space> [shape: f32[1,1], index: 19, kind: input, shape index: {}]
  %s20 = inlined_call_operand.vmem [shape: f32[2,1], index: 20, kind: output, shape index: {}]
  %s21 = sld [smem:[#allocation0]]
  $region150: #{discriminator_forward.1} parent=0
    _
  %s23 = ssub.s32 1, %s21
  %s24 = scalar_select 0, %s23, %s21
  %v25 = vstv %s19
  %26 = vst [vmem:[#allocation2] sm:$0x1] %v25
  $region1: #{discriminator_forward.1} parent=0
    #allocation3 [shape = 'u8[1572864]{0}', space=vmem, size = 0x180000, scoped, tag = 'input window, operand 1, single buffered']
    #allocation4 [shape = 's32[1]{0}', space=sflag, size = 0x4, scoped, tag = 'scoped memory for discriminator_forward.1']
    #allocation5 [shape = 'u8[4096]{0}', space=vmem, size = 0x1000, scoped, tag = 'input window, operand 2, single buffered']
    #allocation6 [shape = 's32[1]{0}', space=sflag, size = 0x4, scoped, tag = 'scoped memory for discriminator_forward.1']
    #allocation7 [shape = 'u8[1048576]{0}', space=vmem, size = 0x100000, scoped, tag = 'input window, operand 3, single buffered']
    #allocation8 [shape = 'u8[512]{0}', space=vmem, size = 0x400, scoped, tag = 'input window, operand 4, single buffered']
    #allocation9 [shape = 's32[1]{0}', space=sflag, size = 0x4, scoped, tag = 'scoped memory for discriminator_forward.1']
    #allocation10 [shape = 'u8[512]{0}', space=vmem, size = 0x400, scoped, tag = 'input window, operand 5, single buffered']
    #allocation11 [shape = 'u8[65536]{0}', space=vmem, size = 0x10000, scoped, tag = 'input window, operand 7, single buffered']
    #allocation12 [shape = 's32[1]{0}', space=sflag, size = 0x4, scoped, tag = 'scoped memory for discriminator_forward.1']
    #allocation13 [shape = 'u8[262144]{0}', space=vmem, size = 0x40000, scoped, tag = 'input window, operand 8, single buffered']
    #allocation14 [shape = 'u8[512]{0}', space=vmem, size = 0x400, scoped, tag = 'input window, operand 9, single buffered']
    #allocation15 [shape = 's32[1]{0}', space=sflag, size = 0x4, scoped, tag = 'scoped memory for discriminator_forward.1']
    #allocation16 [shape = 'u8[512]{0}', space=vmem, size = 0x400, scoped, tag = 'input window, operand 10, single buffered']
    #allocation17 [shape = 'u8[65536]{0}', space=vmem, size = 0x10000, scoped, tag = 'input window, operand 12, single buffered']
    #allocation18 [shape = 's32[1]{0}', space=sflag, size = 0x4, scoped, tag = 'scoped memory for discriminator_forward.1']
    #allocation19 [shape = 'u8[65536]{0}', space=vmem, size = 0x10000, scoped, tag = 'input window, operand 13, single buffered']
    #allocation20 [shape = 'u8[512]{0}', space=vmem, size = 0x400, scoped, tag = 'input window, operand 14, single buffered']
    #allocation21 [shape = 's32[1]{0}', space=sflag, size = 0x4, scoped, tag = 'scoped memory for discriminator_forward.1']
    #allocation22 [shape = 'u8[512]{0}', space=vmem, size = 0x400, scoped, tag = 'input window, operand 15, single buffered']
    #allocation23 [shape = 'u8[65536]{0}', space=vmem, size = 0x10000, scoped, tag = 'input window, operand 16, single buffered']
    #allocation24 [shape = 's32[1]{0}', space=sflag, size = 0x4, scoped, tag = 'scoped memory for discriminator_forward.1']
    #allocation25 [shape = 'u8[65536]{0}', space=vmem, size = 0x10000, scoped, tag = 'input window, operand 17, single buffered']
    %27 = vsyncpa [#allocation4], 0
    %28 = vsyncpa [#allocation6], 0
    %29 = vsyncpa [#allocation9], 0
    %30 = vsyncpa [#allocation12], 0
    %31 = vsyncpa [#allocation15], 0
    %32 = vsyncpa [#allocation18], 0
    %33 = vsyncpa [#allocation21], 0
    %34 = vsyncpa [#allocation24], 0
    // Predicated region
    $region2: #{discriminator_forward.1} parent=1 // pred_check
      _
    $region3: #{discriminator_forward.1} parent=1 // pred_check_branch
      %36 = sbr.rel (0) target = $region5
    $region4: #{discriminator_forward.1} parent=1 // pred_region
      _
    $region5: #{discriminator_forward.1} parent=1 // pred_fallthru
      _
    // Predicated region
    $region6: #{discriminator_forward.1} parent=1 // pred_check
      _
    $region7: #{discriminator_forward.1} parent=1 // pred_check_branch
      %38 = sbr.rel (0) target = $region9
    $region8: #{discriminator_forward.1} parent=1 // pred_region
      %s40 = ssub.s32 49152, 49152
      %41 = vsyncadd [#allocation4], %s40
      %s42 = sshll.u32 [#allocation3], 4
      %s43 = int_to_ptr.vmem [resolvable:$true] %s42
      %48 = dma.hbm_to_vmem [thread:$0]  %s1, 49152, %s43, [#allocation4], 512, 512, 32
    $region9: #{discriminator_forward.1} parent=1 // pred_fallthru
      _
    // Predicated region
    $region10: #{discriminator_forward.1} parent=1 // pred_check
      _
    $region11: #{discriminator_forward.1} parent=1 // pred_check_branch
      %50 = sbr.rel (0) target = $region13
    $region12: #{discriminator_forward.1} parent=1 // pred_region
      %s52 = ssub.s32 128, 128
      %53 = vsyncadd [#allocation6], %s52
      %s55 = sshll.u32 [#allocation5], 4
      %s56 = int_to_ptr.vmem [resolvable:$true] %s55
      %58 = dma.hbm_to_vmem [thread:$0]  %s2, 128, %s56, [#allocation6]
    $region13: #{discriminator_forward.1} parent=1 // pred_fallthru
      _
    // Predicated region
    $region14: #{discriminator_forward.1} parent=1 // pred_check
      _
    $region15: #{discriminator_forward.1} parent=1 // pred_check_branch
      %60 = sbr.rel (0) target = $region17
    $region16: #{discriminator_forward.1} parent=1 // pred_region
      %s62 = ssub.s32 32768, 32768
      %63 = vsyncadd [#allocation6], %s62
      %s64 = sshll.u32 [#allocation7], 4
      %s65 = int_to_ptr.vmem [resolvable:$true] %s64
      %70 = dma.hbm_to_vmem [thread:$0]  %s3, 32768, %s65, [#allocation6], 256, 256, 16
    $region17: #{discriminator_forward.1} parent=1 // pred_fallthru
      _
    // Predicated region
    $region18: #{discriminator_forward.1} parent=1 // pred_check
      _
    $region19: #{discriminator_forward.1} parent=1 // pred_check_branch
      %72 = sbr.rel (0) target = $region21
    $region20: #{discriminator_forward.1} parent=1 // pred_region
      %s74 = ssub.s32 16, 16
      %75 = vsyncadd [#allocation9], %s74
      %s77 = sshll.u32 [#allocation8], 4
      %s78 = int_to_ptr.vmem [resolvable:$true] %s77
      %80 = dma.hbm_to_vmem [thread:$0]  %s4, 16, %s78, [#allocation9]
    $region21: #{discriminator_forward.1} parent=1 // pred_fallthru
      _
    // Predicated region
    $region22: #{discriminator_forward.1} parent=1 // pred_check
      _
    $region23: #{discriminator_forward.1} parent=1 // pred_check_branch
      %82 = sbr.rel (0) target = $region25
    $region24: #{discriminator_forward.1} parent=1 // pred_region
      %s84 = ssub.s32 16, 16
      %85 = vsyncadd [#allocation9], %s84
      %s87 = sshll.u32 [#allocation10], 4
      %s88 = int_to_ptr.vmem [resolvable:$true] %s87
      %90 = dma.hbm_to_vmem [thread:$0]  %s5, 16, %s88, [#allocation9]
    $region25: #{discriminator_forward.1} parent=1 // pred_fallthru
      _
    // Predicated region
    $region26: #{discriminator_forward.1} parent=1 // pred_check
      _
    $region27: #{discriminator_forward.1} parent=1 // pred_check_branch
      %92 = sbr.rel (0) target = $region29
    $region28: #{discriminator_forward.1} parent=1 // pred_region
      _
    $region29: #{discriminator_forward.1} parent=1 // pred_fallthru
      _
    // Predicated region
    $region30: #{discriminator_forward.1} parent=1 // pred_check
      _
    $region31: #{discriminator_forward.1} parent=1 // pred_check_branch
      %94 = sbr.rel (0) target = $region33
    $region32: #{discriminator_forward.1} parent=1 // pred_region
      %s96 = ssub.s32 2048, 2048
      %97 = vsyncadd [#allocation12], %s96
      %s98 = sshll.u32 [#allocation11], 4
      %s99 = int_to_ptr.vmem [resolvable:$true] %s98
      %104 = dma.hbm_to_vmem [thread:$0]  %s7, 2048, %s99, [#allocation12], 512, 512, 32
    $region33: #{discriminator_forward.1} parent=1 // pred_fallthru
      _
    // Predicated region
    $region34: #{discriminator_forward.1} parent=1 // pred_check
      _
    $region35: #{discriminator_forward.1} parent=1 // pred_check_branch
      %106 = sbr.rel (0) target = $region37
    $region36: #{discriminator_forward.1} parent=1 // pred_region
      %s108 = ssub.s32 8192, 8192
      %109 = vsyncadd [#allocation12], %s108
      %s110 = sshll.u32 [#allocation13], 4
      %s111 = int_to_ptr.vmem [resolvable:$true] %s110
      %116 = dma.hbm_to_vmem [thread:$0]  %s8, 8192, %s111, [#allocation12], 128, 128, 8
    $region37: #{discriminator_forward.1} parent=1 // pred_fallthru
      _
    // Predicated region
    $region38: #{discriminator_forward.1} parent=1 // pred_check
      _
    $region39: #{discriminator_forward.1} parent=1 // pred_check_branch
      %118 = sbr.rel (0) target = $region41
    $region40: #{discriminator_forward.1} parent=1 // pred_region
      %s120 = ssub.s32 16, 16
      %121 = vsyncadd [#allocation15], %s120
      %s123 = sshll.u32 [#allocation14], 4
      %s124 = int_to_ptr.vmem [resolvable:$true] %s123
      %126 = dma.hbm_to_vmem [thread:$0]  %s9, 16, %s124, [#allocation15]
    $region41: #{discriminator_forward.1} parent=1 // pred_fallthru
      _
    // Predicated region
    $region42: #{discriminator_forward.1} parent=1 // pred_check
      _
    $region43: #{discriminator_forward.1} parent=1 // pred_check_branch
      %128 = sbr.rel (0) target = $region45
    $region44: #{discriminator_forward.1} parent=1 // pred_region
      %s130 = ssub.s32 16, 16
      %131 = vsyncadd [#allocation15], %s130
      %s133 = sshll.u32 [#allocation16], 4
      %s134 = int_to_ptr.vmem [resolvable:$true] %s133
      %136 = dma.hbm_to_vmem [thread:$0]  %s10, 16, %s134, [#allocation15]
    $region45: #{discriminator_forward.1} parent=1 // pred_fallthru
      _
    // Predicated region
    $region46: #{discriminator_forward.1} parent=1 // pred_check
      _
    $region47: #{discriminator_forward.1} parent=1 // pred_check_branch
      %138 = sbr.rel (0) target = $region49
    $region48: #{discriminator_forward.1} parent=1 // pred_region
      _
    $region49: #{discriminator_forward.1} parent=1 // pred_fallthru
      _
    // Predicated region
    $region50: #{discriminator_forward.1} parent=1 // pred_check
      _
    $region51: #{discriminator_forward.1} parent=1 // pred_check_branch
      %140 = sbr.rel (0) target = $region53
    $region52: #{discriminator_forward.1} parent=1 // pred_region
      %s142 = ssub.s32 2048, 2048
      %143 = vsyncadd [#allocation18], %s142
      %s144 = sshll.u32 [#allocation17], 4
      %s145 = int_to_ptr.vmem [resolvable:$true] %s144
      %150 = dma.hbm_to_vmem [thread:$0]  %s12, 2048, %s145, [#allocation18], 256, 256, 16
    $region53: #{discriminator_forward.1} parent=1 // pred_fallthru
      _
    // Predicated region
    $region54: #{discriminator_forward.1} parent=1 // pred_check
      _
    $region55: #{discriminator_forward.1} parent=1 // pred_check_branch
      %152 = sbr.rel (0) target = $region57
    $region56: #{discriminator_forward.1} parent=1 // pred_region
      %s154 = ssub.s32 2048, 2048
      %155 = vsyncadd [#allocation18], %s154
      %s156 = sshll.u32 [#allocation19], 4
      %s157 = int_to_ptr.vmem [resolvable:$true] %s156
      %162 = dma.hbm_to_vmem [thread:$0]  %s13, 2048, %s157, [#allocation18], 64, 64, 4
    $region57: #{discriminator_forward.1} parent=1 // pred_fallthru
      _
    // Predicated region
    $region58: #{discriminator_forward.1} parent=1 // pred_check
      _
    $region59: #{discriminator_forward.1} parent=1 // pred_check_branch
      %164 = sbr.rel (0) target = $region61
    $region60: #{discriminator_forward.1} parent=1 // pred_region
      %s166 = ssub.s32 16, 16
      %167 = vsyncadd [#allocation21], %s166
      %s169 = sshll.u32 [#allocation20], 4
      %s170 = int_to_ptr.vmem [resolvable:$true] %s169
      %172 = dma.hbm_to_vmem [thread:$0]  %s14, 16, %s170, [#allocation21]
    $region61: #{discriminator_forward.1} parent=1 // pred_fallthru
      _
    // Predicated region
    $region62: #{discriminator_forward.1} parent=1 // pred_check
      _
    $region63: #{discriminator_forward.1} parent=1 // pred_check_branch
      %174 = sbr.rel (0) target = $region65
    $region64: #{discriminator_forward.1} parent=1 // pred_region
      %s176 = ssub.s32 16, 16
      %177 = vsyncadd [#allocation21], %s176
      %s179 = sshll.u32 [#allocation22], 4
      %s180 = int_to_ptr.vmem [resolvable:$true] %s179
      %182 = dma.hbm_to_vmem [thread:$0]  %s15, 16, %s180, [#allocation21]
    $region65: #{discriminator_forward.1} parent=1 // pred_fallthru
      _
    // Predicated region
    $region66: #{discriminator_forward.1} parent=1 // pred_check
      _
    $region67: #{discriminator_forward.1} parent=1 // pred_check_branch
      %184 = sbr.rel (0) target = $region69
    $region68: #{discriminator_forward.1} parent=1 // pred_region
      %s186 = ssub.s32 2048, 2048
      %187 = vsyncadd [#allocation24], %s186
      %s188 = sshll.u32 [#allocation23], 4
      %s189 = int_to_ptr.vmem [resolvable:$true] %s188
      %194 = dma.hbm_to_vmem [thread:$0]  %s16, 2048, %s189, [#allocation24], 128, 128, 8
    $region69: #{discriminator_forward.1} parent=1 // pred_fallthru
      _
    // Predicated region
    $region70: #{discriminator_forward.1} parent=1 // pred_check
      _
    $region71: #{discriminator_forward.1} parent=1 // pred_check_branch
      %196 = sbr.rel (0) target = $region73
    $region72: #{discriminator_forward.1} parent=1 // pred_region
      %s198 = ssub.s32 2048, 2048
      %199 = vsyncadd [#allocation24], %s198
      %s200 = sshll.u32 [#allocation25], 4
      %s201 = int_to_ptr.vmem [resolvable:$true] %s200
      %206 = dma.hbm_to_vmem [thread:$0]  %s17, 2048, %s201, [#allocation24], 128, 128, 8
    $region73: #{discriminator_forward.1} parent=1 // pred_fallthru
      _
    // Predicated region
    $region74: #{discriminator_forward.1} parent=1 // pred_check
      _
    $region75: #{discriminator_forward.1} parent=1 // pred_check_branch
      %208 = sbr.rel (0) target = $region77
    $region76: #{discriminator_forward.1} parent=1 // pred_region
      _
    $region77: #{discriminator_forward.1} parent=1 // pred_fallthru
      _
    // Predicated region
    $region78: #{discriminator_forward.1} parent=1 // pred_check
      _
    $region79: #{discriminator_forward.1} parent=1 // pred_check_branch
      %210 = sbr.rel (0) target = $region81
    $region80: #{discriminator_forward.1} parent=1 // pred_region
      _
    $region81: #{discriminator_forward.1} parent=1 // pred_fallthru
      _
    // Predicated region
    $region82: #{discriminator_forward.1} parent=1 // pred_check
      _
    $region83: #{discriminator_forward.1} parent=1 // pred_check_branch
      %212 = sbr.rel (0) target = $region85
    $region84: #{discriminator_forward.1} parent=1 // pred_region
      %213 = dma.done [#allocation4], 49152
    $region85: #{discriminator_forward.1} parent=1 // pred_fallthru
      _
    // Predicated region
    $region86: #{discriminator_forward.1} parent=1 // pred_check
      _
    $region87: #{discriminator_forward.1} parent=1 // pred_check_branch
      %215 = sbr.rel (0) target = $region89
    $region88: #{discriminator_forward.1} parent=1 // pred_region
      %216 = dma.done [#allocation6], 128
    $region89: #{discriminator_forward.1} parent=1 // pred_fallthru
      _
    // Predicated region
    $region90: #{discriminator_forward.1} parent=1 // pred_check
      _
    $region91: #{discriminator_forward.1} parent=1 // pred_check_branch
      %218 = sbr.rel (0) target = $region93
    $region92: #{discriminator_forward.1} parent=1 // pred_region
      %219 = dma.done [#allocation6], 32768
    $region93: #{discriminator_forward.1} parent=1 // pred_fallthru
      _
    // Predicated region
    $region94: #{discriminator_forward.1} parent=1 // pred_check
      _
    $region95: #{discriminator_forward.1} parent=1 // pred_check_branch
      %221 = sbr.rel (0) target = $region97
    $region96: #{discriminator_forward.1} parent=1 // pred_region
      %222 = dma.done [#allocation9], 16
    $region97: #{discriminator_forward.1} parent=1 // pred_fallthru
      _
    // Predicated region
    $region98: #{discriminator_forward.1} parent=1 // pred_check
      _
    $region99: #{discriminator_forward.1} parent=1 // pred_check_branch
      %224 = sbr.rel (0) target = $region101
    $region100: #{discriminator_forward.1} parent=1 // pred_region
      %225 = dma.done [#allocation9], 16
    $region101: #{discriminator_forward.1} parent=1 // pred_fallthru
      _
    // Predicated region
    $region102: #{discriminator_forward.1} parent=1 // pred_check
      _
    $region103: #{discriminator_forward.1} parent=1 // pred_check_branch
      %227 = sbr.rel (0) target = $region105
    $region104: #{discriminator_forward.1} parent=1 // pred_region
      %228 = dma.done [#allocation12], 2048
    $region105: #{discriminator_forward.1} parent=1 // pred_fallthru
      _
    // Predicated region
    $region106: #{discriminator_forward.1} parent=1 // pred_check
      _
    $region107: #{discriminator_forward.1} parent=1 // pred_check_branch
      %230 = sbr.rel (0) target = $region109
    $region108: #{discriminator_forward.1} parent=1 // pred_region
      %231 = dma.done [#allocation12], 8192
    $region109: #{discriminator_forward.1} parent=1 // pred_fallthru
      _
    // Predicated region
    $region110: #{discriminator_forward.1} parent=1 // pred_check
      _
    $region111: #{discriminator_forward.1} parent=1 // pred_check_branch
      %233 = sbr.rel (0) target = $region113
    $region112: #{discriminator_forward.1} parent=1 // pred_region
      %234 = dma.done [#allocation15], 16
    $region113: #{discriminator_forward.1} parent=1 // pred_fallthru
      _
    // Predicated region
    $region114: #{discriminator_forward.1} parent=1 // pred_check
      _
    $region115: #{discriminator_forward.1} parent=1 // pred_check_branch
      %236 = sbr.rel (0) target = $region117
    $region116: #{discriminator_forward.1} parent=1 // pred_region
      %237 = dma.done [#allocation15], 16
    $region117: #{discriminator_forward.1} parent=1 // pred_fallthru
      _
    // Predicated region
    $region118: #{discriminator_forward.1} parent=1 // pred_check
      _
    $region119: #{discriminator_forward.1} parent=1 // pred_check_branch
      %239 = sbr.rel (0) target = $region121
    $region120: #{discriminator_forward.1} parent=1 // pred_region
      %240 = dma.done [#allocation18], 2048
    $region121: #{discriminator_forward.1} parent=1 // pred_fallthru
      _
    // Predicated region
    $region122: #{discriminator_forward.1} parent=1 // pred_check
      _
    $region123: #{discriminator_forward.1} parent=1 // pred_check_branch
      %242 = sbr.rel (0) target = $region125
    $region124: #{discriminator_forward.1} parent=1 // pred_region
      %243 = dma.done [#allocation18], 2048
    $region125: #{discriminator_forward.1} parent=1 // pred_fallthru
      _
    // Predicated region
    $region126: #{discriminator_forward.1} parent=1 // pred_check
      _
    $region127: #{discriminator_forward.1} parent=1 // pred_check_branch
      %245 = sbr.rel (0) target = $region129
    $region128: #{discriminator_forward.1} parent=1 // pred_region
      %246 = dma.done [#allocation21], 16
    $region129: #{discriminator_forward.1} parent=1 // pred_fallthru
      _
    // Predicated region
    $region130: #{discriminator_forward.1} parent=1 // pred_check
      _
    $region131: #{discriminator_forward.1} parent=1 // pred_check_branch
      %248 = sbr.rel (0) target = $region133
    $region132: #{discriminator_forward.1} parent=1 // pred_region
      %249 = dma.done [#allocation21], 16
    $region133: #{discriminator_forward.1} parent=1 // pred_fallthru
      _
    // Predicated region
    $region134: #{discriminator_forward.1} parent=1 // pred_check
      _
    $region135: #{discriminator_forward.1} parent=1 // pred_check_branch
      %251 = sbr.rel (0) target = $region137
    $region136: #{discriminator_forward.1} parent=1 // pred_region
      %252 = dma.done [#allocation24], 2048
    $region137: #{discriminator_forward.1} parent=1 // pred_fallthru
      _
    // Predicated region
    $region138: #{discriminator_forward.1} parent=1 // pred_check
      _
    $region139: #{discriminator_forward.1} parent=1 // pred_check_branch
      %254 = sbr.rel (0) target = $region141
    $region140: #{discriminator_forward.1} parent=1 // pred_region
      %255 = dma.done [#allocation24], 2048
    $region141: #{discriminator_forward.1} parent=1 // pred_fallthru
      _
    %v257 = vld [vmem:[%s0] sm:$0xff]
    %v258 = vld [vmem:[%s0 + $0x8] sm:$0xf]
    %v261 = vunpack.c.l.s4 1983009808
    %v262 = vunpack.c.0.s8 %v261
    %v263 = vlaneseq
    %v264 = vshrl.u32 %v263, 7
    %v265 = vsub.s32 %v262, %v264
    %v266 = vrot.slane %v257, %v265
    %v267 = vcombine.high %v266, %v266
    %v270 = vpack.c.bf16 %v266, %v266
    %v271 = vpack.c.bf16 %v267, %v267
    %v272 = vld [vmem:[#allocation3] sm:$0xff]
    %v273 = vld [vmem:[#allocation3 + $0x8] sm:$0xff]
    %v274 = vld [vmem:[#allocation3 + $0x10] sm:$0xff]
    %v275 = vld [vmem:[#allocation3 + $0x18] sm:$0xff]
    %v276 = vld [vmem:[#allocation3 + $0x20] sm:$0xff]
    %v277 = vld [vmem:[#allocation3 + $0x28] sm:$0xff]
    %v278 = vld [vmem:[#allocation3 + $0x30] sm:$0xff]
    %v279 = vld [vmem:[#allocation3 + $0x38] sm:$0xff]
    %v280 = vld [vmem:[#allocation3 + $0x40] sm:$0xff]
    %v281 = vld [vmem:[#allocation3 + $0x48] sm:$0xff]
    %v282 = vld [vmem:[#allocation3 + $0x50] sm:$0xff]
    %v283 = vld [vmem:[#allocation3 + $0x58] sm:$0xff]
    %v284 = vld [vmem:[#allocation3 + $0x60] sm:$0xff]
    %v285 = vld [vmem:[#allocation3 + $0x68] sm:$0xff]
    %v286 = vld [vmem:[#allocation3 + $0x70] sm:$0xff]
    %v287 = vld [vmem:[#allocation3 + $0x78] sm:$0xff]
    %v288 = vld [vmem:[#allocation3 + $0x80] sm:$0xff]
    %v289 = vld [vmem:[#allocation3 + $0x88] sm:$0xff]
    %v290 = vld [vmem:[#allocation3 + $0x90] sm:$0xff]
    %v291 = vld [vmem:[#allocation3 + $0x98] sm:$0xff]
    %v292 = vld [vmem:[#allocation3 + $0xa0] sm:$0xff]
    %v293 = vld [vmem:[#allocation3 + $0xa8] sm:$0xff]
    %v294 = vld [vmem:[#allocation3 + $0xb0] sm:$0xff]
    %v295 = vld [vmem:[#allocation3 + $0xb8] sm:$0xff]
    %v296 = vld [vmem:[#allocation3 + $0xc0] sm:$0xff]
    %v297 = vld [vmem:[#allocation3 + $0xc8] sm:$0xff]
    %v298 = vld [vmem:[#allocation3 + $0xd0] sm:$0xff]
    %v299 = vld [vmem:[#allocation3 + $0xd8] sm:$0xff]
    %v300 = vld [vmem:[#allocation3 + $0xe0] sm:$0xff]
    %v301 = vld [vmem:[#allocation3 + $0xe8] sm:$0xff]
    %v302 = vld [vmem:[#allocation3 + $0xf0] sm:$0xff]
    %v303 = vld [vmem:[#allocation3 + $0xf8] sm:$0xff]
    %v304 = vld [vmem:[#allocation3 + $0x100] sm:$0xff]
    %v305 = vld [vmem:[#allocation3 + $0x108] sm:$0xff]
    %v306 = vld [vmem:[#allocation3 + $0x110] sm:$0xff]
    %v307 = vld [vmem:[#allocation3 + $0x118] sm:$0xff]
    %v308 = vld [vmem:[#allocation3 + $0x120] sm:$0xff]
    %v309 = vld [vmem:[#allocation3 + $0x128] sm:$0xff]
    %v310 = vld [vmem:[#allocation3 + $0x130] sm:$0xff]
    %v311 = vld [vmem:[#allocation3 + $0x138] sm:$0xff]
    %v312 = vld [vmem:[#allocation3 + $0x140] sm:$0xff]
    %v313 = vld [vmem:[#allocation3 + $0x148] sm:$0xff]
    %v314 = vld [vmem:[#allocation3 + $0x150] sm:$0xff]
    %v315 = vld [vmem:[#allocation3 + $0x158] sm:$0xff]
    %v316 = vld [vmem:[#allocation3 + $0x160] sm:$0xff]
    %v317 = vld [vmem:[#allocation3 + $0x168] sm:$0xff]
    %v318 = vld [vmem:[#allocation3 + $0x170] sm:$0xff]
    %v319 = vld [vmem:[#allocation3 + $0x178] sm:$0xff]
    %v320 = vld [vmem:[#allocation3 + $0x180] sm:$0xff]
    %v321 = vld [vmem:[#allocation3 + $0x188] sm:$0xff]
    %v322 = vld [vmem:[#allocation3 + $0x190] sm:$0xff]
    %v323 = vld [vmem:[#allocation3 + $0x198] sm:$0xff]
    %v324 = vld [vmem:[#allocation3 + $0x1a0] sm:$0xff]
    %v325 = vld [vmem:[#allocation3 + $0x1a8] sm:$0xff]
    %v326 = vld [vmem:[#allocation3 + $0x1b0] sm:$0xff]
    %v327 = vld [vmem:[#allocation3 + $0x1b8] sm:$0xff]
    %v328 = vld [vmem:[#allocation3 + $0x1c0] sm:$0xff]
    %v329 = vld [vmem:[#allocation3 + $0x1c8] sm:$0xff]
    %v330 = vld [vmem:[#allocation3 + $0x1d0] sm:$0xff]
    %v331 = vld [vmem:[#allocation3 + $0x1d8] sm:$0xff]
    %v332 = vld [vmem:[#allocation3 + $0x1e0] sm:$0xff]
    %v333 = vld [vmem:[#allocation3 + $0x1e8] sm:$0xff]
    %v334 = vld [vmem:[#allocation3 + $0x1f0] sm:$0xff]
    %v335 = vld [vmem:[#allocation3 + $0x1f8] sm:$0xff]
    %v336 = vld [vmem:[#allocation3 + $0x200] sm:$0xff]
    %v337 = vld [vmem:[#allocation3 + $0x208] sm:$0xff]
    %v338 = vld [vmem:[#allocation3 + $0x210] sm:$0xff]
    %v339 = vld [vmem:[#allocation3 + $0x218] sm:$0xff]
    %v340 = vld [vmem:[#allocation3 + $0x220] sm:$0xff]
    %v341 = vld [vmem:[#allocation3 + $0x228] sm:$0xff]
    %v342 = vld [vmem:[#allocation3 + $0x230] sm:$0xff]
    %v343 = vld [vmem:[#allocation3 + $0x238] sm:$0xff]
    %v344 = vld [vmem:[#allocation3 + $0x240] sm:$0xff]
    %v345 = vld [vmem:[#allocation3 + $0x248] sm:$0xff]
    %v346 = vld [vmem:[#allocation3 + $0x250] sm:$0xff]
    %v347 = vld [vmem:[#allocation3 + $0x258] sm:$0xff]
    %v348 = vld [vmem:[#allocation3 + $0x260] sm:$0xff]
    %v349 = vld [vmem:[#allocation3 + $0x268] sm:$0xff]
    %v350 = vld [vmem:[#allocation3 + $0x270] sm:$0xff]
    %v351 = vld [vmem:[#allocation3 + $0x278] sm:$0xff]
    %v352 = vld [vmem:[#allocation3 + $0x280] sm:$0xff]
    %v353 = vld [vmem:[#allocation3 + $0x288] sm:$0xff]
    %v354 = vld [vmem:[#allocation3 + $0x290] sm:$0xff]
    %v355 = vld [vmem:[#allocation3 + $0x298] sm:$0xff]
    %v356 = vld [vmem:[#allocation3 + $0x2a0] sm:$0xff]
    %v357 = vld [vmem:[#allocation3 + $0x2a8] sm:$0xff]
    %v358 = vld [vmem:[#allocation3 + $0x2b0] sm:$0xff]
    %v359 = vld [vmem:[#allocation3 + $0x2b8] sm:$0xff]
    %v360 = vld [vmem:[#allocation3 + $0x2c0] sm:$0xff]
    %v361 = vld [vmem:[#allocation3 + $0x2c8] sm:$0xff]
    %v362 = vld [vmem:[#allocation3 + $0x2d0] sm:$0xff]
    %v363 = vld [vmem:[#allocation3 + $0x2d8] sm:$0xff]
    %v364 = vld [vmem:[#allocation3 + $0x2e0] sm:$0xff]
    %v365 = vld [vmem:[#allocation3 + $0x2e8] sm:$0xff]
    %v366 = vld [vmem:[#allocation3 + $0x2f0] sm:$0xff]
    %v367 = vld [vmem:[#allocation3 + $0x2f8] sm:$0xff]
    %v368 = vld [vmem:[#allocation3 + $0x300] sm:$0xff]
    %v369 = vld [vmem:[#allocation3 + $0x308] sm:$0xff]
    %v370 = vld [vmem:[#allocation3 + $0x310] sm:$0xff]
    %v371 = vld [vmem:[#allocation3 + $0x318] sm:$0xff]
    %v372 = vld [vmem:[#allocation3 + $0x320] sm:$0xff]
    %v373 = vld [vmem:[#allocation3 + $0x328] sm:$0xff]
    %v374 = vld [vmem:[#allocation3 + $0x330] sm:$0xff]
    %v375 = vld [vmem:[#allocation3 + $0x338] sm:$0xff]
    %v376 = vld [vmem:[#allocation3 + $0x340] sm:$0xff]
    %v377 = vld [vmem:[#allocation3 + $0x348] sm:$0xff]
    %v378 = vld [vmem:[#allocation3 + $0x350] sm:$0xff]
    %v379 = vld [vmem:[#allocation3 + $0x358] sm:$0xff]
    %v380 = vld [vmem:[#allocation3 + $0x360] sm:$0xff]
    %v381 = vld [vmem:[#allocation3 + $0x368] sm:$0xff]
    %v382 = vld [vmem:[#allocation3 + $0x370] sm:$0xff]
    %v383 = vld [vmem:[#allocation3 + $0x378] sm:$0xff]
    %v384 = vld [vmem:[#allocation3 + $0x380] sm:$0xff]
    %v385 = vld [vmem:[#allocation3 + $0x388] sm:$0xff]
    %v386 = vld [vmem:[#allocation3 + $0x390] sm:$0xff]
    %v387 = vld [vmem:[#allocation3 + $0x398] sm:$0xff]
    %v388 = vld [vmem:[#allocation3 + $0x3a0] sm:$0xff]
    %v389 = vld [vmem:[#allocation3 + $0x3a8] sm:$0xff]
    %v390 = vld [vmem:[#allocation3 + $0x3b0] sm:$0xff]
    %v391 = vld [vmem:[#allocation3 + $0x3b8] sm:$0xff]
    %v392 = vld [vmem:[#allocation3 + $0x3c0] sm:$0xff]
    %v393 = vld [vmem:[#allocation3 + $0x3c8] sm:$0xff]
    %v394 = vld [vmem:[#allocation3 + $0x3d0] sm:$0xff]
    %v395 = vld [vmem:[#allocation3 + $0x3d8] sm:$0xff]
    %v396 = vld [vmem:[#allocation3 + $0x3e0] sm:$0xff]
    %v397 = vld [vmem:[#allocation3 + $0x3e8] sm:$0xff]
    %v398 = vld [vmem:[#allocation3 + $0x3f0] sm:$0xff]
    %v399 = vld [vmem:[#allocation3 + $0x3f8] sm:$0xff]
    %v400 = vcombine.high %v257, %v257
    %v402 = vunpack.c.l.s4 1983009808
    %v403 = vunpack.c.0.s8 %v402
    %v404 = vlaneseq
    %v405 = vshrl.u32 %v404, 7
    %v406 = vsub.s32 %v403, %v405
    %v407 = vrot.slane %v400, %v406
    %v408 = vcombine.high %v407, %v407
    %v411 = vpack.c.bf16 %v407, %v407
    %v412 = vpack.c.bf16 %v408, %v408
    %v413 = vld [vmem:[#allocation3 + $0x400] sm:$0xff]
    %v414 = vld [vmem:[#allocation3 + $0x408] sm:$0xff]
    %v415 = vld [vmem:[#allocation3 + $0x410] sm:$0xff]
    %v416 = vld [vmem:[#allocation3 + $0x418] sm:$0xff]
    %v417 = vld [vmem:[#allocation3 + $0x420] sm:$0xff]
    %v418 = vld [vmem:[#allocation3 + $0x428] sm:$0xff]
    %v419 = vld [vmem:[#allocation3 + $0x430] sm:$0xff]
    %v420 = vld [vmem:[#allocation3 + $0x438] sm:$0xff]
    %v421 = vld [vmem:[#allocation3 + $0x440] sm:$0xff]
    %v422 = vld [vmem:[#allocation3 + $0x448] sm:$0xff]
    %v423 = vld [vmem:[#allocation3 + $0x450] sm:$0xff]
    %v424 = vld [vmem:[#allocation3 + $0x458] sm:$0xff]
    %v425 = vld [vmem:[#allocation3 + $0x460] sm:$0xff]
    %v426 = vld [vmem:[#allocation3 + $0x468] sm:$0xff]
    %v427 = vld [vmem:[#allocation3 + $0x470] sm:$0xff]
    %v428 = vld [vmem:[#allocation3 + $0x478] sm:$0xff]
    %v429 = vld [vmem:[#allocation3 + $0x480] sm:$0xff]
    %v430 = vld [vmem:[#allocation3 + $0x488] sm:$0xff]
    %v431 = vld [vmem:[#allocation3 + $0x490] sm:$0xff]
    %v432 = vld [vmem:[#allocation3 + $0x498] sm:$0xff]
    %v433 = vld [vmem:[#allocation3 + $0x4a0] sm:$0xff]
    %v434 = vld [vmem:[#allocation3 + $0x4a8] sm:$0xff]
    %v435 = vld [vmem:[#allocation3 + $0x4b0] sm:$0xff]
    %v436 = vld [vmem:[#allocation3 + $0x4b8] sm:$0xff]
    %v437 = vld [vmem:[#allocation3 + $0x4c0] sm:$0xff]
    %v438 = vld [vmem:[#allocation3 + $0x4c8] sm:$0xff]
    %v439 = vld [vmem:[#allocation3 + $0x4d0] sm:$0xff]
    %v440 = vld [vmem:[#allocation3 + $0x4d8] sm:$0xff]
    %v441 = vld [vmem:[#allocation3 + $0x4e0] sm:$0xff]
    %v442 = vld [vmem:[#allocation3 + $0x4e8] sm:$0xff]
    %v443 = vld [vmem:[#allocation3 + $0x4f0] sm:$0xff]
    %v444 = vld [vmem:[#allocation3 + $0x4f8] sm:$0xff]
    %v445 = vld [vmem:[#allocation3 + $0x500] sm:$0xff]
    %v446 = vld [vmem:[#allocation3 + $0x508] sm:$0xff]
    %v447 = vld [vmem:[#allocation3 + $0x510] sm:$0xff]
    %v448 = vld [vmem:[#allocation3 + $0x518] sm:$0xff]
    %v449 = vld [vmem:[#allocation3 + $0x520] sm:$0xff]
    %v450 = vld [vmem:[#allocation3 + $0x528] sm:$0xff]
    %v451 = vld [vmem:[#allocation3 + $0x530] sm:$0xff]
    %v452 = vld [vmem:[#allocation3 + $0x538] sm:$0xff]
    %v453 = vld [vmem:[#allocation3 + $0x540] sm:$0xff]
    %v454 = vld [vmem:[#allocation3 + $0x548] sm:$0xff]
    %v455 = vld [vmem:[#allocation3 + $0x550] sm:$0xff]
    %v456 = vld [vmem:[#allocation3 + $0x558] sm:$0xff]
    %v457 = vld [vmem:[#allocation3 + $0x560] sm:$0xff]
    %v458 = vld [vmem:[#allocation3 + $0x568] sm:$0xff]
    %v459 = vld [vmem:[#allocation3 + $0x570] sm:$0xff]
    %v460 = vld [vmem:[#allocation3 + $0x578] sm:$0xff]
    %v461 = vld [vmem:[#allocation3 + $0x580] sm:$0xff]
    %v462 = vld [vmem:[#allocation3 + $0x588] sm:$0xff]
    %v463 = vld [vmem:[#allocation3 + $0x590] sm:$0xff]
    %v464 = vld [vmem:[#allocation3 + $0x598] sm:$0xff]
    %v465 = vld [vmem:[#allocation3 + $0x5a0] sm:$0xff]
    %v466 = vld [vmem:[#allocation3 + $0x5a8] sm:$0xff]
    %v467 = vld [vmem:[#allocation3 + $0x5b0] sm:$0xff]
    %v468 = vld [vmem:[#allocation3 + $0x5b8] sm:$0xff]
    %v469 = vld [vmem:[#allocation3 + $0x5c0] sm:$0xff]
    %v470 = vld [vmem:[#allocation3 + $0x5c8] sm:$0xff]
    %v471 = vld [vmem:[#allocation3 + $0x5d0] sm:$0xff]
    %v472 = vld [vmem:[#allocation3 + $0x5d8] sm:$0xff]
    %v473 = vld [vmem:[#allocation3 + $0x5e0] sm:$0xff]
    %v474 = vld [vmem:[#allocation3 + $0x5e8] sm:$0xff]
    %v475 = vld [vmem:[#allocation3 + $0x5f0] sm:$0xff]
    %v476 = vld [vmem:[#allocation3 + $0x5f8] sm:$0xff]
    %v477 = vld [vmem:[#allocation3 + $0x600] sm:$0xff]
    %v478 = vld [vmem:[#allocation3 + $0x608] sm:$0xff]
    %v479 = vld [vmem:[#allocation3 + $0x610] sm:$0xff]
    %v480 = vld [vmem:[#allocation3 + $0x618] sm:$0xff]
    %v481 = vld [vmem:[#allocation3 + $0x620] sm:$0xff]
    %v482 = vld [vmem:[#allocation3 + $0x628] sm:$0xff]
    %v483 = vld [vmem:[#allocation3 + $0x630] sm:$0xff]
    %v484 = vld [vmem:[#allocation3 + $0x638] sm:$0xff]
    %v485 = vld [vmem:[#allocation3 + $0x640] sm:$0xff]
    %v486 = vld [vmem:[#allocation3 + $0x648] sm:$0xff]
    %v487 = vld [vmem:[#allocation3 + $0x650] sm:$0xff]
    %v488 = vld [vmem:[#allocation3 + $0x658] sm:$0xff]
    %v489 = vld [vmem:[#allocation3 + $0x660] sm:$0xff]
    %v490 = vld [vmem:[#allocation3 + $0x668] sm:$0xff]
    %v491 = vld [vmem:[#allocation3 + $0x670] sm:$0xff]
    %v492 = vld [vmem:[#allocation3 + $0x678] sm:$0xff]
    %v493 = vld [vmem:[#allocation3 + $0x680] sm:$0xff]
    %v494 = vld [vmem:[#allocation3 + $0x688] sm:$0xff]
    %v495 = vld [vmem:[#allocation3 + $0x690] sm:$0xff]
    %v496 = vld [vmem:[#allocation3 + $0x698] sm:$0xff]
    %v497 = vld [vmem:[#allocation3 + $0x6a0] sm:$0xff]
    %v498 = vld [vmem:[#allocation3 + $0x6a8] sm:$0xff]
    %v499 = vld [vmem:[#allocation3 + $0x6b0] sm:$0xff]
    %v500 = vld [vmem:[#allocation3 + $0x6b8] sm:$0xff]
    %v501 = vld [vmem:[#allocation3 + $0x6c0] sm:$0xff]
    %v502 = vld [vmem:[#allocation3 + $0x6c8] sm:$0xff]
    %v503 = vld [vmem:[#allocation3 + $0x6d0] sm:$0xff]
    %v504 = vld [vmem:[#allocation3 + $0x6d8] sm:$0xff]
    %v505 = vld [vmem:[#allocation3 + $0x6e0] sm:$0xff]
    %v506 = vld [vmem:[#allocation3 + $0x6e8] sm:$0xff]
    %v507 = vld [vmem:[#allocation3 + $0x6f0] sm:$0xff]
    %v508 = vld [vmem:[#allocation3 + $0x6f8] sm:$0xff]
    %v509 = vld [vmem:[#allocation3 + $0x700] sm:$0xff]
    %v510 = vld [vmem:[#allocation3 + $0x708] sm:$0xff]
    %v511 = vld [vmem:[#allocation3 + $0x710] sm:$0xff]
    %v512 = vld [vmem:[#allocation3 + $0x718] sm:$0xff]
    %v513 = vld [vmem:[#allocation3 + $0x720] sm:$0xff]
    %v514 = vld [vmem:[#allocation3 + $0x728] sm:$0xff]
    %v515 = vld [vmem:[#allocation3 + $0x730] sm:$0xff]
    %v516 = vld [vmem:[#allocation3 + $0x738] sm:$0xff]
    %v517 = vld [vmem:[#allocation3 + $0x740] sm:$0xff]
    %v518 = vld [vmem:[#allocation3 + $0x748] sm:$0xff]
    %v519 = vld [vmem:[#allocation3 + $0x750] sm:$0xff]
    %v520 = vld [vmem:[#allocation3 + $0x758] sm:$0xff]
    %v521 = vld [vmem:[#allocation3 + $0x760] sm:$0xff]
    %v522 = vld [vmem:[#allocation3 + $0x768] sm:$0xff]
    %v523 = vld [vmem:[#allocation3 + $0x770] sm:$0xff]
    %v524 = vld [vmem:[#allocation3 + $0x778] sm:$0xff]
    %v525 = vld [vmem:[#allocation3 + $0x780] sm:$0xff]
    %v526 = vld [vmem:[#allocation3 + $0x788] sm:$0xff]
    %v527 = vld [vmem:[#allocation3 + $0x790] sm:$0xff]
    %v528 = vld [vmem:[#allocation3 + $0x798] sm:$0xff]
    %v529 = vld [vmem:[#allocation3 + $0x7a0] sm:$0xff]
    %v530 = vld [vmem:[#allocation3 + $0x7a8] sm:$0xff]
    %v531 = vld [vmem:[#allocation3 + $0x7b0] sm:$0xff]
    %v532 = vld [vmem:[#allocation3 + $0x7b8] sm:$0xff]
    %v533 = vld [vmem:[#allocation3 + $0x7c0] sm:$0xff]
    %v534 = vld [vmem:[#allocation3 + $0x7c8] sm:$0xff]
    %v535 = vld [vmem:[#allocation3 + $0x7d0] sm:$0xff]
    %v536 = vld [vmem:[#allocation3 + $0x7d8] sm:$0xff]
    %v537 = vld [vmem:[#allocation3 + $0x7e0] sm:$0xff]
    %v538 = vld [vmem:[#allocation3 + $0x7e8] sm:$0xff]
    %v539 = vld [vmem:[#allocation3 + $0x7f0] sm:$0xff]
    %v540 = vld [vmem:[#allocation3 + $0x7f8] sm:$0xff]
    %v669 = vunpack.c.l.b16 %v413
    %v670 = vunpack.c.h.b16 %v413
    %v671 = vunpack.c.l.b16 %v414
    %v672 = vunpack.c.h.b16 %v414
    %v673 = vunpack.c.l.b16 %v415
    %v674 = vunpack.c.h.b16 %v415
    %v675 = vunpack.c.l.b16 %v416
    %v676 = vunpack.c.h.b16 %v416
    %v677 = vunpack.c.l.b16 %v417
    %v678 = vunpack.c.h.b16 %v417
    %v679 = vunpack.c.l.b16 %v418
    %v680 = vunpack.c.h.b16 %v418
    %v681 = vunpack.c.l.b16 %v419
    %v682 = vunpack.c.h.b16 %v419
    %v683 = vunpack.c.l.b16 %v420
    %v684 = vunpack.c.h.b16 %v420
    %v685 = vunpack.c.l.b16 %v421
    %v686 = vunpack.c.h.b16 %v421
    %v687 = vunpack.c.l.b16 %v422
    %v688 = vunpack.c.h.b16 %v422
    %v689 = vunpack.c.l.b16 %v423
    %v690 = vunpack.c.h.b16 %v423
    %v691 = vunpack.c.l.b16 %v424
    %v692 = vunpack.c.h.b16 %v424
    %v693 = vunpack.c.l.b16 %v425
    %v694 = vunpack.c.h.b16 %v425
    %v695 = vunpack.c.l.b16 %v426
    %v696 = vunpack.c.h.b16 %v426
    %v697 = vunpack.c.l.b16 %v427
    %v698 = vunpack.c.h.b16 %v427
    %v699 = vunpack.c.l.b16 %v428
    %v700 = vunpack.c.h.b16 %v428
    %v701 = vunpack.c.l.b16 %v429
    %v702 = vunpack.c.h.b16 %v429
    %v703 = vunpack.c.l.b16 %v430
    %v704 = vunpack.c.h.b16 %v430
    %v705 = vunpack.c.l.b16 %v431
    %v706 = vunpack.c.h.b16 %v431
    %v707 = vunpack.c.l.b16 %v432
    %v708 = vunpack.c.h.b16 %v432
    %v709 = vunpack.c.l.b16 %v433
    %v710 = vunpack.c.h.b16 %v433
    %v711 = vunpack.c.l.b16 %v434
    %v712 = vunpack.c.h.b16 %v434
    %v713 = vunpack.c.l.b16 %v435
    %v714 = vunpack.c.h.b16 %v435
    %v715 = vunpack.c.l.b16 %v436
    %v716 = vunpack.c.h.b16 %v436
    %v717 = vunpack.c.l.b16 %v437
    %v718 = vunpack.c.h.b16 %v437
    %v719 = vunpack.c.l.b16 %v438
    %v720 = vunpack.c.h.b16 %v438
    %v721 = vunpack.c.l.b16 %v439
    %v722 = vunpack.c.h.b16 %v439
    %v723 = vunpack.c.l.b16 %v440
    %v724 = vunpack.c.h.b16 %v440
    %v725 = vunpack.c.l.b16 %v441
    %v726 = vunpack.c.h.b16 %v441
    %v727 = vunpack.c.l.b16 %v442
    %v728 = vunpack.c.h.b16 %v442
    %v729 = vunpack.c.l.b16 %v443
    %v730 = vunpack.c.h.b16 %v443
    %v731 = vunpack.c.l.b16 %v444
    %v732 = vunpack.c.h.b16 %v444
    %v733 = vunpack.c.l.b16 %v445
    %v734 = vunpack.c.h.b16 %v445
    %v735 = vunpack.c.l.b16 %v446
    %v736 = vunpack.c.h.b16 %v446
    %v737 = vunpack.c.l.b16 %v447
    %v738 = vunpack.c.h.b16 %v447
    %v739 = vunpack.c.l.b16 %v448
    %v740 = vunpack.c.h.b16 %v448
    %v741 = vunpack.c.l.b16 %v449
    %v742 = vunpack.c.h.b16 %v449
    %v743 = vunpack.c.l.b16 %v450
    %v744 = vunpack.c.h.b16 %v450
    %v745 = vunpack.c.l.b16 %v451
    %v746 = vunpack.c.h.b16 %v451
    %v747 = vunpack.c.l.b16 %v452
    %v748 = vunpack.c.h.b16 %v452
    %v749 = vunpack.c.l.b16 %v453
    %v750 = vunpack.c.h.b16 %v453
    %v751 = vunpack.c.l.b16 %v454
    %v752 = vunpack.c.h.b16 %v454
    %v753 = vunpack.c.l.b16 %v455
    %v754 = vunpack.c.h.b16 %v455
    %v755 = vunpack.c.l.b16 %v456
    %v756 = vunpack.c.h.b16 %v456
    %v757 = vunpack.c.l.b16 %v457
    %v758 = vunpack.c.h.b16 %v457
    %v759 = vunpack.c.l.b16 %v458
    %v760 = vunpack.c.h.b16 %v458
    %v761 = vunpack.c.l.b16 %v459
    %v762 = vunpack.c.h.b16 %v459
    %v763 = vunpack.c.l.b16 %v460
    %v764 = vunpack.c.h.b16 %v460
    %v765 = vunpack.c.l.b16 %v461
    %v766 = vunpack.c.h.b16 %v461
    %v767 = vunpack.c.l.b16 %v462
    %v768 = vunpack.c.h.b16 %v462
    %v769 = vunpack.c.l.b16 %v463
    %v770 = vunpack.c.h.b16 %v463
    %v771 = vunpack.c.l.b16 %v464
    %v772 = vunpack.c.h.b16 %v464
    %v773 = vunpack.c.l.b16 %v465
    %v774 = vunpack.c.h.b16 %v465
    %v775 = vunpack.c.l.b16 %v466
    %v776 = vunpack.c.h.b16 %v466
    %v777 = vunpack.c.l.b16 %v467
    %v778 = vunpack.c.h.b16 %v467
    %v779 = vunpack.c.l.b16 %v468
    %v780 = vunpack.c.h.b16 %v468
    %v781 = vunpack.c.l.b16 %v469
    %v782 = vunpack.c.h.b16 %v469
    %v783 = vunpack.c.l.b16 %v470
    %v784 = vunpack.c.h.b16 %v470
    %v785 = vunpack.c.l.b16 %v471
    %v786 = vunpack.c.h.b16 %v471
    %v787 = vunpack.c.l.b16 %v472
    %v788 = vunpack.c.h.b16 %v472
    %v789 = vunpack.c.l.b16 %v473
    %v790 = vunpack.c.h.b16 %v473
    %v791 = vunpack.c.l.b16 %v474
    %v792 = vunpack.c.h.b16 %v474
    %v793 = vunpack.c.l.b16 %v475
    %v794 = vunpack.c.h.b16 %v475
    %v795 = vunpack.c.l.b16 %v476
    %v796 = vunpack.c.h.b16 %v476
    %v797 = vunpack.c.l.b16 %v477
    %v798 = vunpack.c.h.b16 %v477
    %v799 = vunpack.c.l.b16 %v478
    %v800 = vunpack.c.h.b16 %v478
    %v801 = vunpack.c.l.b16 %v479
    %v802 = vunpack.c.h.b16 %v479
    %v803 = vunpack.c.l.b16 %v480
    %v804 = vunpack.c.h.b16 %v480
    %v805 = vunpack.c.l.b16 %v481
    %v806 = vunpack.c.h.b16 %v481
    %v807 = vunpack.c.l.b16 %v482
    %v808 = vunpack.c.h.b16 %v482
    %v809 = vunpack.c.l.b16 %v483
    %v810 = vunpack.c.h.b16 %v483
    %v811 = vunpack.c.l.b16 %v484
    %v812 = vunpack.c.h.b16 %v484
    %v813 = vunpack.c.l.b16 %v485
    %v814 = vunpack.c.h.b16 %v485
    %v815 = vunpack.c.l.b16 %v486
    %v816 = vunpack.c.h.b16 %v486
    %v817 = vunpack.c.l.b16 %v487
    %v818 = vunpack.c.h.b16 %v487
    %v819 = vunpack.c.l.b16 %v488
    %v820 = vunpack.c.h.b16 %v488
    %v821 = vunpack.c.l.b16 %v489
    %v822 = vunpack.c.h.b16 %v489
    %v823 = vunpack.c.l.b16 %v490
    %v824 = vunpack.c.h.b16 %v490
    %v825 = vunpack.c.l.b16 %v491
    %v826 = vunpack.c.h.b16 %v491
    %v827 = vunpack.c.l.b16 %v492
    %v828 = vunpack.c.h.b16 %v492
    %v829 = vunpack.c.l.b16 %v493
    %v830 = vunpack.c.h.b16 %v493
    %v831 = vunpack.c.l.b16 %v494
    %v832 = vunpack.c.h.b16 %v494
    %v833 = vunpack.c.l.b16 %v495
    %v834 = vunpack.c.h.b16 %v495
    %v835 = vunpack.c.l.b16 %v496
    %v836 = vunpack.c.h.b16 %v496
    %v837 = vunpack.c.l.b16 %v497
    %v838 = vunpack.c.h.b16 %v497
    %v839 = vunpack.c.l.b16 %v498
    %v840 = vunpack.c.h.b16 %v498
    %v841 = vunpack.c.l.b16 %v499
    %v842 = vunpack.c.h.b16 %v499
    %v843 = vunpack.c.l.b16 %v500
    %v844 = vunpack.c.h.b16 %v500
    %v845 = vunpack.c.l.b16 %v501
    %v846 = vunpack.c.h.b16 %v501
    %v847 = vunpack.c.l.b16 %v502
    %v848 = vunpack.c.h.b16 %v502
    %v849 = vunpack.c.l.b16 %v503
    %v850 = vunpack.c.h.b16 %v503
    %v851 = vunpack.c.l.b16 %v504
    %v852 = vunpack.c.h.b16 %v504
    %v853 = vunpack.c.l.b16 %v505
    %v854 = vunpack.c.h.b16 %v505
    %v855 = vunpack.c.l.b16 %v506
    %v856 = vunpack.c.h.b16 %v506
    %v857 = vunpack.c.l.b16 %v507
    %v858 = vunpack.c.h.b16 %v507
    %v859 = vunpack.c.l.b16 %v508
    %v860 = vunpack.c.h.b16 %v508
    %v861 = vunpack.c.l.b16 %v509
    %v862 = vunpack.c.h.b16 %v509
    %v863 = vunpack.c.l.b16 %v510
    %v864 = vunpack.c.h.b16 %v510
    %v865 = vunpack.c.l.b16 %v511
    %v866 = vunpack.c.h.b16 %v511
    %v867 = vunpack.c.l.b16 %v512
    %v868 = vunpack.c.h.b16 %v512
    %v869 = vunpack.c.l.b16 %v513
    %v870 = vunpack.c.h.b16 %v513
    %v871 = vunpack.c.l.b16 %v514
    %v872 = vunpack.c.h.b16 %v514
    %v873 = vunpack.c.l.b16 %v515
    %v874 = vunpack.c.h.b16 %v515
    %v875 = vunpack.c.l.b16 %v516
    %v876 = vunpack.c.h.b16 %v516
    %v877 = vunpack.c.l.b16 %v517
    %v878 = vunpack.c.h.b16 %v517
    %v879 = vunpack.c.l.b16 %v518
    %v880 = vunpack.c.h.b16 %v518
    %v881 = vunpack.c.l.b16 %v519
    %v882 = vunpack.c.h.b16 %v519
    %v883 = vunpack.c.l.b16 %v520
    %v884 = vunpack.c.h.b16 %v520
    %v885 = vunpack.c.l.b16 %v521
    %v886 = vunpack.c.h.b16 %v521
    %v887 = vunpack.c.l.b16 %v522
    %v888 = vunpack.c.h.b16 %v522
    %v889 = vunpack.c.l.b16 %v523
    %v890 = vunpack.c.h.b16 %v523
    %v891 = vunpack.c.l.b16 %v524
    %v892 = vunpack.c.h.b16 %v524
    %v893 = vunpack.c.l.b16 %v525
    %v894 = vunpack.c.h.b16 %v525
    %v895 = vunpack.c.l.b16 %v526
    %v896 = vunpack.c.h.b16 %v526
    %v897 = vunpack.c.l.b16 %v527
    %v898 = vunpack.c.h.b16 %v527
    %v899 = vunpack.c.l.b16 %v528
    %v900 = vunpack.c.h.b16 %v528
    %v901 = vunpack.c.l.b16 %v529
    %v902 = vunpack.c.h.b16 %v529
    %v903 = vunpack.c.l.b16 %v530
    %v904 = vunpack.c.h.b16 %v530
    %v905 = vunpack.c.l.b16 %v531
    %v906 = vunpack.c.h.b16 %v531
    %v907 = vunpack.c.l.b16 %v532
    %v908 = vunpack.c.h.b16 %v532
    %v909 = vunpack.c.l.b16 %v533
    %v910 = vunpack.c.h.b16 %v533
    %v911 = vunpack.c.l.b16 %v534
    %v912 = vunpack.c.h.b16 %v534
    %v913 = vunpack.c.l.b16 %v535
    %v914 = vunpack.c.h.b16 %v535
    %v915 = vunpack.c.l.b16 %v536
    %v916 = vunpack.c.h.b16 %v536
    %v917 = vunpack.c.l.b16 %v537
    %v918 = vunpack.c.h.b16 %v537
    %v919 = vunpack.c.l.b16 %v538
    %v920 = vunpack.c.h.b16 %v538
    %v921 = vunpack.c.l.b16 %v539
    %v922 = vunpack.c.h.b16 %v539
    %v923 = vunpack.c.l.b16 %v540
    %v924 = vunpack.c.h.b16 %v540
    %v925 = vpack.c.b16 %v677, %v669
    %v926 = vpack.c.b16 %v678, %v670
    %v927 = vpack.c.b16 %v679, %v671
    %v928 = vpack.c.b16 %v680, %v672
    %v929 = vpack.c.b16 %v681, %v673
    %v930 = vpack.c.b16 %v682, %v674
    %v931 = vpack.c.b16 %v683, %v675
    %v932 = vpack.c.b16 %v684, %v676
    %v933 = vpack.c.b16 %v693, %v685
    %v934 = vpack.c.b16 %v694, %v686
    %v935 = vpack.c.b16 %v695, %v687
    %v936 = vpack.c.b16 %v696, %v688
    %v937 = vpack.c.b16 %v697, %v689
    %v938 = vpack.c.b16 %v698, %v690
    %v939 = vpack.c.b16 %v699, %v691
    %v940 = vpack.c.b16 %v700, %v692
    %v941 = vpack.c.b16 %v709, %v701
    %v942 = vpack.c.b16 %v710, %v702
    %v943 = vpack.c.b16 %v711, %v703
    %v944 = vpack.c.b16 %v712, %v704
    %v945 = vpack.c.b16 %v713, %v705
    %v946 = vpack.c.b16 %v714, %v706
    %v947 = vpack.c.b16 %v715, %v707
    %v948 = vpack.c.b16 %v716, %v708
    %v949 = vpack.c.b16 %v725, %v717
    %v950 = vpack.c.b16 %v726, %v718
    %v951 = vpack.c.b16 %v727, %v719
    %v952 = vpack.c.b16 %v728, %v720
    %v953 = vpack.c.b16 %v729, %v721
    %v954 = vpack.c.b16 %v730, %v722
    %v955 = vpack.c.b16 %v731, %v723
    %v956 = vpack.c.b16 %v732, %v724
    %v957 = vpack.c.b16 %v741, %v733
    %v958 = vpack.c.b16 %v742, %v734
    %v959 = vpack.c.b16 %v743, %v735
    %v960 = vpack.c.b16 %v744, %v736
    %v961 = vpack.c.b16 %v745, %v737
    %v962 = vpack.c.b16 %v746, %v738
    %v963 = vpack.c.b16 %v747, %v739
    %v964 = vpack.c.b16 %v748, %v740
    %v965 = vpack.c.b16 %v757, %v749
    %v966 = vpack.c.b16 %v758, %v750
    %v967 = vpack.c.b16 %v759, %v751
    %v968 = vpack.c.b16 %v760, %v752
    %v969 = vpack.c.b16 %v761, %v753
    %v970 = vpack.c.b16 %v762, %v754
    %v971 = vpack.c.b16 %v763, %v755
    %v972 = vpack.c.b16 %v764, %v756
    %v973 = vpack.c.b16 %v773, %v765
    %v974 = vpack.c.b16 %v774, %v766
    %v975 = vpack.c.b16 %v775, %v767
    %v976 = vpack.c.b16 %v776, %v768
    %v977 = vpack.c.b16 %v777, %v769
    %v978 = vpack.c.b16 %v778, %v770
    %v979 = vpack.c.b16 %v779, %v771
    %v980 = vpack.c.b16 %v780, %v772
    %v981 = vpack.c.b16 %v789, %v781
    %v982 = vpack.c.b16 %v790, %v782
    %v983 = vpack.c.b16 %v791, %v783
    %v984 = vpack.c.b16 %v792, %v784
    %v985 = vpack.c.b16 %v793, %v785
    %v986 = vpack.c.b16 %v794, %v786
    %v987 = vpack.c.b16 %v795, %v787
    %v988 = vpack.c.b16 %v796, %v788
    %v989 = vpack.c.b16 %v805, %v797
    %v990 = vpack.c.b16 %v806, %v798
    %v991 = vpack.c.b16 %v807, %v799
    %v992 = vpack.c.b16 %v808, %v800
    %v993 = vpack.c.b16 %v809, %v801
    %v994 = vpack.c.b16 %v810, %v802
    %v995 = vpack.c.b16 %v811, %v803
    %v996 = vpack.c.b16 %v812, %v804
    %v997 = vpack.c.b16 %v821, %v813
    %v998 = vpack.c.b16 %v822, %v814
    %v999 = vpack.c.b16 %v823, %v815
    %v1000 = vpack.c.b16 %v824, %v816
    %v1001 = vpack.c.b16 %v825, %v817
    %v1002 = vpack.c.b16 %v826, %v818
    %v1003 = vpack.c.b16 %v827, %v819
    %v1004 = vpack.c.b16 %v828, %v820
    %v1005 = vpack.c.b16 %v837, %v829
    %v1006 = vpack.c.b16 %v838, %v830
    %v1007 = vpack.c.b16 %v839, %v831
    %v1008 = vpack.c.b16 %v840, %v832
    %v1009 = vpack.c.b16 %v841, %v833
    %v1010 = vpack.c.b16 %v842, %v834
    %v1011 = vpack.c.b16 %v843, %v835
    %v1012 = vpack.c.b16 %v844, %v836
    %v1013 = vpack.c.b16 %v853, %v845
    %v1014 = vpack.c.b16 %v854, %v846
    %v1015 = vpack.c.b16 %v855, %v847
    %v1016 = vpack.c.b16 %v856, %v848
    %v1017 = vpack.c.b16 %v857, %v849
    %v1018 = vpack.c.b16 %v858, %v850
    %v1019 = vpack.c.b16 %v859, %v851
    %v1020 = vpack.c.b16 %v860, %v852
    %v1021 = vpack.c.b16 %v869, %v861
    %v1022 = vpack.c.b16 %v870, %v862
    %v1023 = vpack.c.b16 %v871, %v863
    %v1024 = vpack.c.b16 %v872, %v864
    %v1025 = vpack.c.b16 %v873, %v865
    %v1026 = vpack.c.b16 %v874, %v866
    %v1027 = vpack.c.b16 %v875, %v867
    %v1028 = vpack.c.b16 %v876, %v868
    %v1029 = vpack.c.b16 %v885, %v877
    %v1030 = vpack.c.b16 %v886, %v878
    %v1031 = vpack.c.b16 %v887, %v879
    %v1032 = vpack.c.b16 %v888, %v880
    %v1033 = vpack.c.b16 %v889, %v881
    %v1034 = vpack.c.b16 %v890, %v882
    %v1035 = vpack.c.b16 %v891, %v883
    %v1036 = vpack.c.b16 %v892, %v884
    %v1037 = vpack.c.b16 %v901, %v893
    %v1038 = vpack.c.b16 %v902, %v894
    %v1039 = vpack.c.b16 %v903, %v895
    %v1040 = vpack.c.b16 %v904, %v896
    %v1041 = vpack.c.b16 %v905, %v897
    %v1042 = vpack.c.b16 %v906, %v898
    %v1043 = vpack.c.b16 %v907, %v899
    %v1044 = vpack.c.b16 %v908, %v900
    %v1045 = vpack.c.b16 %v917, %v909
    %v1046 = vpack.c.b16 %v918, %v910
    %v1047 = vpack.c.b16 %v919, %v911
    %v1048 = vpack.c.b16 %v920, %v912
    %v1049 = vpack.c.b16 %v921, %v913
    %v1050 = vpack.c.b16 %v922, %v914
    %v1051 = vpack.c.b16 %v923, %v915
    %v1052 = vpack.c.b16 %v924, %v916
    %1181 = vmatprep.subr.bf16.mxu0 %v926
    %1182 = vmatpush1.bf16.msra.mxu0 %v925
    %1183 = vmatprep.subr.bf16.mxu0 %v934
    %1184 = vmatpush1.bf16.msra.mxu0 %v933
    %1185 = vmatprep.subr.bf16.mxu0 %v942
    %1186 = vmatpush1.bf16.msra.mxu0 %v941
    %1187 = vmatprep.subr.bf16.mxu0 %v950
    %1188 = vmatpush1.bf16.msra.mxu0 %v949
    %1189 = vmatprep.subr.bf16.mxu0 %v958
    %1190 = vmatpush1.bf16.msra.mxu0 %v957
    %1191 = vmatprep.subr.bf16.mxu0 %v966
    %1192 = vmatpush1.bf16.msra.mxu0 %v965
    %1193 = vmatprep.subr.bf16.mxu0 %v974
    %1194 = vmatpush1.bf16.msra.mxu0 %v973
    %1195 = vmatprep.subr.bf16.mxu0 %v982
    %1196 = vmatpush1.bf16.msra.mxu0 %v981
    %1197 = vmatprep.subr.bf16.mxu0 %v990
    %1198 = vmatpush1.bf16.msra.mxu0 %v989
    %1199 = vmatprep.subr.bf16.mxu0 %v998
    %1200 = vmatpush1.bf16.msra.mxu0 %v997
    %1201 = vmatprep.subr.bf16.mxu0 %v1006
    %1202 = vmatpush1.bf16.msra.mxu0 %v1005
    %1203 = vmatprep.subr.bf16.mxu0 %v1014
    %1204 = vmatpush1.bf16.msra.mxu0 %v1013
    %1205 = vmatprep.subr.bf16.mxu0 %v1022
    %1206 = vmatpush1.bf16.msra.mxu0 %v1021
    %1207 = vmatprep.subr.bf16.mxu0 %v1030
    %1208 = vmatpush1.bf16.msra.mxu0 %v1029
    %1209 = vmatprep.subr.bf16.mxu0 %v1038
    %1210 = vmatpush1.bf16.msra.mxu0 %v1037
    %1211 = vmatprep.subr.bf16.mxu0 %v1046
    %1212 = vmatpush1.bf16.msra.mxu0 %v1045
    %1213 = vmatprep.mubr.bf16.mxu0 %v412
    %1214 = vmatmul.mubr.bf16.gmra.mrb[0].mxu0 %v411
    %v1215 = vpop.f32.mrb[0].mxu0
    %v1216 = vadd.f32 0.0, %v1215
    %v1217 = vpop.f32.mrb[0].mxu0
    %v1218 = vadd.f32 0.0, %v1217
    %v1219 = vpop.f32.mrb[0].mxu0
    %v1220 = vpop.f32.mrb[0].mxu0
    %1221 = vdwg.mxu0
    %1222 = vmatprep.subr.bf16.mxu0 %v928
    %1223 = vmatpush1.bf16.msra.mxu0 %v927
    %1224 = vmatprep.subr.bf16.mxu0 %v936
    %1225 = vmatpush1.bf16.msra.mxu0 %v935
    %1226 = vmatprep.subr.bf16.mxu0 %v944
    %1227 = vmatpush1.bf16.msra.mxu0 %v943
    %1228 = vmatprep.subr.bf16.mxu0 %v952
    %1229 = vmatpush1.bf16.msra.mxu0 %v951
    %1230 = vmatprep.subr.bf16.mxu0 %v960
    %1231 = vmatpush1.bf16.msra.mxu0 %v959
    %1232 = vmatprep.subr.bf16.mxu0 %v968
    %1233 = vmatpush1.bf16.msra.mxu0 %v967
    %1234 = vmatprep.subr.bf16.mxu0 %v976
    %1235 = vmatpush1.bf16.msra.mxu0 %v975
    %1236 = vmatprep.subr.bf16.mxu0 %v984
    %1237 = vmatpush1.bf16.msra.mxu0 %v983
    %1238 = vmatprep.subr.bf16.mxu0 %v992
    %1239 = vmatpush1.bf16.msra.mxu0 %v991
    %1240 = vmatprep.subr.bf16.mxu0 %v1000
    %1241 = vmatpush1.bf16.msra.mxu0 %v999
    %1242 = vmatprep.subr.bf16.mxu0 %v1008
    %1243 = vmatpush1.bf16.msra.mxu0 %v1007
    %1244 = vmatprep.subr.bf16.mxu0 %v1016
    %1245 = vmatpush1.bf16.msra.mxu0 %v1015
    %1246 = vmatprep.subr.bf16.mxu0 %v1024
    %1247 = vmatpush1.bf16.msra.mxu0 %v1023
    %1248 = vmatprep.subr.bf16.mxu0 %v1032
    %1249 = vmatpush1.bf16.msra.mxu0 %v1031
    %1250 = vmatprep.subr.bf16.mxu0 %v1040
    %1251 = vmatpush1.bf16.msra.mxu0 %v1039
    %1252 = vmatprep.subr.bf16.mxu0 %v1048
    %1253 = vmatpush1.bf16.msra.mxu0 %v1047
    %1254 = vmatprep.mubr.bf16.mxu0 %v412
    %1255 = vmatmul.mubr.bf16.gmra.mrb[0].mxu0 %v411
    %v1256 = vpop.f32.mrb[0].mxu0
    %v1257 = vadd.f32 0.0, %v1256
    %v1258 = vpop.f32.mrb[0].mxu0
    %v1259 = vadd.f32 0.0, %v1258
    %v1260 = vpop.f32.mrb[0].mxu0
    %v1261 = vpop.f32.mrb[0].mxu0
    %1262 = vdwg.mxu0
    %1263 = vmatprep.subr.bf16.mxu0 %v930
    %1264 = vmatpush1.bf16.msra.mxu0 %v929
    %1265 = vmatprep.subr.bf16.mxu0 %v938
    %1266 = vmatpush1.bf16.msra.mxu0 %v937
    %1267 = vmatprep.subr.bf16.mxu0 %v946
    %1268 = vmatpush1.bf16.msra.mxu0 %v945
    %1269 = vmatprep.subr.bf16.mxu0 %v954
    %1270 = vmatpush1.bf16.msra.mxu0 %v953
    %1271 = vmatprep.subr.bf16.mxu0 %v962
    %1272 = vmatpush1.bf16.msra.mxu0 %v961
    %1273 = vmatprep.subr.bf16.mxu0 %v970
    %1274 = vmatpush1.bf16.msra.mxu0 %v969
    %1275 = vmatprep.subr.bf16.mxu0 %v978
    %1276 = vmatpush1.bf16.msra.mxu0 %v977
    %1277 = vmatprep.subr.bf16.mxu0 %v986
    %1278 = vmatpush1.bf16.msra.mxu0 %v985
    %1279 = vmatprep.subr.bf16.mxu0 %v994
    %1280 = vmatpush1.bf16.msra.mxu0 %v993
    %1281 = vmatprep.subr.bf16.mxu0 %v1002
    %1282 = vmatpush1.bf16.msra.mxu0 %v1001
    %1283 = vmatprep.subr.bf16.mxu0 %v1010
    %1284 = vmatpush1.bf16.msra.mxu0 %v1009
    %1285 = vmatprep.subr.bf16.mxu0 %v1018
    %1286 = vmatpush1.bf16.msra.mxu0 %v1017
    %1287 = vmatprep.subr.bf16.mxu0 %v1026
    %1288 = vmatpush1.bf16.msra.mxu0 %v1025
    %1289 = vmatprep.subr.bf16.mxu0 %v1034
    %1290 = vmatpush1.bf16.msra.mxu0 %v1033
    %1291 = vmatprep.subr.bf16.mxu0 %v1042
    %1292 = vmatpush1.bf16.msra.mxu0 %v1041
    %1293 = vmatprep.subr.bf16.mxu0 %v1050
    %1294 = vmatpush1.bf16.msra.mxu0 %v1049
    %1295 = vmatprep.mubr.bf16.mxu0 %v412
    %1296 = vmatmul.mubr.bf16.gmra.mrb[0].mxu0 %v411
    %v1297 = vpop.f32.mrb[0].mxu0
    %v1298 = vadd.f32 0.0, %v1297
    %v1299 = vpop.f32.mrb[0].mxu0
    %v1300 = vadd.f32 0.0, %v1299
    %v1301 = vpop.f32.mrb[0].mxu0
    %v1302 = vpop.f32.mrb[0].mxu0
    %1303 = vdwg.mxu0
    %1304 = vmatprep.subr.bf16.mxu0 %v932
    %1305 = vmatpush1.bf16.msra.mxu0 %v931
    %1306 = vmatprep.subr.bf16.mxu0 %v940
    %1307 = vmatpush1.bf16.msra.mxu0 %v939
    %1308 = vmatprep.subr.bf16.mxu0 %v948
    %1309 = vmatpush1.bf16.msra.mxu0 %v947
    %1310 = vmatprep.subr.bf16.mxu0 %v956
    %1311 = vmatpush1.bf16.msra.mxu0 %v955
    %1312 = vmatprep.subr.bf16.mxu0 %v964
    %1313 = vmatpush1.bf16.msra.mxu0 %v963
    %1314 = vmatprep.subr.bf16.mxu0 %v972
    %1315 = vmatpush1.bf16.msra.mxu0 %v971
    %1316 = vmatprep.subr.bf16.mxu0 %v980
    %1317 = vmatpush1.bf16.msra.mxu0 %v979
    %1318 = vmatprep.subr.bf16.mxu0 %v988
    %1319 = vmatpush1.bf16.msra.mxu0 %v987
    %1320 = vmatprep.subr.bf16.mxu0 %v996
    %1321 = vmatpush1.bf16.msra.mxu0 %v995
    %1322 = vmatprep.subr.bf16.mxu0 %v1004
    %1323 = vmatpush1.bf16.msra.mxu0 %v1003
    %1324 = vmatprep.subr.bf16.mxu0 %v1012
    %1325 = vmatpush1.bf16.msra.mxu0 %v1011
    %1326 = vmatprep.subr.bf16.mxu0 %v1020
    %1327 = vmatpush1.bf16.msra.mxu0 %v1019
    %1328 = vmatprep.subr.bf16.mxu0 %v1028
    %1329 = vmatpush1.bf16.msra.mxu0 %v1027
    %1330 = vmatprep.subr.bf16.mxu0 %v1036
    %1331 = vmatpush1.bf16.msra.mxu0 %v1035
    %1332 = vmatprep.subr.bf16.mxu0 %v1044
    %1333 = vmatpush1.bf16.msra.mxu0 %v1043
    %1334 = vmatprep.subr.bf16.mxu0 %v1052
    %1335 = vmatpush1.bf16.msra.mxu0 %v1051
    %1336 = vmatprep.mubr.bf16.mxu0 %v412
    %1337 = vmatmul.mubr.bf16.gmra.mrb[0].mxu0 %v411
    %v1338 = vpop.f32.mrb[0].mxu0
    %v1339 = vadd.f32 0.0, %v1338
    %v1340 = vpop.f32.mrb[0].mxu0
    %v1341 = vadd.f32 0.0, %v1340
    %v1342 = vpop.f32.mrb[0].mxu0
    %v1343 = vpop.f32.mrb[0].mxu0
    %1344 = vdwg.mxu0
    %v1473 = vunpack.c.l.b16 %v272
    %v1474 = vunpack.c.h.b16 %v272
    %v1475 = vunpack.c.l.b16 %v273
    %v1476 = vunpack.c.h.b16 %v273
    %v1477 = vunpack.c.l.b16 %v274
    %v1478 = vunpack.c.h.b16 %v274
    %v1479 = vunpack.c.l.b16 %v275
    %v1480 = vunpack.c.h.b16 %v275
    %v1481 = vunpack.c.l.b16 %v276
    %v1482 = vunpack.c.h.b16 %v276
    %v1483 = vunpack.c.l.b16 %v277
    %v1484 = vunpack.c.h.b16 %v277
    %v1485 = vunpack.c.l.b16 %v278
    %v1486 = vunpack.c.h.b16 %v278
    %v1487 = vunpack.c.l.b16 %v279
    %v1488 = vunpack.c.h.b16 %v279
    %v1489 = vunpack.c.l.b16 %v280
    %v1490 = vunpack.c.h.b16 %v280
    %v1491 = vunpack.c.l.b16 %v281
    %v1492 = vunpack.c.h.b16 %v281
    %v1493 = vunpack.c.l.b16 %v282
    %v1494 = vunpack.c.h.b16 %v282
    %v1495 = vunpack.c.l.b16 %v283
    %v1496 = vunpack.c.h.b16 %v283
    %v1497 = vunpack.c.l.b16 %v284
    %v1498 = vunpack.c.h.b16 %v284
    %v1499 = vunpack.c.l.b16 %v285
    %v1500 = vunpack.c.h.b16 %v285
    %v1501 = vunpack.c.l.b16 %v286
    %v1502 = vunpack.c.h.b16 %v286
    %v1503 = vunpack.c.l.b16 %v287
    %v1504 = vunpack.c.h.b16 %v287
    %v1505 = vunpack.c.l.b16 %v288
    %v1506 = vunpack.c.h.b16 %v288
    %v1507 = vunpack.c.l.b16 %v289
    %v1508 = vunpack.c.h.b16 %v289
    %v1509 = vunpack.c.l.b16 %v290
    %v1510 = vunpack.c.h.b16 %v290
    %v1511 = vunpack.c.l.b16 %v291
    %v1512 = vunpack.c.h.b16 %v291
    %v1513 = vunpack.c.l.b16 %v292
    %v1514 = vunpack.c.h.b16 %v292
    %v1515 = vunpack.c.l.b16 %v293
    %v1516 = vunpack.c.h.b16 %v293
    %v1517 = vunpack.c.l.b16 %v294
    %v1518 = vunpack.c.h.b16 %v294
    %v1519 = vunpack.c.l.b16 %v295
    %v1520 = vunpack.c.h.b16 %v295
    %v1521 = vunpack.c.l.b16 %v296
    %v1522 = vunpack.c.h.b16 %v296
    %v1523 = vunpack.c.l.b16 %v297
    %v1524 = vunpack.c.h.b16 %v297
    %v1525 = vunpack.c.l.b16 %v298
    %v1526 = vunpack.c.h.b16 %v298
    %v1527 = vunpack.c.l.b16 %v299
    %v1528 = vunpack.c.h.b16 %v299
    %v1529 = vunpack.c.l.b16 %v300
    %v1530 = vunpack.c.h.b16 %v300
    %v1531 = vunpack.c.l.b16 %v301
    %v1532 = vunpack.c.h.b16 %v301
    %v1533 = vunpack.c.l.b16 %v302
    %v1534 = vunpack.c.h.b16 %v302
    %v1535 = vunpack.c.l.b16 %v303
    %v1536 = vunpack.c.h.b16 %v303
    %v1537 = vunpack.c.l.b16 %v304
    %v1538 = vunpack.c.h.b16 %v304
    %v1539 = vunpack.c.l.b16 %v305
    %v1540 = vunpack.c.h.b16 %v305
    %v1541 = vunpack.c.l.b16 %v306
    %v1542 = vunpack.c.h.b16 %v306
    %v1543 = vunpack.c.l.b16 %v307
    %v1544 = vunpack.c.h.b16 %v307
    %v1545 = vunpack.c.l.b16 %v308
    %v1546 = vunpack.c.h.b16 %v308
    %v1547 = vunpack.c.l.b16 %v309
    %v1548 = vunpack.c.h.b16 %v309
    %v1549 = vunpack.c.l.b16 %v310
    %v1550 = vunpack.c.h.b16 %v310
    %v1551 = vunpack.c.l.b16 %v311
    %v1552 = vunpack.c.h.b16 %v311
    %v1553 = vunpack.c.l.b16 %v312
    %v1554 = vunpack.c.h.b16 %v312
    %v1555 = vunpack.c.l.b16 %v313
    %v1556 = vunpack.c.h.b16 %v313
    %v1557 = vunpack.c.l.b16 %v314
    %v1558 = vunpack.c.h.b16 %v314
    %v1559 = vunpack.c.l.b16 %v315
    %v1560 = vunpack.c.h.b16 %v315
    %v1561 = vunpack.c.l.b16 %v316
    %v1562 = vunpack.c.h.b16 %v316
    %v1563 = vunpack.c.l.b16 %v317
    %v1564 = vunpack.c.h.b16 %v317
    %v1565 = vunpack.c.l.b16 %v318
    %v1566 = vunpack.c.h.b16 %v318
    %v1567 = vunpack.c.l.b16 %v319
    %v1568 = vunpack.c.h.b16 %v319
    %v1569 = vunpack.c.l.b16 %v320
    %v1570 = vunpack.c.h.b16 %v320
    %v1571 = vunpack.c.l.b16 %v321
    %v1572 = vunpack.c.h.b16 %v321
    %v1573 = vunpack.c.l.b16 %v322
    %v1574 = vunpack.c.h.b16 %v322
    %v1575 = vunpack.c.l.b16 %v323
    %v1576 = vunpack.c.h.b16 %v323
    %v1577 = vunpack.c.l.b16 %v324
    %v1578 = vunpack.c.h.b16 %v324
    %v1579 = vunpack.c.l.b16 %v325
    %v1580 = vunpack.c.h.b16 %v325
    %v1581 = vunpack.c.l.b16 %v326
    %v1582 = vunpack.c.h.b16 %v326
    %v1583 = vunpack.c.l.b16 %v327
    %v1584 = vunpack.c.h.b16 %v327
    %v1585 = vunpack.c.l.b16 %v328
    %v1586 = vunpack.c.h.b16 %v328
    %v1587 = vunpack.c.l.b16 %v329
    %v1588 = vunpack.c.h.b16 %v329
    %v1589 = vunpack.c.l.b16 %v330
    %v1590 = vunpack.c.h.b16 %v330
    %v1591 = vunpack.c.l.b16 %v331
    %v1592 = vunpack.c.h.b16 %v331
    %v1593 = vunpack.c.l.b16 %v332
    %v1594 = vunpack.c.h.b16 %v332
    %v1595 = vunpack.c.l.b16 %v333
    %v1596 = vunpack.c.h.b16 %v333
    %v1597 = vunpack.c.l.b16 %v334
    %v1598 = vunpack.c.h.b16 %v334
    %v1599 = vunpack.c.l.b16 %v335
    %v1600 = vunpack.c.h.b16 %v335
    %v1601 = vunpack.c.l.b16 %v336
    %v1602 = vunpack.c.h.b16 %v336
    %v1603 = vunpack.c.l.b16 %v337
    %v1604 = vunpack.c.h.b16 %v337
    %v1605 = vunpack.c.l.b16 %v338
    %v1606 = vunpack.c.h.b16 %v338
    %v1607 = vunpack.c.l.b16 %v339
    %v1608 = vunpack.c.h.b16 %v339
    %v1609 = vunpack.c.l.b16 %v340
    %v1610 = vunpack.c.h.b16 %v340
    %v1611 = vunpack.c.l.b16 %v341
    %v1612 = vunpack.c.h.b16 %v341
    %v1613 = vunpack.c.l.b16 %v342
    %v1614 = vunpack.c.h.b16 %v342
    %v1615 = vunpack.c.l.b16 %v343
    %v1616 = vunpack.c.h.b16 %v343
    %v1617 = vunpack.c.l.b16 %v344
    %v1618 = vunpack.c.h.b16 %v344
    %v1619 = vunpack.c.l.b16 %v345
    %v1620 = vunpack.c.h.b16 %v345
    %v1621 = vunpack.c.l.b16 %v346
    %v1622 = vunpack.c.h.b16 %v346
    %v1623 = vunpack.c.l.b16 %v347
    %v1624 = vunpack.c.h.b16 %v347
    %v1625 = vunpack.c.l.b16 %v348
    %v1626 = vunpack.c.h.b16 %v348
    %v1627 = vunpack.c.l.b16 %v349
    %v1628 = vunpack.c.h.b16 %v349
    %v1629 = vunpack.c.l.b16 %v350
    %v1630 = vunpack.c.h.b16 %v350
    %v1631 = vunpack.c.l.b16 %v351
    %v1632 = vunpack.c.h.b16 %v351
    %v1633 = vunpack.c.l.b16 %v352
    %v1634 = vunpack.c.h.b16 %v352
    %v1635 = vunpack.c.l.b16 %v353
    %v1636 = vunpack.c.h.b16 %v353
    %v1637 = vunpack.c.l.b16 %v354
    %v1638 = vunpack.c.h.b16 %v354
    %v1639 = vunpack.c.l.b16 %v355
    %v1640 = vunpack.c.h.b16 %v355
    %v1641 = vunpack.c.l.b16 %v356
    %v1642 = vunpack.c.h.b16 %v356
    %v1643 = vunpack.c.l.b16 %v357
    %v1644 = vunpack.c.h.b16 %v357
    %v1645 = vunpack.c.l.b16 %v358
    %v1646 = vunpack.c.h.b16 %v358
    %v1647 = vunpack.c.l.b16 %v359
    %v1648 = vunpack.c.h.b16 %v359
    %v1649 = vunpack.c.l.b16 %v360
    %v1650 = vunpack.c.h.b16 %v360
    %v1651 = vunpack.c.l.b16 %v361
    %v1652 = vunpack.c.h.b16 %v361
    %v1653 = vunpack.c.l.b16 %v362
    %v1654 = vunpack.c.h.b16 %v362
    %v1655 = vunpack.c.l.b16 %v363
    %v1656 = vunpack.c.h.b16 %v363
    %v1657 = vunpack.c.l.b16 %v364
    %v1658 = vunpack.c.h.b16 %v364
    %v1659 = vunpack.c.l.b16 %v365
    %v1660 = vunpack.c.h.b16 %v365
    %v1661 = vunpack.c.l.b16 %v366
    %v1662 = vunpack.c.h.b16 %v366
    %v1663 = vunpack.c.l.b16 %v367
    %v1664 = vunpack.c.h.b16 %v367
    %v1665 = vunpack.c.l.b16 %v368
    %v1666 = vunpack.c.h.b16 %v368
    %v1667 = vunpack.c.l.b16 %v369
    %v1668 = vunpack.c.h.b16 %v369
    %v1669 = vunpack.c.l.b16 %v370
    %v1670 = vunpack.c.h.b16 %v370
    %v1671 = vunpack.c.l.b16 %v371
    %v1672 = vunpack.c.h.b16 %v371
    %v1673 = vunpack.c.l.b16 %v372
    %v1674 = vunpack.c.h.b16 %v372
    %v1675 = vunpack.c.l.b16 %v373
    %v1676 = vunpack.c.h.b16 %v373
    %v1677 = vunpack.c.l.b16 %v374
    %v1678 = vunpack.c.h.b16 %v374
    %v1679 = vunpack.c.l.b16 %v375
    %v1680 = vunpack.c.h.b16 %v375
    %v1681 = vunpack.c.l.b16 %v376
    %v1682 = vunpack.c.h.b16 %v376
    %v1683 = vunpack.c.l.b16 %v377
    %v1684 = vunpack.c.h.b16 %v377
    %v1685 = vunpack.c.l.b16 %v378
    %v1686 = vunpack.c.h.b16 %v378
    %v1687 = vunpack.c.l.b16 %v379
    %v1688 = vunpack.c.h.b16 %v379
    %v1689 = vunpack.c.l.b16 %v380
    %v1690 = vunpack.c.h.b16 %v380
    %v1691 = vunpack.c.l.b16 %v381
    %v1692 = vunpack.c.h.b16 %v381
    %v1693 = vunpack.c.l.b16 %v382
    %v1694 = vunpack.c.h.b16 %v382
    %v1695 = vunpack.c.l.b16 %v383
    %v1696 = vunpack.c.h.b16 %v383
    %v1697 = vunpack.c.l.b16 %v384
    %v1698 = vunpack.c.h.b16 %v384
    %v1699 = vunpack.c.l.b16 %v385
    %v1700 = vunpack.c.h.b16 %v385
    %v1701 = vunpack.c.l.b16 %v386
    %v1702 = vunpack.c.h.b16 %v386
    %v1703 = vunpack.c.l.b16 %v387
    %v1704 = vunpack.c.h.b16 %v387
    %v1705 = vunpack.c.l.b16 %v388
    %v1706 = vunpack.c.h.b16 %v388
    %v1707 = vunpack.c.l.b16 %v389
    %v1708 = vunpack.c.h.b16 %v389
    %v1709 = vunpack.c.l.b16 %v390
    %v1710 = vunpack.c.h.b16 %v390
    %v1711 = vunpack.c.l.b16 %v391
    %v1712 = vunpack.c.h.b16 %v391
    %v1713 = vunpack.c.l.b16 %v392
    %v1714 = vunpack.c.h.b16 %v392
    %v1715 = vunpack.c.l.b16 %v393
    %v1716 = vunpack.c.h.b16 %v393
    %v1717 = vunpack.c.l.b16 %v394
    %v1718 = vunpack.c.h.b16 %v394
    %v1719 = vunpack.c.l.b16 %v395
    %v1720 = vunpack.c.h.b16 %v395
    %v1721 = vunpack.c.l.b16 %v396
    %v1722 = vunpack.c.h.b16 %v396
    %v1723 = vunpack.c.l.b16 %v397
    %v1724 = vunpack.c.h.b16 %v397
    %v1725 = vunpack.c.l.b16 %v398
    %v1726 = vunpack.c.h.b16 %v398
    %v1727 = vunpack.c.l.b16 %v399
    %v1728 = vunpack.c.h.b16 %v399
    %v1729 = vpack.c.b16 %v1481, %v1473
    %v1730 = vpack.c.b16 %v1482, %v1474
    %v1731 = vpack.c.b16 %v1483, %v1475
    %v1732 = vpack.c.b16 %v1484, %v1476
    %v1733 = vpack.c.b16 %v1485, %v1477
    %v1734 = vpack.c.b16 %v1486, %v1478
    %v1735 = vpack.c.b16 %v1487, %v1479
    %v1736 = vpack.c.b16 %v1488, %v1480
    %v1737 = vpack.c.b16 %v1497, %v1489
    %v1738 = vpack.c.b16 %v1498, %v1490
    %v1739 = vpack.c.b16 %v1499, %v1491
    %v1740 = vpack.c.b16 %v1500, %v1492
    %v1741 = vpack.c.b16 %v1501, %v1493
    %v1742 = vpack.c.b16 %v1502, %v1494
    %v1743 = vpack.c.b16 %v1503, %v1495
    %v1744 = vpack.c.b16 %v1504, %v1496
    %v1745 = vpack.c.b16 %v1513, %v1505
    %v1746 = vpack.c.b16 %v1514, %v1506
    %v1747 = vpack.c.b16 %v1515, %v1507
    %v1748 = vpack.c.b16 %v1516, %v1508
    %v1749 = vpack.c.b16 %v1517, %v1509
    %v1750 = vpack.c.b16 %v1518, %v1510
    %v1751 = vpack.c.b16 %v1519, %v1511
    %v1752 = vpack.c.b16 %v1520, %v1512
    %v1753 = vpack.c.b16 %v1529, %v1521
    %v1754 = vpack.c.b16 %v1530, %v1522
    %v1755 = vpack.c.b16 %v1531, %v1523
    %v1756 = vpack.c.b16 %v1532, %v1524
    %v1757 = vpack.c.b16 %v1533, %v1525
    %v1758 = vpack.c.b16 %v1534, %v1526
    %v1759 = vpack.c.b16 %v1535, %v1527
    %v1760 = vpack.c.b16 %v1536, %v1528
    %v1761 = vpack.c.b16 %v1545, %v1537
    %v1762 = vpack.c.b16 %v1546, %v1538
    %v1763 = vpack.c.b16 %v1547, %v1539
    %v1764 = vpack.c.b16 %v1548, %v1540
    %v1765 = vpack.c.b16 %v1549, %v1541
    %v1766 = vpack.c.b16 %v1550, %v1542
    %v1767 = vpack.c.b16 %v1551, %v1543
    %v1768 = vpack.c.b16 %v1552, %v1544
    %v1769 = vpack.c.b16 %v1561, %v1553
    %v1770 = vpack.c.b16 %v1562, %v1554
    %v1771 = vpack.c.b16 %v1563, %v1555
    %v1772 = vpack.c.b16 %v1564, %v1556
    %v1773 = vpack.c.b16 %v1565, %v1557
    %v1774 = vpack.c.b16 %v1566, %v1558
    %v1775 = vpack.c.b16 %v1567, %v1559
    %v1776 = vpack.c.b16 %v1568, %v1560
    %v1777 = vpack.c.b16 %v1577, %v1569
    %v1778 = vpack.c.b16 %v1578, %v1570
    %v1779 = vpack.c.b16 %v1579, %v1571
    %v1780 = vpack.c.b16 %v1580, %v1572
    %v1781 = vpack.c.b16 %v1581, %v1573
    %v1782 = vpack.c.b16 %v1582, %v1574
    %v1783 = vpack.c.b16 %v1583, %v1575
    %v1784 = vpack.c.b16 %v1584, %v1576
    %v1785 = vpack.c.b16 %v1593, %v1585
    %v1786 = vpack.c.b16 %v1594, %v1586
    %v1787 = vpack.c.b16 %v1595, %v1587
    %v1788 = vpack.c.b16 %v1596, %v1588
    %v1789 = vpack.c.b16 %v1597, %v1589
    %v1790 = vpack.c.b16 %v1598, %v1590
    %v1791 = vpack.c.b16 %v1599, %v1591
    %v1792 = vpack.c.b16 %v1600, %v1592
    %v1793 = vpack.c.b16 %v1609, %v1601
    %v1794 = vpack.c.b16 %v1610, %v1602
    %v1795 = vpack.c.b16 %v1611, %v1603
    %v1796 = vpack.c.b16 %v1612, %v1604
    %v1797 = vpack.c.b16 %v1613, %v1605
    %v1798 = vpack.c.b16 %v1614, %v1606
    %v1799 = vpack.c.b16 %v1615, %v1607
    %v1800 = vpack.c.b16 %v1616, %v1608
    %v1801 = vpack.c.b16 %v1625, %v1617
    %v1802 = vpack.c.b16 %v1626, %v1618
    %v1803 = vpack.c.b16 %v1627, %v1619
    %v1804 = vpack.c.b16 %v1628, %v1620
    %v1805 = vpack.c.b16 %v1629, %v1621
    %v1806 = vpack.c.b16 %v1630, %v1622
    %v1807 = vpack.c.b16 %v1631, %v1623
    %v1808 = vpack.c.b16 %v1632, %v1624
    %v1809 = vpack.c.b16 %v1641, %v1633
    %v1810 = vpack.c.b16 %v1642, %v1634
    %v1811 = vpack.c.b16 %v1643, %v1635
    %v1812 = vpack.c.b16 %v1644, %v1636
    %v1813 = vpack.c.b16 %v1645, %v1637
    %v1814 = vpack.c.b16 %v1646, %v1638
    %v1815 = vpack.c.b16 %v1647, %v1639
    %v1816 = vpack.c.b16 %v1648, %v1640
    %v1817 = vpack.c.b16 %v1657, %v1649
    %v1818 = vpack.c.b16 %v1658, %v1650
    %v1819 = vpack.c.b16 %v1659, %v1651
    %v1820 = vpack.c.b16 %v1660, %v1652
    %v1821 = vpack.c.b16 %v1661, %v1653
    %v1822 = vpack.c.b16 %v1662, %v1654
    %v1823 = vpack.c.b16 %v1663, %v1655
    %v1824 = vpack.c.b16 %v1664, %v1656
    %v1825 = vpack.c.b16 %v1673, %v1665
    %v1826 = vpack.c.b16 %v1674, %v1666
    %v1827 = vpack.c.b16 %v1675, %v1667
    %v1828 = vpack.c.b16 %v1676, %v1668
    %v1829 = vpack.c.b16 %v1677, %v1669
    %v1830 = vpack.c.b16 %v1678, %v1670
    %v1831 = vpack.c.b16 %v1679, %v1671
    %v1832 = vpack.c.b16 %v1680, %v1672
    %v1833 = vpack.c.b16 %v1689, %v1681
    %v1834 = vpack.c.b16 %v1690, %v1682
    %v1835 = vpack.c.b16 %v1691, %v1683
    %v1836 = vpack.c.b16 %v1692, %v1684
    %v1837 = vpack.c.b16 %v1693, %v1685
    %v1838 = vpack.c.b16 %v1694, %v1686
    %v1839 = vpack.c.b16 %v1695, %v1687
    %v1840 = vpack.c.b16 %v1696, %v1688
    %v1841 = vpack.c.b16 %v1705, %v1697
    %v1842 = vpack.c.b16 %v1706, %v1698
    %v1843 = vpack.c.b16 %v1707, %v1699
    %v1844 = vpack.c.b16 %v1708, %v1700
    %v1845 = vpack.c.b16 %v1709, %v1701
    %v1846 = vpack.c.b16 %v1710, %v1702
    %v1847 = vpack.c.b16 %v1711, %v1703
    %v1848 = vpack.c.b16 %v1712, %v1704
    %v1849 = vpack.c.b16 %v1721, %v1713
    %v1850 = vpack.c.b16 %v1722, %v1714
    %v1851 = vpack.c.b16 %v1723, %v1715
    %v1852 = vpack.c.b16 %v1724, %v1716
    %v1853 = vpack.c.b16 %v1725, %v1717
    %v1854 = vpack.c.b16 %v1726, %v1718
    %v1855 = vpack.c.b16 %v1727, %v1719
    %v1856 = vpack.c.b16 %v1728, %v1720
    %1985 = vmatprep.subr.bf16.mxu0 %v1730
    %1986 = vmatpush1.bf16.msra.mxu0 %v1729
    %1987 = vmatprep.subr.bf16.mxu0 %v1738
    %1988 = vmatpush1.bf16.msra.mxu0 %v1737
    %1989 = vmatprep.subr.bf16.mxu0 %v1746
    %1990 = vmatpush1.bf16.msra.mxu0 %v1745
    %1991 = vmatprep.subr.bf16.mxu0 %v1754
    %1992 = vmatpush1.bf16.msra.mxu0 %v1753
    %1993 = vmatprep.subr.bf16.mxu0 %v1762
    %1994 = vmatpush1.bf16.msra.mxu0 %v1761
    %1995 = vmatprep.subr.bf16.mxu0 %v1770
    %1996 = vmatpush1.bf16.msra.mxu0 %v1769
    %1997 = vmatprep.subr.bf16.mxu0 %v1778
    %1998 = vmatpush1.bf16.msra.mxu0 %v1777
    %1999 = vmatprep.subr.bf16.mxu0 %v1786
    %2000 = vmatpush1.bf16.msra.mxu0 %v1785
    %2001 = vmatprep.subr.bf16.mxu0 %v1794
    %2002 = vmatpush1.bf16.msra.mxu0 %v1793
    %2003 = vmatprep.subr.bf16.mxu0 %v1802
    %2004 = vmatpush1.bf16.msra.mxu0 %v1801
    %2005 = vmatprep.subr.bf16.mxu0 %v1810
    %2006 = vmatpush1.bf16.msra.mxu0 %v1809
    %2007 = vmatprep.subr.bf16.mxu0 %v1818
    %2008 = vmatpush1.bf16.msra.mxu0 %v1817
    %2009 = vmatprep.subr.bf16.mxu0 %v1826
    %2010 = vmatpush1.bf16.msra.mxu0 %v1825
    %2011 = vmatprep.subr.bf16.mxu0 %v1834
    %2012 = vmatpush1.bf16.msra.mxu0 %v1833
    %2013 = vmatprep.subr.bf16.mxu0 %v1842
    %2014 = vmatpush1.bf16.msra.mxu0 %v1841
    %2015 = vmatprep.subr.bf16.mxu0 %v1850
    %2016 = vmatpush1.bf16.msra.mxu0 %v1849
    %2017 = vmatprep.mubr.bf16.mxu0 %v271
    %2018 = vmatmul.mubr.bf16.gmra.mrb[0].mxu0 %v270
    %v2019 = vpop.f32.mrb[0].mxu0
    %v2020 = vadd.f32 %v1216, %v2019
    %v2021 = vpop.f32.mrb[0].mxu0
    %v2022 = vadd.f32 %v1218, %v2021
    %v2023 = vpop.f32.mrb[0].mxu0
    %v2024 = vpop.f32.mrb[0].mxu0
    %2025 = vdwg.mxu0
    %2026 = vmatprep.subr.bf16.mxu0 %v1732
    %2027 = vmatpush1.bf16.msra.mxu0 %v1731
    %2028 = vmatprep.subr.bf16.mxu0 %v1740
    %2029 = vmatpush1.bf16.msra.mxu0 %v1739
    %2030 = vmatprep.subr.bf16.mxu0 %v1748
    %2031 = vmatpush1.bf16.msra.mxu0 %v1747
    %2032 = vmatprep.subr.bf16.mxu0 %v1756
    %2033 = vmatpush1.bf16.msra.mxu0 %v1755
    %2034 = vmatprep.subr.bf16.mxu0 %v1764
    %2035 = vmatpush1.bf16.msra.mxu0 %v1763
    %2036 = vmatprep.subr.bf16.mxu0 %v1772
    %2037 = vmatpush1.bf16.msra.mxu0 %v1771
    %2038 = vmatprep.subr.bf16.mxu0 %v1780
    %2039 = vmatpush1.bf16.msra.mxu0 %v1779
    %2040 = vmatprep.subr.bf16.mxu0 %v1788
    %2041 = vmatpush1.bf16.msra.mxu0 %v1787
    %2042 = vmatprep.subr.bf16.mxu0 %v1796
    %2043 = vmatpush1.bf16.msra.mxu0 %v1795
    %2044 = vmatprep.subr.bf16.mxu0 %v1804
    %2045 = vmatpush1.bf16.msra.mxu0 %v1803
    %2046 = vmatprep.subr.bf16.mxu0 %v1812
    %2047 = vmatpush1.bf16.msra.mxu0 %v1811
    %2048 = vmatprep.subr.bf16.mxu0 %v1820
    %2049 = vmatpush1.bf16.msra.mxu0 %v1819
    %2050 = vmatprep.subr.bf16.mxu0 %v1828
    %2051 = vmatpush1.bf16.msra.mxu0 %v1827
    %2052 = vmatprep.subr.bf16.mxu0 %v1836
    %2053 = vmatpush1.bf16.msra.mxu0 %v1835
    %2054 = vmatprep.subr.bf16.mxu0 %v1844
    %2055 = vmatpush1.bf16.msra.mxu0 %v1843
    %2056 = vmatprep.subr.bf16.mxu0 %v1852
    %2057 = vmatpush1.bf16.msra.mxu0 %v1851
    %2058 = vmatprep.mubr.bf16.mxu0 %v271
    %2059 = vmatmul.mubr.bf16.gmra.mrb[0].mxu0 %v270
    %v2060 = vpop.f32.mrb[0].mxu0
    %v2061 = vadd.f32 %v1257, %v2060
    %v2062 = vpop.f32.mrb[0].mxu0
    %v2063 = vadd.f32 %v1259, %v2062
    %v2064 = vpop.f32.mrb[0].mxu0
    %v2065 = vpop.f32.mrb[0].mxu0
    %2066 = vdwg.mxu0
    %2067 = vmatprep.subr.bf16.mxu0 %v1734
    %2068 = vmatpush1.bf16.msra.mxu0 %v1733
    %2069 = vmatprep.subr.bf16.mxu0 %v1742
    %2070 = vmatpush1.bf16.msra.mxu0 %v1741
    %2071 = vmatprep.subr.bf16.mxu0 %v1750
    %2072 = vmatpush1.bf16.msra.mxu0 %v1749
    %2073 = vmatprep.subr.bf16.mxu0 %v1758
    %2074 = vmatpush1.bf16.msra.mxu0 %v1757
    %2075 = vmatprep.subr.bf16.mxu0 %v1766
    %2076 = vmatpush1.bf16.msra.mxu0 %v1765
    %2077 = vmatprep.subr.bf16.mxu0 %v1774
    %2078 = vmatpush1.bf16.msra.mxu0 %v1773
    %2079 = vmatprep.subr.bf16.mxu0 %v1782
    %2080 = vmatpush1.bf16.msra.mxu0 %v1781
    %2081 = vmatprep.subr.bf16.mxu0 %v1790
    %2082 = vmatpush1.bf16.msra.mxu0 %v1789
    %2083 = vmatprep.subr.bf16.mxu0 %v1798
    %2084 = vmatpush1.bf16.msra.mxu0 %v1797
    %2085 = vmatprep.subr.bf16.mxu0 %v1806
    %2086 = vmatpush1.bf16.msra.mxu0 %v1805
    %2087 = vmatprep.subr.bf16.mxu0 %v1814
    %2088 = vmatpush1.bf16.msra.mxu0 %v1813
    %2089 = vmatprep.subr.bf16.mxu0 %v1822
    %2090 = vmatpush1.bf16.msra.mxu0 %v1821
    %2091 = vmatprep.subr.bf16.mxu0 %v1830
    %2092 = vmatpush1.bf16.msra.mxu0 %v1829
    %2093 = vmatprep.subr.bf16.mxu0 %v1838
    %2094 = vmatpush1.bf16.msra.mxu0 %v1837
    %2095 = vmatprep.subr.bf16.mxu0 %v1846
    %2096 = vmatpush1.bf16.msra.mxu0 %v1845
    %2097 = vmatprep.subr.bf16.mxu0 %v1854
    %2098 = vmatpush1.bf16.msra.mxu0 %v1853
    %2099 = vmatprep.mubr.bf16.mxu0 %v271
    %2100 = vmatmul.mubr.bf16.gmra.mrb[0].mxu0 %v270
    %v2101 = vpop.f32.mrb[0].mxu0
    %v2102 = vadd.f32 %v1298, %v2101
    %v2103 = vpop.f32.mrb[0].mxu0
    %v2104 = vadd.f32 %v1300, %v2103
    %v2105 = vpop.f32.mrb[0].mxu0
    %v2106 = vpop.f32.mrb[0].mxu0
    %2107 = vdwg.mxu0
    %2108 = vmatprep.subr.bf16.mxu0 %v1736
    %2109 = vmatpush1.bf16.msra.mxu0 %v1735
    %2110 = vmatprep.subr.bf16.mxu0 %v1744
    %2111 = vmatpush1.bf16.msra.mxu0 %v1743
    %2112 = vmatprep.subr.bf16.mxu0 %v1752
    %2113 = vmatpush1.bf16.msra.mxu0 %v1751
    %2114 = vmatprep.subr.bf16.mxu0 %v1760
    %2115 = vmatpush1.bf16.msra.mxu0 %v1759
    %2116 = vmatprep.subr.bf16.mxu0 %v1768
    %2117 = vmatpush1.bf16.msra.mxu0 %v1767
    %2118 = vmatprep.subr.bf16.mxu0 %v1776
    %2119 = vmatpush1.bf16.msra.mxu0 %v1775
    %2120 = vmatprep.subr.bf16.mxu0 %v1784
    %2121 = vmatpush1.bf16.msra.mxu0 %v1783
    %2122 = vmatprep.subr.bf16.mxu0 %v1792
    %2123 = vmatpush1.bf16.msra.mxu0 %v1791
    %2124 = vmatprep.subr.bf16.mxu0 %v1800
    %2125 = vmatpush1.bf16.msra.mxu0 %v1799
    %2126 = vmatprep.subr.bf16.mxu0 %v1808
    %2127 = vmatpush1.bf16.msra.mxu0 %v1807
    %2128 = vmatprep.subr.bf16.mxu0 %v1816
    %2129 = vmatpush1.bf16.msra.mxu0 %v1815
    %2130 = vmatprep.subr.bf16.mxu0 %v1824
    %2131 = vmatpush1.bf16.msra.mxu0 %v1823
    %2132 = vmatprep.subr.bf16.mxu0 %v1832
    %2133 = vmatpush1.bf16.msra.mxu0 %v1831
    %2134 = vmatprep.subr.bf16.mxu0 %v1840
    %2135 = vmatpush1.bf16.msra.mxu0 %v1839
    %2136 = vmatprep.subr.bf16.mxu0 %v1848
    %2137 = vmatpush1.bf16.msra.mxu0 %v1847
    %2138 = vmatprep.subr.bf16.mxu0 %v1856
    %2139 = vmatpush1.bf16.msra.mxu0 %v1855
    %2140 = vmatprep.mubr.bf16.mxu0 %v271
    %2141 = vmatmul.mubr.bf16.gmra.mrb[0].mxu0 %v270
    %v2142 = vpop.f32.mrb[0].mxu0
    %v2143 = vadd.f32 %v1339, %v2142
    %v2144 = vpop.f32.mrb[0].mxu0
    %v2145 = vadd.f32 %v1341, %v2144
    %v2146 = vpop.f32.mrb[0].mxu0
    %v2147 = vpop.f32.mrb[0].mxu0
    %2148 = vdwg.mxu0
    %v2151 = vunpack.c.l.s4 1983009808
    %v2152 = vunpack.c.0.s8 %v2151
    %v2153 = vlaneseq
    %v2154 = vshrl.u32 %v2153, 7
    %v2155 = vsub.s32 %v2152, %v2154
    %v2156 = vrot.slane %v258, %v2155
    %v2157 = vcombine.high %v2156, %v2156
    %v2160 = vpack.c.bf16 %v2156, %v2156
    %v2161 = vpack.c.bf16 %v2157, %v2157
    %v2162 = vld [vmem:[#allocation3 + $0x800] sm:$0xff]
    %v2163 = vld [vmem:[#allocation3 + $0x808] sm:$0xff]
    %v2164 = vld [vmem:[#allocation3 + $0x810] sm:$0xff]
    %v2165 = vld [vmem:[#allocation3 + $0x818] sm:$0xff]
    %v2166 = vld [vmem:[#allocation3 + $0x820] sm:$0xff]
    %v2167 = vld [vmem:[#allocation3 + $0x828] sm:$0xff]
    %v2168 = vld [vmem:[#allocation3 + $0x830] sm:$0xff]
    %v2169 = vld [vmem:[#allocation3 + $0x838] sm:$0xff]
    %v2170 = vld [vmem:[#allocation3 + $0x840] sm:$0xff]
    %v2171 = vld [vmem:[#allocation3 + $0x848] sm:$0xff]
    %v2172 = vld [vmem:[#allocation3 + $0x850] sm:$0xff]
    %v2173 = vld [vmem:[#allocation3 + $0x858] sm:$0xff]
    %v2174 = vld [vmem:[#allocation3 + $0x860] sm:$0xff]
    %v2175 = vld [vmem:[#allocation3 + $0x868] sm:$0xff]
    %v2176 = vld [vmem:[#allocation3 + $0x870] sm:$0xff]
    %v2177 = vld [vmem:[#allocation3 + $0x878] sm:$0xff]
    %v2178 = vld [vmem:[#allocation3 + $0x880] sm:$0xff]
    %v2179 = vld [vmem:[#allocation3 + $0x888] sm:$0xff]
    %v2180 = vld [vmem:[#allocation3 + $0x890] sm:$0xff]
    %v2181 = vld [vmem:[#allocation3 + $0x898] sm:$0xff]
    %v2182 = vld [vmem:[#allocation3 + $0x8a0] sm:$0xff]
    %v2183 = vld [vmem:[#allocation3 + $0x8a8] sm:$0xff]
    %v2184 = vld [vmem:[#allocation3 + $0x8b0] sm:$0xff]
    %v2185 = vld [vmem:[#allocation3 + $0x8b8] sm:$0xff]
    %v2186 = vld [vmem:[#allocation3 + $0x8c0] sm:$0xff]
    %v2187 = vld [vmem:[#allocation3 + $0x8c8] sm:$0xff]
    %v2188 = vld [vmem:[#allocation3 + $0x8d0] sm:$0xff]
    %v2189 = vld [vmem:[#allocation3 + $0x8d8] sm:$0xff]
    %v2190 = vld [vmem:[#allocation3 + $0x8e0] sm:$0xff]
    %v2191 = vld [vmem:[#allocation3 + $0x8e8] sm:$0xff]
    %v2192 = vld [vmem:[#allocation3 + $0x8f0] sm:$0xff]
    %v2193 = vld [vmem:[#allocation3 + $0x8f8] sm:$0xff]
    %v2194 = vld [vmem:[#allocation3 + $0x900] sm:$0xff]
    %v2195 = vld [vmem:[#allocation3 + $0x908] sm:$0xff]
    %v2196 = vld [vmem:[#allocation3 + $0x910] sm:$0xff]
    %v2197 = vld [vmem:[#allocation3 + $0x918] sm:$0xff]
    %v2198 = vld [vmem:[#allocation3 + $0x920] sm:$0xff]
    %v2199 = vld [vmem:[#allocation3 + $0x928] sm:$0xff]
    %v2200 = vld [vmem:[#allocation3 + $0x930] sm:$0xff]
    %v2201 = vld [vmem:[#allocation3 + $0x938] sm:$0xff]
    %v2202 = vld [vmem:[#allocation3 + $0x940] sm:$0xff]
    %v2203 = vld [vmem:[#allocation3 + $0x948] sm:$0xff]
    %v2204 = vld [vmem:[#allocation3 + $0x950] sm:$0xff]
    %v2205 = vld [vmem:[#allocation3 + $0x958] sm:$0xff]
    %v2206 = vld [vmem:[#allocation3 + $0x960] sm:$0xff]
    %v2207 = vld [vmem:[#allocation3 + $0x968] sm:$0xff]
    %v2208 = vld [vmem:[#allocation3 + $0x970] sm:$0xff]
    %v2209 = vld [vmem:[#allocation3 + $0x978] sm:$0xff]
    %v2210 = vld [vmem:[#allocation3 + $0x980] sm:$0xff]
    %v2211 = vld [vmem:[#allocation3 + $0x988] sm:$0xff]
    %v2212 = vld [vmem:[#allocation3 + $0x990] sm:$0xff]
    %v2213 = vld [vmem:[#allocation3 + $0x998] sm:$0xff]
    %v2214 = vld [vmem:[#allocation3 + $0x9a0] sm:$0xff]
    %v2215 = vld [vmem:[#allocation3 + $0x9a8] sm:$0xff]
    %v2216 = vld [vmem:[#allocation3 + $0x9b0] sm:$0xff]
    %v2217 = vld [vmem:[#allocation3 + $0x9b8] sm:$0xff]
    %v2218 = vld [vmem:[#allocation3 + $0x9c0] sm:$0xff]
    %v2219 = vld [vmem:[#allocation3 + $0x9c8] sm:$0xff]
    %v2220 = vld [vmem:[#allocation3 + $0x9d0] sm:$0xff]
    %v2221 = vld [vmem:[#allocation3 + $0x9d8] sm:$0xff]
    %v2222 = vld [vmem:[#allocation3 + $0x9e0] sm:$0xff]
    %v2223 = vld [vmem:[#allocation3 + $0x9e8] sm:$0xff]
    %v2224 = vld [vmem:[#allocation3 + $0x9f0] sm:$0xff]
    %v2225 = vld [vmem:[#allocation3 + $0x9f8] sm:$0xff]
    %v2226 = vld [vmem:[#allocation3 + $0xa00] sm:$0xff]
    %v2227 = vld [vmem:[#allocation3 + $0xa08] sm:$0xff]
    %v2228 = vld [vmem:[#allocation3 + $0xa10] sm:$0xff]
    %v2229 = vld [vmem:[#allocation3 + $0xa18] sm:$0xff]
    %v2230 = vld [vmem:[#allocation3 + $0xa20] sm:$0xff]
    %v2231 = vld [vmem:[#allocation3 + $0xa28] sm:$0xff]
    %v2232 = vld [vmem:[#allocation3 + $0xa30] sm:$0xff]
    %v2233 = vld [vmem:[#allocation3 + $0xa38] sm:$0xff]
    %v2234 = vld [vmem:[#allocation3 + $0xa40] sm:$0xff]
    %v2235 = vld [vmem:[#allocation3 + $0xa48] sm:$0xff]
    %v2236 = vld [vmem:[#allocation3 + $0xa50] sm:$0xff]
    %v2237 = vld [vmem:[#allocation3 + $0xa58] sm:$0xff]
    %v2238 = vld [vmem:[#allocation3 + $0xa60] sm:$0xff]
    %v2239 = vld [vmem:[#allocation3 + $0xa68] sm:$0xff]
    %v2240 = vld [vmem:[#allocation3 + $0xa70] sm:$0xff]
    %v2241 = vld [vmem:[#allocation3 + $0xa78] sm:$0xff]
    %v2242 = vld [vmem:[#allocation3 + $0xa80] sm:$0xff]
    %v2243 = vld [vmem:[#allocation3 + $0xa88] sm:$0xff]
    %v2244 = vld [vmem:[#allocation3 + $0xa90] sm:$0xff]
    %v2245 = vld [vmem:[#allocation3 + $0xa98] sm:$0xff]
    %v2246 = vld [vmem:[#allocation3 + $0xaa0] sm:$0xff]
    %v2247 = vld [vmem:[#allocation3 + $0xaa8] sm:$0xff]
    %v2248 = vld [vmem:[#allocation3 + $0xab0] sm:$0xff]
    %v2249 = vld [vmem:[#allocation3 + $0xab8] sm:$0xff]
    %v2250 = vld [vmem:[#allocation3 + $0xac0] sm:$0xff]
    %v2251 = vld [vmem:[#allocation3 + $0xac8] sm:$0xff]
    %v2252 = vld [vmem:[#allocation3 + $0xad0] sm:$0xff]
    %v2253 = vld [vmem:[#allocation3 + $0xad8] sm:$0xff]
    %v2254 = vld [vmem:[#allocation3 + $0xae0] sm:$0xff]
    %v2255 = vld [vmem:[#allocation3 + $0xae8] sm:$0xff]
    %v2256 = vld [vmem:[#allocation3 + $0xaf0] sm:$0xff]
    %v2257 = vld [vmem:[#allocation3 + $0xaf8] sm:$0xff]
    %v2258 = vld [vmem:[#allocation3 + $0xb00] sm:$0xff]
    %v2259 = vld [vmem:[#allocation3 + $0xb08] sm:$0xff]
    %v2260 = vld [vmem:[#allocation3 + $0xb10] sm:$0xff]
    %v2261 = vld [vmem:[#allocation3 + $0xb18] sm:$0xff]
    %v2262 = vld [vmem:[#allocation3 + $0xb20] sm:$0xff]
    %v2263 = vld [vmem:[#allocation3 + $0xb28] sm:$0xff]
    %v2264 = vld [vmem:[#allocation3 + $0xb30] sm:$0xff]
    %v2265 = vld [vmem:[#allocation3 + $0xb38] sm:$0xff]
    %v2266 = vld [vmem:[#allocation3 + $0xb40] sm:$0xff]
    %v2267 = vld [vmem:[#allocation3 + $0xb48] sm:$0xff]
    %v2268 = vld [vmem:[#allocation3 + $0xb50] sm:$0xff]
    %v2269 = vld [vmem:[#allocation3 + $0xb58] sm:$0xff]
    %v2270 = vld [vmem:[#allocation3 + $0xb60] sm:$0xff]
    %v2271 = vld [vmem:[#allocation3 + $0xb68] sm:$0xff]
    %v2272 = vld [vmem:[#allocation3 + $0xb70] sm:$0xff]
    %v2273 = vld [vmem:[#allocation3 + $0xb78] sm:$0xff]
    %v2274 = vld [vmem:[#allocation3 + $0xb80] sm:$0xff]
    %v2275 = vld [vmem:[#allocation3 + $0xb88] sm:$0xff]
    %v2276 = vld [vmem:[#allocation3 + $0xb90] sm:$0xff]
    %v2277 = vld [vmem:[#allocation3 + $0xb98] sm:$0xff]
    %v2278 = vld [vmem:[#allocation3 + $0xba0] sm:$0xff]
    %v2279 = vld [vmem:[#allocation3 + $0xba8] sm:$0xff]
    %v2280 = vld [vmem:[#allocation3 + $0xbb0] sm:$0xff]
    %v2281 = vld [vmem:[#allocation3 + $0xbb8] sm:$0xff]
    %v2282 = vld [vmem:[#allocation3 + $0xbc0] sm:$0xff]
    %v2283 = vld [vmem:[#allocation3 + $0xbc8] sm:$0xff]
    %v2284 = vld [vmem:[#allocation3 + $0xbd0] sm:$0xff]
    %v2285 = vld [vmem:[#allocation3 + $0xbd8] sm:$0xff]
    %v2286 = vld [vmem:[#allocation3 + $0xbe0] sm:$0xff]
    %v2287 = vld [vmem:[#allocation3 + $0xbe8] sm:$0xff]
    %v2288 = vld [vmem:[#allocation3 + $0xbf0] sm:$0xff]
    %v2289 = vld [vmem:[#allocation3 + $0xbf8] sm:$0xff]
    %v2418 = vunpack.c.l.b16 %v2162
    %v2419 = vunpack.c.h.b16 %v2162
    %v2420 = vunpack.c.l.b16 %v2163
    %v2421 = vunpack.c.h.b16 %v2163
    %v2422 = vunpack.c.l.b16 %v2164
    %v2423 = vunpack.c.h.b16 %v2164
    %v2424 = vunpack.c.l.b16 %v2165
    %v2425 = vunpack.c.h.b16 %v2165
    %v2426 = vunpack.c.l.b16 %v2166
    %v2427 = vunpack.c.h.b16 %v2166
    %v2428 = vunpack.c.l.b16 %v2167
    %v2429 = vunpack.c.h.b16 %v2167
    %v2430 = vunpack.c.l.b16 %v2168
    %v2431 = vunpack.c.h.b16 %v2168
    %v2432 = vunpack.c.l.b16 %v2169
    %v2433 = vunpack.c.h.b16 %v2169
    %v2434 = vunpack.c.l.b16 %v2170
    %v2435 = vunpack.c.h.b16 %v2170
    %v2436 = vunpack.c.l.b16 %v2171
    %v2437 = vunpack.c.h.b16 %v2171
    %v2438 = vunpack.c.l.b16 %v2172
    %v2439 = vunpack.c.h.b16 %v2172
    %v2440 = vunpack.c.l.b16 %v2173
    %v2441 = vunpack.c.h.b16 %v2173
    %v2442 = vunpack.c.l.b16 %v2174
    %v2443 = vunpack.c.h.b16 %v2174
    %v2444 = vunpack.c.l.b16 %v2175
    %v2445 = vunpack.c.h.b16 %v2175
    %v2446 = vunpack.c.l.b16 %v2176
    %v2447 = vunpack.c.h.b16 %v2176
    %v2448 = vunpack.c.l.b16 %v2177
    %v2449 = vunpack.c.h.b16 %v2177
    %v2450 = vunpack.c.l.b16 %v2178
    %v2451 = vunpack.c.h.b16 %v2178
    %v2452 = vunpack.c.l.b16 %v2179
    %v2453 = vunpack.c.h.b16 %v2179
    %v2454 = vunpack.c.l.b16 %v2180
    %v2455 = vunpack.c.h.b16 %v2180
    %v2456 = vunpack.c.l.b16 %v2181
    %v2457 = vunpack.c.h.b16 %v2181
    %v2458 = vunpack.c.l.b16 %v2182
    %v2459 = vunpack.c.h.b16 %v2182
    %v2460 = vunpack.c.l.b16 %v2183
    %v2461 = vunpack.c.h.b16 %v2183
    %v2462 = vunpack.c.l.b16 %v2184
    %v2463 = vunpack.c.h.b16 %v2184
    %v2464 = vunpack.c.l.b16 %v2185
    %v2465 = vunpack.c.h.b16 %v2185
    %v2466 = vunpack.c.l.b16 %v2186
    %v2467 = vunpack.c.h.b16 %v2186
    %v2468 = vunpack.c.l.b16 %v2187
    %v2469 = vunpack.c.h.b16 %v2187
    %v2470 = vunpack.c.l.b16 %v2188
    %v2471 = vunpack.c.h.b16 %v2188
    %v2472 = vunpack.c.l.b16 %v2189
    %v2473 = vunpack.c.h.b16 %v2189
    %v2474 = vunpack.c.l.b16 %v2190
    %v2475 = vunpack.c.h.b16 %v2190
    %v2476 = vunpack.c.l.b16 %v2191
    %v2477 = vunpack.c.h.b16 %v2191
    %v2478 = vunpack.c.l.b16 %v2192
    %v2479 = vunpack.c.h.b16 %v2192
    %v2480 = vunpack.c.l.b16 %v2193
    %v2481 = vunpack.c.h.b16 %v2193
    %v2482 = vunpack.c.l.b16 %v2194
    %v2483 = vunpack.c.h.b16 %v2194
    %v2484 = vunpack.c.l.b16 %v2195
    %v2485 = vunpack.c.h.b16 %v2195
    %v2486 = vunpack.c.l.b16 %v2196
    %v2487 = vunpack.c.h.b16 %v2196
    %v2488 = vunpack.c.l.b16 %v2197
    %v2489 = vunpack.c.h.b16 %v2197
    %v2490 = vunpack.c.l.b16 %v2198
    %v2491 = vunpack.c.h.b16 %v2198
    %v2492 = vunpack.c.l.b16 %v2199
    %v2493 = vunpack.c.h.b16 %v2199
    %v2494 = vunpack.c.l.b16 %v2200
    %v2495 = vunpack.c.h.b16 %v2200
    %v2496 = vunpack.c.l.b16 %v2201
    %v2497 = vunpack.c.h.b16 %v2201
    %v2498 = vunpack.c.l.b16 %v2202
    %v2499 = vunpack.c.h.b16 %v2202
    %v2500 = vunpack.c.l.b16 %v2203
    %v2501 = vunpack.c.h.b16 %v2203
    %v2502 = vunpack.c.l.b16 %v2204
    %v2503 = vunpack.c.h.b16 %v2204
    %v2504 = vunpack.c.l.b16 %v2205
    %v2505 = vunpack.c.h.b16 %v2205
    %v2506 = vunpack.c.l.b16 %v2206
    %v2507 = vunpack.c.h.b16 %v2206
    %v2508 = vunpack.c.l.b16 %v2207
    %v2509 = vunpack.c.h.b16 %v2207
    %v2510 = vunpack.c.l.b16 %v2208
    %v2511 = vunpack.c.h.b16 %v2208
    %v2512 = vunpack.c.l.b16 %v2209
    %v2513 = vunpack.c.h.b16 %v2209
    %v2514 = vunpack.c.l.b16 %v2210
    %v2515 = vunpack.c.h.b16 %v2210
    %v2516 = vunpack.c.l.b16 %v2211
    %v2517 = vunpack.c.h.b16 %v2211
    %v2518 = vunpack.c.l.b16 %v2212
    %v2519 = vunpack.c.h.b16 %v2212
    %v2520 = vunpack.c.l.b16 %v2213
    %v2521 = vunpack.c.h.b16 %v2213
    %v2522 = vunpack.c.l.b16 %v2214
    %v2523 = vunpack.c.h.b16 %v2214
    %v2524 = vunpack.c.l.b16 %v2215
    %v2525 = vunpack.c.h.b16 %v2215
    %v2526 = vunpack.c.l.b16 %v2216
    %v2527 = vunpack.c.h.b16 %v2216
    %v2528 = vunpack.c.l.b16 %v2217
    %v2529 = vunpack.c.h.b16 %v2217
    %v2530 = vunpack.c.l.b16 %v2218
    %v2531 = vunpack.c.h.b16 %v2218
    %v2532 = vunpack.c.l.b16 %v2219
    %v2533 = vunpack.c.h.b16 %v2219
    %v2534 = vunpack.c.l.b16 %v2220
    %v2535 = vunpack.c.h.b16 %v2220
    %v2536 = vunpack.c.l.b16 %v2221
    %v2537 = vunpack.c.h.b16 %v2221
    %v2538 = vunpack.c.l.b16 %v2222
    %v2539 = vunpack.c.h.b16 %v2222
    %v2540 = vunpack.c.l.b16 %v2223
    %v2541 = vunpack.c.h.b16 %v2223
    %v2542 = vunpack.c.l.b16 %v2224
    %v2543 = vunpack.c.h.b16 %v2224
    %v2544 = vunpack.c.l.b16 %v2225
    %v2545 = vunpack.c.h.b16 %v2225
    %v2546 = vunpack.c.l.b16 %v2226
    %v2547 = vunpack.c.h.b16 %v2226
    %v2548 = vunpack.c.l.b16 %v2227
    %v2549 = vunpack.c.h.b16 %v2227
    %v2550 = vunpack.c.l.b16 %v2228
    %v2551 = vunpack.c.h.b16 %v2228
    %v2552 = vunpack.c.l.b16 %v2229
    %v2553 = vunpack.c.h.b16 %v2229
    %v2554 = vunpack.c.l.b16 %v2230
    %v2555 = vunpack.c.h.b16 %v2230
    %v2556 = vunpack.c.l.b16 %v2231
    %v2557 = vunpack.c.h.b16 %v2231
    %v2558 = vunpack.c.l.b16 %v2232
    %v2559 = vunpack.c.h.b16 %v2232
    %v2560 = vunpack.c.l.b16 %v2233
    %v2561 = vunpack.c.h.b16 %v2233
    %v2562 = vunpack.c.l.b16 %v2234
    %v2563 = vunpack.c.h.b16 %v2234
    %v2564 = vunpack.c.l.b16 %v2235
    %v2565 = vunpack.c.h.b16 %v2235
    %v2566 = vunpack.c.l.b16 %v2236
    %v2567 = vunpack.c.h.b16 %v2236
    %v2568 = vunpack.c.l.b16 %v2237
    %v2569 = vunpack.c.h.b16 %v2237
    %v2570 = vunpack.c.l.b16 %v2238
    %v2571 = vunpack.c.h.b16 %v2238
    %v2572 = vunpack.c.l.b16 %v2239
    %v2573 = vunpack.c.h.b16 %v2239
    %v2574 = vunpack.c.l.b16 %v2240
    %v2575 = vunpack.c.h.b16 %v2240
    %v2576 = vunpack.c.l.b16 %v2241
    %v2577 = vunpack.c.h.b16 %v2241
    %v2578 = vunpack.c.l.b16 %v2242
    %v2579 = vunpack.c.h.b16 %v2242
    %v2580 = vunpack.c.l.b16 %v2243
    %v2581 = vunpack.c.h.b16 %v2243
    %v2582 = vunpack.c.l.b16 %v2244
    %v2583 = vunpack.c.h.b16 %v2244
    %v2584 = vunpack.c.l.b16 %v2245
    %v2585 = vunpack.c.h.b16 %v2245
    %v2586 = vunpack.c.l.b16 %v2246
    %v2587 = vunpack.c.h.b16 %v2246
    %v2588 = vunpack.c.l.b16 %v2247
    %v2589 = vunpack.c.h.b16 %v2247
    %v2590 = vunpack.c.l.b16 %v2248
    %v2591 = vunpack.c.h.b16 %v2248
    %v2592 = vunpack.c.l.b16 %v2249
    %v2593 = vunpack.c.h.b16 %v2249
    %v2594 = vunpack.c.l.b16 %v2250
    %v2595 = vunpack.c.h.b16 %v2250
    %v2596 = vunpack.c.l.b16 %v2251
    %v2597 = vunpack.c.h.b16 %v2251
    %v2598 = vunpack.c.l.b16 %v2252
    %v2599 = vunpack.c.h.b16 %v2252
    %v2600 = vunpack.c.l.b16 %v2253
    %v2601 = vunpack.c.h.b16 %v2253
    %v2602 = vunpack.c.l.b16 %v2254
    %v2603 = vunpack.c.h.b16 %v2254
    %v2604 = vunpack.c.l.b16 %v2255
    %v2605 = vunpack.c.h.b16 %v2255
    %v2606 = vunpack.c.l.b16 %v2256
    %v2607 = vunpack.c.h.b16 %v2256
    %v2608 = vunpack.c.l.b16 %v2257
    %v2609 = vunpack.c.h.b16 %v2257
    %v2610 = vunpack.c.l.b16 %v2258
    %v2611 = vunpack.c.h.b16 %v2258
    %v2612 = vunpack.c.l.b16 %v2259
    %v2613 = vunpack.c.h.b16 %v2259
    %v2614 = vunpack.c.l.b16 %v2260
    %v2615 = vunpack.c.h.b16 %v2260
    %v2616 = vunpack.c.l.b16 %v2261
    %v2617 = vunpack.c.h.b16 %v2261
    %v2618 = vunpack.c.l.b16 %v2262
    %v2619 = vunpack.c.h.b16 %v2262
    %v2620 = vunpack.c.l.b16 %v2263
    %v2621 = vunpack.c.h.b16 %v2263
    %v2622 = vunpack.c.l.b16 %v2264
    %v2623 = vunpack.c.h.b16 %v2264
    %v2624 = vunpack.c.l.b16 %v2265
    %v2625 = vunpack.c.h.b16 %v2265
    %v2626 = vunpack.c.l.b16 %v2266
    %v2627 = vunpack.c.h.b16 %v2266
    %v2628 = vunpack.c.l.b16 %v2267
    %v2629 = vunpack.c.h.b16 %v2267
    %v2630 = vunpack.c.l.b16 %v2268
    %v2631 = vunpack.c.h.b16 %v2268
    %v2632 = vunpack.c.l.b16 %v2269
    %v2633 = vunpack.c.h.b16 %v2269
    %v2634 = vunpack.c.l.b16 %v2270
    %v2635 = vunpack.c.h.b16 %v2270
    %v2636 = vunpack.c.l.b16 %v2271
    %v2637 = vunpack.c.h.b16 %v2271
    %v2638 = vunpack.c.l.b16 %v2272
    %v2639 = vunpack.c.h.b16 %v2272
    %v2640 = vunpack.c.l.b16 %v2273
    %v2641 = vunpack.c.h.b16 %v2273
    %v2642 = vunpack.c.l.b16 %v2274
    %v2643 = vunpack.c.h.b16 %v2274
    %v2644 = vunpack.c.l.b16 %v2275
    %v2645 = vunpack.c.h.b16 %v2275
    %v2646 = vunpack.c.l.b16 %v2276
    %v2647 = vunpack.c.h.b16 %v2276
    %v2648 = vunpack.c.l.b16 %v2277
    %v2649 = vunpack.c.h.b16 %v2277
    %v2650 = vunpack.c.l.b16 %v2278
    %v2651 = vunpack.c.h.b16 %v2278
    %v2652 = vunpack.c.l.b16 %v2279
    %v2653 = vunpack.c.h.b16 %v2279
    %v2654 = vunpack.c.l.b16 %v2280
    %v2655 = vunpack.c.h.b16 %v2280
    %v2656 = vunpack.c.l.b16 %v2281
    %v2657 = vunpack.c.h.b16 %v2281
    %v2658 = vunpack.c.l.b16 %v2282
    %v2659 = vunpack.c.h.b16 %v2282
    %v2660 = vunpack.c.l.b16 %v2283
    %v2661 = vunpack.c.h.b16 %v2283
    %v2662 = vunpack.c.l.b16 %v2284
    %v2663 = vunpack.c.h.b16 %v2284
    %v2664 = vunpack.c.l.b16 %v2285
    %v2665 = vunpack.c.h.b16 %v2285
    %v2666 = vunpack.c.l.b16 %v2286
    %v2667 = vunpack.c.h.b16 %v2286
    %v2668 = vunpack.c.l.b16 %v2287
    %v2669 = vunpack.c.h.b16 %v2287
    %v2670 = vunpack.c.l.b16 %v2288
    %v2671 = vunpack.c.h.b16 %v2288
    %v2672 = vunpack.c.l.b16 %v2289
    %v2673 = vunpack.c.h.b16 %v2289
    %v2674 = vpack.c.b16 %v2426, %v2418
    %v2675 = vpack.c.b16 %v2427, %v2419
    %v2676 = vpack.c.b16 %v2428, %v2420
    %v2677 = vpack.c.b16 %v2429, %v2421
    %v2678 = vpack.c.b16 %v2430, %v2422
    %v2679 = vpack.c.b16 %v2431, %v2423
    %v2680 = vpack.c.b16 %v2432, %v2424
    %v2681 = vpack.c.b16 %v2433, %v2425
    %v2682 = vpack.c.b16 %v2442, %v2434
    %v2683 = vpack.c.b16 %v2443, %v2435
    %v2684 = vpack.c.b16 %v2444, %v2436
    %v2685 = vpack.c.b16 %v2445, %v2437
    %v2686 = vpack.c.b16 %v2446, %v2438
    %v2687 = vpack.c.b16 %v2447, %v2439
    %v2688 = vpack.c.b16 %v2448, %v2440
    %v2689 = vpack.c.b16 %v2449, %v2441
    %v2690 = vpack.c.b16 %v2458, %v2450
    %v2691 = vpack.c.b16 %v2459, %v2451
    %v2692 = vpack.c.b16 %v2460, %v2452
    %v2693 = vpack.c.b16 %v2461, %v2453
    %v2694 = vpack.c.b16 %v2462, %v2454
    %v2695 = vpack.c.b16 %v2463, %v2455
    %v2696 = vpack.c.b16 %v2464, %v2456
    %v2697 = vpack.c.b16 %v2465, %v2457
    %v2698 = vpack.c.b16 %v2474, %v2466
    %v2699 = vpack.c.b16 %v2475, %v2467
    %v2700 = vpack.c.b16 %v2476, %v2468
    %v2701 = vpack.c.b16 %v2477, %v2469
    %v2702 = vpack.c.b16 %v2478, %v2470
    %v2703 = vpack.c.b16 %v2479, %v2471
    %v2704 = vpack.c.b16 %v2480, %v2472
    %v2705 = vpack.c.b16 %v2481, %v2473
    %v2706 = vpack.c.b16 %v2490, %v2482
    %v2707 = vpack.c.b16 %v2491, %v2483
    %v2708 = vpack.c.b16 %v2492, %v2484
    %v2709 = vpack.c.b16 %v2493, %v2485
    %v2710 = vpack.c.b16 %v2494, %v2486
    %v2711 = vpack.c.b16 %v2495, %v2487
    %v2712 = vpack.c.b16 %v2496, %v2488
    %v2713 = vpack.c.b16 %v2497, %v2489
    %v2714 = vpack.c.b16 %v2506, %v2498
    %v2715 = vpack.c.b16 %v2507, %v2499
    %v2716 = vpack.c.b16 %v2508, %v2500
    %v2717 = vpack.c.b16 %v2509, %v2501
    %v2718 = vpack.c.b16 %v2510, %v2502
    %v2719 = vpack.c.b16 %v2511, %v2503
    %v2720 = vpack.c.b16 %v2512, %v2504
    %v2721 = vpack.c.b16 %v2513, %v2505
    %v2722 = vpack.c.b16 %v2522, %v2514
    %v2723 = vpack.c.b16 %v2523, %v2515
    %v2724 = vpack.c.b16 %v2524, %v2516
    %v2725 = vpack.c.b16 %v2525, %v2517
    %v2726 = vpack.c.b16 %v2526, %v2518
    %v2727 = vpack.c.b16 %v2527, %v2519
    %v2728 = vpack.c.b16 %v2528, %v2520
    %v2729 = vpack.c.b16 %v2529, %v2521
    %v2730 = vpack.c.b16 %v2538, %v2530
    %v2731 = vpack.c.b16 %v2539, %v2531
    %v2732 = vpack.c.b16 %v2540, %v2532
    %v2733 = vpack.c.b16 %v2541, %v2533
    %v2734 = vpack.c.b16 %v2542, %v2534
    %v2735 = vpack.c.b16 %v2543, %v2535
    %v2736 = vpack.c.b16 %v2544, %v2536
    %v2737 = vpack.c.b16 %v2545, %v2537
    %v2738 = vpack.c.b16 %v2554, %v2546
    %v2739 = vpack.c.b16 %v2555, %v2547
    %v2740 = vpack.c.b16 %v2556, %v2548
    %v2741 = vpack.c.b16 %v2557, %v2549
    %v2742 = vpack.c.b16 %v2558, %v2550
    %v2743 = vpack.c.b16 %v2559, %v2551
    %v2744 = vpack.c.b16 %v2560, %v2552
    %v2745 = vpack.c.b16 %v2561, %v2553
    %v2746 = vpack.c.b16 %v2570, %v2562
    %v2747 = vpack.c.b16 %v2571, %v2563
    %v2748 = vpack.c.b16 %v2572, %v2564
    %v2749 = vpack.c.b16 %v2573, %v2565
    %v2750 = vpack.c.b16 %v2574, %v2566
    %v2751 = vpack.c.b16 %v2575, %v2567
    %v2752 = vpack.c.b16 %v2576, %v2568
    %v2753 = vpack.c.b16 %v2577, %v2569
    %v2754 = vpack.c.b16 %v2586, %v2578
    %v2755 = vpack.c.b16 %v2587, %v2579
    %v2756 = vpack.c.b16 %v2588, %v2580
    %v2757 = vpack.c.b16 %v2589, %v2581
    %v2758 = vpack.c.b16 %v2590, %v2582
    %v2759 = vpack.c.b16 %v2591, %v2583
    %v2760 = vpack.c.b16 %v2592, %v2584
    %v2761 = vpack.c.b16 %v2593, %v2585
    %v2762 = vpack.c.b16 %v2602, %v2594
    %v2763 = vpack.c.b16 %v2603, %v2595
    %v2764 = vpack.c.b16 %v2604, %v2596
    %v2765 = vpack.c.b16 %v2605, %v2597
    %v2766 = vpack.c.b16 %v2606, %v2598
    %v2767 = vpack.c.b16 %v2607, %v2599
    %v2768 = vpack.c.b16 %v2608, %v2600
    %v2769 = vpack.c.b16 %v2609, %v2601
    %v2770 = vpack.c.b16 %v2618, %v2610
    %v2771 = vpack.c.b16 %v2619, %v2611
    %v2772 = vpack.c.b16 %v2620, %v2612
    %v2773 = vpack.c.b16 %v2621, %v2613
    %v2774 = vpack.c.b16 %v2622, %v2614
    %v2775 = vpack.c.b16 %v2623, %v2615
    %v2776 = vpack.c.b16 %v2624, %v2616
    %v2777 = vpack.c.b16 %v2625, %v2617
    %v2778 = vpack.c.b16 %v2634, %v2626
    %v2779 = vpack.c.b16 %v2635, %v2627
    %v2780 = vpack.c.b16 %v2636, %v2628
    %v2781 = vpack.c.b16 %v2637, %v2629
    %v2782 = vpack.c.b16 %v2638, %v2630
    %v2783 = vpack.c.b16 %v2639, %v2631
    %v2784 = vpack.c.b16 %v2640, %v2632
    %v2785 = vpack.c.b16 %v2641, %v2633
    %v2786 = vpack.c.b16 %v2650, %v2642
    %v2787 = vpack.c.b16 %v2651, %v2643
    %v2788 = vpack.c.b16 %v2652, %v2644
    %v2789 = vpack.c.b16 %v2653, %v2645
    %v2790 = vpack.c.b16 %v2654, %v2646
    %v2791 = vpack.c.b16 %v2655, %v2647
    %v2792 = vpack.c.b16 %v2656, %v2648
    %v2793 = vpack.c.b16 %v2657, %v2649
    %v2794 = vpack.c.b16 %v2666, %v2658
    %v2795 = vpack.c.b16 %v2667, %v2659
    %v2796 = vpack.c.b16 %v2668, %v2660
    %v2797 = vpack.c.b16 %v2669, %v2661
    %v2798 = vpack.c.b16 %v2670, %v2662
    %v2799 = vpack.c.b16 %v2671, %v2663
    %v2800 = vpack.c.b16 %v2672, %v2664
    %v2801 = vpack.c.b16 %v2673, %v2665
    %2930 = vmatprep.subr.bf16.mxu0 %v2675
    %2931 = vmatpush1.bf16.msra.mxu0 %v2674
    %2932 = vmatprep.subr.bf16.mxu0 %v2683
    %2933 = vmatpush1.bf16.msra.mxu0 %v2682
    %2934 = vmatprep.subr.bf16.mxu0 %v2691
    %2935 = vmatpush1.bf16.msra.mxu0 %v2690
    %2936 = vmatprep.subr.bf16.mxu0 %v2699
    %2937 = vmatpush1.bf16.msra.mxu0 %v2698
    %2938 = vmatprep.subr.bf16.mxu0 %v2707
    %2939 = vmatpush1.bf16.msra.mxu0 %v2706
    %2940 = vmatprep.subr.bf16.mxu0 %v2715
    %2941 = vmatpush1.bf16.msra.mxu0 %v2714
    %2942 = vmatprep.subr.bf16.mxu0 %v2723
    %2943 = vmatpush1.bf16.msra.mxu0 %v2722
    %2944 = vmatprep.subr.bf16.mxu0 %v2731
    %2945 = vmatpush1.bf16.msra.mxu0 %v2730
    %2946 = vmatprep.subr.bf16.mxu0 %v2739
    %2947 = vmatpush1.bf16.msra.mxu0 %v2738
    %2948 = vmatprep.subr.bf16.mxu0 %v2747
    %2949 = vmatpush1.bf16.msra.mxu0 %v2746
    %2950 = vmatprep.subr.bf16.mxu0 %v2755
    %2951 = vmatpush1.bf16.msra.mxu0 %v2754
    %2952 = vmatprep.subr.bf16.mxu0 %v2763
    %2953 = vmatpush1.bf16.msra.mxu0 %v2762
    %2954 = vmatprep.subr.bf16.mxu0 %v2771
    %2955 = vmatpush1.bf16.msra.mxu0 %v2770
    %2956 = vmatprep.subr.bf16.mxu0 %v2779
    %2957 = vmatpush1.bf16.msra.mxu0 %v2778
    %2958 = vmatprep.subr.bf16.mxu0 %v2787
    %2959 = vmatpush1.bf16.msra.mxu0 %v2786
    %2960 = vmatprep.subr.bf16.mxu0 %v2795
    %2961 = vmatpush1.bf16.msra.mxu0 %v2794
    %2962 = vmatprep.mubr.bf16.mxu0 %v2161
    %2963 = vmatmul.mubr.bf16.gmra.mrb[0].mxu0 %v2160
    %v2964 = vpop.f32.mrb[0].mxu0
    %v2965 = vadd.f32 0.0, %v2964
    %v2966 = vpop.f32.mrb[0].mxu0
    %v2967 = vadd.f32 0.0, %v2966
    %v2968 = vpop.f32.mrb[0].mxu0
    %v2969 = vpop.f32.mrb[0].mxu0
    %2970 = vdwg.mxu0
    %2971 = vmatprep.subr.bf16.mxu0 %v2677
    %2972 = vmatpush1.bf16.msra.mxu0 %v2676
    %2973 = vmatprep.subr.bf16.mxu0 %v2685
    %2974 = vmatpush1.bf16.msra.mxu0 %v2684
    %2975 = vmatprep.subr.bf16.mxu0 %v2693
    %2976 = vmatpush1.bf16.msra.mxu0 %v2692
    %2977 = vmatprep.subr.bf16.mxu0 %v2701
    %2978 = vmatpush1.bf16.msra.mxu0 %v2700
    %2979 = vmatprep.subr.bf16.mxu0 %v2709
    %2980 = vmatpush1.bf16.msra.mxu0 %v2708
    %2981 = vmatprep.subr.bf16.mxu0 %v2717
    %2982 = vmatpush1.bf16.msra.mxu0 %v2716
    %2983 = vmatprep.subr.bf16.mxu0 %v2725
    %2984 = vmatpush1.bf16.msra.mxu0 %v2724
    %2985 = vmatprep.subr.bf16.mxu0 %v2733
    %2986 = vmatpush1.bf16.msra.mxu0 %v2732
    %2987 = vmatprep.subr.bf16.mxu0 %v2741
    %2988 = vmatpush1.bf16.msra.mxu0 %v2740
    %2989 = vmatprep.subr.bf16.mxu0 %v2749
    %2990 = vmatpush1.bf16.msra.mxu0 %v2748
    %2991 = vmatprep.subr.bf16.mxu0 %v2757
    %2992 = vmatpush1.bf16.msra.mxu0 %v2756
    %2993 = vmatprep.subr.bf16.mxu0 %v2765
    %2994 = vmatpush1.bf16.msra.mxu0 %v2764
    %2995 = vmatprep.subr.bf16.mxu0 %v2773
    %2996 = vmatpush1.bf16.msra.mxu0 %v2772
    %2997 = vmatprep.subr.bf16.mxu0 %v2781
    %2998 = vmatpush1.bf16.msra.mxu0 %v2780
    %2999 = vmatprep.subr.bf16.mxu0 %v2789
    %3000 = vmatpush1.bf16.msra.mxu0 %v2788
    %3001 = vmatprep.subr.bf16.mxu0 %v2797
    %3002 = vmatpush1.bf16.msra.mxu0 %v2796
    %3003 = vmatprep.mubr.bf16.mxu0 %v2161
    %3004 = vmatmul.mubr.bf16.gmra.mrb[0].mxu0 %v2160
    %v3005 = vpop.f32.mrb[0].mxu0
    %v3006 = vadd.f32 0.0, %v3005
    %v3007 = vpop.f32.mrb[0].mxu0
    %v3008 = vadd.f32 0.0, %v3007
    %v3009 = vpop.f32.mrb[0].mxu0
    %v3010 = vpop.f32.mrb[0].mxu0
    %3011 = vdwg.mxu0
    %3012 = vmatprep.subr.bf16.mxu0 %v2679
    %3013 = vmatpush1.bf16.msra.mxu0 %v2678
    %3014 = vmatprep.subr.bf16.mxu0 %v2687
    %3015 = vmatpush1.bf16.msra.mxu0 %v2686
    %3016 = vmatprep.subr.bf16.mxu0 %v2695
    %3017 = vmatpush1.bf16.msra.mxu0 %v2694
    %3018 = vmatprep.subr.bf16.mxu0 %v2703
    %3019 = vmatpush1.bf16.msra.mxu0 %v2702
    %3020 = vmatprep.subr.bf16.mxu0 %v2711
    %3021 = vmatpush1.bf16.msra.mxu0 %v2710
    %3022 = vmatprep.subr.bf16.mxu0 %v2719
    %3023 = vmatpush1.bf16.msra.mxu0 %v2718
    %3024 = vmatprep.subr.bf16.mxu0 %v2727
    %3025 = vmatpush1.bf16.msra.mxu0 %v2726
    %3026 = vmatprep.subr.bf16.mxu0 %v2735
    %3027 = vmatpush1.bf16.msra.mxu0 %v2734
    %3028 = vmatprep.subr.bf16.mxu0 %v2743
    %3029 = vmatpush1.bf16.msra.mxu0 %v2742
    %3030 = vmatprep.subr.bf16.mxu0 %v2751
    %3031 = vmatpush1.bf16.msra.mxu0 %v2750
    %3032 = vmatprep.subr.bf16.mxu0 %v2759
    %3033 = vmatpush1.bf16.msra.mxu0 %v2758
    %3034 = vmatprep.subr.bf16.mxu0 %v2767
    %3035 = vmatpush1.bf16.msra.mxu0 %v2766
    %3036 = vmatprep.subr.bf16.mxu0 %v2775
    %3037 = vmatpush1.bf16.msra.mxu0 %v2774
    %3038 = vmatprep.subr.bf16.mxu0 %v2783
    %3039 = vmatpush1.bf16.msra.mxu0 %v2782
    %3040 = vmatprep.subr.bf16.mxu0 %v2791
    %3041 = vmatpush1.bf16.msra.mxu0 %v2790
    %3042 = vmatprep.subr.bf16.mxu0 %v2799
    %3043 = vmatpush1.bf16.msra.mxu0 %v2798
    %3044 = vmatprep.mubr.bf16.mxu0 %v2161
    %3045 = vmatmul.mubr.bf16.gmra.mrb[0].mxu0 %v2160
    %v3046 = vpop.f32.mrb[0].mxu0
    %v3047 = vadd.f32 0.0, %v3046
    %v3048 = vpop.f32.mrb[0].mxu0
    %v3049 = vadd.f32 0.0, %v3048
    %v3050 = vpop.f32.mrb[0].mxu0
    %v3051 = vpop.f32.mrb[0].mxu0
    %3052 = vdwg.mxu0
    %3053 = vmatprep.subr.bf16.mxu0 %v2681
    %3054 = vmatpush1.bf16.msra.mxu0 %v2680
    %3055 = vmatprep.subr.bf16.mxu0 %v2689
    %3056 = vmatpush1.bf16.msra.mxu0 %v2688
    %3057 = vmatprep.subr.bf16.mxu0 %v2697
    %3058 = vmatpush1.bf16.msra.mxu0 %v2696
    %3059 = vmatprep.subr.bf16.mxu0 %v2705
    %3060 = vmatpush1.bf16.msra.mxu0 %v2704
    %3061 = vmatprep.subr.bf16.mxu0 %v2713
    %3062 = vmatpush1.bf16.msra.mxu0 %v2712
    %3063 = vmatprep.subr.bf16.mxu0 %v2721
    %3064 = vmatpush1.bf16.msra.mxu0 %v2720
    %3065 = vmatprep.subr.bf16.mxu0 %v2729
    %3066 = vmatpush1.bf16.msra.mxu0 %v2728
    %3067 = vmatprep.subr.bf16.mxu0 %v2737
    %3068 = vmatpush1.bf16.msra.mxu0 %v2736
    %3069 = vmatprep.subr.bf16.mxu0 %v2745
    %3070 = vmatpush1.bf16.msra.mxu0 %v2744
    %3071 = vmatprep.subr.bf16.mxu0 %v2753
    %3072 = vmatpush1.bf16.msra.mxu0 %v2752
    %3073 = vmatprep.subr.bf16.mxu0 %v2761
    %3074 = vmatpush1.bf16.msra.mxu0 %v2760
    %3075 = vmatprep.subr.bf16.mxu0 %v2769
    %3076 = vmatpush1.bf16.msra.mxu0 %v2768
    %3077 = vmatprep.subr.bf16.mxu0 %v2777
    %3078 = vmatpush1.bf16.msra.mxu0 %v2776
    %3079 = vmatprep.subr.bf16.mxu0 %v2785
    %3080 = vmatpush1.bf16.msra.mxu0 %v2784
    %3081 = vmatprep.subr.bf16.mxu0 %v2793
    %3082 = vmatpush1.bf16.msra.mxu0 %v2792
    %3083 = vmatprep.subr.bf16.mxu0 %v2801
    %3084 = vmatpush1.bf16.msra.mxu0 %v2800
    %3085 = vmatprep.mubr.bf16.mxu0 %v2161
    %3086 = vmatmul.mubr.bf16.gmra.mrb[0].mxu0 %v2160
    %v3087 = vpop.f32.mrb[0].mxu0
    %v3088 = vadd.f32 0.0, %v3087
    %v3089 = vpop.f32.mrb[0].mxu0
    %v3090 = vadd.f32 0.0, %v3089
    %v3091 = vpop.f32.mrb[0].mxu0
    %v3092 = vpop.f32.mrb[0].mxu0
    %3093 = vdwg.mxu0
    %v3094 = vadd.f32 %v2020, %v2965
    %v3095 = vadd.f32 %v2022, %v2967
    %v3096 = vadd.f32 %v2061, %v3006
    %v3097 = vadd.f32 %v2063, %v3008
    %v3098 = vadd.f32 %v2102, %v3047
    %v3099 = vadd.f32 %v2104, %v3049
    %v3100 = vadd.f32 %v2143, %v3088
    %v3101 = vadd.f32 %v2145, %v3090
    %v3102 = vld [vmem:[#allocation5] sm:$0xff]
    %v3104 = vlaneseq
    %v3105 = vshrl.u32 %v3104, 7
    %v3106 = vsub.s32 0, %v3105
    %v3107 = vrot.slane %v3102, %v3106
    %v3108 = vlaneseq
    %v3109 = vshrl.u32 %v3108, 7
    %v3110 = vsub.s32 1, %v3109
    %v3111 = vrot.slane %v3102, %v3110
    %v3112 = vlaneseq
    %v3113 = vshrl.u32 %v3112, 7
    %v3114 = vsub.s32 2, %v3113
    %v3115 = vrot.slane %v3102, %v3114
    %v3116 = vlaneseq
    %v3117 = vshrl.u32 %v3116, 7
    %v3118 = vsub.s32 3, %v3117
    %v3119 = vrot.slane %v3102, %v3118
    %v3120 = vlaneseq
    %v3121 = vshrl.u32 %v3120, 7
    %v3122 = vsub.s32 4, %v3121
    %v3123 = vrot.slane %v3102, %v3122
    %v3124 = vlaneseq
    %v3125 = vshrl.u32 %v3124, 7
    %v3126 = vsub.s32 5, %v3125
    %v3127 = vrot.slane %v3102, %v3126
    %v3128 = vlaneseq
    %v3129 = vshrl.u32 %v3128, 7
    %v3130 = vsub.s32 6, %v3129
    %v3131 = vrot.slane %v3102, %v3130
    %v3132 = vlaneseq
    %v3133 = vshrl.u32 %v3132, 7
    %v3134 = vsub.s32 7, %v3133
    %v3135 = vrot.slane %v3102, %v3134
    %v3144 = vadd.f32 %v3094, %v3107
    %v3145 = vadd.f32 %v3095, %v3111
    %v3146 = vadd.f32 %v3096, %v3115
    %v3147 = vadd.f32 %v3097, %v3119
    %v3148 = vadd.f32 %v3098, %v3123
    %v3149 = vadd.f32 %v3099, %v3127
    %v3150 = vadd.f32 %v3100, %v3131
    %v3151 = vadd.f32 %v3101, %v3135
    %vm3152 = vcmp.ge.f32.partialorder %v3144, 0.0
    %vm3153 = vcmp.ge.f32.partialorder %v3145, 0.0
    %vm3154 = vcmp.ge.f32.partialorder %v3146, 0.0
    %vm3155 = vcmp.ge.f32.partialorder %v3147, 0.0
    %vm3156 = vcmp.ge.f32.partialorder %v3148, 0.0
    %vm3157 = vcmp.ge.f32.partialorder %v3149, 0.0
    %vm3158 = vcmp.ge.f32.partialorder %v3150, 0.0
    %vm3159 = vcmp.ge.f32.partialorder %v3151, 0.0
    %v3160 = vmul.f32 %v3144, 0.2
    %v3161 = vmul.f32 %v3145, 0.2
    %v3162 = vmul.f32 %v3146, 0.2
    %v3163 = vmul.f32 %v3147, 0.2
    %v3164 = vmul.f32 %v3148, 0.2
    %v3165 = vmul.f32 %v3149, 0.2
    %v3166 = vmul.f32 %v3150, 0.2
    %v3167 = vmul.f32 %v3151, 0.2
    %v3168 = vsel %vm3152, %v3144, %v3160
    %v3169 = vsel %vm3153, %v3145, %v3161
    %v3170 = vsel %vm3154, %v3146, %v3162
    %v3171 = vsel %vm3155, %v3147, %v3163
    %v3172 = vsel %vm3156, %v3148, %v3164
    %v3173 = vsel %vm3157, %v3149, %v3165
    %v3174 = vsel %vm3158, %v3150, %v3166
    %v3175 = vsel %vm3159, %v3151, %v3167
    %v3176 = vpack.c.bf16 %v3168, %v3168
    %v3177 = vpack.c.bf16 %v3169, %v3169
    %v3178 = vld [vmem:[#allocation7] sm:$0xff]
    %v3179 = vld [vmem:[#allocation7 + $0x8] sm:$0xff]
    %v3180 = vld [vmem:[#allocation7 + $0x10] sm:$0xff]
    %v3181 = vld [vmem:[#allocation7 + $0x18] sm:$0xff]
    %v3182 = vld [vmem:[#allocation7 + $0x20] sm:$0xff]
    %v3183 = vld [vmem:[#allocation7 + $0x28] sm:$0xff]
    %v3184 = vld [vmem:[#allocation7 + $0x30] sm:$0xff]
    %v3185 = vld [vmem:[#allocation7 + $0x38] sm:$0xff]
    %v3186 = vld [vmem:[#allocation7 + $0x40] sm:$0xff]
    %v3187 = vld [vmem:[#allocation7 + $0x48] sm:$0xff]
    %v3188 = vld [vmem:[#allocation7 + $0x50] sm:$0xff]
    %v3189 = vld [vmem:[#allocation7 + $0x58] sm:$0xff]
    %v3190 = vld [vmem:[#allocation7 + $0x60] sm:$0xff]
    %v3191 = vld [vmem:[#allocation7 + $0x68] sm:$0xff]
    %v3192 = vld [vmem:[#allocation7 + $0x70] sm:$0xff]
    %v3193 = vld [vmem:[#allocation7 + $0x78] sm:$0xff]
    %v3194 = vld [vmem:[#allocation7 + $0x80] sm:$0xff]
    %v3195 = vld [vmem:[#allocation7 + $0x88] sm:$0xff]
    %v3196 = vld [vmem:[#allocation7 + $0x90] sm:$0xff]
    %v3197 = vld [vmem:[#allocation7 + $0x98] sm:$0xff]
    %v3198 = vld [vmem:[#allocation7 + $0xa0] sm:$0xff]
    %v3199 = vld [vmem:[#allocation7 + $0xa8] sm:$0xff]
    %v3200 = vld [vmem:[#allocation7 + $0xb0] sm:$0xff]
    %v3201 = vld [vmem:[#allocation7 + $0xb8] sm:$0xff]
    %v3202 = vld [vmem:[#allocation7 + $0xc0] sm:$0xff]
    %v3203 = vld [vmem:[#allocation7 + $0xc8] sm:$0xff]
    %v3204 = vld [vmem:[#allocation7 + $0xd0] sm:$0xff]
    %v3205 = vld [vmem:[#allocation7 + $0xd8] sm:$0xff]
    %v3206 = vld [vmem:[#allocation7 + $0xe0] sm:$0xff]
    %v3207 = vld [vmem:[#allocation7 + $0xe8] sm:$0xff]
    %v3208 = vld [vmem:[#allocation7 + $0xf0] sm:$0xff]
    %v3209 = vld [vmem:[#allocation7 + $0xf8] sm:$0xff]
    %v3210 = vld [vmem:[#allocation7 + $0x100] sm:$0xff]
    %v3211 = vld [vmem:[#allocation7 + $0x108] sm:$0xff]
    %v3212 = vld [vmem:[#allocation7 + $0x110] sm:$0xff]
    %v3213 = vld [vmem:[#allocation7 + $0x118] sm:$0xff]
    %v3214 = vld [vmem:[#allocation7 + $0x120] sm:$0xff]
    %v3215 = vld [vmem:[#allocation7 + $0x128] sm:$0xff]
    %v3216 = vld [vmem:[#allocation7 + $0x130] sm:$0xff]
    %v3217 = vld [vmem:[#allocation7 + $0x138] sm:$0xff]
    %v3218 = vld [vmem:[#allocation7 + $0x140] sm:$0xff]
    %v3219 = vld [vmem:[#allocation7 + $0x148] sm:$0xff]
    %v3220 = vld [vmem:[#allocation7 + $0x150] sm:$0xff]
    %v3221 = vld [vmem:[#allocation7 + $0x158] sm:$0xff]
    %v3222 = vld [vmem:[#allocation7 + $0x160] sm:$0xff]
    %v3223 = vld [vmem:[#allocation7 + $0x168] sm:$0xff]
    %v3224 = vld [vmem:[#allocation7 + $0x170] sm:$0xff]
    %v3225 = vld [vmem:[#allocation7 + $0x178] sm:$0xff]
    %v3226 = vld [vmem:[#allocation7 + $0x180] sm:$0xff]
    %v3227 = vld [vmem:[#allocation7 + $0x188] sm:$0xff]
    %v3228 = vld [vmem:[#allocation7 + $0x190] sm:$0xff]
    %v3229 = vld [vmem:[#allocation7 + $0x198] sm:$0xff]
    %v3230 = vld [vmem:[#allocation7 + $0x1a0] sm:$0xff]
    %v3231 = vld [vmem:[#allocation7 + $0x1a8] sm:$0xff]
    %v3232 = vld [vmem:[#allocation7 + $0x1b0] sm:$0xff]
    %v3233 = vld [vmem:[#allocation7 + $0x1b8] sm:$0xff]
    %v3234 = vld [vmem:[#allocation7 + $0x1c0] sm:$0xff]
    %v3235 = vld [vmem:[#allocation7 + $0x1c8] sm:$0xff]
    %v3236 = vld [vmem:[#allocation7 + $0x1d0] sm:$0xff]
    %v3237 = vld [vmem:[#allocation7 + $0x1d8] sm:$0xff]
    %v3238 = vld [vmem:[#allocation7 + $0x1e0] sm:$0xff]
    %v3239 = vld [vmem:[#allocation7 + $0x1e8] sm:$0xff]
    %v3240 = vld [vmem:[#allocation7 + $0x1f0] sm:$0xff]
    %v3241 = vld [vmem:[#allocation7 + $0x1f8] sm:$0xff]
    %v3242 = vpack.c.bf16 %v3170, %v3170
    %v3243 = vpack.c.bf16 %v3171, %v3171
    %v3244 = vld [vmem:[#allocation7 + $0x200] sm:$0xff]
    %v3245 = vld [vmem:[#allocation7 + $0x208] sm:$0xff]
    %v3246 = vld [vmem:[#allocation7 + $0x210] sm:$0xff]
    %v3247 = vld [vmem:[#allocation7 + $0x218] sm:$0xff]
    %v3248 = vld [vmem:[#allocation7 + $0x220] sm:$0xff]
    %v3249 = vld [vmem:[#allocation7 + $0x228] sm:$0xff]
    %v3250 = vld [vmem:[#allocation7 + $0x230] sm:$0xff]
    %v3251 = vld [vmem:[#allocation7 + $0x238] sm:$0xff]
    %v3252 = vld [vmem:[#allocation7 + $0x240] sm:$0xff]
    %v3253 = vld [vmem:[#allocation7 + $0x248] sm:$0xff]
    %v3254 = vld [vmem:[#allocation7 + $0x250] sm:$0xff]
    %v3255 = vld [vmem:[#allocation7 + $0x258] sm:$0xff]
    %v3256 = vld [vmem:[#allocation7 + $0x260] sm:$0xff]
    %v3257 = vld [vmem:[#allocation7 + $0x268] sm:$0xff]
    %v3258 = vld [vmem:[#allocation7 + $0x270] sm:$0xff]
    %v3259 = vld [vmem:[#allocation7 + $0x278] sm:$0xff]
    %v3260 = vld [vmem:[#allocation7 + $0x280] sm:$0xff]
    %v3261 = vld [vmem:[#allocation7 + $0x288] sm:$0xff]
    %v3262 = vld [vmem:[#allocation7 + $0x290] sm:$0xff]
    %v3263 = vld [vmem:[#allocation7 + $0x298] sm:$0xff]
    %v3264 = vld [vmem:[#allocation7 + $0x2a0] sm:$0xff]
    %v3265 = vld [vmem:[#allocation7 + $0x2a8] sm:$0xff]
    %v3266 = vld [vmem:[#allocation7 + $0x2b0] sm:$0xff]
    %v3267 = vld [vmem:[#allocation7 + $0x2b8] sm:$0xff]
    %v3268 = vld [vmem:[#allocation7 + $0x2c0] sm:$0xff]
    %v3269 = vld [vmem:[#allocation7 + $0x2c8] sm:$0xff]
    %v3270 = vld [vmem:[#allocation7 + $0x2d0] sm:$0xff]
    %v3271 = vld [vmem:[#allocation7 + $0x2d8] sm:$0xff]
    %v3272 = vld [vmem:[#allocation7 + $0x2e0] sm:$0xff]
    %v3273 = vld [vmem:[#allocation7 + $0x2e8] sm:$0xff]
    %v3274 = vld [vmem:[#allocation7 + $0x2f0] sm:$0xff]
    %v3275 = vld [vmem:[#allocation7 + $0x2f8] sm:$0xff]
    %v3276 = vld [vmem:[#allocation7 + $0x300] sm:$0xff]
    %v3277 = vld [vmem:[#allocation7 + $0x308] sm:$0xff]
    %v3278 = vld [vmem:[#allocation7 + $0x310] sm:$0xff]
    %v3279 = vld [vmem:[#allocation7 + $0x318] sm:$0xff]
    %v3280 = vld [vmem:[#allocation7 + $0x320] sm:$0xff]
    %v3281 = vld [vmem:[#allocation7 + $0x328] sm:$0xff]
    %v3282 = vld [vmem:[#allocation7 + $0x330] sm:$0xff]
    %v3283 = vld [vmem:[#allocation7 + $0x338] sm:$0xff]
    %v3284 = vld [vmem:[#allocation7 + $0x340] sm:$0xff]
    %v3285 = vld [vmem:[#allocation7 + $0x348] sm:$0xff]
    %v3286 = vld [vmem:[#allocation7 + $0x350] sm:$0xff]
    %v3287 = vld [vmem:[#allocation7 + $0x358] sm:$0xff]
    %v3288 = vld [vmem:[#allocation7 + $0x360] sm:$0xff]
    %v3289 = vld [vmem:[#allocation7 + $0x368] sm:$0xff]
    %v3290 = vld [vmem:[#allocation7 + $0x370] sm:$0xff]
    %v3291 = vld [vmem:[#allocation7 + $0x378] sm:$0xff]
    %v3292 = vld [vmem:[#allocation7 + $0x380] sm:$0xff]
    %v3293 = vld [vmem:[#allocation7 + $0x388] sm:$0xff]
    %v3294 = vld [vmem:[#allocation7 + $0x390] sm:$0xff]
    %v3295 = vld [vmem:[#allocation7 + $0x398] sm:$0xff]
    %v3296 = vld [vmem:[#allocation7 + $0x3a0] sm:$0xff]
    %v3297 = vld [vmem:[#allocation7 + $0x3a8] sm:$0xff]
    %v3298 = vld [vmem:[#allocation7 + $0x3b0] sm:$0xff]
    %v3299 = vld [vmem:[#allocation7 + $0x3b8] sm:$0xff]
    %v3300 = vld [vmem:[#allocation7 + $0x3c0] sm:$0xff]
    %v3301 = vld [vmem:[#allocation7 + $0x3c8] sm:$0xff]
    %v3302 = vld [vmem:[#allocation7 + $0x3d0] sm:$0xff]
    %v3303 = vld [vmem:[#allocation7 + $0x3d8] sm:$0xff]
    %v3304 = vld [vmem:[#allocation7 + $0x3e0] sm:$0xff]
    %v3305 = vld [vmem:[#allocation7 + $0x3e8] sm:$0xff]
    %v3306 = vld [vmem:[#allocation7 + $0x3f0] sm:$0xff]
    %v3307 = vld [vmem:[#allocation7 + $0x3f8] sm:$0xff]
    %v3372 = vunpack.c.l.b16 %v3244
    %v3373 = vunpack.c.h.b16 %v3244
    %v3374 = vunpack.c.l.b16 %v3245
    %v3375 = vunpack.c.h.b16 %v3245
    %v3376 = vunpack.c.l.b16 %v3246
    %v3377 = vunpack.c.h.b16 %v3246
    %v3378 = vunpack.c.l.b16 %v3247
    %v3379 = vunpack.c.h.b16 %v3247
    %v3380 = vunpack.c.l.b16 %v3248
    %v3381 = vunpack.c.h.b16 %v3248
    %v3382 = vunpack.c.l.b16 %v3249
    %v3383 = vunpack.c.h.b16 %v3249
    %v3384 = vunpack.c.l.b16 %v3250
    %v3385 = vunpack.c.h.b16 %v3250
    %v3386 = vunpack.c.l.b16 %v3251
    %v3387 = vunpack.c.h.b16 %v3251
    %v3388 = vunpack.c.l.b16 %v3252
    %v3389 = vunpack.c.h.b16 %v3252
    %v3390 = vunpack.c.l.b16 %v3253
    %v3391 = vunpack.c.h.b16 %v3253
    %v3392 = vunpack.c.l.b16 %v3254
    %v3393 = vunpack.c.h.b16 %v3254
    %v3394 = vunpack.c.l.b16 %v3255
    %v3395 = vunpack.c.h.b16 %v3255
    %v3396 = vunpack.c.l.b16 %v3256
    %v3397 = vunpack.c.h.b16 %v3256
    %v3398 = vunpack.c.l.b16 %v3257
    %v3399 = vunpack.c.h.b16 %v3257
    %v3400 = vunpack.c.l.b16 %v3258
    %v3401 = vunpack.c.h.b16 %v3258
    %v3402 = vunpack.c.l.b16 %v3259
    %v3403 = vunpack.c.h.b16 %v3259
    %v3404 = vunpack.c.l.b16 %v3260
    %v3405 = vunpack.c.h.b16 %v3260
    %v3406 = vunpack.c.l.b16 %v3261
    %v3407 = vunpack.c.h.b16 %v3261
    %v3408 = vunpack.c.l.b16 %v3262
    %v3409 = vunpack.c.h.b16 %v3262
    %v3410 = vunpack.c.l.b16 %v3263
    %v3411 = vunpack.c.h.b16 %v3263
    %v3412 = vunpack.c.l.b16 %v3264
    %v3413 = vunpack.c.h.b16 %v3264
    %v3414 = vunpack.c.l.b16 %v3265
    %v3415 = vunpack.c.h.b16 %v3265
    %v3416 = vunpack.c.l.b16 %v3266
    %v3417 = vunpack.c.h.b16 %v3266
    %v3418 = vunpack.c.l.b16 %v3267
    %v3419 = vunpack.c.h.b16 %v3267
    %v3420 = vunpack.c.l.b16 %v3268
    %v3421 = vunpack.c.h.b16 %v3268
    %v3422 = vunpack.c.l.b16 %v3269
    %v3423 = vunpack.c.h.b16 %v3269
    %v3424 = vunpack.c.l.b16 %v3270
    %v3425 = vunpack.c.h.b16 %v3270
    %v3426 = vunpack.c.l.b16 %v3271
    %v3427 = vunpack.c.h.b16 %v3271
    %v3428 = vunpack.c.l.b16 %v3272
    %v3429 = vunpack.c.h.b16 %v3272
    %v3430 = vunpack.c.l.b16 %v3273
    %v3431 = vunpack.c.h.b16 %v3273
    %v3432 = vunpack.c.l.b16 %v3274
    %v3433 = vunpack.c.h.b16 %v3274
    %v3434 = vunpack.c.l.b16 %v3275
    %v3435 = vunpack.c.h.b16 %v3275
    %v3436 = vunpack.c.l.b16 %v3276
    %v3437 = vunpack.c.h.b16 %v3276
    %v3438 = vunpack.c.l.b16 %v3277
    %v3439 = vunpack.c.h.b16 %v3277
    %v3440 = vunpack.c.l.b16 %v3278
    %v3441 = vunpack.c.h.b16 %v3278
    %v3442 = vunpack.c.l.b16 %v3279
    %v3443 = vunpack.c.h.b16 %v3279
    %v3444 = vunpack.c.l.b16 %v3280
    %v3445 = vunpack.c.h.b16 %v3280
    %v3446 = vunpack.c.l.b16 %v3281
    %v3447 = vunpack.c.h.b16 %v3281
    %v3448 = vunpack.c.l.b16 %v3282
    %v3449 = vunpack.c.h.b16 %v3282
    %v3450 = vunpack.c.l.b16 %v3283
    %v3451 = vunpack.c.h.b16 %v3283
    %v3452 = vunpack.c.l.b16 %v3284
    %v3453 = vunpack.c.h.b16 %v3284
    %v3454 = vunpack.c.l.b16 %v3285
    %v3455 = vunpack.c.h.b16 %v3285
    %v3456 = vunpack.c.l.b16 %v3286
    %v3457 = vunpack.c.h.b16 %v3286
    %v3458 = vunpack.c.l.b16 %v3287
    %v3459 = vunpack.c.h.b16 %v3287
    %v3460 = vunpack.c.l.b16 %v3288
    %v3461 = vunpack.c.h.b16 %v3288
    %v3462 = vunpack.c.l.b16 %v3289
    %v3463 = vunpack.c.h.b16 %v3289
    %v3464 = vunpack.c.l.b16 %v3290
    %v3465 = vunpack.c.h.b16 %v3290
    %v3466 = vunpack.c.l.b16 %v3291
    %v3467 = vunpack.c.h.b16 %v3291
    %v3468 = vunpack.c.l.b16 %v3292
    %v3469 = vunpack.c.h.b16 %v3292
    %v3470 = vunpack.c.l.b16 %v3293
    %v3471 = vunpack.c.h.b16 %v3293
    %v3472 = vunpack.c.l.b16 %v3294
    %v3473 = vunpack.c.h.b16 %v3294
    %v3474 = vunpack.c.l.b16 %v3295
    %v3475 = vunpack.c.h.b16 %v3295
    %v3476 = vunpack.c.l.b16 %v3296
    %v3477 = vunpack.c.h.b16 %v3296
    %v3478 = vunpack.c.l.b16 %v3297
    %v3479 = vunpack.c.h.b16 %v3297
    %v3480 = vunpack.c.l.b16 %v3298
    %v3481 = vunpack.c.h.b16 %v3298
    %v3482 = vunpack.c.l.b16 %v3299
    %v3483 = vunpack.c.h.b16 %v3299
    %v3484 = vunpack.c.l.b16 %v3300
    %v3485 = vunpack.c.h.b16 %v3300
    %v3486 = vunpack.c.l.b16 %v3301
    %v3487 = vunpack.c.h.b16 %v3301
    %v3488 = vunpack.c.l.b16 %v3302
    %v3489 = vunpack.c.h.b16 %v3302
    %v3490 = vunpack.c.l.b16 %v3303
    %v3491 = vunpack.c.h.b16 %v3303
    %v3492 = vunpack.c.l.b16 %v3304
    %v3493 = vunpack.c.h.b16 %v3304
    %v3494 = vunpack.c.l.b16 %v3305
    %v3495 = vunpack.c.h.b16 %v3305
    %v3496 = vunpack.c.l.b16 %v3306
    %v3497 = vunpack.c.h.b16 %v3306
    %v3498 = vunpack.c.l.b16 %v3307
    %v3499 = vunpack.c.h.b16 %v3307
    %v3500 = vpack.c.b16 %v3376, %v3372
    %v3501 = vpack.c.b16 %v3377, %v3373
    %v3502 = vpack.c.b16 %v3378, %v3374
    %v3503 = vpack.c.b16 %v3379, %v3375
    %v3504 = vpack.c.b16 %v3384, %v3380
    %v3505 = vpack.c.b16 %v3385, %v3381
    %v3506 = vpack.c.b16 %v3386, %v3382
    %v3507 = vpack.c.b16 %v3387, %v3383
    %v3508 = vpack.c.b16 %v3392, %v3388
    %v3509 = vpack.c.b16 %v3393, %v3389
    %v3510 = vpack.c.b16 %v3394, %v3390
    %v3511 = vpack.c.b16 %v3395, %v3391
    %v3512 = vpack.c.b16 %v3400, %v3396
    %v3513 = vpack.c.b16 %v3401, %v3397
    %v3514 = vpack.c.b16 %v3402, %v3398
    %v3515 = vpack.c.b16 %v3403, %v3399
    %v3516 = vpack.c.b16 %v3408, %v3404
    %v3517 = vpack.c.b16 %v3409, %v3405
    %v3518 = vpack.c.b16 %v3410, %v3406
    %v3519 = vpack.c.b16 %v3411, %v3407
    %v3520 = vpack.c.b16 %v3416, %v3412
    %v3521 = vpack.c.b16 %v3417, %v3413
    %v3522 = vpack.c.b16 %v3418, %v3414
    %v3523 = vpack.c.b16 %v3419, %v3415
    %v3524 = vpack.c.b16 %v3424, %v3420
    %v3525 = vpack.c.b16 %v3425, %v3421
    %v3526 = vpack.c.b16 %v3426, %v3422
    %v3527 = vpack.c.b16 %v3427, %v3423
    %v3528 = vpack.c.b16 %v3432, %v3428
    %v3529 = vpack.c.b16 %v3433, %v3429
    %v3530 = vpack.c.b16 %v3434, %v3430
    %v3531 = vpack.c.b16 %v3435, %v3431
    %v3532 = vpack.c.b16 %v3440, %v3436
    %v3533 = vpack.c.b16 %v3441, %v3437
    %v3534 = vpack.c.b16 %v3442, %v3438
    %v3535 = vpack.c.b16 %v3443, %v3439
    %v3536 = vpack.c.b16 %v3448, %v3444
    %v3537 = vpack.c.b16 %v3449, %v3445
    %v3538 = vpack.c.b16 %v3450, %v3446
    %v3539 = vpack.c.b16 %v3451, %v3447
    %v3540 = vpack.c.b16 %v3456, %v3452
    %v3541 = vpack.c.b16 %v3457, %v3453
    %v3542 = vpack.c.b16 %v3458, %v3454
    %v3543 = vpack.c.b16 %v3459, %v3455
    %v3544 = vpack.c.b16 %v3464, %v3460
    %v3545 = vpack.c.b16 %v3465, %v3461
    %v3546 = vpack.c.b16 %v3466, %v3462
    %v3547 = vpack.c.b16 %v3467, %v3463
    %v3548 = vpack.c.b16 %v3472, %v3468
    %v3549 = vpack.c.b16 %v3473, %v3469
    %v3550 = vpack.c.b16 %v3474, %v3470
    %v3551 = vpack.c.b16 %v3475, %v3471
    %v3552 = vpack.c.b16 %v3480, %v3476
    %v3553 = vpack.c.b16 %v3481, %v3477
    %v3554 = vpack.c.b16 %v3482, %v3478
    %v3555 = vpack.c.b16 %v3483, %v3479
    %v3556 = vpack.c.b16 %v3488, %v3484
    %v3557 = vpack.c.b16 %v3489, %v3485
    %v3558 = vpack.c.b16 %v3490, %v3486
    %v3559 = vpack.c.b16 %v3491, %v3487
    %v3560 = vpack.c.b16 %v3496, %v3492
    %v3561 = vpack.c.b16 %v3497, %v3493
    %v3562 = vpack.c.b16 %v3498, %v3494
    %v3563 = vpack.c.b16 %v3499, %v3495
    %3628 = vmatprep.subr.bf16.mxu0 %v3501
    %3629 = vmatpush1.bf16.msra.mxu0 %v3500
    %3630 = vmatprep.subr.bf16.mxu0 %v3505
    %3631 = vmatpush1.bf16.msra.mxu0 %v3504
    %3632 = vmatprep.subr.bf16.mxu0 %v3509
    %3633 = vmatpush1.bf16.msra.mxu0 %v3508
    %3634 = vmatprep.subr.bf16.mxu0 %v3513
    %3635 = vmatpush1.bf16.msra.mxu0 %v3512
    %3636 = vmatprep.subr.bf16.mxu0 %v3517
    %3637 = vmatpush1.bf16.msra.mxu0 %v3516
    %3638 = vmatprep.subr.bf16.mxu0 %v3521
    %3639 = vmatpush1.bf16.msra.mxu0 %v3520
    %3640 = vmatprep.subr.bf16.mxu0 %v3525
    %3641 = vmatpush1.bf16.msra.mxu0 %v3524
    %3642 = vmatprep.subr.bf16.mxu0 %v3529
    %3643 = vmatpush1.bf16.msra.mxu0 %v3528
    %3644 = vmatprep.subr.bf16.mxu0 %v3533
    %3645 = vmatpush1.bf16.msra.mxu0 %v3532
    %3646 = vmatprep.subr.bf16.mxu0 %v3537
    %3647 = vmatpush1.bf16.msra.mxu0 %v3536
    %3648 = vmatprep.subr.bf16.mxu0 %v3541
    %3649 = vmatpush1.bf16.msra.mxu0 %v3540
    %3650 = vmatprep.subr.bf16.mxu0 %v3545
    %3651 = vmatpush1.bf16.msra.mxu0 %v3544
    %3652 = vmatprep.subr.bf16.mxu0 %v3549
    %3653 = vmatpush1.bf16.msra.mxu0 %v3548
    %3654 = vmatprep.subr.bf16.mxu0 %v3553
    %3655 = vmatpush1.bf16.msra.mxu0 %v3552
    %3656 = vmatprep.subr.bf16.mxu0 %v3557
    %3657 = vmatpush1.bf16.msra.mxu0 %v3556
    %3658 = vmatprep.subr.bf16.mxu0 %v3561
    %3659 = vmatpush1.bf16.msra.mxu0 %v3560
    %3660 = vmatprep.mubr.bf16.mxu0 %v3243
    %3661 = vmatmul.mubr.bf16.gmra.mrb[0].mxu0 %v3242
    %v3662 = vpop.f32.mrb[0].mxu0
    %v3663 = vadd.f32 0.0, %v3662
    %v3664 = vpop.f32.mrb[0].mxu0
    %v3665 = vadd.f32 0.0, %v3664
    %v3666 = vpop.f32.mrb[0].mxu0
    %v3667 = vpop.f32.mrb[0].mxu0
    %3668 = vdwg.mxu0
    %3669 = vmatprep.subr.bf16.mxu0 %v3503
    %3670 = vmatpush1.bf16.msra.mxu0 %v3502
    %3671 = vmatprep.subr.bf16.mxu0 %v3507
    %3672 = vmatpush1.bf16.msra.mxu0 %v3506
    %3673 = vmatprep.subr.bf16.mxu0 %v3511
    %3674 = vmatpush1.bf16.msra.mxu0 %v3510
    %3675 = vmatprep.subr.bf16.mxu0 %v3515
    %3676 = vmatpush1.bf16.msra.mxu0 %v3514
    %3677 = vmatprep.subr.bf16.mxu0 %v3519
    %3678 = vmatpush1.bf16.msra.mxu0 %v3518
    %3679 = vmatprep.subr.bf16.mxu0 %v3523
    %3680 = vmatpush1.bf16.msra.mxu0 %v3522
    %3681 = vmatprep.subr.bf16.mxu0 %v3527
    %3682 = vmatpush1.bf16.msra.mxu0 %v3526
    %3683 = vmatprep.subr.bf16.mxu0 %v3531
    %3684 = vmatpush1.bf16.msra.mxu0 %v3530
    %3685 = vmatprep.subr.bf16.mxu0 %v3535
    %3686 = vmatpush1.bf16.msra.mxu0 %v3534
    %3687 = vmatprep.subr.bf16.mxu0 %v3539
    %3688 = vmatpush1.bf16.msra.mxu0 %v3538
    %3689 = vmatprep.subr.bf16.mxu0 %v3543
    %3690 = vmatpush1.bf16.msra.mxu0 %v3542
    %3691 = vmatprep.subr.bf16.mxu0 %v3547
    %3692 = vmatpush1.bf16.msra.mxu0 %v3546
    %3693 = vmatprep.subr.bf16.mxu0 %v3551
    %3694 = vmatpush1.bf16.msra.mxu0 %v3550
    %3695 = vmatprep.subr.bf16.mxu0 %v3555
    %3696 = vmatpush1.bf16.msra.mxu0 %v3554
    %3697 = vmatprep.subr.bf16.mxu0 %v3559
    %3698 = vmatpush1.bf16.msra.mxu0 %v3558
    %3699 = vmatprep.subr.bf16.mxu0 %v3563
    %3700 = vmatpush1.bf16.msra.mxu0 %v3562
    %3701 = vmatprep.mubr.bf16.mxu0 %v3243
    %3702 = vmatmul.mubr.bf16.gmra.mrb[0].mxu0 %v3242
    %v3703 = vpop.f32.mrb[0].mxu0
    %v3704 = vadd.f32 0.0, %v3703
    %v3705 = vpop.f32.mrb[0].mxu0
    %v3706 = vadd.f32 0.0, %v3705
    %v3707 = vpop.f32.mrb[0].mxu0
    %v3708 = vpop.f32.mrb[0].mxu0
    %3709 = vdwg.mxu0
    %v3774 = vunpack.c.l.b16 %v3178
    %v3775 = vunpack.c.h.b16 %v3178
    %v3776 = vunpack.c.l.b16 %v3179
    %v3777 = vunpack.c.h.b16 %v3179
    %v3778 = vunpack.c.l.b16 %v3180
    %v3779 = vunpack.c.h.b16 %v3180
    %v3780 = vunpack.c.l.b16 %v3181
    %v3781 = vunpack.c.h.b16 %v3181
    %v3782 = vunpack.c.l.b16 %v3182
    %v3783 = vunpack.c.h.b16 %v3182
    %v3784 = vunpack.c.l.b16 %v3183
    %v3785 = vunpack.c.h.b16 %v3183
    %v3786 = vunpack.c.l.b16 %v3184
    %v3787 = vunpack.c.h.b16 %v3184
    %v3788 = vunpack.c.l.b16 %v3185
    %v3789 = vunpack.c.h.b16 %v3185
    %v3790 = vunpack.c.l.b16 %v3186
    %v3791 = vunpack.c.h.b16 %v3186
    %v3792 = vunpack.c.l.b16 %v3187
    %v3793 = vunpack.c.h.b16 %v3187
    %v3794 = vunpack.c.l.b16 %v3188
    %v3795 = vunpack.c.h.b16 %v3188
    %v3796 = vunpack.c.l.b16 %v3189
    %v3797 = vunpack.c.h.b16 %v3189
    %v3798 = vunpack.c.l.b16 %v3190
    %v3799 = vunpack.c.h.b16 %v3190
    %v3800 = vunpack.c.l.b16 %v3191
    %v3801 = vunpack.c.h.b16 %v3191
    %v3802 = vunpack.c.l.b16 %v3192
    %v3803 = vunpack.c.h.b16 %v3192
    %v3804 = vunpack.c.l.b16 %v3193
    %v3805 = vunpack.c.h.b16 %v3193
    %v3806 = vunpack.c.l.b16 %v3194
    %v3807 = vunpack.c.h.b16 %v3194
    %v3808 = vunpack.c.l.b16 %v3195
    %v3809 = vunpack.c.h.b16 %v3195
    %v3810 = vunpack.c.l.b16 %v3196
    %v3811 = vunpack.c.h.b16 %v3196
    %v3812 = vunpack.c.l.b16 %v3197
    %v3813 = vunpack.c.h.b16 %v3197
    %v3814 = vunpack.c.l.b16 %v3198
    %v3815 = vunpack.c.h.b16 %v3198
    %v3816 = vunpack.c.l.b16 %v3199
    %v3817 = vunpack.c.h.b16 %v3199
    %v3818 = vunpack.c.l.b16 %v3200
    %v3819 = vunpack.c.h.b16 %v3200
    %v3820 = vunpack.c.l.b16 %v3201
    %v3821 = vunpack.c.h.b16 %v3201
    %v3822 = vunpack.c.l.b16 %v3202
    %v3823 = vunpack.c.h.b16 %v3202
    %v3824 = vunpack.c.l.b16 %v3203
    %v3825 = vunpack.c.h.b16 %v3203
    %v3826 = vunpack.c.l.b16 %v3204
    %v3827 = vunpack.c.h.b16 %v3204
    %v3828 = vunpack.c.l.b16 %v3205
    %v3829 = vunpack.c.h.b16 %v3205
    %v3830 = vunpack.c.l.b16 %v3206
    %v3831 = vunpack.c.h.b16 %v3206
    %v3832 = vunpack.c.l.b16 %v3207
    %v3833 = vunpack.c.h.b16 %v3207
    %v3834 = vunpack.c.l.b16 %v3208
    %v3835 = vunpack.c.h.b16 %v3208
    %v3836 = vunpack.c.l.b16 %v3209
    %v3837 = vunpack.c.h.b16 %v3209
    %v3838 = vunpack.c.l.b16 %v3210
    %v3839 = vunpack.c.h.b16 %v3210
    %v3840 = vunpack.c.l.b16 %v3211
    %v3841 = vunpack.c.h.b16 %v3211
    %v3842 = vunpack.c.l.b16 %v3212
    %v3843 = vunpack.c.h.b16 %v3212
    %v3844 = vunpack.c.l.b16 %v3213
    %v3845 = vunpack.c.h.b16 %v3213
    %v3846 = vunpack.c.l.b16 %v3214
    %v3847 = vunpack.c.h.b16 %v3214
    %v3848 = vunpack.c.l.b16 %v3215
    %v3849 = vunpack.c.h.b16 %v3215
    %v3850 = vunpack.c.l.b16 %v3216
    %v3851 = vunpack.c.h.b16 %v3216
    %v3852 = vunpack.c.l.b16 %v3217
    %v3853 = vunpack.c.h.b16 %v3217
    %v3854 = vunpack.c.l.b16 %v3218
    %v3855 = vunpack.c.h.b16 %v3218
    %v3856 = vunpack.c.l.b16 %v3219
    %v3857 = vunpack.c.h.b16 %v3219
    %v3858 = vunpack.c.l.b16 %v3220
    %v3859 = vunpack.c.h.b16 %v3220
    %v3860 = vunpack.c.l.b16 %v3221
    %v3861 = vunpack.c.h.b16 %v3221
    %v3862 = vunpack.c.l.b16 %v3222
    %v3863 = vunpack.c.h.b16 %v3222
    %v3864 = vunpack.c.l.b16 %v3223
    %v3865 = vunpack.c.h.b16 %v3223
    %v3866 = vunpack.c.l.b16 %v3224
    %v3867 = vunpack.c.h.b16 %v3224
    %v3868 = vunpack.c.l.b16 %v3225
    %v3869 = vunpack.c.h.b16 %v3225
    %v3870 = vunpack.c.l.b16 %v3226
    %v3871 = vunpack.c.h.b16 %v3226
    %v3872 = vunpack.c.l.b16 %v3227
    %v3873 = vunpack.c.h.b16 %v3227
    %v3874 = vunpack.c.l.b16 %v3228
    %v3875 = vunpack.c.h.b16 %v3228
    %v3876 = vunpack.c.l.b16 %v3229
    %v3877 = vunpack.c.h.b16 %v3229
    %v3878 = vunpack.c.l.b16 %v3230
    %v3879 = vunpack.c.h.b16 %v3230
    %v3880 = vunpack.c.l.b16 %v3231
    %v3881 = vunpack.c.h.b16 %v3231
    %v3882 = vunpack.c.l.b16 %v3232
    %v3883 = vunpack.c.h.b16 %v3232
    %v3884 = vunpack.c.l.b16 %v3233
    %v3885 = vunpack.c.h.b16 %v3233
    %v3886 = vunpack.c.l.b16 %v3234
    %v3887 = vunpack.c.h.b16 %v3234
    %v3888 = vunpack.c.l.b16 %v3235
    %v3889 = vunpack.c.h.b16 %v3235
    %v3890 = vunpack.c.l.b16 %v3236
    %v3891 = vunpack.c.h.b16 %v3236
    %v3892 = vunpack.c.l.b16 %v3237
    %v3893 = vunpack.c.h.b16 %v3237
    %v3894 = vunpack.c.l.b16 %v3238
    %v3895 = vunpack.c.h.b16 %v3238
    %v3896 = vunpack.c.l.b16 %v3239
    %v3897 = vunpack.c.h.b16 %v3239
    %v3898 = vunpack.c.l.b16 %v3240
    %v3899 = vunpack.c.h.b16 %v3240
    %v3900 = vunpack.c.l.b16 %v3241
    %v3901 = vunpack.c.h.b16 %v3241
    %v3902 = vpack.c.b16 %v3778, %v3774
    %v3903 = vpack.c.b16 %v3779, %v3775
    %v3904 = vpack.c.b16 %v3780, %v3776
    %v3905 = vpack.c.b16 %v3781, %v3777
    %v3906 = vpack.c.b16 %v3786, %v3782
    %v3907 = vpack.c.b16 %v3787, %v3783
    %v3908 = vpack.c.b16 %v3788, %v3784
    %v3909 = vpack.c.b16 %v3789, %v3785
    %v3910 = vpack.c.b16 %v3794, %v3790
    %v3911 = vpack.c.b16 %v3795, %v3791
    %v3912 = vpack.c.b16 %v3796, %v3792
    %v3913 = vpack.c.b16 %v3797, %v3793
    %v3914 = vpack.c.b16 %v3802, %v3798
    %v3915 = vpack.c.b16 %v3803, %v3799
    %v3916 = vpack.c.b16 %v3804, %v3800
    %v3917 = vpack.c.b16 %v3805, %v3801
    %v3918 = vpack.c.b16 %v3810, %v3806
    %v3919 = vpack.c.b16 %v3811, %v3807
    %v3920 = vpack.c.b16 %v3812, %v3808
    %v3921 = vpack.c.b16 %v3813, %v3809
    %v3922 = vpack.c.b16 %v3818, %v3814
    %v3923 = vpack.c.b16 %v3819, %v3815
    %v3924 = vpack.c.b16 %v3820, %v3816
    %v3925 = vpack.c.b16 %v3821, %v3817
    %v3926 = vpack.c.b16 %v3826, %v3822
    %v3927 = vpack.c.b16 %v3827, %v3823
    %v3928 = vpack.c.b16 %v3828, %v3824
    %v3929 = vpack.c.b16 %v3829, %v3825
    %v3930 = vpack.c.b16 %v3834, %v3830
    %v3931 = vpack.c.b16 %v3835, %v3831
    %v3932 = vpack.c.b16 %v3836, %v3832
    %v3933 = vpack.c.b16 %v3837, %v3833
    %v3934 = vpack.c.b16 %v3842, %v3838
    %v3935 = vpack.c.b16 %v3843, %v3839
    %v3936 = vpack.c.b16 %v3844, %v3840
    %v3937 = vpack.c.b16 %v3845, %v3841
    %v3938 = vpack.c.b16 %v3850, %v3846
    %v3939 = vpack.c.b16 %v3851, %v3847
    %v3940 = vpack.c.b16 %v3852, %v3848
    %v3941 = vpack.c.b16 %v3853, %v3849
    %v3942 = vpack.c.b16 %v3858, %v3854
    %v3943 = vpack.c.b16 %v3859, %v3855
    %v3944 = vpack.c.b16 %v3860, %v3856
    %v3945 = vpack.c.b16 %v3861, %v3857
    %v3946 = vpack.c.b16 %v3866, %v3862
    %v3947 = vpack.c.b16 %v3867, %v3863
    %v3948 = vpack.c.b16 %v3868, %v3864
    %v3949 = vpack.c.b16 %v3869, %v3865
    %v3950 = vpack.c.b16 %v3874, %v3870
    %v3951 = vpack.c.b16 %v3875, %v3871
    %v3952 = vpack.c.b16 %v3876, %v3872
    %v3953 = vpack.c.b16 %v3877, %v3873
    %v3954 = vpack.c.b16 %v3882, %v3878
    %v3955 = vpack.c.b16 %v3883, %v3879
    %v3956 = vpack.c.b16 %v3884, %v3880
    %v3957 = vpack.c.b16 %v3885, %v3881
    %v3958 = vpack.c.b16 %v3890, %v3886
    %v3959 = vpack.c.b16 %v3891, %v3887
    %v3960 = vpack.c.b16 %v3892, %v3888
    %v3961 = vpack.c.b16 %v3893, %v3889
    %v3962 = vpack.c.b16 %v3898, %v3894
    %v3963 = vpack.c.b16 %v3899, %v3895
    %v3964 = vpack.c.b16 %v3900, %v3896
    %v3965 = vpack.c.b16 %v3901, %v3897
    %4030 = vmatprep.subr.bf16.mxu0 %v3903
    %4031 = vmatpush1.bf16.msra.mxu0 %v3902
    %4032 = vmatprep.subr.bf16.mxu0 %v3907
    %4033 = vmatpush1.bf16.msra.mxu0 %v3906
    %4034 = vmatprep.subr.bf16.mxu0 %v3911
    %4035 = vmatpush1.bf16.msra.mxu0 %v3910
    %4036 = vmatprep.subr.bf16.mxu0 %v3915
    %4037 = vmatpush1.bf16.msra.mxu0 %v3914
    %4038 = vmatprep.subr.bf16.mxu0 %v3919
    %4039 = vmatpush1.bf16.msra.mxu0 %v3918
    %4040 = vmatprep.subr.bf16.mxu0 %v3923
    %4041 = vmatpush1.bf16.msra.mxu0 %v3922
    %4042 = vmatprep.subr.bf16.mxu0 %v3927
    %4043 = vmatpush1.bf16.msra.mxu0 %v3926
    %4044 = vmatprep.subr.bf16.mxu0 %v3931
    %4045 = vmatpush1.bf16.msra.mxu0 %v3930
    %4046 = vmatprep.subr.bf16.mxu0 %v3935
    %4047 = vmatpush1.bf16.msra.mxu0 %v3934
    %4048 = vmatprep.subr.bf16.mxu0 %v3939
    %4049 = vmatpush1.bf16.msra.mxu0 %v3938
    %4050 = vmatprep.subr.bf16.mxu0 %v3943
    %4051 = vmatpush1.bf16.msra.mxu0 %v3942
    %4052 = vmatprep.subr.bf16.mxu0 %v3947
    %4053 = vmatpush1.bf16.msra.mxu0 %v3946
    %4054 = vmatprep.subr.bf16.mxu0 %v3951
    %4055 = vmatpush1.bf16.msra.mxu0 %v3950
    %4056 = vmatprep.subr.bf16.mxu0 %v3955
    %4057 = vmatpush1.bf16.msra.mxu0 %v3954
    %4058 = vmatprep.subr.bf16.mxu0 %v3959
    %4059 = vmatpush1.bf16.msra.mxu0 %v3958
    %4060 = vmatprep.subr.bf16.mxu0 %v3963
    %4061 = vmatpush1.bf16.msra.mxu0 %v3962
    %4062 = vmatprep.mubr.bf16.mxu0 %v3177
    %4063 = vmatmul.mubr.bf16.gmra.mrb[0].mxu0 %v3176
    %v4064 = vpop.f32.mrb[0].mxu0
    %v4065 = vadd.f32 %v3663, %v4064
    %v4066 = vpop.f32.mrb[0].mxu0
    %v4067 = vadd.f32 %v3665, %v4066
    %v4068 = vpop.f32.mrb[0].mxu0
    %v4069 = vpop.f32.mrb[0].mxu0
    %4070 = vdwg.mxu0
    %4071 = vmatprep.subr.bf16.mxu0 %v3905
    %4072 = vmatpush1.bf16.msra.mxu0 %v3904
    %4073 = vmatprep.subr.bf16.mxu0 %v3909
    %4074 = vmatpush1.bf16.msra.mxu0 %v3908
    %4075 = vmatprep.subr.bf16.mxu0 %v3913
    %4076 = vmatpush1.bf16.msra.mxu0 %v3912
    %4077 = vmatprep.subr.bf16.mxu0 %v3917
    %4078 = vmatpush1.bf16.msra.mxu0 %v3916
    %4079 = vmatprep.subr.bf16.mxu0 %v3921
    %4080 = vmatpush1.bf16.msra.mxu0 %v3920
    %4081 = vmatprep.subr.bf16.mxu0 %v3925
    %4082 = vmatpush1.bf16.msra.mxu0 %v3924
    %4083 = vmatprep.subr.bf16.mxu0 %v3929
    %4084 = vmatpush1.bf16.msra.mxu0 %v3928
    %4085 = vmatprep.subr.bf16.mxu0 %v3933
    %4086 = vmatpush1.bf16.msra.mxu0 %v3932
    %4087 = vmatprep.subr.bf16.mxu0 %v3937
    %4088 = vmatpush1.bf16.msra.mxu0 %v3936
    %4089 = vmatprep.subr.bf16.mxu0 %v3941
    %4090 = vmatpush1.bf16.msra.mxu0 %v3940
    %4091 = vmatprep.subr.bf16.mxu0 %v3945
    %4092 = vmatpush1.bf16.msra.mxu0 %v3944
    %4093 = vmatprep.subr.bf16.mxu0 %v3949
    %4094 = vmatpush1.bf16.msra.mxu0 %v3948
    %4095 = vmatprep.subr.bf16.mxu0 %v3953
    %4096 = vmatpush1.bf16.msra.mxu0 %v3952
    %4097 = vmatprep.subr.bf16.mxu0 %v3957
    %4098 = vmatpush1.bf16.msra.mxu0 %v3956
    %4099 = vmatprep.subr.bf16.mxu0 %v3961
    %4100 = vmatpush1.bf16.msra.mxu0 %v3960
    %4101 = vmatprep.subr.bf16.mxu0 %v3965
    %4102 = vmatpush1.bf16.msra.mxu0 %v3964
    %4103 = vmatprep.mubr.bf16.mxu0 %v3177
    %4104 = vmatmul.mubr.bf16.gmra.mrb[0].mxu0 %v3176
    %v4105 = vpop.f32.mrb[0].mxu0
    %v4106 = vadd.f32 %v3704, %v4105
    %v4107 = vpop.f32.mrb[0].mxu0
    %v4108 = vadd.f32 %v3706, %v4107
    %v4109 = vpop.f32.mrb[0].mxu0
    %v4110 = vpop.f32.mrb[0].mxu0
    %4111 = vdwg.mxu0
    %v4112 = vpack.c.bf16 %v3172, %v3172
    %v4113 = vpack.c.bf16 %v3173, %v3173
    %v4114 = vld [vmem:[#allocation7 + $0x400] sm:$0xff]
    %v4115 = vld [vmem:[#allocation7 + $0x408] sm:$0xff]
    %v4116 = vld [vmem:[#allocation7 + $0x410] sm:$0xff]
    %v4117 = vld [vmem:[#allocation7 + $0x418] sm:$0xff]
    %v4118 = vld [vmem:[#allocation7 + $0x420] sm:$0xff]
    %v4119 = vld [vmem:[#allocation7 + $0x428] sm:$0xff]
    %v4120 = vld [vmem:[#allocation7 + $0x430] sm:$0xff]
    %v4121 = vld [vmem:[#allocation7 + $0x438] sm:$0xff]
    %v4122 = vld [vmem:[#allocation7 + $0x440] sm:$0xff]
    %v4123 = vld [vmem:[#allocation7 + $0x448] sm:$0xff]
    %v4124 = vld [vmem:[#allocation7 + $0x450] sm:$0xff]
    %v4125 = vld [vmem:[#allocation7 + $0x458] sm:$0xff]
    %v4126 = vld [vmem:[#allocation7 + $0x460] sm:$0xff]
    %v4127 = vld [vmem:[#allocation7 + $0x468] sm:$0xff]
    %v4128 = vld [vmem:[#allocation7 + $0x470] sm:$0xff]
    %v4129 = vld [vmem:[#allocation7 + $0x478] sm:$0xff]
    %v4130 = vld [vmem:[#allocation7 + $0x480] sm:$0xff]
    %v4131 = vld [vmem:[#allocation7 + $0x488] sm:$0xff]
    %v4132 = vld [vmem:[#allocation7 + $0x490] sm:$0xff]
    %v4133 = vld [vmem:[#allocation7 + $0x498] sm:$0xff]
    %v4134 = vld [vmem:[#allocation7 + $0x4a0] sm:$0xff]
    %v4135 = vld [vmem:[#allocation7 + $0x4a8] sm:$0xff]
    %v4136 = vld [vmem:[#allocation7 + $0x4b0] sm:$0xff]
    %v4137 = vld [vmem:[#allocation7 + $0x4b8] sm:$0xff]
    %v4138 = vld [vmem:[#allocation7 + $0x4c0] sm:$0xff]
    %v4139 = vld [vmem:[#allocation7 + $0x4c8] sm:$0xff]
    %v4140 = vld [vmem:[#allocation7 + $0x4d0] sm:$0xff]
    %v4141 = vld [vmem:[#allocation7 + $0x4d8] sm:$0xff]
    %v4142 = vld [vmem:[#allocation7 + $0x4e0] sm:$0xff]
    %v4143 = vld [vmem:[#allocation7 + $0x4e8] sm:$0xff]
    %v4144 = vld [vmem:[#allocation7 + $0x4f0] sm:$0xff]
    %v4145 = vld [vmem:[#allocation7 + $0x4f8] sm:$0xff]
    %v4146 = vld [vmem:[#allocation7 + $0x500] sm:$0xff]
    %v4147 = vld [vmem:[#allocation7 + $0x508] sm:$0xff]
    %v4148 = vld [vmem:[#allocation7 + $0x510] sm:$0xff]
    %v4149 = vld [vmem:[#allocation7 + $0x518] sm:$0xff]
    %v4150 = vld [vmem:[#allocation7 + $0x520] sm:$0xff]
    %v4151 = vld [vmem:[#allocation7 + $0x528] sm:$0xff]
    %v4152 = vld [vmem:[#allocation7 + $0x530] sm:$0xff]
    %v4153 = vld [vmem:[#allocation7 + $0x538] sm:$0xff]
    %v4154 = vld [vmem:[#allocation7 + $0x540] sm:$0xff]
    %v4155 = vld [vmem:[#allocation7 + $0x548] sm:$0xff]
    %v4156 = vld [vmem:[#allocation7 + $0x550] sm:$0xff]
    %v4157 = vld [vmem:[#allocation7 + $0x558] sm:$0xff]
    %v4158 = vld [vmem:[#allocation7 + $0x560] sm:$0xff]
    %v4159 = vld [vmem:[#allocation7 + $0x568] sm:$0xff]
    %v4160 = vld [vmem:[#allocation7 + $0x570] sm:$0xff]
    %v4161 = vld [vmem:[#allocation7 + $0x578] sm:$0xff]
    %v4162 = vld [vmem:[#allocation7 + $0x580] sm:$0xff]
    %v4163 = vld [vmem:[#allocation7 + $0x588] sm:$0xff]
    %v4164 = vld [vmem:[#allocation7 + $0x590] sm:$0xff]
    %v4165 = vld [vmem:[#allocation7 + $0x598] sm:$0xff]
    %v4166 = vld [vmem:[#allocation7 + $0x5a0] sm:$0xff]
    %v4167 = vld [vmem:[#allocation7 + $0x5a8] sm:$0xff]
    %v4168 = vld [vmem:[#allocation7 + $0x5b0] sm:$0xff]
    %v4169 = vld [vmem:[#allocation7 + $0x5b8] sm:$0xff]
    %v4170 = vld [vmem:[#allocation7 + $0x5c0] sm:$0xff]
    %v4171 = vld [vmem:[#allocation7 + $0x5c8] sm:$0xff]
    %v4172 = vld [vmem:[#allocation7 + $0x5d0] sm:$0xff]
    %v4173 = vld [vmem:[#allocation7 + $0x5d8] sm:$0xff]
    %v4174 = vld [vmem:[#allocation7 + $0x5e0] sm:$0xff]
    %v4175 = vld [vmem:[#allocation7 + $0x5e8] sm:$0xff]
    %v4176 = vld [vmem:[#allocation7 + $0x5f0] sm:$0xff]
    %v4177 = vld [vmem:[#allocation7 + $0x5f8] sm:$0xff]
    %v4242 = vunpack.c.l.b16 %v4114
    %v4243 = vunpack.c.h.b16 %v4114
    %v4244 = vunpack.c.l.b16 %v4115
    %v4245 = vunpack.c.h.b16 %v4115
    %v4246 = vunpack.c.l.b16 %v4116
    %v4247 = vunpack.c.h.b16 %v4116
    %v4248 = vunpack.c.l.b16 %v4117
    %v4249 = vunpack.c.h.b16 %v4117
    %v4250 = vunpack.c.l.b16 %v4118
    %v4251 = vunpack.c.h.b16 %v4118
    %v4252 = vunpack.c.l.b16 %v4119
    %v4253 = vunpack.c.h.b16 %v4119
    %v4254 = vunpack.c.l.b16 %v4120
    %v4255 = vunpack.c.h.b16 %v4120
    %v4256 = vunpack.c.l.b16 %v4121
    %v4257 = vunpack.c.h.b16 %v4121
    %v4258 = vunpack.c.l.b16 %v4122
    %v4259 = vunpack.c.h.b16 %v4122
    %v4260 = vunpack.c.l.b16 %v4123
    %v4261 = vunpack.c.h.b16 %v4123
    %v4262 = vunpack.c.l.b16 %v4124
    %v4263 = vunpack.c.h.b16 %v4124
    %v4264 = vunpack.c.l.b16 %v4125
    %v4265 = vunpack.c.h.b16 %v4125
    %v4266 = vunpack.c.l.b16 %v4126
    %v4267 = vunpack.c.h.b16 %v4126
    %v4268 = vunpack.c.l.b16 %v4127
    %v4269 = vunpack.c.h.b16 %v4127
    %v4270 = vunpack.c.l.b16 %v4128
    %v4271 = vunpack.c.h.b16 %v4128
    %v4272 = vunpack.c.l.b16 %v4129
    %v4273 = vunpack.c.h.b16 %v4129
    %v4274 = vunpack.c.l.b16 %v4130
    %v4275 = vunpack.c.h.b16 %v4130
    %v4276 = vunpack.c.l.b16 %v4131
    %v4277 = vunpack.c.h.b16 %v4131
    %v4278 = vunpack.c.l.b16 %v4132
    %v4279 = vunpack.c.h.b16 %v4132
    %v4280 = vunpack.c.l.b16 %v4133
    %v4281 = vunpack.c.h.b16 %v4133
    %v4282 = vunpack.c.l.b16 %v4134
    %v4283 = vunpack.c.h.b16 %v4134
    %v4284 = vunpack.c.l.b16 %v4135
    %v4285 = vunpack.c.h.b16 %v4135
    %v4286 = vunpack.c.l.b16 %v4136
    %v4287 = vunpack.c.h.b16 %v4136
    %v4288 = vunpack.c.l.b16 %v4137
    %v4289 = vunpack.c.h.b16 %v4137
    %v4290 = vunpack.c.l.b16 %v4138
    %v4291 = vunpack.c.h.b16 %v4138
    %v4292 = vunpack.c.l.b16 %v4139
    %v4293 = vunpack.c.h.b16 %v4139
    %v4294 = vunpack.c.l.b16 %v4140
    %v4295 = vunpack.c.h.b16 %v4140
    %v4296 = vunpack.c.l.b16 %v4141
    %v4297 = vunpack.c.h.b16 %v4141
    %v4298 = vunpack.c.l.b16 %v4142
    %v4299 = vunpack.c.h.b16 %v4142
    %v4300 = vunpack.c.l.b16 %v4143
    %v4301 = vunpack.c.h.b16 %v4143
    %v4302 = vunpack.c.l.b16 %v4144
    %v4303 = vunpack.c.h.b16 %v4144
    %v4304 = vunpack.c.l.b16 %v4145
    %v4305 = vunpack.c.h.b16 %v4145
    %v4306 = vunpack.c.l.b16 %v4146
    %v4307 = vunpack.c.h.b16 %v4146
    %v4308 = vunpack.c.l.b16 %v4147
    %v4309 = vunpack.c.h.b16 %v4147
    %v4310 = vunpack.c.l.b16 %v4148
    %v4311 = vunpack.c.h.b16 %v4148
    %v4312 = vunpack.c.l.b16 %v4149
    %v4313 = vunpack.c.h.b16 %v4149
    %v4314 = vunpack.c.l.b16 %v4150
    %v4315 = vunpack.c.h.b16 %v4150
    %v4316 = vunpack.c.l.b16 %v4151
    %v4317 = vunpack.c.h.b16 %v4151
    %v4318 = vunpack.c.l.b16 %v4152
    %v4319 = vunpack.c.h.b16 %v4152
    %v4320 = vunpack.c.l.b16 %v4153
    %v4321 = vunpack.c.h.b16 %v4153
    %v4322 = vunpack.c.l.b16 %v4154
    %v4323 = vunpack.c.h.b16 %v4154
    %v4324 = vunpack.c.l.b16 %v4155
    %v4325 = vunpack.c.h.b16 %v4155
    %v4326 = vunpack.c.l.b16 %v4156
    %v4327 = vunpack.c.h.b16 %v4156
    %v4328 = vunpack.c.l.b16 %v4157
    %v4329 = vunpack.c.h.b16 %v4157
    %v4330 = vunpack.c.l.b16 %v4158
    %v4331 = vunpack.c.h.b16 %v4158
    %v4332 = vunpack.c.l.b16 %v4159
    %v4333 = vunpack.c.h.b16 %v4159
    %v4334 = vunpack.c.l.b16 %v4160
    %v4335 = vunpack.c.h.b16 %v4160
    %v4336 = vunpack.c.l.b16 %v4161
    %v4337 = vunpack.c.h.b16 %v4161
    %v4338 = vunpack.c.l.b16 %v4162
    %v4339 = vunpack.c.h.b16 %v4162
    %v4340 = vunpack.c.l.b16 %v4163
    %v4341 = vunpack.c.h.b16 %v4163
    %v4342 = vunpack.c.l.b16 %v4164
    %v4343 = vunpack.c.h.b16 %v4164
    %v4344 = vunpack.c.l.b16 %v4165
    %v4345 = vunpack.c.h.b16 %v4165
    %v4346 = vunpack.c.l.b16 %v4166
    %v4347 = vunpack.c.h.b16 %v4166
    %v4348 = vunpack.c.l.b16 %v4167
    %v4349 = vunpack.c.h.b16 %v4167
    %v4350 = vunpack.c.l.b16 %v4168
    %v4351 = vunpack.c.h.b16 %v4168
    %v4352 = vunpack.c.l.b16 %v4169
    %v4353 = vunpack.c.h.b16 %v4169
    %v4354 = vunpack.c.l.b16 %v4170
    %v4355 = vunpack.c.h.b16 %v4170
    %v4356 = vunpack.c.l.b16 %v4171
    %v4357 = vunpack.c.h.b16 %v4171
    %v4358 = vunpack.c.l.b16 %v4172
    %v4359 = vunpack.c.h.b16 %v4172
    %v4360 = vunpack.c.l.b16 %v4173
    %v4361 = vunpack.c.h.b16 %v4173
    %v4362 = vunpack.c.l.b16 %v4174
    %v4363 = vunpack.c.h.b16 %v4174
    %v4364 = vunpack.c.l.b16 %v4175
    %v4365 = vunpack.c.h.b16 %v4175
    %v4366 = vunpack.c.l.b16 %v4176
    %v4367 = vunpack.c.h.b16 %v4176
    %v4368 = vunpack.c.l.b16 %v4177
    %v4369 = vunpack.c.h.b16 %v4177
    %v4370 = vpack.c.b16 %v4246, %v4242
    %v4371 = vpack.c.b16 %v4247, %v4243
    %v4372 = vpack.c.b16 %v4248, %v4244
    %v4373 = vpack.c.b16 %v4249, %v4245
    %v4374 = vpack.c.b16 %v4254, %v4250
    %v4375 = vpack.c.b16 %v4255, %v4251
    %v4376 = vpack.c.b16 %v4256, %v4252
    %v4377 = vpack.c.b16 %v4257, %v4253
    %v4378 = vpack.c.b16 %v4262, %v4258
    %v4379 = vpack.c.b16 %v4263, %v4259
    %v4380 = vpack.c.b16 %v4264, %v4260
    %v4381 = vpack.c.b16 %v4265, %v4261
    %v4382 = vpack.c.b16 %v4270, %v4266
    %v4383 = vpack.c.b16 %v4271, %v4267
    %v4384 = vpack.c.b16 %v4272, %v4268
    %v4385 = vpack.c.b16 %v4273, %v4269
    %v4386 = vpack.c.b16 %v4278, %v4274
    %v4387 = vpack.c.b16 %v4279, %v4275
    %v4388 = vpack.c.b16 %v4280, %v4276
    %v4389 = vpack.c.b16 %v4281, %v4277
    %v4390 = vpack.c.b16 %v4286, %v4282
    %v4391 = vpack.c.b16 %v4287, %v4283
    %v4392 = vpack.c.b16 %v4288, %v4284
    %v4393 = vpack.c.b16 %v4289, %v4285
    %v4394 = vpack.c.b16 %v4294, %v4290
    %v4395 = vpack.c.b16 %v4295, %v4291
    %v4396 = vpack.c.b16 %v4296, %v4292
    %v4397 = vpack.c.b16 %v4297, %v4293
    %v4398 = vpack.c.b16 %v4302, %v4298
    %v4399 = vpack.c.b16 %v4303, %v4299
    %v4400 = vpack.c.b16 %v4304, %v4300
    %v4401 = vpack.c.b16 %v4305, %v4301
    %v4402 = vpack.c.b16 %v4310, %v4306
    %v4403 = vpack.c.b16 %v4311, %v4307
    %v4404 = vpack.c.b16 %v4312, %v4308
    %v4405 = vpack.c.b16 %v4313, %v4309
    %v4406 = vpack.c.b16 %v4318, %v4314
    %v4407 = vpack.c.b16 %v4319, %v4315
    %v4408 = vpack.c.b16 %v4320, %v4316
    %v4409 = vpack.c.b16 %v4321, %v4317
    %v4410 = vpack.c.b16 %v4326, %v4322
    %v4411 = vpack.c.b16 %v4327, %v4323
    %v4412 = vpack.c.b16 %v4328, %v4324
    %v4413 = vpack.c.b16 %v4329, %v4325
    %v4414 = vpack.c.b16 %v4334, %v4330
    %v4415 = vpack.c.b16 %v4335, %v4331
    %v4416 = vpack.c.b16 %v4336, %v4332
    %v4417 = vpack.c.b16 %v4337, %v4333
    %v4418 = vpack.c.b16 %v4342, %v4338
    %v4419 = vpack.c.b16 %v4343, %v4339
    %v4420 = vpack.c.b16 %v4344, %v4340
    %v4421 = vpack.c.b16 %v4345, %v4341
    %v4422 = vpack.c.b16 %v4350, %v4346
    %v4423 = vpack.c.b16 %v4351, %v4347
    %v4424 = vpack.c.b16 %v4352, %v4348
    %v4425 = vpack.c.b16 %v4353, %v4349
    %v4426 = vpack.c.b16 %v4358, %v4354
    %v4427 = vpack.c.b16 %v4359, %v4355
    %v4428 = vpack.c.b16 %v4360, %v4356
    %v4429 = vpack.c.b16 %v4361, %v4357
    %v4430 = vpack.c.b16 %v4366, %v4362
    %v4431 = vpack.c.b16 %v4367, %v4363
    %v4432 = vpack.c.b16 %v4368, %v4364
    %v4433 = vpack.c.b16 %v4369, %v4365
    %4498 = vmatprep.subr.bf16.mxu0 %v4371
    %4499 = vmatpush1.bf16.msra.mxu0 %v4370
    %4500 = vmatprep.subr.bf16.mxu0 %v4375
    %4501 = vmatpush1.bf16.msra.mxu0 %v4374
    %4502 = vmatprep.subr.bf16.mxu0 %v4379
    %4503 = vmatpush1.bf16.msra.mxu0 %v4378
    %4504 = vmatprep.subr.bf16.mxu0 %v4383
    %4505 = vmatpush1.bf16.msra.mxu0 %v4382
    %4506 = vmatprep.subr.bf16.mxu0 %v4387
    %4507 = vmatpush1.bf16.msra.mxu0 %v4386
    %4508 = vmatprep.subr.bf16.mxu0 %v4391
    %4509 = vmatpush1.bf16.msra.mxu0 %v4390
    %4510 = vmatprep.subr.bf16.mxu0 %v4395
    %4511 = vmatpush1.bf16.msra.mxu0 %v4394
    %4512 = vmatprep.subr.bf16.mxu0 %v4399
    %4513 = vmatpush1.bf16.msra.mxu0 %v4398
    %4514 = vmatprep.subr.bf16.mxu0 %v4403
    %4515 = vmatpush1.bf16.msra.mxu0 %v4402
    %4516 = vmatprep.subr.bf16.mxu0 %v4407
    %4517 = vmatpush1.bf16.msra.mxu0 %v4406
    %4518 = vmatprep.subr.bf16.mxu0 %v4411
    %4519 = vmatpush1.bf16.msra.mxu0 %v4410
    %4520 = vmatprep.subr.bf16.mxu0 %v4415
    %4521 = vmatpush1.bf16.msra.mxu0 %v4414
    %4522 = vmatprep.subr.bf16.mxu0 %v4419
    %4523 = vmatpush1.bf16.msra.mxu0 %v4418
    %4524 = vmatprep.subr.bf16.mxu0 %v4423
    %4525 = vmatpush1.bf16.msra.mxu0 %v4422
    %4526 = vmatprep.subr.bf16.mxu0 %v4427
    %4527 = vmatpush1.bf16.msra.mxu0 %v4426
    %4528 = vmatprep.subr.bf16.mxu0 %v4431
    %4529 = vmatpush1.bf16.msra.mxu0 %v4430
    %4530 = vmatprep.mubr.bf16.mxu0 %v4113
    %4531 = vmatmul.mubr.bf16.gmra.mrb[0].mxu0 %v4112
    %v4532 = vpop.f32.mrb[0].mxu0
    %v4533 = vadd.f32 0.0, %v4532
    %v4534 = vpop.f32.mrb[0].mxu0
    %v4535 = vadd.f32 0.0, %v4534
    %v4536 = vpop.f32.mrb[0].mxu0
    %v4537 = vpop.f32.mrb[0].mxu0
    %4538 = vdwg.mxu0
    %4539 = vmatprep.subr.bf16.mxu0 %v4373
    %4540 = vmatpush1.bf16.msra.mxu0 %v4372
    %4541 = vmatprep.subr.bf16.mxu0 %v4377
    %4542 = vmatpush1.bf16.msra.mxu0 %v4376
    %4543 = vmatprep.subr.bf16.mxu0 %v4381
    %4544 = vmatpush1.bf16.msra.mxu0 %v4380
    %4545 = vmatprep.subr.bf16.mxu0 %v4385
    %4546 = vmatpush1.bf16.msra.mxu0 %v4384
    %4547 = vmatprep.subr.bf16.mxu0 %v4389
    %4548 = vmatpush1.bf16.msra.mxu0 %v4388
    %4549 = vmatprep.subr.bf16.mxu0 %v4393
    %4550 = vmatpush1.bf16.msra.mxu0 %v4392
    %4551 = vmatprep.subr.bf16.mxu0 %v4397
    %4552 = vmatpush1.bf16.msra.mxu0 %v4396
    %4553 = vmatprep.subr.bf16.mxu0 %v4401
    %4554 = vmatpush1.bf16.msra.mxu0 %v4400
    %4555 = vmatprep.subr.bf16.mxu0 %v4405
    %4556 = vmatpush1.bf16.msra.mxu0 %v4404
    %4557 = vmatprep.subr.bf16.mxu0 %v4409
    %4558 = vmatpush1.bf16.msra.mxu0 %v4408
    %4559 = vmatprep.subr.bf16.mxu0 %v4413
    %4560 = vmatpush1.bf16.msra.mxu0 %v4412
    %4561 = vmatprep.subr.bf16.mxu0 %v4417
    %4562 = vmatpush1.bf16.msra.mxu0 %v4416
    %4563 = vmatprep.subr.bf16.mxu0 %v4421
    %4564 = vmatpush1.bf16.msra.mxu0 %v4420
    %4565 = vmatprep.subr.bf16.mxu0 %v4425
    %4566 = vmatpush1.bf16.msra.mxu0 %v4424
    %4567 = vmatprep.subr.bf16.mxu0 %v4429
    %4568 = vmatpush1.bf16.msra.mxu0 %v4428
    %4569 = vmatprep.subr.bf16.mxu0 %v4433
    %4570 = vmatpush1.bf16.msra.mxu0 %v4432
    %4571 = vmatprep.mubr.bf16.mxu0 %v4113
    %4572 = vmatmul.mubr.bf16.gmra.mrb[0].mxu0 %v4112
    %v4573 = vpop.f32.mrb[0].mxu0
    %v4574 = vadd.f32 0.0, %v4573
    %v4575 = vpop.f32.mrb[0].mxu0
    %v4576 = vadd.f32 0.0, %v4575
    %v4577 = vpop.f32.mrb[0].mxu0
    %v4578 = vpop.f32.mrb[0].mxu0
    %4579 = vdwg.mxu0
    %v4580 = vadd.f32 %v4065, %v4533
    %v4581 = vadd.f32 %v4067, %v4535
    %v4582 = vadd.f32 %v4106, %v4574
    %v4583 = vadd.f32 %v4108, %v4576
    %v4584 = vpack.c.bf16 %v3174, %v3174
    %v4585 = vpack.c.bf16 %v3175, %v3175
    %v4586 = vld [vmem:[#allocation7 + $0x600] sm:$0xff]
    %v4587 = vld [vmem:[#allocation7 + $0x608] sm:$0xff]
    %v4588 = vld [vmem:[#allocation7 + $0x610] sm:$0xff]
    %v4589 = vld [vmem:[#allocation7 + $0x618] sm:$0xff]
    %v4590 = vld [vmem:[#allocation7 + $0x620] sm:$0xff]
    %v4591 = vld [vmem:[#allocation7 + $0x628] sm:$0xff]
    %v4592 = vld [vmem:[#allocation7 + $0x630] sm:$0xff]
    %v4593 = vld [vmem:[#allocation7 + $0x638] sm:$0xff]
    %v4594 = vld [vmem:[#allocation7 + $0x640] sm:$0xff]
    %v4595 = vld [vmem:[#allocation7 + $0x648] sm:$0xff]
    %v4596 = vld [vmem:[#allocation7 + $0x650] sm:$0xff]
    %v4597 = vld [vmem:[#allocation7 + $0x658] sm:$0xff]
    %v4598 = vld [vmem:[#allocation7 + $0x660] sm:$0xff]
    %v4599 = vld [vmem:[#allocation7 + $0x668] sm:$0xff]
    %v4600 = vld [vmem:[#allocation7 + $0x670] sm:$0xff]
    %v4601 = vld [vmem:[#allocation7 + $0x678] sm:$0xff]
    %v4602 = vld [vmem:[#allocation7 + $0x680] sm:$0xff]
    %v4603 = vld [vmem:[#allocation7 + $0x688] sm:$0xff]
    %v4604 = vld [vmem:[#allocation7 + $0x690] sm:$0xff]
    %v4605 = vld [vmem:[#allocation7 + $0x698] sm:$0xff]
    %v4606 = vld [vmem:[#allocation7 + $0x6a0] sm:$0xff]
    %v4607 = vld [vmem:[#allocation7 + $0x6a8] sm:$0xff]
    %v4608 = vld [vmem:[#allocation7 + $0x6b0] sm:$0xff]
    %v4609 = vld [vmem:[#allocation7 + $0x6b8] sm:$0xff]
    %v4610 = vld [vmem:[#allocation7 + $0x6c0] sm:$0xff]
    %v4611 = vld [vmem:[#allocation7 + $0x6c8] sm:$0xff]
    %v4612 = vld [vmem:[#allocation7 + $0x6d0] sm:$0xff]
    %v4613 = vld [vmem:[#allocation7 + $0x6d8] sm:$0xff]
    %v4614 = vld [vmem:[#allocation7 + $0x6e0] sm:$0xff]
    %v4615 = vld [vmem:[#allocation7 + $0x6e8] sm:$0xff]
    %v4616 = vld [vmem:[#allocation7 + $0x6f0] sm:$0xff]
    %v4617 = vld [vmem:[#allocation7 + $0x6f8] sm:$0xff]
    %v4618 = vld [vmem:[#allocation7 + $0x700] sm:$0xff]
    %v4619 = vld [vmem:[#allocation7 + $0x708] sm:$0xff]
    %v4620 = vld [vmem:[#allocation7 + $0x710] sm:$0xff]
    %v4621 = vld [vmem:[#allocation7 + $0x718] sm:$0xff]
    %v4622 = vld [vmem:[#allocation7 + $0x720] sm:$0xff]
    %v4623 = vld [vmem:[#allocation7 + $0x728] sm:$0xff]
    %v4624 = vld [vmem:[#allocation7 + $0x730] sm:$0xff]
    %v4625 = vld [vmem:[#allocation7 + $0x738] sm:$0xff]
    %v4626 = vld [vmem:[#allocation7 + $0x740] sm:$0xff]
    %v4627 = vld [vmem:[#allocation7 + $0x748] sm:$0xff]
    %v4628 = vld [vmem:[#allocation7 + $0x750] sm:$0xff]
    %v4629 = vld [vmem:[#allocation7 + $0x758] sm:$0xff]
    %v4630 = vld [vmem:[#allocation7 + $0x760] sm:$0xff]
    %v4631 = vld [vmem:[#allocation7 + $0x768] sm:$0xff]
    %v4632 = vld [vmem:[#allocation7 + $0x770] sm:$0xff]
    %v4633 = vld [vmem:[#allocation7 + $0x778] sm:$0xff]
    %v4634 = vld [vmem:[#allocation7 + $0x780] sm:$0xff]
    %v4635 = vld [vmem:[#allocation7 + $0x788] sm:$0xff]
    %v4636 = vld [vmem:[#allocation7 + $0x790] sm:$0xff]
    %v4637 = vld [vmem:[#allocation7 + $0x798] sm:$0xff]
    %v4638 = vld [vmem:[#allocation7 + $0x7a0] sm:$0xff]
    %v4639 = vld [vmem:[#allocation7 + $0x7a8] sm:$0xff]
    %v4640 = vld [vmem:[#allocation7 + $0x7b0] sm:$0xff]
    %v4641 = vld [vmem:[#allocation7 + $0x7b8] sm:$0xff]
    %v4642 = vld [vmem:[#allocation7 + $0x7c0] sm:$0xff]
    %v4643 = vld [vmem:[#allocation7 + $0x7c8] sm:$0xff]
    %v4644 = vld [vmem:[#allocation7 + $0x7d0] sm:$0xff]
    %v4645 = vld [vmem:[#allocation7 + $0x7d8] sm:$0xff]
    %v4646 = vld [vmem:[#allocation7 + $0x7e0] sm:$0xff]
    %v4647 = vld [vmem:[#allocation7 + $0x7e8] sm:$0xff]
    %v4648 = vld [vmem:[#allocation7 + $0x7f0] sm:$0xff]
    %v4649 = vld [vmem:[#allocation7 + $0x7f8] sm:$0xff]
    %v4714 = vunpack.c.l.b16 %v4586
    %v4715 = vunpack.c.h.b16 %v4586
    %v4716 = vunpack.c.l.b16 %v4587
    %v4717 = vunpack.c.h.b16 %v4587
    %v4718 = vunpack.c.l.b16 %v4588
    %v4719 = vunpack.c.h.b16 %v4588
    %v4720 = vunpack.c.l.b16 %v4589
    %v4721 = vunpack.c.h.b16 %v4589
    %v4722 = vunpack.c.l.b16 %v4590
    %v4723 = vunpack.c.h.b16 %v4590
    %v4724 = vunpack.c.l.b16 %v4591
    %v4725 = vunpack.c.h.b16 %v4591
    %v4726 = vunpack.c.l.b16 %v4592
    %v4727 = vunpack.c.h.b16 %v4592
    %v4728 = vunpack.c.l.b16 %v4593
    %v4729 = vunpack.c.h.b16 %v4593
    %v4730 = vunpack.c.l.b16 %v4594
    %v4731 = vunpack.c.h.b16 %v4594
    %v4732 = vunpack.c.l.b16 %v4595
    %v4733 = vunpack.c.h.b16 %v4595
    %v4734 = vunpack.c.l.b16 %v4596
    %v4735 = vunpack.c.h.b16 %v4596
    %v4736 = vunpack.c.l.b16 %v4597
    %v4737 = vunpack.c.h.b16 %v4597
    %v4738 = vunpack.c.l.b16 %v4598
    %v4739 = vunpack.c.h.b16 %v4598
    %v4740 = vunpack.c.l.b16 %v4599
    %v4741 = vunpack.c.h.b16 %v4599
    %v4742 = vunpack.c.l.b16 %v4600
    %v4743 = vunpack.c.h.b16 %v4600
    %v4744 = vunpack.c.l.b16 %v4601
    %v4745 = vunpack.c.h.b16 %v4601
    %v4746 = vunpack.c.l.b16 %v4602
    %v4747 = vunpack.c.h.b16 %v4602
    %v4748 = vunpack.c.l.b16 %v4603
    %v4749 = vunpack.c.h.b16 %v4603
    %v4750 = vunpack.c.l.b16 %v4604
    %v4751 = vunpack.c.h.b16 %v4604
    %v4752 = vunpack.c.l.b16 %v4605
    %v4753 = vunpack.c.h.b16 %v4605
    %v4754 = vunpack.c.l.b16 %v4606
    %v4755 = vunpack.c.h.b16 %v4606
    %v4756 = vunpack.c.l.b16 %v4607
    %v4757 = vunpack.c.h.b16 %v4607
    %v4758 = vunpack.c.l.b16 %v4608
    %v4759 = vunpack.c.h.b16 %v4608
    %v4760 = vunpack.c.l.b16 %v4609
    %v4761 = vunpack.c.h.b16 %v4609
    %v4762 = vunpack.c.l.b16 %v4610
    %v4763 = vunpack.c.h.b16 %v4610
    %v4764 = vunpack.c.l.b16 %v4611
    %v4765 = vunpack.c.h.b16 %v4611
    %v4766 = vunpack.c.l.b16 %v4612
    %v4767 = vunpack.c.h.b16 %v4612
    %v4768 = vunpack.c.l.b16 %v4613
    %v4769 = vunpack.c.h.b16 %v4613
    %v4770 = vunpack.c.l.b16 %v4614
    %v4771 = vunpack.c.h.b16 %v4614
    %v4772 = vunpack.c.l.b16 %v4615
    %v4773 = vunpack.c.h.b16 %v4615
    %v4774 = vunpack.c.l.b16 %v4616
    %v4775 = vunpack.c.h.b16 %v4616
    %v4776 = vunpack.c.l.b16 %v4617
    %v4777 = vunpack.c.h.b16 %v4617
    %v4778 = vunpack.c.l.b16 %v4618
    %v4779 = vunpack.c.h.b16 %v4618
    %v4780 = vunpack.c.l.b16 %v4619
    %v4781 = vunpack.c.h.b16 %v4619
    %v4782 = vunpack.c.l.b16 %v4620
    %v4783 = vunpack.c.h.b16 %v4620
    %v4784 = vunpack.c.l.b16 %v4621
    %v4785 = vunpack.c.h.b16 %v4621
    %v4786 = vunpack.c.l.b16 %v4622
    %v4787 = vunpack.c.h.b16 %v4622
    %v4788 = vunpack.c.l.b16 %v4623
    %v4789 = vunpack.c.h.b16 %v4623
    %v4790 = vunpack.c.l.b16 %v4624
    %v4791 = vunpack.c.h.b16 %v4624
    %v4792 = vunpack.c.l.b16 %v4625
    %v4793 = vunpack.c.h.b16 %v4625
    %v4794 = vunpack.c.l.b16 %v4626
    %v4795 = vunpack.c.h.b16 %v4626
    %v4796 = vunpack.c.l.b16 %v4627
    %v4797 = vunpack.c.h.b16 %v4627
    %v4798 = vunpack.c.l.b16 %v4628
    %v4799 = vunpack.c.h.b16 %v4628
    %v4800 = vunpack.c.l.b16 %v4629
    %v4801 = vunpack.c.h.b16 %v4629
    %v4802 = vunpack.c.l.b16 %v4630
    %v4803 = vunpack.c.h.b16 %v4630
    %v4804 = vunpack.c.l.b16 %v4631
    %v4805 = vunpack.c.h.b16 %v4631
    %v4806 = vunpack.c.l.b16 %v4632
    %v4807 = vunpack.c.h.b16 %v4632
    %v4808 = vunpack.c.l.b16 %v4633
    %v4809 = vunpack.c.h.b16 %v4633
    %v4810 = vunpack.c.l.b16 %v4634
    %v4811 = vunpack.c.h.b16 %v4634
    %v4812 = vunpack.c.l.b16 %v4635
    %v4813 = vunpack.c.h.b16 %v4635
    %v4814 = vunpack.c.l.b16 %v4636
    %v4815 = vunpack.c.h.b16 %v4636
    %v4816 = vunpack.c.l.b16 %v4637
    %v4817 = vunpack.c.h.b16 %v4637
    %v4818 = vunpack.c.l.b16 %v4638
    %v4819 = vunpack.c.h.b16 %v4638
    %v4820 = vunpack.c.l.b16 %v4639
    %v4821 = vunpack.c.h.b16 %v4639
    %v4822 = vunpack.c.l.b16 %v4640
    %v4823 = vunpack.c.h.b16 %v4640
    %v4824 = vunpack.c.l.b16 %v4641
    %v4825 = vunpack.c.h.b16 %v4641
    %v4826 = vunpack.c.l.b16 %v4642
    %v4827 = vunpack.c.h.b16 %v4642
    %v4828 = vunpack.c.l.b16 %v4643
    %v4829 = vunpack.c.h.b16 %v4643
    %v4830 = vunpack.c.l.b16 %v4644
    %v4831 = vunpack.c.h.b16 %v4644
    %v4832 = vunpack.c.l.b16 %v4645
    %v4833 = vunpack.c.h.b16 %v4645
    %v4834 = vunpack.c.l.b16 %v4646
    %v4835 = vunpack.c.h.b16 %v4646
    %v4836 = vunpack.c.l.b16 %v4647
    %v4837 = vunpack.c.h.b16 %v4647
    %v4838 = vunpack.c.l.b16 %v4648
    %v4839 = vunpack.c.h.b16 %v4648
    %v4840 = vunpack.c.l.b16 %v4649
    %v4841 = vunpack.c.h.b16 %v4649
    %v4842 = vpack.c.b16 %v4718, %v4714
    %v4843 = vpack.c.b16 %v4719, %v4715
    %v4844 = vpack.c.b16 %v4720, %v4716
    %v4845 = vpack.c.b16 %v4721, %v4717
    %v4846 = vpack.c.b16 %v4726, %v4722
    %v4847 = vpack.c.b16 %v4727, %v4723
    %v4848 = vpack.c.b16 %v4728, %v4724
    %v4849 = vpack.c.b16 %v4729, %v4725
    %v4850 = vpack.c.b16 %v4734, %v4730
    %v4851 = vpack.c.b16 %v4735, %v4731
    %v4852 = vpack.c.b16 %v4736, %v4732
    %v4853 = vpack.c.b16 %v4737, %v4733
    %v4854 = vpack.c.b16 %v4742, %v4738
    %v4855 = vpack.c.b16 %v4743, %v4739
    %v4856 = vpack.c.b16 %v4744, %v4740
    %v4857 = vpack.c.b16 %v4745, %v4741
    %v4858 = vpack.c.b16 %v4750, %v4746
    %v4859 = vpack.c.b16 %v4751, %v4747
    %v4860 = vpack.c.b16 %v4752, %v4748
    %v4861 = vpack.c.b16 %v4753, %v4749
    %v4862 = vpack.c.b16 %v4758, %v4754
    %v4863 = vpack.c.b16 %v4759, %v4755
    %v4864 = vpack.c.b16 %v4760, %v4756
    %v4865 = vpack.c.b16 %v4761, %v4757
    %v4866 = vpack.c.b16 %v4766, %v4762
    %v4867 = vpack.c.b16 %v4767, %v4763
    %v4868 = vpack.c.b16 %v4768, %v4764
    %v4869 = vpack.c.b16 %v4769, %v4765
    %v4870 = vpack.c.b16 %v4774, %v4770
    %v4871 = vpack.c.b16 %v4775, %v4771
    %v4872 = vpack.c.b16 %v4776, %v4772
    %v4873 = vpack.c.b16 %v4777, %v4773
    %v4874 = vpack.c.b16 %v4782, %v4778
    %v4875 = vpack.c.b16 %v4783, %v4779
    %v4876 = vpack.c.b16 %v4784, %v4780
    %v4877 = vpack.c.b16 %v4785, %v4781
    %v4878 = vpack.c.b16 %v4790, %v4786
    %v4879 = vpack.c.b16 %v4791, %v4787
    %v4880 = vpack.c.b16 %v4792, %v4788
    %v4881 = vpack.c.b16 %v4793, %v4789
    %v4882 = vpack.c.b16 %v4798, %v4794
    %v4883 = vpack.c.b16 %v4799, %v4795
    %v4884 = vpack.c.b16 %v4800, %v4796
    %v4885 = vpack.c.b16 %v4801, %v4797
    %v4886 = vpack.c.b16 %v4806, %v4802
    %v4887 = vpack.c.b16 %v4807, %v4803
    %v4888 = vpack.c.b16 %v4808, %v4804
    %v4889 = vpack.c.b16 %v4809, %v4805
    %v4890 = vpack.c.b16 %v4814, %v4810
    %v4891 = vpack.c.b16 %v4815, %v4811
    %v4892 = vpack.c.b16 %v4816, %v4812
    %v4893 = vpack.c.b16 %v4817, %v4813
    %v4894 = vpack.c.b16 %v4822, %v4818
    %v4895 = vpack.c.b16 %v4823, %v4819
    %v4896 = vpack.c.b16 %v4824, %v4820
    %v4897 = vpack.c.b16 %v4825, %v4821
    %v4898 = vpack.c.b16 %v4830, %v4826
    %v4899 = vpack.c.b16 %v4831, %v4827
    %v4900 = vpack.c.b16 %v4832, %v4828
    %v4901 = vpack.c.b16 %v4833, %v4829
    %v4902 = vpack.c.b16 %v4838, %v4834
    %v4903 = vpack.c.b16 %v4839, %v4835
    %v4904 = vpack.c.b16 %v4840, %v4836
    %v4905 = vpack.c.b16 %v4841, %v4837
    %4970 = vmatprep.subr.bf16.mxu0 %v4843
    %4971 = vmatpush1.bf16.msra.mxu0 %v4842
    %4972 = vmatprep.subr.bf16.mxu0 %v4847
    %4973 = vmatpush1.bf16.msra.mxu0 %v4846
    %4974 = vmatprep.subr.bf16.mxu0 %v4851
    %4975 = vmatpush1.bf16.msra.mxu0 %v4850
    %4976 = vmatprep.subr.bf16.mxu0 %v4855
    %4977 = vmatpush1.bf16.msra.mxu0 %v4854
    %4978 = vmatprep.subr.bf16.mxu0 %v4859
    %4979 = vmatpush1.bf16.msra.mxu0 %v4858
    %4980 = vmatprep.subr.bf16.mxu0 %v4863
    %4981 = vmatpush1.bf16.msra.mxu0 %v4862
    %4982 = vmatprep.subr.bf16.mxu0 %v4867
    %4983 = vmatpush1.bf16.msra.mxu0 %v4866
    %4984 = vmatprep.subr.bf16.mxu0 %v4871
    %4985 = vmatpush1.bf16.msra.mxu0 %v4870
    %4986 = vmatprep.subr.bf16.mxu0 %v4875
    %4987 = vmatpush1.bf16.msra.mxu0 %v4874
    %4988 = vmatprep.subr.bf16.mxu0 %v4879
    %4989 = vmatpush1.bf16.msra.mxu0 %v4878
    %4990 = vmatprep.subr.bf16.mxu0 %v4883
    %4991 = vmatpush1.bf16.msra.mxu0 %v4882
    %4992 = vmatprep.subr.bf16.mxu0 %v4887
    %4993 = vmatpush1.bf16.msra.mxu0 %v4886
    %4994 = vmatprep.subr.bf16.mxu0 %v4891
    %4995 = vmatpush1.bf16.msra.mxu0 %v4890
    %4996 = vmatprep.subr.bf16.mxu0 %v4895
    %4997 = vmatpush1.bf16.msra.mxu0 %v4894
    %4998 = vmatprep.subr.bf16.mxu0 %v4899
    %4999 = vmatpush1.bf16.msra.mxu0 %v4898
    %5000 = vmatprep.subr.bf16.mxu0 %v4903
    %5001 = vmatpush1.bf16.msra.mxu0 %v4902
    %5002 = vmatprep.mubr.bf16.mxu0 %v4585
    %5003 = vmatmul.mubr.bf16.gmra.mrb[0].mxu0 %v4584
    %v5004 = vpop.f32.mrb[0].mxu0
    %v5005 = vadd.f32 0.0, %v5004
    %v5006 = vpop.f32.mrb[0].mxu0
    %v5007 = vadd.f32 0.0, %v5006
    %v5008 = vpop.f32.mrb[0].mxu0
    %v5009 = vpop.f32.mrb[0].mxu0
    %5010 = vdwg.mxu0
    %5011 = vmatprep.subr.bf16.mxu0 %v4845
    %5012 = vmatpush1.bf16.msra.mxu0 %v4844
    %5013 = vmatprep.subr.bf16.mxu0 %v4849
    %5014 = vmatpush1.bf16.msra.mxu0 %v4848
    %5015 = vmatprep.subr.bf16.mxu0 %v4853
    %5016 = vmatpush1.bf16.msra.mxu0 %v4852
    %5017 = vmatprep.subr.bf16.mxu0 %v4857
    %5018 = vmatpush1.bf16.msra.mxu0 %v4856
    %5019 = vmatprep.subr.bf16.mxu0 %v4861
    %5020 = vmatpush1.bf16.msra.mxu0 %v4860
    %5021 = vmatprep.subr.bf16.mxu0 %v4865
    %5022 = vmatpush1.bf16.msra.mxu0 %v4864
    %5023 = vmatprep.subr.bf16.mxu0 %v4869
    %5024 = vmatpush1.bf16.msra.mxu0 %v4868
    %5025 = vmatprep.subr.bf16.mxu0 %v4873
    %5026 = vmatpush1.bf16.msra.mxu0 %v4872
    %5027 = vmatprep.subr.bf16.mxu0 %v4877
    %5028 = vmatpush1.bf16.msra.mxu0 %v4876
    %5029 = vmatprep.subr.bf16.mxu0 %v4881
    %5030 = vmatpush1.bf16.msra.mxu0 %v4880
    %5031 = vmatprep.subr.bf16.mxu0 %v4885
    %5032 = vmatpush1.bf16.msra.mxu0 %v4884
    %5033 = vmatprep.subr.bf16.mxu0 %v4889
    %5034 = vmatpush1.bf16.msra.mxu0 %v4888
    %5035 = vmatprep.subr.bf16.mxu0 %v4893
    %5036 = vmatpush1.bf16.msra.mxu0 %v4892
    %5037 = vmatprep.subr.bf16.mxu0 %v4897
    %5038 = vmatpush1.bf16.msra.mxu0 %v4896
    %5039 = vmatprep.subr.bf16.mxu0 %v4901
    %5040 = vmatpush1.bf16.msra.mxu0 %v4900
    %5041 = vmatprep.subr.bf16.mxu0 %v4905
    %5042 = vmatpush1.bf16.msra.mxu0 %v4904
    %5043 = vmatprep.mubr.bf16.mxu0 %v4585
    %5044 = vmatmul.mubr.bf16.gmra.mrb[0].mxu0 %v4584
    %v5045 = vpop.f32.mrb[0].mxu0
    %v5046 = vadd.f32 0.0, %v5045
    %v5047 = vpop.f32.mrb[0].mxu0
    %v5048 = vadd.f32 0.0, %v5047
    %v5049 = vpop.f32.mrb[0].mxu0
    %v5050 = vpop.f32.mrb[0].mxu0
    %5051 = vdwg.mxu0
    %v5052 = vadd.f32 %v4580, %v5005
    %v5053 = vadd.f32 %v4581, %v5007
    %v5054 = vadd.f32 %v4582, %v5046
    %v5055 = vadd.f32 %v4583, %v5048
    %vm5056 = vcmask 1041408
    %v5057 = vsel %vm5056, %v5052, 0.0
    %v5058 = vrot.slane %v5057, 4
    %v5059 = vadd.f32 %v5057, %v5058
    %v5060 = vrot.slane %v5059, 2
    %v5061 = vadd.f32 %v5059, %v5060
    %v5062 = vrot.slane %v5061, 1
    %v5063 = vadd.f32 %v5061, %v5062
    %v5064 = vsel %vm5056, %v5053, 0.0
    %v5065 = vrot.slane %v5064, 4
    %v5066 = vadd.f32 %v5064, %v5065
    %v5067 = vrot.slane %v5066, 2
    %v5068 = vadd.f32 %v5066, %v5067
    %v5069 = vrot.slane %v5068, 1
    %v5070 = vadd.f32 %v5068, %v5069
    %v5071 = vsel %vm5056, %v5054, 0.0
    %v5072 = vrot.slane %v5071, 4
    %v5073 = vadd.f32 %v5071, %v5072
    %v5074 = vrot.slane %v5073, 2
    %v5075 = vadd.f32 %v5073, %v5074
    %v5076 = vrot.slane %v5075, 1
    %v5077 = vadd.f32 %v5075, %v5076
    %v5078 = vsel %vm5056, %v5055, 0.0
    %v5079 = vrot.slane %v5078, 4
    %v5080 = vadd.f32 %v5078, %v5079
    %v5081 = vrot.slane %v5080, 2
    %v5082 = vadd.f32 %v5080, %v5081
    %v5083 = vrot.slane %v5082, 1
    %v5084 = vadd.f32 %v5082, %v5083
    %v5085 = vmul.f32 %v5052, %v5052
    %v5086 = vmul.f32 %v5053, %v5053
    %v5087 = vmul.f32 %v5054, %v5054
    %v5088 = vmul.f32 %v5055, %v5055
    %v5089 = vsel %vm5056, %v5085, 0.0
    %v5090 = vrot.slane %v5089, 4
    %v5091 = vadd.f32 %v5089, %v5090
    %v5092 = vrot.slane %v5091, 2
    %v5093 = vadd.f32 %v5091, %v5092
    %v5094 = vrot.slane %v5093, 1
    %v5095 = vadd.f32 %v5093, %v5094
    %v5096 = vsel %vm5056, %v5086, 0.0
    %v5097 = vrot.slane %v5096, 4
    %v5098 = vadd.f32 %v5096, %v5097
    %v5099 = vrot.slane %v5098, 2
    %v5100 = vadd.f32 %v5098, %v5099
    %v5101 = vrot.slane %v5100, 1
    %v5102 = vadd.f32 %v5100, %v5101
    %v5103 = vsel %vm5056, %v5087, 0.0
    %v5104 = vrot.slane %v5103, 4
    %v5105 = vadd.f32 %v5103, %v5104
    %v5106 = vrot.slane %v5105, 2
    %v5107 = vadd.f32 %v5105, %v5106
    %v5108 = vrot.slane %v5107, 1
    %v5109 = vadd.f32 %v5107, %v5108
    %v5110 = vsel %vm5056, %v5088, 0.0
    %v5111 = vrot.slane %v5110, 4
    %v5112 = vadd.f32 %v5110, %v5111
    %v5113 = vrot.slane %v5112, 2
    %v5114 = vadd.f32 %v5112, %v5113
    %v5115 = vrot.slane %v5114, 1
    %v5116 = vadd.f32 %v5114, %v5115
    %v5117 = vld [vmem:[%s6] sm:$0xff]
    %v5118 = vld [vmem:[%s6 + $0x8] sm:$0xff]
    %v5119 = vld [vmem:[%s6 + $0x10] sm:$0xff]
    %v5120 = vld [vmem:[%s6 + $0x18] sm:$0xff]
    %v5121 = vld [vmem:[%s6 + $0x20] sm:$0xff]
    %v5122 = vld [vmem:[%s6 + $0x28] sm:$0xff]
    %v5123 = vld [vmem:[%s6 + $0x30] sm:$0xff]
    %v5124 = vld [vmem:[%s6 + $0x38] sm:$0xff]
    %v5125 = vld [vmem:[%s6 + $0x40] sm:$0xff]
    %v5126 = vld [vmem:[%s6 + $0x48] sm:$0xff]
    %v5127 = vld [vmem:[%s6 + $0x50] sm:$0xff]
    %v5128 = vld [vmem:[%s6 + $0x58] sm:$0xff]
    %v5129 = vld [vmem:[%s6 + $0x60] sm:$0xff]
    %v5130 = vld [vmem:[%s6 + $0x68] sm:$0xff]
    %v5131 = vld [vmem:[%s6 + $0x70] sm:$0xff]
    %v5132 = vld [vmem:[%s6 + $0x78] sm:$0xff]
    %v5133 = vld [vmem:[%s6 + $0x80] sm:$0xff]
    %v5134 = vld [vmem:[%s6 + $0x88] sm:$0xff]
    %v5135 = vld [vmem:[%s6 + $0x90] sm:$0xff]
    %v5136 = vld [vmem:[%s6 + $0x98] sm:$0xff]
    %v5137 = vld [vmem:[%s6 + $0xa0] sm:$0xff]
    %v5138 = vld [vmem:[%s6 + $0xa8] sm:$0xff]
    %v5139 = vld [vmem:[%s6 + $0xb0] sm:$0xff]
    %v5140 = vld [vmem:[%s6 + $0xb8] sm:$0xff]
    %v5141 = vld [vmem:[%s6 + $0xc0] sm:$0xff]
    %v5142 = vld [vmem:[%s6 + $0xc8] sm:$0xff]
    %v5143 = vld [vmem:[%s6 + $0xd0] sm:$0xff]
    %v5144 = vld [vmem:[%s6 + $0xd8] sm:$0xff]
    %v5145 = vld [vmem:[%s6 + $0xe0] sm:$0xff]
    %v5146 = vld [vmem:[%s6 + $0xe8] sm:$0xff]
    %v5147 = vld [vmem:[%s6 + $0xf0] sm:$0xff]
    %v5148 = vld [vmem:[%s6 + $0xf8] sm:$0xff]
    %v5149 = vld [vmem:[%s6 + $0x100] sm:$0xff]
    %v5150 = vld [vmem:[%s6 + $0x108] sm:$0xff]
    %v5151 = vld [vmem:[%s6 + $0x110] sm:$0xff]
    %v5152 = vld [vmem:[%s6 + $0x118] sm:$0xff]
    %v5153 = vld [vmem:[%s6 + $0x120] sm:$0xff]
    %v5154 = vld [vmem:[%s6 + $0x128] sm:$0xff]
    %v5155 = vld [vmem:[%s6 + $0x130] sm:$0xff]
    %v5156 = vld [vmem:[%s6 + $0x138] sm:$0xff]
    %v5157 = vld [vmem:[%s6 + $0x140] sm:$0xff]
    %v5158 = vld [vmem:[%s6 + $0x148] sm:$0xff]
    %v5159 = vld [vmem:[%s6 + $0x150] sm:$0xff]
    %v5160 = vld [vmem:[%s6 + $0x158] sm:$0xff]
    %v5161 = vld [vmem:[%s6 + $0x160] sm:$0xff]
    %v5162 = vld [vmem:[%s6 + $0x168] sm:$0xff]
    %v5163 = vld [vmem:[%s6 + $0x170] sm:$0xff]
    %v5164 = vld [vmem:[%s6 + $0x178] sm:$0xff]
    %v5165 = vld [vmem:[%s6 + $0x180] sm:$0xff]
    %v5166 = vld [vmem:[%s6 + $0x188] sm:$0xff]
    %v5167 = vld [vmem:[%s6 + $0x190] sm:$0xff]
    %v5168 = vld [vmem:[%s6 + $0x198] sm:$0xff]
    %v5169 = vld [vmem:[%s6 + $0x1a0] sm:$0xff]
    %v5170 = vld [vmem:[%s6 + $0x1a8] sm:$0xff]
    %v5171 = vld [vmem:[%s6 + $0x1b0] sm:$0xff]
    %v5172 = vld [vmem:[%s6 + $0x1b8] sm:$0xff]
    %v5173 = vld [vmem:[%s6 + $0x1c0] sm:$0xff]
    %v5174 = vld [vmem:[%s6 + $0x1c8] sm:$0xff]
    %v5175 = vld [vmem:[%s6 + $0x1d0] sm:$0xff]
    %v5176 = vld [vmem:[%s6 + $0x1d8] sm:$0xff]
    %v5177 = vld [vmem:[%s6 + $0x1e0] sm:$0xff]
    %v5178 = vld [vmem:[%s6 + $0x1e8] sm:$0xff]
    %v5179 = vld [vmem:[%s6 + $0x1f0] sm:$0xff]
    %v5180 = vld [vmem:[%s6 + $0x1f8] sm:$0xff]
    %5181 = vmatprep.subr.mxu0 0.0
    %5182 = vmatpush1.msra.mxu0 %v5117
    %5183 = vmatprep.subr.mxu0 0.0
    %5184 = vmatpush1.msra.mxu0 %v5118
    %5185 = vmatprep.subr.mxu0 0.0
    %5186 = vmatpush1.msra.mxu0 %v5119
    %5187 = vmatprep.subr.mxu0 0.0
    %5188 = vmatpush1.msra.mxu0 %v5120
    %5189 = vmatprep.subr.mxu0 0.0
    %5190 = vmatpush1.msra.mxu0 %v5121
    %5191 = vmatprep.subr.mxu0 0.0
    %5192 = vmatpush1.msra.mxu0 %v5122
    %5193 = vmatprep.subr.mxu0 0.0
    %5194 = vmatpush1.msra.mxu0 %v5123
    %5195 = vmatprep.subr.mxu0 0.0
    %5196 = vmatpush1.msra.mxu0 %v5124
    %5197 = vmatprep.subr.mxu0 0.0
    %5198 = vmatpush1.msra.mxu0 %v5125
    %5199 = vmatprep.subr.mxu0 0.0
    %5200 = vmatpush1.msra.mxu0 %v5126
    %5201 = vmatprep.subr.mxu0 0.0
    %5202 = vmatpush1.msra.mxu0 %v5127
    %5203 = vmatprep.subr.mxu0 0.0
    %5204 = vmatpush1.msra.mxu0 %v5128
    %5205 = vmatprep.subr.mxu0 0.0
    %5206 = vmatpush1.msra.mxu0 %v5129
    %5207 = vmatprep.subr.mxu0 0.0
    %5208 = vmatpush1.msra.mxu0 %v5130
    %5209 = vmatprep.subr.mxu0 0.0
    %5210 = vmatpush1.msra.mxu0 %v5131
    %5211 = vmatprep.subr.mxu0 0.0
    %5212 = vmatpush1.msra.mxu0 %v5132
    %5213 = vmatprep.subr.mxu0 0.0
    %5214 = vmatpush1.msra.mxu0 %v5133
    %5215 = vmatprep.subr.mxu0 0.0
    %5216 = vmatpush1.msra.mxu0 %v5134
    %5217 = vmatprep.subr.mxu0 0.0
    %5218 = vmatpush1.msra.mxu0 %v5135
    %5219 = vmatprep.subr.mxu0 0.0
    %5220 = vmatpush1.msra.mxu0 %v5136
    %5221 = vmatprep.subr.mxu0 0.0
    %5222 = vmatpush1.msra.mxu0 %v5137
    %5223 = vmatprep.subr.mxu0 0.0
    %5224 = vmatpush1.msra.mxu0 %v5138
    %5225 = vmatprep.subr.mxu0 0.0
    %5226 = vmatpush1.msra.mxu0 %v5139
    %5227 = vmatprep.subr.mxu0 0.0
    %5228 = vmatpush1.msra.mxu0 %v5140
    %5229 = vmatprep.subr.mxu0 0.0
    %5230 = vmatpush1.msra.mxu0 %v5141
    %5231 = vmatprep.subr.mxu0 0.0
    %5232 = vmatpush1.msra.mxu0 %v5142
    %5233 = vmatprep.subr.mxu0 0.0
    %5234 = vmatpush1.msra.mxu0 %v5143
    %5235 = vmatprep.subr.mxu0 0.0
    %5236 = vmatpush1.msra.mxu0 %v5144
    %5237 = vmatprep.subr.mxu0 0.0
    %5238 = vmatpush1.msra.mxu0 %v5145
    %5239 = vmatprep.subr.mxu0 0.0
    %5240 = vmatpush1.msra.mxu0 %v5146
    %5241 = vmatprep.subr.mxu0 0.0
    %5242 = vmatpush1.msra.mxu0 %v5147
    %5243 = vmatprep.subr.mxu0 0.0
    %5244 = vmatpush1.msra.mxu0 %v5148
    %5245 = vmatprep.mubr.f32.mxu0 %v5070
    %5246 = vmatmul.mubr.f32.gmra.mrb[0].mxu0 %v5063
    %v5247 = vpop.f32.mrb[0].mxu0
    %v5248 = vadd.f32 0.0, %v5247
    %v5249 = vpop.f32.mrb[0].mxu0
    %5250 = vdwg.mxu0
    %5251 = vmatprep.subr.mxu0 0.0
    %5252 = vmatpush1.msra.mxu0 %v5149
    %5253 = vmatprep.subr.mxu0 0.0
    %5254 = vmatpush1.msra.mxu0 %v5150
    %5255 = vmatprep.subr.mxu0 0.0
    %5256 = vmatpush1.msra.mxu0 %v5151
    %5257 = vmatprep.subr.mxu0 0.0
    %5258 = vmatpush1.msra.mxu0 %v5152
    %5259 = vmatprep.subr.mxu0 0.0
    %5260 = vmatpush1.msra.mxu0 %v5153
    %5261 = vmatprep.subr.mxu0 0.0
    %5262 = vmatpush1.msra.mxu0 %v5154
    %5263 = vmatprep.subr.mxu0 0.0
    %5264 = vmatpush1.msra.mxu0 %v5155
    %5265 = vmatprep.subr.mxu0 0.0
    %5266 = vmatpush1.msra.mxu0 %v5156
    %5267 = vmatprep.subr.mxu0 0.0
    %5268 = vmatpush1.msra.mxu0 %v5157
    %5269 = vmatprep.subr.mxu0 0.0
    %5270 = vmatpush1.msra.mxu0 %v5158
    %5271 = vmatprep.subr.mxu0 0.0
    %5272 = vmatpush1.msra.mxu0 %v5159
    %5273 = vmatprep.subr.mxu0 0.0
    %5274 = vmatpush1.msra.mxu0 %v5160
    %5275 = vmatprep.subr.mxu0 0.0
    %5276 = vmatpush1.msra.mxu0 %v5161
    %5277 = vmatprep.subr.mxu0 0.0
    %5278 = vmatpush1.msra.mxu0 %v5162
    %5279 = vmatprep.subr.mxu0 0.0
    %5280 = vmatpush1.msra.mxu0 %v5163
    %5281 = vmatprep.subr.mxu0 0.0
    %5282 = vmatpush1.msra.mxu0 %v5164
    %5283 = vmatprep.subr.mxu0 0.0
    %5284 = vmatpush1.msra.mxu0 %v5165
    %5285 = vmatprep.subr.mxu0 0.0
    %5286 = vmatpush1.msra.mxu0 %v5166
    %5287 = vmatprep.subr.mxu0 0.0
    %5288 = vmatpush1.msra.mxu0 %v5167
    %5289 = vmatprep.subr.mxu0 0.0
    %5290 = vmatpush1.msra.mxu0 %v5168
    %5291 = vmatprep.subr.mxu0 0.0
    %5292 = vmatpush1.msra.mxu0 %v5169
    %5293 = vmatprep.subr.mxu0 0.0
    %5294 = vmatpush1.msra.mxu0 %v5170
    %5295 = vmatprep.subr.mxu0 0.0
    %5296 = vmatpush1.msra.mxu0 %v5171
    %5297 = vmatprep.subr.mxu0 0.0
    %5298 = vmatpush1.msra.mxu0 %v5172
    %5299 = vmatprep.subr.mxu0 0.0
    %5300 = vmatpush1.msra.mxu0 %v5173
    %5301 = vmatprep.subr.mxu0 0.0
    %5302 = vmatpush1.msra.mxu0 %v5174
    %5303 = vmatprep.subr.mxu0 0.0
    %5304 = vmatpush1.msra.mxu0 %v5175
    %5305 = vmatprep.subr.mxu0 0.0
    %5306 = vmatpush1.msra.mxu0 %v5176
    %5307 = vmatprep.subr.mxu0 0.0
    %5308 = vmatpush1.msra.mxu0 %v5177
    %5309 = vmatprep.subr.mxu0 0.0
    %5310 = vmatpush1.msra.mxu0 %v5178
    %5311 = vmatprep.subr.mxu0 0.0
    %5312 = vmatpush1.msra.mxu0 %v5179
    %5313 = vmatprep.subr.mxu0 0.0
    %5314 = vmatpush1.msra.mxu0 %v5180
    %5315 = vmatprep.mubr.f32.mxu0 %v5084
    %5316 = vmatmul.mubr.f32.gmra.mrb[0].mxu0 %v5077
    %v5317 = vpop.f32.mrb[0].mxu0
    %v5318 = vadd.f32 %v5248, %v5317
    %v5319 = vpop.f32.mrb[0].mxu0
    %5320 = vdwg.mxu0
    %v5321 = vmul.f32 %v5318, 0.03125
    %5322 = vmatprep.subr.mxu0 0.0
    %5323 = vmatpush1.msra.mxu0 %v5117
    %5324 = vmatprep.subr.mxu0 0.0
    %5325 = vmatpush1.msra.mxu0 %v5118
    %5326 = vmatprep.subr.mxu0 0.0
    %5327 = vmatpush1.msra.mxu0 %v5119
    %5328 = vmatprep.subr.mxu0 0.0
    %5329 = vmatpush1.msra.mxu0 %v5120
    %5330 = vmatprep.subr.mxu0 0.0
    %5331 = vmatpush1.msra.mxu0 %v5121
    %5332 = vmatprep.subr.mxu0 0.0
    %5333 = vmatpush1.msra.mxu0 %v5122
    %5334 = vmatprep.subr.mxu0 0.0
    %5335 = vmatpush1.msra.mxu0 %v5123
    %5336 = vmatprep.subr.mxu0 0.0
    %5337 = vmatpush1.msra.mxu0 %v5124
    %5338 = vmatprep.subr.mxu0 0.0
    %5339 = vmatpush1.msra.mxu0 %v5125
    %5340 = vmatprep.subr.mxu0 0.0
    %5341 = vmatpush1.msra.mxu0 %v5126
    %5342 = vmatprep.subr.mxu0 0.0
    %5343 = vmatpush1.msra.mxu0 %v5127
    %5344 = vmatprep.subr.mxu0 0.0
    %5345 = vmatpush1.msra.mxu0 %v5128
    %5346 = vmatprep.subr.mxu0 0.0
    %5347 = vmatpush1.msra.mxu0 %v5129
    %5348 = vmatprep.subr.mxu0 0.0
    %5349 = vmatpush1.msra.mxu0 %v5130
    %5350 = vmatprep.subr.mxu0 0.0
    %5351 = vmatpush1.msra.mxu0 %v5131
    %5352 = vmatprep.subr.mxu0 0.0
    %5353 = vmatpush1.msra.mxu0 %v5132
    %5354 = vmatprep.subr.mxu0 0.0
    %5355 = vmatpush1.msra.mxu0 %v5133
    %5356 = vmatprep.subr.mxu0 0.0
    %5357 = vmatpush1.msra.mxu0 %v5134
    %5358 = vmatprep.subr.mxu0 0.0
    %5359 = vmatpush1.msra.mxu0 %v5135
    %5360 = vmatprep.subr.mxu0 0.0
    %5361 = vmatpush1.msra.mxu0 %v5136
    %5362 = vmatprep.subr.mxu0 0.0
    %5363 = vmatpush1.msra.mxu0 %v5137
    %5364 = vmatprep.subr.mxu0 0.0
    %5365 = vmatpush1.msra.mxu0 %v5138
    %5366 = vmatprep.subr.mxu0 0.0
    %5367 = vmatpush1.msra.mxu0 %v5139
    %5368 = vmatprep.subr.mxu0 0.0
    %5369 = vmatpush1.msra.mxu0 %v5140
    %5370 = vmatprep.subr.mxu0 0.0
    %5371 = vmatpush1.msra.mxu0 %v5141
    %5372 = vmatprep.subr.mxu0 0.0
    %5373 = vmatpush1.msra.mxu0 %v5142
    %5374 = vmatprep.subr.mxu0 0.0
    %5375 = vmatpush1.msra.mxu0 %v5143
    %5376 = vmatprep.subr.mxu0 0.0
    %5377 = vmatpush1.msra.mxu0 %v5144
    %5378 = vmatprep.subr.mxu0 0.0
    %5379 = vmatpush1.msra.mxu0 %v5145
    %5380 = vmatprep.subr.mxu0 0.0
    %5381 = vmatpush1.msra.mxu0 %v5146
    %5382 = vmatprep.subr.mxu0 0.0
    %5383 = vmatpush1.msra.mxu0 %v5147
    %5384 = vmatprep.subr.mxu0 0.0
    %5385 = vmatpush1.msra.mxu0 %v5148
    %5386 = vmatprep.mubr.f32.mxu0 %v5102
    %5387 = vmatmul.mubr.f32.gmra.mrb[0].mxu0 %v5095
    %v5388 = vpop.f32.mrb[0].mxu0
    %v5389 = vadd.f32 0.0, %v5388
    %v5390 = vpop.f32.mrb[0].mxu0
    %5391 = vdwg.mxu0
    %5392 = vmatprep.subr.mxu0 0.0
    %5393 = vmatpush1.msra.mxu0 %v5149
    %5394 = vmatprep.subr.mxu0 0.0
    %5395 = vmatpush1.msra.mxu0 %v5150
    %5396 = vmatprep.subr.mxu0 0.0
    %5397 = vmatpush1.msra.mxu0 %v5151
    %5398 = vmatprep.subr.mxu0 0.0
    %5399 = vmatpush1.msra.mxu0 %v5152
    %5400 = vmatprep.subr.mxu0 0.0
    %5401 = vmatpush1.msra.mxu0 %v5153
    %5402 = vmatprep.subr.mxu0 0.0
    %5403 = vmatpush1.msra.mxu0 %v5154
    %5404 = vmatprep.subr.mxu0 0.0
    %5405 = vmatpush1.msra.mxu0 %v5155
    %5406 = vmatprep.subr.mxu0 0.0
    %5407 = vmatpush1.msra.mxu0 %v5156
    %5408 = vmatprep.subr.mxu0 0.0
    %5409 = vmatpush1.msra.mxu0 %v5157
    %5410 = vmatprep.subr.mxu0 0.0
    %5411 = vmatpush1.msra.mxu0 %v5158
    %5412 = vmatprep.subr.mxu0 0.0
    %5413 = vmatpush1.msra.mxu0 %v5159
    %5414 = vmatprep.subr.mxu0 0.0
    %5415 = vmatpush1.msra.mxu0 %v5160
    %5416 = vmatprep.subr.mxu0 0.0
    %5417 = vmatpush1.msra.mxu0 %v5161
    %5418 = vmatprep.subr.mxu0 0.0
    %5419 = vmatpush1.msra.mxu0 %v5162
    %5420 = vmatprep.subr.mxu0 0.0
    %5421 = vmatpush1.msra.mxu0 %v5163
    %5422 = vmatprep.subr.mxu0 0.0
    %5423 = vmatpush1.msra.mxu0 %v5164
    %5424 = vmatprep.subr.mxu0 0.0
    %5425 = vmatpush1.msra.mxu0 %v5165
    %5426 = vmatprep.subr.mxu0 0.0
    %5427 = vmatpush1.msra.mxu0 %v5166
    %5428 = vmatprep.subr.mxu0 0.0
    %5429 = vmatpush1.msra.mxu0 %v5167
    %5430 = vmatprep.subr.mxu0 0.0
    %5431 = vmatpush1.msra.mxu0 %v5168
    %5432 = vmatprep.subr.mxu0 0.0
    %5433 = vmatpush1.msra.mxu0 %v5169
    %5434 = vmatprep.subr.mxu0 0.0
    %5435 = vmatpush1.msra.mxu0 %v5170
    %5436 = vmatprep.subr.mxu0 0.0
    %5437 = vmatpush1.msra.mxu0 %v5171
    %5438 = vmatprep.subr.mxu0 0.0
    %5439 = vmatpush1.msra.mxu0 %v5172
    %5440 = vmatprep.subr.mxu0 0.0
    %5441 = vmatpush1.msra.mxu0 %v5173
    %5442 = vmatprep.subr.mxu0 0.0
    %5443 = vmatpush1.msra.mxu0 %v5174
    %5444 = vmatprep.subr.mxu0 0.0
    %5445 = vmatpush1.msra.mxu0 %v5175
    %5446 = vmatprep.subr.mxu0 0.0
    %5447 = vmatpush1.msra.mxu0 %v5176
    %5448 = vmatprep.subr.mxu0 0.0
    %5449 = vmatpush1.msra.mxu0 %v5177
    %5450 = vmatprep.subr.mxu0 0.0
    %5451 = vmatpush1.msra.mxu0 %v5178
    %5452 = vmatprep.subr.mxu0 0.0
    %5453 = vmatpush1.msra.mxu0 %v5179
    %5454 = vmatprep.subr.mxu0 0.0
    %5455 = vmatpush1.msra.mxu0 %v5180
    %5456 = vmatprep.mubr.f32.mxu0 %v5116
    %5457 = vmatmul.mubr.f32.gmra.mrb[0].mxu0 %v5109
    %v5458 = vpop.f32.mrb[0].mxu0
    %v5459 = vadd.f32 %v5389, %v5458
    %v5460 = vpop.f32.mrb[0].mxu0
    %5461 = vdwg.mxu0
    %v5462 = vmul.f32 %v5459, 0.03125
    %v5463 = vmul.f32 %v5321, %v5321
    %v5464 = vsub.f32 %v5462, %v5463
    %v5465 = vmax.f32 %v5464, 0.0
    %v5466 = vld [vmem:[#allocation8] sm:$0x1]
    %v5467 = vadd.f32 %v5465, 1e-05
    %v5468 = vrsqrt.pop %v5467
    %v5469 = vmul.f32 %v5466, %v5468
    %v5470 = vld [vmem:[#allocation10] sm:$0x1]
    %v5471 = vmul.f32 %v5321, %v5469
    %v5472 = vsub.f32 %v5470, %v5471
    %v5473 = vld [vmem:[#allocation11] sm:$0xff]
    %v5474 = vld [vmem:[#allocation11 + $0x8] sm:$0xff]
    %v5475 = vld [vmem:[#allocation11 + $0x10] sm:$0xff]
    %v5476 = vld [vmem:[#allocation11 + $0x18] sm:$0xff]
    %v5477 = vld [vmem:[#allocation11 + $0x20] sm:$0xff]
    %v5478 = vld [vmem:[#allocation11 + $0x28] sm:$0xff]
    %v5479 = vld [vmem:[#allocation11 + $0x30] sm:$0xff]
    %v5480 = vld [vmem:[#allocation11 + $0x38] sm:$0xff]
    %v5481 = vld [vmem:[#allocation11 + $0x40] sm:$0xff]
    %v5482 = vld [vmem:[#allocation11 + $0x48] sm:$0xff]
    %v5483 = vld [vmem:[#allocation11 + $0x50] sm:$0xff]
    %v5484 = vld [vmem:[#allocation11 + $0x58] sm:$0xff]
    %v5485 = vld [vmem:[#allocation11 + $0x60] sm:$0xff]
    %v5486 = vld [vmem:[#allocation11 + $0x68] sm:$0xff]
    %v5487 = vld [vmem:[#allocation11 + $0x70] sm:$0xff]
    %v5488 = vld [vmem:[#allocation11 + $0x78] sm:$0xff]
    %vm5489 = vcmask 261120
    %v5491 = vsel %vm5489, %v5469, 0
    %5493 = vmatprep.subr.mxu0 %v5474
    %5494 = vmatpush1.msra.mxu0 %v5473
    %5495 = vmatprep.subr.mxu0 %v5478
    %5496 = vmatpush1.msra.mxu0 %v5477
    %5497 = vmatprep.subr.mxu0 %v5482
    %5498 = vmatpush1.msra.mxu0 %v5481
    %5499 = vmatprep.subr.mxu0 %v5486
    %5500 = vmatpush1.msra.mxu0 %v5485
    %5501 = vmatprep.subr.mxu0 0.0
    %5502 = vmatpush1.msra.mxu0 0.0
    %5503 = vmatprep.subr.mxu0 0.0
    %5504 = vmatpush1.msra.mxu0 0.0
    %5505 = vmatprep.subr.mxu0 0.0
    %5506 = vmatpush1.msra.mxu0 0.0
    %5507 = vmatprep.subr.mxu0 0.0
    %5508 = vmatpush1.msra.mxu0 0.0
    %5509 = vmatprep.subr.mxu0 0.0
    %5510 = vmatpush1.msra.mxu0 0.0
    %5511 = vmatprep.subr.mxu0 0.0
    %5512 = vmatpush1.msra.mxu0 0.0
    %5513 = vmatprep.subr.mxu0 0.0
    %5514 = vmatpush1.msra.mxu0 0.0
    %5515 = vmatprep.subr.mxu0 0.0
    %5516 = vmatpush1.msra.mxu0 0.0
    %5517 = vmatprep.subr.mxu0 0.0
    %5518 = vmatpush1.msra.mxu0 0.0
    %5519 = vmatprep.subr.mxu0 0.0
    %5520 = vmatpush1.msra.mxu0 0.0
    %5521 = vmatprep.subr.mxu0 0.0
    %5522 = vmatpush1.msra.mxu0 0.0
    %5523 = vmatprep.subr.mxu0 0.0
    %5524 = vmatpush1.msra.mxu0 0.0
    %5525 = vmatprep.subr.mxu0 0.0
    %5526 = vmatpush1.msra.mxu0 0.0
    %5527 = vmatprep.subr.mxu0 0.0
    %5528 = vmatpush1.msra.mxu0 0.0
    %5529 = vmatprep.subr.mxu0 0.0
    %5530 = vmatpush1.msra.mxu0 0.0
    %5531 = vmatprep.subr.mxu0 0.0
    %5532 = vmatpush1.msra.mxu0 0.0
    %5533 = vmatprep.subr.mxu0 0.0
    %5534 = vmatpush1.msra.mxu0 0.0
    %5535 = vmatprep.subr.mxu0 0.0
    %5536 = vmatpush1.msra.mxu0 0.0
    %5537 = vmatprep.subr.mxu0 0.0
    %5538 = vmatpush1.msra.mxu0 0.0
    %5539 = vmatprep.subr.mxu0 0.0
    %5540 = vmatpush1.msra.mxu0 0.0
    %5541 = vmatprep.subr.mxu0 0.0
    %5542 = vmatpush1.msra.mxu0 0.0
    %5543 = vmatprep.subr.mxu0 0.0
    %5544 = vmatpush1.msra.mxu0 0.0
    %5545 = vmatprep.subr.mxu0 0.0
    %5546 = vmatpush1.msra.mxu0 0.0
    %5547 = vmatprep.subr.mxu0 0.0
    %5548 = vmatpush1.msra.mxu0 0.0
    %5549 = vmatprep.subr.mxu0 0.0
    %5550 = vmatpush1.msra.mxu0 0.0
    %5551 = vmatprep.subr.mxu0 0.0
    %5552 = vmatpush1.msra.mxu0 0.0
    %5553 = vmatprep.subr.mxu0 0.0
    %5554 = vmatpush1.msra.mxu0 0.0
    %5555 = vmatprep.subr.mxu0 0.0
    %5556 = vmatpush1.msra.mxu0 0.0
    %5557 = vmatprep.mubr.f32.mxu0 0.0
    %5558 = vmatmul.mubr.f32.gmra.mrb[0].mxu0 %v5491
    %v5559 = vpop.f32.mrb[0].mxu0
    %v5560 = vadd.f32 0.0, %v5559
    %v5561 = vpop.f32.mrb[0].mxu0
    %v5562 = vadd.f32 0.0, %v5561
    %5563 = vdwg.mxu0
    %5564 = vmatprep.subr.mxu0 %v5476
    %5565 = vmatpush1.msra.mxu0 %v5475
    %5566 = vmatprep.subr.mxu0 %v5480
    %5567 = vmatpush1.msra.mxu0 %v5479
    %5568 = vmatprep.subr.mxu0 %v5484
    %5569 = vmatpush1.msra.mxu0 %v5483
    %5570 = vmatprep.subr.mxu0 %v5488
    %5571 = vmatpush1.msra.mxu0 %v5487
    %5572 = vmatprep.subr.mxu0 0.0
    %5573 = vmatpush1.msra.mxu0 0.0
    %5574 = vmatprep.subr.mxu0 0.0
    %5575 = vmatpush1.msra.mxu0 0.0
    %5576 = vmatprep.subr.mxu0 0.0
    %5577 = vmatpush1.msra.mxu0 0.0
    %5578 = vmatprep.subr.mxu0 0.0
    %5579 = vmatpush1.msra.mxu0 0.0
    %5580 = vmatprep.subr.mxu0 0.0
    %5581 = vmatpush1.msra.mxu0 0.0
    %5582 = vmatprep.subr.mxu0 0.0
    %5583 = vmatpush1.msra.mxu0 0.0
    %5584 = vmatprep.subr.mxu0 0.0
    %5585 = vmatpush1.msra.mxu0 0.0
    %5586 = vmatprep.subr.mxu0 0.0
    %5587 = vmatpush1.msra.mxu0 0.0
    %5588 = vmatprep.subr.mxu0 0.0
    %5589 = vmatpush1.msra.mxu0 0.0
    %5590 = vmatprep.subr.mxu0 0.0
    %5591 = vmatpush1.msra.mxu0 0.0
    %5592 = vmatprep.subr.mxu0 0.0
    %5593 = vmatpush1.msra.mxu0 0.0
    %5594 = vmatprep.subr.mxu0 0.0
    %5595 = vmatpush1.msra.mxu0 0.0
    %5596 = vmatprep.subr.mxu0 0.0
    %5597 = vmatpush1.msra.mxu0 0.0
    %5598 = vmatprep.subr.mxu0 0.0
    %5599 = vmatpush1.msra.mxu0 0.0
    %5600 = vmatprep.subr.mxu0 0.0
    %5601 = vmatpush1.msra.mxu0 0.0
    %5602 = vmatprep.subr.mxu0 0.0
    %5603 = vmatpush1.msra.mxu0 0.0
    %5604 = vmatprep.subr.mxu0 0.0
    %5605 = vmatpush1.msra.mxu0 0.0
    %5606 = vmatprep.subr.mxu0 0.0
    %5607 = vmatpush1.msra.mxu0 0.0
    %5608 = vmatprep.subr.mxu0 0.0
    %5609 = vmatpush1.msra.mxu0 0.0
    %5610 = vmatprep.subr.mxu0 0.0
    %5611 = vmatpush1.msra.mxu0 0.0
    %5612 = vmatprep.subr.mxu0 0.0
    %5613 = vmatpush1.msra.mxu0 0.0
    %5614 = vmatprep.subr.mxu0 0.0
    %5615 = vmatpush1.msra.mxu0 0.0
    %5616 = vmatprep.subr.mxu0 0.0
    %5617 = vmatpush1.msra.mxu0 0.0
    %5618 = vmatprep.subr.mxu0 0.0
    %5619 = vmatpush1.msra.mxu0 0.0
    %5620 = vmatprep.subr.mxu0 0.0
    %5621 = vmatpush1.msra.mxu0 0.0
    %5622 = vmatprep.subr.mxu0 0.0
    %5623 = vmatpush1.msra.mxu0 0.0
    %5624 = vmatprep.subr.mxu0 0.0
    %5625 = vmatpush1.msra.mxu0 0.0
    %5626 = vmatprep.subr.mxu0 0.0
    %5627 = vmatpush1.msra.mxu0 0.0
    %5628 = vmatprep.mubr.f32.mxu0 0.0
    %5629 = vmatmul.mubr.f32.gmra.mrb[0].mxu0 %v5491
    %v5630 = vpop.f32.mrb[0].mxu0
    %v5631 = vadd.f32 0.0, %v5630
    %v5632 = vpop.f32.mrb[0].mxu0
    %v5633 = vadd.f32 0.0, %v5632
    %5634 = vdwg.mxu0
    %v5636 = vsel %vm5489, %v5472, 0
    %5638 = vmatprep.subr.mxu0 %v5474
    %5639 = vmatpush1.msra.mxu0 %v5473
    %5640 = vmatprep.subr.mxu0 %v5478
    %5641 = vmatpush1.msra.mxu0 %v5477
    %5642 = vmatprep.subr.mxu0 %v5482
    %5643 = vmatpush1.msra.mxu0 %v5481
    %5644 = vmatprep.subr.mxu0 %v5486
    %5645 = vmatpush1.msra.mxu0 %v5485
    %5646 = vmatprep.subr.mxu0 0.0
    %5647 = vmatpush1.msra.mxu0 0.0
    %5648 = vmatprep.subr.mxu0 0.0
    %5649 = vmatpush1.msra.mxu0 0.0
    %5650 = vmatprep.subr.mxu0 0.0
    %5651 = vmatpush1.msra.mxu0 0.0
    %5652 = vmatprep.subr.mxu0 0.0
    %5653 = vmatpush1.msra.mxu0 0.0
    %5654 = vmatprep.subr.mxu0 0.0
    %5655 = vmatpush1.msra.mxu0 0.0
    %5656 = vmatprep.subr.mxu0 0.0
    %5657 = vmatpush1.msra.mxu0 0.0
    %5658 = vmatprep.subr.mxu0 0.0
    %5659 = vmatpush1.msra.mxu0 0.0
    %5660 = vmatprep.subr.mxu0 0.0
    %5661 = vmatpush1.msra.mxu0 0.0
    %5662 = vmatprep.subr.mxu0 0.0
    %5663 = vmatpush1.msra.mxu0 0.0
    %5664 = vmatprep.subr.mxu0 0.0
    %5665 = vmatpush1.msra.mxu0 0.0
    %5666 = vmatprep.subr.mxu0 0.0
    %5667 = vmatpush1.msra.mxu0 0.0
    %5668 = vmatprep.subr.mxu0 0.0
    %5669 = vmatpush1.msra.mxu0 0.0
    %5670 = vmatprep.subr.mxu0 0.0
    %5671 = vmatpush1.msra.mxu0 0.0
    %5672 = vmatprep.subr.mxu0 0.0
    %5673 = vmatpush1.msra.mxu0 0.0
    %5674 = vmatprep.subr.mxu0 0.0
    %5675 = vmatpush1.msra.mxu0 0.0
    %5676 = vmatprep.subr.mxu0 0.0
    %5677 = vmatpush1.msra.mxu0 0.0
    %5678 = vmatprep.subr.mxu0 0.0
    %5679 = vmatpush1.msra.mxu0 0.0
    %5680 = vmatprep.subr.mxu0 0.0
    %5681 = vmatpush1.msra.mxu0 0.0
    %5682 = vmatprep.subr.mxu0 0.0
    %5683 = vmatpush1.msra.mxu0 0.0
    %5684 = vmatprep.subr.mxu0 0.0
    %5685 = vmatpush1.msra.mxu0 0.0
    %5686 = vmatprep.subr.mxu0 0.0
    %5687 = vmatpush1.msra.mxu0 0.0
    %5688 = vmatprep.subr.mxu0 0.0
    %5689 = vmatpush1.msra.mxu0 0.0
    %5690 = vmatprep.subr.mxu0 0.0
    %5691 = vmatpush1.msra.mxu0 0.0
    %5692 = vmatprep.subr.mxu0 0.0
    %5693 = vmatpush1.msra.mxu0 0.0
    %5694 = vmatprep.subr.mxu0 0.0
    %5695 = vmatpush1.msra.mxu0 0.0
    %5696 = vmatprep.subr.mxu0 0.0
    %5697 = vmatpush1.msra.mxu0 0.0
    %5698 = vmatprep.subr.mxu0 0.0
    %5699 = vmatpush1.msra.mxu0 0.0
    %5700 = vmatprep.subr.mxu0 0.0
    %5701 = vmatpush1.msra.mxu0 0.0
    %5702 = vmatprep.mubr.f32.mxu0 0.0
    %5703 = vmatmul.mubr.f32.gmra.mrb[0].mxu0 %v5636
    %v5704 = vpop.f32.mrb[0].mxu0
    %v5705 = vadd.f32 0.0, %v5704
    %v5706 = vpop.f32.mrb[0].mxu0
    %v5707 = vadd.f32 0.0, %v5706
    %5708 = vdwg.mxu0
    %5709 = vmatprep.subr.mxu0 %v5476
    %5710 = vmatpush1.msra.mxu0 %v5475
    %5711 = vmatprep.subr.mxu0 %v5480
    %5712 = vmatpush1.msra.mxu0 %v5479
    %5713 = vmatprep.subr.mxu0 %v5484
    %5714 = vmatpush1.msra.mxu0 %v5483
    %5715 = vmatprep.subr.mxu0 %v5488
    %5716 = vmatpush1.msra.mxu0 %v5487
    %5717 = vmatprep.subr.mxu0 0.0
    %5718 = vmatpush1.msra.mxu0 0.0
    %5719 = vmatprep.subr.mxu0 0.0
    %5720 = vmatpush1.msra.mxu0 0.0
    %5721 = vmatprep.subr.mxu0 0.0
    %5722 = vmatpush1.msra.mxu0 0.0
    %5723 = vmatprep.subr.mxu0 0.0
    %5724 = vmatpush1.msra.mxu0 0.0
    %5725 = vmatprep.subr.mxu0 0.0
    %5726 = vmatpush1.msra.mxu0 0.0
    %5727 = vmatprep.subr.mxu0 0.0
    %5728 = vmatpush1.msra.mxu0 0.0
    %5729 = vmatprep.subr.mxu0 0.0
    %5730 = vmatpush1.msra.mxu0 0.0
    %5731 = vmatprep.subr.mxu0 0.0
    %5732 = vmatpush1.msra.mxu0 0.0
    %5733 = vmatprep.subr.mxu0 0.0
    %5734 = vmatpush1.msra.mxu0 0.0
    %5735 = vmatprep.subr.mxu0 0.0
    %5736 = vmatpush1.msra.mxu0 0.0
    %5737 = vmatprep.subr.mxu0 0.0
    %5738 = vmatpush1.msra.mxu0 0.0
    %5739 = vmatprep.subr.mxu0 0.0
    %5740 = vmatpush1.msra.mxu0 0.0
    %5741 = vmatprep.subr.mxu0 0.0
    %5742 = vmatpush1.msra.mxu0 0.0
    %5743 = vmatprep.subr.mxu0 0.0
    %5744 = vmatpush1.msra.mxu0 0.0
    %5745 = vmatprep.subr.mxu0 0.0
    %5746 = vmatpush1.msra.mxu0 0.0
    %5747 = vmatprep.subr.mxu0 0.0
    %5748 = vmatpush1.msra.mxu0 0.0
    %5749 = vmatprep.subr.mxu0 0.0
    %5750 = vmatpush1.msra.mxu0 0.0
    %5751 = vmatprep.subr.mxu0 0.0
    %5752 = vmatpush1.msra.mxu0 0.0
    %5753 = vmatprep.subr.mxu0 0.0
    %5754 = vmatpush1.msra.mxu0 0.0
    %5755 = vmatprep.subr.mxu0 0.0
    %5756 = vmatpush1.msra.mxu0 0.0
    %5757 = vmatprep.subr.mxu0 0.0
    %5758 = vmatpush1.msra.mxu0 0.0
    %5759 = vmatprep.subr.mxu0 0.0
    %5760 = vmatpush1.msra.mxu0 0.0
    %5761 = vmatprep.subr.mxu0 0.0
    %5762 = vmatpush1.msra.mxu0 0.0
    %5763 = vmatprep.subr.mxu0 0.0
    %5764 = vmatpush1.msra.mxu0 0.0
    %5765 = vmatprep.subr.mxu0 0.0
    %5766 = vmatpush1.msra.mxu0 0.0
    %5767 = vmatprep.subr.mxu0 0.0
    %5768 = vmatpush1.msra.mxu0 0.0
    %5769 = vmatprep.subr.mxu0 0.0
    %5770 = vmatpush1.msra.mxu0 0.0
    %5771 = vmatprep.subr.mxu0 0.0
    %5772 = vmatpush1.msra.mxu0 0.0
    %5773 = vmatprep.mubr.f32.mxu0 0.0
    %5774 = vmatmul.mubr.f32.gmra.mrb[0].mxu0 %v5636
    %v5775 = vpop.f32.mrb[0].mxu0
    %v5776 = vadd.f32 0.0, %v5775
    %v5777 = vpop.f32.mrb[0].mxu0
    %v5778 = vadd.f32 0.0, %v5777
    %5779 = vdwg.mxu0
    %v5780 = vlaneseq
    %v5781 = vshrl.u32 %v5780, 7
    %v5782 = vsub.s32 0, %v5781
    %v5783 = vrot.slane %v5560, %v5782
    %v5784 = vlaneseq
    %v5785 = vshrl.u32 %v5784, 7
    %v5786 = vsub.s32 0, %v5785
    %v5787 = vrot.slane %v5562, %v5786
    %v5788 = vlaneseq
    %v5789 = vshrl.u32 %v5788, 7
    %v5790 = vsub.s32 0, %v5789
    %v5791 = vrot.slane %v5631, %v5790
    %v5792 = vlaneseq
    %v5793 = vshrl.u32 %v5792, 7
    %v5794 = vsub.s32 0, %v5793
    %v5795 = vrot.slane %v5633, %v5794
    %v5796 = vmul.f32 %v5052, %v5783
    %v5797 = vmul.f32 %v5053, %v5787
    %v5798 = vmul.f32 %v5054, %v5791
    %v5799 = vmul.f32 %v5055, %v5795
    %v5800 = vlaneseq
    %v5801 = vshrl.u32 %v5800, 7
    %v5802 = vsub.s32 0, %v5801
    %v5803 = vrot.slane %v5705, %v5802
    %v5804 = vlaneseq
    %v5805 = vshrl.u32 %v5804, 7
    %v5806 = vsub.s32 0, %v5805
    %v5807 = vrot.slane %v5707, %v5806
    %v5808 = vlaneseq
    %v5809 = vshrl.u32 %v5808, 7
    %v5810 = vsub.s32 0, %v5809
    %v5811 = vrot.slane %v5776, %v5810
    %v5812 = vlaneseq
    %v5813 = vshrl.u32 %v5812, 7
    %v5814 = vsub.s32 0, %v5813
    %v5815 = vrot.slane %v5778, %v5814
    %v5816 = vadd.f32 %v5796, %v5803
    %v5817 = vadd.f32 %v5797, %v5807
    %v5818 = vadd.f32 %v5798, %v5811
    %v5819 = vadd.f32 %v5799, %v5815
    %vm5820 = vcmp.ge.f32.partialorder %v5816, 0.0
    %vm5821 = vcmp.ge.f32.partialorder %v5817, 0.0
    %vm5822 = vcmp.ge.f32.partialorder %v5818, 0.0
    %vm5823 = vcmp.ge.f32.partialorder %v5819, 0.0
    %v5824 = vmul.f32 %v5816, 0.2
    %v5825 = vmul.f32 %v5817, 0.2
    %v5826 = vmul.f32 %v5818, 0.2
    %v5827 = vmul.f32 %v5819, 0.2
    %v5828 = vsel %vm5820, %v5816, %v5824
    %v5829 = vsel %vm5821, %v5817, %v5825
    %v5830 = vsel %vm5822, %v5818, %v5826
    %v5831 = vsel %vm5823, %v5819, %v5827
    %v5832 = vpack.c.bf16 %v5828, %v5828
    %v5833 = vpack.c.bf16 %v5829, %v5829
    %v5834 = vld [vmem:[#allocation13] sm:$0xff]
    %v5835 = vld [vmem:[#allocation13 + $0x8] sm:$0xff]
    %v5836 = vld [vmem:[#allocation13 + $0x10] sm:$0xff]
    %v5837 = vld [vmem:[#allocation13 + $0x18] sm:$0xff]
    %v5838 = vld [vmem:[#allocation13 + $0x20] sm:$0xff]
    %v5839 = vld [vmem:[#allocation13 + $0x28] sm:$0xff]
    %v5840 = vld [vmem:[#allocation13 + $0x30] sm:$0xff]
    %v5841 = vld [vmem:[#allocation13 + $0x38] sm:$0xff]
    %v5842 = vld [vmem:[#allocation13 + $0x40] sm:$0xff]
    %v5843 = vld [vmem:[#allocation13 + $0x48] sm:$0xff]
    %v5844 = vld [vmem:[#allocation13 + $0x50] sm:$0xff]
    %v5845 = vld [vmem:[#allocation13 + $0x58] sm:$0xff]
    %v5846 = vld [vmem:[#allocation13 + $0x60] sm:$0xff]
    %v5847 = vld [vmem:[#allocation13 + $0x68] sm:$0xff]
    %v5848 = vld [vmem:[#allocation13 + $0x70] sm:$0xff]
    %v5849 = vld [vmem:[#allocation13 + $0x78] sm:$0xff]
    %v5850 = vld [vmem:[#allocation13 + $0x80] sm:$0xff]
    %v5851 = vld [vmem:[#allocation13 + $0x88] sm:$0xff]
    %v5852 = vld [vmem:[#allocation13 + $0x90] sm:$0xff]
    %v5853 = vld [vmem:[#allocation13 + $0x98] sm:$0xff]
    %v5854 = vld [vmem:[#allocation13 + $0xa0] sm:$0xff]
    %v5855 = vld [vmem:[#allocation13 + $0xa8] sm:$0xff]
    %v5856 = vld [vmem:[#allocation13 + $0xb0] sm:$0xff]
    %v5857 = vld [vmem:[#allocation13 + $0xb8] sm:$0xff]
    %v5858 = vld [vmem:[#allocation13 + $0xc0] sm:$0xff]
    %v5859 = vld [vmem:[#allocation13 + $0xc8] sm:$0xff]
    %v5860 = vld [vmem:[#allocation13 + $0xd0] sm:$0xff]
    %v5861 = vld [vmem:[#allocation13 + $0xd8] sm:$0xff]
    %v5862 = vld [vmem:[#allocation13 + $0xe0] sm:$0xff]
    %v5863 = vld [vmem:[#allocation13 + $0xe8] sm:$0xff]
    %v5864 = vld [vmem:[#allocation13 + $0xf0] sm:$0xff]
    %v5865 = vld [vmem:[#allocation13 + $0xf8] sm:$0xff]
    %v5866 = vpack.c.bf16 %v5830, %v5830
    %v5867 = vpack.c.bf16 %v5831, %v5831
    %v5868 = vld [vmem:[#allocation13 + $0x100] sm:$0xff]
    %v5869 = vld [vmem:[#allocation13 + $0x108] sm:$0xff]
    %v5870 = vld [vmem:[#allocation13 + $0x110] sm:$0xff]
    %v5871 = vld [vmem:[#allocation13 + $0x118] sm:$0xff]
    %v5872 = vld [vmem:[#allocation13 + $0x120] sm:$0xff]
    %v5873 = vld [vmem:[#allocation13 + $0x128] sm:$0xff]
    %v5874 = vld [vmem:[#allocation13 + $0x130] sm:$0xff]
    %v5875 = vld [vmem:[#allocation13 + $0x138] sm:$0xff]
    %v5876 = vld [vmem:[#allocation13 + $0x140] sm:$0xff]
    %v5877 = vld [vmem:[#allocation13 + $0x148] sm:$0xff]
    %v5878 = vld [vmem:[#allocation13 + $0x150] sm:$0xff]
    %v5879 = vld [vmem:[#allocation13 + $0x158] sm:$0xff]
    %v5880 = vld [vmem:[#allocation13 + $0x160] sm:$0xff]
    %v5881 = vld [vmem:[#allocation13 + $0x168] sm:$0xff]
    %v5882 = vld [vmem:[#allocation13 + $0x170] sm:$0xff]
    %v5883 = vld [vmem:[#allocation13 + $0x178] sm:$0xff]
    %v5884 = vld [vmem:[#allocation13 + $0x180] sm:$0xff]
    %v5885 = vld [vmem:[#allocation13 + $0x188] sm:$0xff]
    %v5886 = vld [vmem:[#allocation13 + $0x190] sm:$0xff]
    %v5887 = vld [vmem:[#allocation13 + $0x198] sm:$0xff]
    %v5888 = vld [vmem:[#allocation13 + $0x1a0] sm:$0xff]
    %v5889 = vld [vmem:[#allocation13 + $0x1a8] sm:$0xff]
    %v5890 = vld [vmem:[#allocation13 + $0x1b0] sm:$0xff]
    %v5891 = vld [vmem:[#allocation13 + $0x1b8] sm:$0xff]
    %v5892 = vld [vmem:[#allocation13 + $0x1c0] sm:$0xff]
    %v5893 = vld [vmem:[#allocation13 + $0x1c8] sm:$0xff]
    %v5894 = vld [vmem:[#allocation13 + $0x1d0] sm:$0xff]
    %v5895 = vld [vmem:[#allocation13 + $0x1d8] sm:$0xff]
    %v5896 = vld [vmem:[#allocation13 + $0x1e0] sm:$0xff]
    %v5897 = vld [vmem:[#allocation13 + $0x1e8] sm:$0xff]
    %v5898 = vld [vmem:[#allocation13 + $0x1f0] sm:$0xff]
    %v5899 = vld [vmem:[#allocation13 + $0x1f8] sm:$0xff]
    %v5932 = vunpack.c.l.b16 %v5868
    %v5933 = vunpack.c.h.b16 %v5868
    %v5934 = vunpack.c.l.b16 %v5869
    %v5935 = vunpack.c.h.b16 %v5869
    %v5936 = vunpack.c.l.b16 %v5870
    %v5937 = vunpack.c.h.b16 %v5870
    %v5938 = vunpack.c.l.b16 %v5871
    %v5939 = vunpack.c.h.b16 %v5871
    %v5940 = vunpack.c.l.b16 %v5872
    %v5941 = vunpack.c.h.b16 %v5872
    %v5942 = vunpack.c.l.b16 %v5873
    %v5943 = vunpack.c.h.b16 %v5873
    %v5944 = vunpack.c.l.b16 %v5874
    %v5945 = vunpack.c.h.b16 %v5874
    %v5946 = vunpack.c.l.b16 %v5875
    %v5947 = vunpack.c.h.b16 %v5875
    %v5948 = vunpack.c.l.b16 %v5876
    %v5949 = vunpack.c.h.b16 %v5876
    %v5950 = vunpack.c.l.b16 %v5877
    %v5951 = vunpack.c.h.b16 %v5877
    %v5952 = vunpack.c.l.b16 %v5878
    %v5953 = vunpack.c.h.b16 %v5878
    %v5954 = vunpack.c.l.b16 %v5879
    %v5955 = vunpack.c.h.b16 %v5879
    %v5956 = vunpack.c.l.b16 %v5880
    %v5957 = vunpack.c.h.b16 %v5880
    %v5958 = vunpack.c.l.b16 %v5881
    %v5959 = vunpack.c.h.b16 %v5881
    %v5960 = vunpack.c.l.b16 %v5882
    %v5961 = vunpack.c.h.b16 %v5882
    %v5962 = vunpack.c.l.b16 %v5883
    %v5963 = vunpack.c.h.b16 %v5883
    %v5964 = vunpack.c.l.b16 %v5884
    %v5965 = vunpack.c.h.b16 %v5884
    %v5966 = vunpack.c.l.b16 %v5885
    %v5967 = vunpack.c.h.b16 %v5885
    %v5968 = vunpack.c.l.b16 %v5886
    %v5969 = vunpack.c.h.b16 %v5886
    %v5970 = vunpack.c.l.b16 %v5887
    %v5971 = vunpack.c.h.b16 %v5887
    %v5972 = vunpack.c.l.b16 %v5888
    %v5973 = vunpack.c.h.b16 %v5888
    %v5974 = vunpack.c.l.b16 %v5889
    %v5975 = vunpack.c.h.b16 %v5889
    %v5976 = vunpack.c.l.b16 %v5890
    %v5977 = vunpack.c.h.b16 %v5890
    %v5978 = vunpack.c.l.b16 %v5891
    %v5979 = vunpack.c.h.b16 %v5891
    %v5980 = vunpack.c.l.b16 %v5892
    %v5981 = vunpack.c.h.b16 %v5892
    %v5982 = vunpack.c.l.b16 %v5893
    %v5983 = vunpack.c.h.b16 %v5893
    %v5984 = vunpack.c.l.b16 %v5894
    %v5985 = vunpack.c.h.b16 %v5894
    %v5986 = vunpack.c.l.b16 %v5895
    %v5987 = vunpack.c.h.b16 %v5895
    %v5988 = vunpack.c.l.b16 %v5896
    %v5989 = vunpack.c.h.b16 %v5896
    %v5990 = vunpack.c.l.b16 %v5897
    %v5991 = vunpack.c.h.b16 %v5897
    %v5992 = vunpack.c.l.b16 %v5898
    %v5993 = vunpack.c.h.b16 %v5898
    %v5994 = vunpack.c.l.b16 %v5899
    %v5995 = vunpack.c.h.b16 %v5899
    %v5996 = vpack.c.b16 %v5934, %v5932
    %v5997 = vpack.c.b16 %v5935, %v5933
    %v5998 = vpack.c.b16 %v5938, %v5936
    %v5999 = vpack.c.b16 %v5939, %v5937
    %v6000 = vpack.c.b16 %v5942, %v5940
    %v6001 = vpack.c.b16 %v5943, %v5941
    %v6002 = vpack.c.b16 %v5946, %v5944
    %v6003 = vpack.c.b16 %v5947, %v5945
    %v6004 = vpack.c.b16 %v5950, %v5948
    %v6005 = vpack.c.b16 %v5951, %v5949
    %v6006 = vpack.c.b16 %v5954, %v5952
    %v6007 = vpack.c.b16 %v5955, %v5953
    %v6008 = vpack.c.b16 %v5958, %v5956
    %v6009 = vpack.c.b16 %v5959, %v5957
    %v6010 = vpack.c.b16 %v5962, %v5960
    %v6011 = vpack.c.b16 %v5963, %v5961
    %v6012 = vpack.c.b16 %v5966, %v5964
    %v6013 = vpack.c.b16 %v5967, %v5965
    %v6014 = vpack.c.b16 %v5970, %v5968
    %v6015 = vpack.c.b16 %v5971, %v5969
    %v6016 = vpack.c.b16 %v5974, %v5972
    %v6017 = vpack.c.b16 %v5975, %v5973
    %v6018 = vpack.c.b16 %v5978, %v5976
    %v6019 = vpack.c.b16 %v5979, %v5977
    %v6020 = vpack.c.b16 %v5982, %v5980
    %v6021 = vpack.c.b16 %v5983, %v5981
    %v6022 = vpack.c.b16 %v5986, %v5984
    %v6023 = vpack.c.b16 %v5987, %v5985
    %v6024 = vpack.c.b16 %v5990, %v5988
    %v6025 = vpack.c.b16 %v5991, %v5989
    %v6026 = vpack.c.b16 %v5994, %v5992
    %v6027 = vpack.c.b16 %v5995, %v5993
    %6060 = vmatprep.subr.bf16.mxu0 %v5997
    %6061 = vmatpush1.bf16.msra.mxu0 %v5996
    %6062 = vmatprep.subr.bf16.mxu0 %v5999
    %6063 = vmatpush1.bf16.msra.mxu0 %v5998
    %6064 = vmatprep.subr.bf16.mxu0 %v6001
    %6065 = vmatpush1.bf16.msra.mxu0 %v6000
    %6066 = vmatprep.subr.bf16.mxu0 %v6003
    %6067 = vmatpush1.bf16.msra.mxu0 %v6002
    %6068 = vmatprep.subr.bf16.mxu0 %v6005
    %6069 = vmatpush1.bf16.msra.mxu0 %v6004
    %6070 = vmatprep.subr.bf16.mxu0 %v6007
    %6071 = vmatpush1.bf16.msra.mxu0 %v6006
    %6072 = vmatprep.subr.bf16.mxu0 %v6009
    %6073 = vmatpush1.bf16.msra.mxu0 %v6008
    %6074 = vmatprep.subr.bf16.mxu0 %v6011
    %6075 = vmatpush1.bf16.msra.mxu0 %v6010
    %6076 = vmatprep.subr.bf16.mxu0 %v6013
    %6077 = vmatpush1.bf16.msra.mxu0 %v6012
    %6078 = vmatprep.subr.bf16.mxu0 %v6015
    %6079 = vmatpush1.bf16.msra.mxu0 %v6014
    %6080 = vmatprep.subr.bf16.mxu0 %v6017
    %6081 = vmatpush1.bf16.msra.mxu0 %v6016
    %6082 = vmatprep.subr.bf16.mxu0 %v6019
    %6083 = vmatpush1.bf16.msra.mxu0 %v6018
    %6084 = vmatprep.subr.bf16.mxu0 %v6021
    %6085 = vmatpush1.bf16.msra.mxu0 %v6020
    %6086 = vmatprep.subr.bf16.mxu0 %v6023
    %6087 = vmatpush1.bf16.msra.mxu0 %v6022
    %6088 = vmatprep.subr.bf16.mxu0 %v6025
    %6089 = vmatpush1.bf16.msra.mxu0 %v6024
    %6090 = vmatprep.subr.bf16.mxu0 %v6027
    %6091 = vmatpush1.bf16.msra.mxu0 %v6026
    %6092 = vmatprep.mubr.bf16.mxu0 %v5867
    %6093 = vmatmul.mubr.bf16.gmra.mrb[0].mxu0 %v5866
    %v6094 = vpop.f32.mrb[0].mxu0
    %v6095 = vadd.f32 0.0, %v6094
    %v6096 = vpop.f32.mrb[0].mxu0
    %v6097 = vadd.f32 0.0, %v6096
    %v6098 = vpop.f32.mrb[0].mxu0
    %v6099 = vpop.f32.mrb[0].mxu0
    %6100 = vdwg.mxu0
    %v6133 = vunpack.c.l.b16 %v5834
    %v6134 = vunpack.c.h.b16 %v5834
    %v6135 = vunpack.c.l.b16 %v5835
    %v6136 = vunpack.c.h.b16 %v5835
    %v6137 = vunpack.c.l.b16 %v5836
    %v6138 = vunpack.c.h.b16 %v5836
    %v6139 = vunpack.c.l.b16 %v5837
    %v6140 = vunpack.c.h.b16 %v5837
    %v6141 = vunpack.c.l.b16 %v5838
    %v6142 = vunpack.c.h.b16 %v5838
    %v6143 = vunpack.c.l.b16 %v5839
    %v6144 = vunpack.c.h.b16 %v5839
    %v6145 = vunpack.c.l.b16 %v5840
    %v6146 = vunpack.c.h.b16 %v5840
    %v6147 = vunpack.c.l.b16 %v5841
    %v6148 = vunpack.c.h.b16 %v5841
    %v6149 = vunpack.c.l.b16 %v5842
    %v6150 = vunpack.c.h.b16 %v5842
    %v6151 = vunpack.c.l.b16 %v5843
    %v6152 = vunpack.c.h.b16 %v5843
    %v6153 = vunpack.c.l.b16 %v5844
    %v6154 = vunpack.c.h.b16 %v5844
    %v6155 = vunpack.c.l.b16 %v5845
    %v6156 = vunpack.c.h.b16 %v5845
    %v6157 = vunpack.c.l.b16 %v5846
    %v6158 = vunpack.c.h.b16 %v5846
    %v6159 = vunpack.c.l.b16 %v5847
    %v6160 = vunpack.c.h.b16 %v5847
    %v6161 = vunpack.c.l.b16 %v5848
    %v6162 = vunpack.c.h.b16 %v5848
    %v6163 = vunpack.c.l.b16 %v5849
    %v6164 = vunpack.c.h.b16 %v5849
    %v6165 = vunpack.c.l.b16 %v5850
    %v6166 = vunpack.c.h.b16 %v5850
    %v6167 = vunpack.c.l.b16 %v5851
    %v6168 = vunpack.c.h.b16 %v5851
    %v6169 = vunpack.c.l.b16 %v5852
    %v6170 = vunpack.c.h.b16 %v5852
    %v6171 = vunpack.c.l.b16 %v5853
    %v6172 = vunpack.c.h.b16 %v5853
    %v6173 = vunpack.c.l.b16 %v5854
    %v6174 = vunpack.c.h.b16 %v5854
    %v6175 = vunpack.c.l.b16 %v5855
    %v6176 = vunpack.c.h.b16 %v5855
    %v6177 = vunpack.c.l.b16 %v5856
    %v6178 = vunpack.c.h.b16 %v5856
    %v6179 = vunpack.c.l.b16 %v5857
    %v6180 = vunpack.c.h.b16 %v5857
    %v6181 = vunpack.c.l.b16 %v5858
    %v6182 = vunpack.c.h.b16 %v5858
    %v6183 = vunpack.c.l.b16 %v5859
    %v6184 = vunpack.c.h.b16 %v5859
    %v6185 = vunpack.c.l.b16 %v5860
    %v6186 = vunpack.c.h.b16 %v5860
    %v6187 = vunpack.c.l.b16 %v5861
    %v6188 = vunpack.c.h.b16 %v5861
    %v6189 = vunpack.c.l.b16 %v5862
    %v6190 = vunpack.c.h.b16 %v5862
    %v6191 = vunpack.c.l.b16 %v5863
    %v6192 = vunpack.c.h.b16 %v5863
    %v6193 = vunpack.c.l.b16 %v5864
    %v6194 = vunpack.c.h.b16 %v5864
    %v6195 = vunpack.c.l.b16 %v5865
    %v6196 = vunpack.c.h.b16 %v5865
    %v6197 = vpack.c.b16 %v6135, %v6133
    %v6198 = vpack.c.b16 %v6136, %v6134
    %v6199 = vpack.c.b16 %v6139, %v6137
    %v6200 = vpack.c.b16 %v6140, %v6138
    %v6201 = vpack.c.b16 %v6143, %v6141
    %v6202 = vpack.c.b16 %v6144, %v6142
    %v6203 = vpack.c.b16 %v6147, %v6145
    %v6204 = vpack.c.b16 %v6148, %v6146
    %v6205 = vpack.c.b16 %v6151, %v6149
    %v6206 = vpack.c.b16 %v6152, %v6150
    %v6207 = vpack.c.b16 %v6155, %v6153
    %v6208 = vpack.c.b16 %v6156, %v6154
    %v6209 = vpack.c.b16 %v6159, %v6157
    %v6210 = vpack.c.b16 %v6160, %v6158
    %v6211 = vpack.c.b16 %v6163, %v6161
    %v6212 = vpack.c.b16 %v6164, %v6162
    %v6213 = vpack.c.b16 %v6167, %v6165
    %v6214 = vpack.c.b16 %v6168, %v6166
    %v6215 = vpack.c.b16 %v6171, %v6169
    %v6216 = vpack.c.b16 %v6172, %v6170
    %v6217 = vpack.c.b16 %v6175, %v6173
    %v6218 = vpack.c.b16 %v6176, %v6174
    %v6219 = vpack.c.b16 %v6179, %v6177
    %v6220 = vpack.c.b16 %v6180, %v6178
    %v6221 = vpack.c.b16 %v6183, %v6181
    %v6222 = vpack.c.b16 %v6184, %v6182
    %v6223 = vpack.c.b16 %v6187, %v6185
    %v6224 = vpack.c.b16 %v6188, %v6186
    %v6225 = vpack.c.b16 %v6191, %v6189
    %v6226 = vpack.c.b16 %v6192, %v6190
    %v6227 = vpack.c.b16 %v6195, %v6193
    %v6228 = vpack.c.b16 %v6196, %v6194
    %6261 = vmatprep.subr.bf16.mxu0 %v6198
    %6262 = vmatpush1.bf16.msra.mxu0 %v6197
    %6263 = vmatprep.subr.bf16.mxu0 %v6200
    %6264 = vmatpush1.bf16.msra.mxu0 %v6199
    %6265 = vmatprep.subr.bf16.mxu0 %v6202
    %6266 = vmatpush1.bf16.msra.mxu0 %v6201
    %6267 = vmatprep.subr.bf16.mxu0 %v6204
    %6268 = vmatpush1.bf16.msra.mxu0 %v6203
    %6269 = vmatprep.subr.bf16.mxu0 %v6206
    %6270 = vmatpush1.bf16.msra.mxu0 %v6205
    %6271 = vmatprep.subr.bf16.mxu0 %v6208
    %6272 = vmatpush1.bf16.msra.mxu0 %v6207
    %6273 = vmatprep.subr.bf16.mxu0 %v6210
    %6274 = vmatpush1.bf16.msra.mxu0 %v6209
    %6275 = vmatprep.subr.bf16.mxu0 %v6212
    %6276 = vmatpush1.bf16.msra.mxu0 %v6211
    %6277 = vmatprep.subr.bf16.mxu0 %v6214
    %6278 = vmatpush1.bf16.msra.mxu0 %v6213
    %6279 = vmatprep.subr.bf16.mxu0 %v6216
    %6280 = vmatpush1.bf16.msra.mxu0 %v6215
    %6281 = vmatprep.subr.bf16.mxu0 %v6218
    %6282 = vmatpush1.bf16.msra.mxu0 %v6217
    %6283 = vmatprep.subr.bf16.mxu0 %v6220
    %6284 = vmatpush1.bf16.msra.mxu0 %v6219
    %6285 = vmatprep.subr.bf16.mxu0 %v6222
    %6286 = vmatpush1.bf16.msra.mxu0 %v6221
    %6287 = vmatprep.subr.bf16.mxu0 %v6224
    %6288 = vmatpush1.bf16.msra.mxu0 %v6223
    %6289 = vmatprep.subr.bf16.mxu0 %v6226
    %6290 = vmatpush1.bf16.msra.mxu0 %v6225
    %6291 = vmatprep.subr.bf16.mxu0 %v6228
    %6292 = vmatpush1.bf16.msra.mxu0 %v6227
    %6293 = vmatprep.mubr.bf16.mxu0 %v5833
    %6294 = vmatmul.mubr.bf16.gmra.mrb[0].mxu0 %v5832
    %v6295 = vpop.f32.mrb[0].mxu0
    %v6296 = vadd.f32 %v6095, %v6295
    %v6297 = vpop.f32.mrb[0].mxu0
    %v6298 = vadd.f32 %v6097, %v6297
    %v6299 = vpop.f32.mrb[0].mxu0
    %v6300 = vpop.f32.mrb[0].mxu0
    %6301 = vdwg.mxu0
    %v6302 = vsel %vm5056, %v6296, 0.0
    %v6303 = vrot.slane %v6302, 4
    %v6304 = vadd.f32 %v6302, %v6303
    %v6305 = vrot.slane %v6304, 2
    %v6306 = vadd.f32 %v6304, %v6305
    %v6307 = vrot.slane %v6306, 1
    %v6308 = vadd.f32 %v6306, %v6307
    %v6309 = vsel %vm5056, %v6298, 0.0
    %v6310 = vrot.slane %v6309, 4
    %v6311 = vadd.f32 %v6309, %v6310
    %v6312 = vrot.slane %v6311, 2
    %v6313 = vadd.f32 %v6311, %v6312
    %v6314 = vrot.slane %v6313, 1
    %v6315 = vadd.f32 %v6313, %v6314
    %v6316 = vmul.f32 %v6296, %v6296
    %v6317 = vmul.f32 %v6298, %v6298
    %v6318 = vsel %vm5056, %v6316, 0.0
    %v6319 = vrot.slane %v6318, 4
    %v6320 = vadd.f32 %v6318, %v6319
    %v6321 = vrot.slane %v6320, 2
    %v6322 = vadd.f32 %v6320, %v6321
    %v6323 = vrot.slane %v6322, 1
    %v6324 = vadd.f32 %v6322, %v6323
    %v6325 = vsel %vm5056, %v6317, 0.0
    %v6326 = vrot.slane %v6325, 4
    %v6327 = vadd.f32 %v6325, %v6326
    %v6328 = vrot.slane %v6327, 2
    %v6329 = vadd.f32 %v6327, %v6328
    %v6330 = vrot.slane %v6329, 1
    %v6331 = vadd.f32 %v6329, %v6330
    %v6332 = vld [vmem:[%s11] sm:$0xff]
    %v6333 = vld [vmem:[%s11 + $0x8] sm:$0xff]
    %v6334 = vld [vmem:[%s11 + $0x10] sm:$0xff]
    %v6335 = vld [vmem:[%s11 + $0x18] sm:$0xff]
    %v6336 = vld [vmem:[%s11 + $0x20] sm:$0xff]
    %v6337 = vld [vmem:[%s11 + $0x28] sm:$0xff]
    %v6338 = vld [vmem:[%s11 + $0x30] sm:$0xff]
    %v6339 = vld [vmem:[%s11 + $0x38] sm:$0xff]
    %v6340 = vld [vmem:[%s11 + $0x40] sm:$0xff]
    %v6341 = vld [vmem:[%s11 + $0x48] sm:$0xff]
    %v6342 = vld [vmem:[%s11 + $0x50] sm:$0xff]
    %v6343 = vld [vmem:[%s11 + $0x58] sm:$0xff]
    %v6344 = vld [vmem:[%s11 + $0x60] sm:$0xff]
    %v6345 = vld [vmem:[%s11 + $0x68] sm:$0xff]
    %v6346 = vld [vmem:[%s11 + $0x70] sm:$0xff]
    %v6347 = vld [vmem:[%s11 + $0x78] sm:$0xff]
    %v6348 = vld [vmem:[%s11 + $0x80] sm:$0xff]
    %v6349 = vld [vmem:[%s11 + $0x88] sm:$0xff]
    %v6350 = vld [vmem:[%s11 + $0x90] sm:$0xff]
    %v6351 = vld [vmem:[%s11 + $0x98] sm:$0xff]
    %v6352 = vld [vmem:[%s11 + $0xa0] sm:$0xff]
    %v6353 = vld [vmem:[%s11 + $0xa8] sm:$0xff]
    %v6354 = vld [vmem:[%s11 + $0xb0] sm:$0xff]
    %v6355 = vld [vmem:[%s11 + $0xb8] sm:$0xff]
    %v6356 = vld [vmem:[%s11 + $0xc0] sm:$0xff]
    %v6357 = vld [vmem:[%s11 + $0xc8] sm:$0xff]
    %v6358 = vld [vmem:[%s11 + $0xd0] sm:$0xff]
    %v6359 = vld [vmem:[%s11 + $0xd8] sm:$0xff]
    %v6360 = vld [vmem:[%s11 + $0xe0] sm:$0xff]
    %v6361 = vld [vmem:[%s11 + $0xe8] sm:$0xff]
    %v6362 = vld [vmem:[%s11 + $0xf0] sm:$0xff]
    %v6363 = vld [vmem:[%s11 + $0xf8] sm:$0xff]
    %6364 = vmatprep.subr.mxu0 0.0
    %6365 = vmatpush1.msra.mxu0 %v6332
    %6366 = vmatprep.subr.mxu0 0.0
    %6367 = vmatpush1.msra.mxu0 %v6333
    %6368 = vmatprep.subr.mxu0 0.0
    %6369 = vmatpush1.msra.mxu0 %v6334
    %6370 = vmatprep.subr.mxu0 0.0
    %6371 = vmatpush1.msra.mxu0 %v6335
    %6372 = vmatprep.subr.mxu0 0.0
    %6373 = vmatpush1.msra.mxu0 %v6336
    %6374 = vmatprep.subr.mxu0 0.0
    %6375 = vmatpush1.msra.mxu0 %v6337
    %6376 = vmatprep.subr.mxu0 0.0
    %6377 = vmatpush1.msra.mxu0 %v6338
    %6378 = vmatprep.subr.mxu0 0.0
    %6379 = vmatpush1.msra.mxu0 %v6339
    %6380 = vmatprep.subr.mxu0 0.0
    %6381 = vmatpush1.msra.mxu0 %v6340
    %6382 = vmatprep.subr.mxu0 0.0
    %6383 = vmatpush1.msra.mxu0 %v6341
    %6384 = vmatprep.subr.mxu0 0.0
    %6385 = vmatpush1.msra.mxu0 %v6342
    %6386 = vmatprep.subr.mxu0 0.0
    %6387 = vmatpush1.msra.mxu0 %v6343
    %6388 = vmatprep.subr.mxu0 0.0
    %6389 = vmatpush1.msra.mxu0 %v6344
    %6390 = vmatprep.subr.mxu0 0.0
    %6391 = vmatpush1.msra.mxu0 %v6345
    %6392 = vmatprep.subr.mxu0 0.0
    %6393 = vmatpush1.msra.mxu0 %v6346
    %6394 = vmatprep.subr.mxu0 0.0
    %6395 = vmatpush1.msra.mxu0 %v6347
    %6396 = vmatprep.subr.mxu0 0.0
    %6397 = vmatpush1.msra.mxu0 %v6348
    %6398 = vmatprep.subr.mxu0 0.0
    %6399 = vmatpush1.msra.mxu0 %v6349
    %6400 = vmatprep.subr.mxu0 0.0
    %6401 = vmatpush1.msra.mxu0 %v6350
    %6402 = vmatprep.subr.mxu0 0.0
    %6403 = vmatpush1.msra.mxu0 %v6351
    %6404 = vmatprep.subr.mxu0 0.0
    %6405 = vmatpush1.msra.mxu0 %v6352
    %6406 = vmatprep.subr.mxu0 0.0
    %6407 = vmatpush1.msra.mxu0 %v6353
    %6408 = vmatprep.subr.mxu0 0.0
    %6409 = vmatpush1.msra.mxu0 %v6354
    %6410 = vmatprep.subr.mxu0 0.0
    %6411 = vmatpush1.msra.mxu0 %v6355
    %6412 = vmatprep.subr.mxu0 0.0
    %6413 = vmatpush1.msra.mxu0 %v6356
    %6414 = vmatprep.subr.mxu0 0.0
    %6415 = vmatpush1.msra.mxu0 %v6357
    %6416 = vmatprep.subr.mxu0 0.0
    %6417 = vmatpush1.msra.mxu0 %v6358
    %6418 = vmatprep.subr.mxu0 0.0
    %6419 = vmatpush1.msra.mxu0 %v6359
    %6420 = vmatprep.subr.mxu0 0.0
    %6421 = vmatpush1.msra.mxu0 %v6360
    %6422 = vmatprep.subr.mxu0 0.0
    %6423 = vmatpush1.msra.mxu0 %v6361
    %6424 = vmatprep.subr.mxu0 0.0
    %6425 = vmatpush1.msra.mxu0 %v6362
    %6426 = vmatprep.subr.mxu0 0.0
    %6427 = vmatpush1.msra.mxu0 %v6363
    %6428 = vmatprep.mubr.f32.mxu0 %v6315
    %6429 = vmatmul.mubr.f32.gmra.mrb[0].mxu0 %v6308
    %v6430 = vpop.f32.mrb[0].mxu0
    %v6431 = vadd.f32 0.0, %v6430
    %v6432 = vpop.f32.mrb[0].mxu0
    %6433 = vdwg.mxu0
    %v6434 = vmul.f32 %v6431, 0.125
    %6435 = vmatprep.subr.mxu0 0.0
    %6436 = vmatpush1.msra.mxu0 %v6332
    %6437 = vmatprep.subr.mxu0 0.0
    %6438 = vmatpush1.msra.mxu0 %v6333
    %6439 = vmatprep.subr.mxu0 0.0
    %6440 = vmatpush1.msra.mxu0 %v6334
    %6441 = vmatprep.subr.mxu0 0.0
    %6442 = vmatpush1.msra.mxu0 %v6335
    %6443 = vmatprep.subr.mxu0 0.0
    %6444 = vmatpush1.msra.mxu0 %v6336
    %6445 = vmatprep.subr.mxu0 0.0
    %6446 = vmatpush1.msra.mxu0 %v6337
    %6447 = vmatprep.subr.mxu0 0.0
    %6448 = vmatpush1.msra.mxu0 %v6338
    %6449 = vmatprep.subr.mxu0 0.0
    %6450 = vmatpush1.msra.mxu0 %v6339
    %6451 = vmatprep.subr.mxu0 0.0
    %6452 = vmatpush1.msra.mxu0 %v6340
    %6453 = vmatprep.subr.mxu0 0.0
    %6454 = vmatpush1.msra.mxu0 %v6341
    %6455 = vmatprep.subr.mxu0 0.0
    %6456 = vmatpush1.msra.mxu0 %v6342
    %6457 = vmatprep.subr.mxu0 0.0
    %6458 = vmatpush1.msra.mxu0 %v6343
    %6459 = vmatprep.subr.mxu0 0.0
    %6460 = vmatpush1.msra.mxu0 %v6344
    %6461 = vmatprep.subr.mxu0 0.0
    %6462 = vmatpush1.msra.mxu0 %v6345
    %6463 = vmatprep.subr.mxu0 0.0
    %6464 = vmatpush1.msra.mxu0 %v6346
    %6465 = vmatprep.subr.mxu0 0.0
    %6466 = vmatpush1.msra.mxu0 %v6347
    %6467 = vmatprep.subr.mxu0 0.0
    %6468 = vmatpush1.msra.mxu0 %v6348
    %6469 = vmatprep.subr.mxu0 0.0
    %6470 = vmatpush1.msra.mxu0 %v6349
    %6471 = vmatprep.subr.mxu0 0.0
    %6472 = vmatpush1.msra.mxu0 %v6350
    %6473 = vmatprep.subr.mxu0 0.0
    %6474 = vmatpush1.msra.mxu0 %v6351
    %6475 = vmatprep.subr.mxu0 0.0
    %6476 = vmatpush1.msra.mxu0 %v6352
    %6477 = vmatprep.subr.mxu0 0.0
    %6478 = vmatpush1.msra.mxu0 %v6353
    %6479 = vmatprep.subr.mxu0 0.0
    %6480 = vmatpush1.msra.mxu0 %v6354
    %6481 = vmatprep.subr.mxu0 0.0
    %6482 = vmatpush1.msra.mxu0 %v6355
    %6483 = vmatprep.subr.mxu0 0.0
    %6484 = vmatpush1.msra.mxu0 %v6356
    %6485 = vmatprep.subr.mxu0 0.0
    %6486 = vmatpush1.msra.mxu0 %v6357
    %6487 = vmatprep.subr.mxu0 0.0
    %6488 = vmatpush1.msra.mxu0 %v6358
    %6489 = vmatprep.subr.mxu0 0.0
    %6490 = vmatpush1.msra.mxu0 %v6359
    %6491 = vmatprep.subr.mxu0 0.0
    %6492 = vmatpush1.msra.mxu0 %v6360
    %6493 = vmatprep.subr.mxu0 0.0
    %6494 = vmatpush1.msra.mxu0 %v6361
    %6495 = vmatprep.subr.mxu0 0.0
    %6496 = vmatpush1.msra.mxu0 %v6362
    %6497 = vmatprep.subr.mxu0 0.0
    %6498 = vmatpush1.msra.mxu0 %v6363
    %6499 = vmatprep.mubr.f32.mxu0 %v6331
    %6500 = vmatmul.mubr.f32.gmra.mrb[0].mxu0 %v6324
    %v6501 = vpop.f32.mrb[0].mxu0
    %v6502 = vadd.f32 0.0, %v6501
    %v6503 = vpop.f32.mrb[0].mxu0
    %6504 = vdwg.mxu0
    %v6505 = vmul.f32 %v6502, 0.125
    %v6506 = vmul.f32 %v6434, %v6434
    %v6507 = vsub.f32 %v6505, %v6506
    %v6508 = vmax.f32 %v6507, 0.0
    %v6509 = vld [vmem:[#allocation14] sm:$0x1]
    %v6510 = vadd.f32 %v6508, 1e-05
    %v6511 = vrsqrt.pop %v6510
    %v6512 = vmul.f32 %v6509, %v6511
    %v6513 = vld [vmem:[#allocation16] sm:$0x1]
    %v6514 = vmul.f32 %v6434, %v6512
    %v6515 = vsub.f32 %v6513, %v6514
    %v6516 = vld [vmem:[#allocation17] sm:$0xff]
    %v6517 = vld [vmem:[#allocation17 + $0x8] sm:$0xff]
    %v6518 = vld [vmem:[#allocation17 + $0x10] sm:$0xff]
    %v6519 = vld [vmem:[#allocation17 + $0x18] sm:$0xff]
    %v6520 = vld [vmem:[#allocation17 + $0x20] sm:$0xff]
    %v6521 = vld [vmem:[#allocation17 + $0x28] sm:$0xff]
    %v6522 = vld [vmem:[#allocation17 + $0x30] sm:$0xff]
    %v6523 = vld [vmem:[#allocation17 + $0x38] sm:$0xff]
    %v6524 = vld [vmem:[#allocation17 + $0x40] sm:$0xff]
    %v6525 = vld [vmem:[#allocation17 + $0x48] sm:$0xff]
    %v6526 = vld [vmem:[#allocation17 + $0x50] sm:$0xff]
    %v6527 = vld [vmem:[#allocation17 + $0x58] sm:$0xff]
    %v6528 = vld [vmem:[#allocation17 + $0x60] sm:$0xff]
    %v6529 = vld [vmem:[#allocation17 + $0x68] sm:$0xff]
    %v6530 = vld [vmem:[#allocation17 + $0x70] sm:$0xff]
    %v6531 = vld [vmem:[#allocation17 + $0x78] sm:$0xff]
    %vm6532 = vcmask 523264
    %v6534 = vsel %vm6532, %v6512, 0
    %6536 = vmatprep.subr.mxu0 %v6517
    %6537 = vmatpush1.msra.mxu0 %v6516
    %6538 = vmatprep.subr.mxu0 %v6519
    %6539 = vmatpush1.msra.mxu0 %v6518
    %6540 = vmatprep.subr.mxu0 %v6521
    %6541 = vmatpush1.msra.mxu0 %v6520
    %6542 = vmatprep.subr.mxu0 %v6523
    %6543 = vmatpush1.msra.mxu0 %v6522
    %6544 = vmatprep.subr.mxu0 %v6525
    %6545 = vmatpush1.msra.mxu0 %v6524
    %6546 = vmatprep.subr.mxu0 %v6527
    %6547 = vmatpush1.msra.mxu0 %v6526
    %6548 = vmatprep.subr.mxu0 %v6529
    %6549 = vmatpush1.msra.mxu0 %v6528
    %6550 = vmatprep.subr.mxu0 %v6531
    %6551 = vmatpush1.msra.mxu0 %v6530
    %6552 = vmatprep.subr.mxu0 0.0
    %6553 = vmatpush1.msra.mxu0 0.0
    %6554 = vmatprep.subr.mxu0 0.0
    %6555 = vmatpush1.msra.mxu0 0.0
    %6556 = vmatprep.subr.mxu0 0.0
    %6557 = vmatpush1.msra.mxu0 0.0
    %6558 = vmatprep.subr.mxu0 0.0
    %6559 = vmatpush1.msra.mxu0 0.0
    %6560 = vmatprep.subr.mxu0 0.0
    %6561 = vmatpush1.msra.mxu0 0.0
    %6562 = vmatprep.subr.mxu0 0.0
    %6563 = vmatpush1.msra.mxu0 0.0
    %6564 = vmatprep.subr.mxu0 0.0
    %6565 = vmatpush1.msra.mxu0 0.0
    %6566 = vmatprep.subr.mxu0 0.0
    %6567 = vmatpush1.msra.mxu0 0.0
    %6568 = vmatprep.subr.mxu0 0.0
    %6569 = vmatpush1.msra.mxu0 0.0
    %6570 = vmatprep.subr.mxu0 0.0
    %6571 = vmatpush1.msra.mxu0 0.0
    %6572 = vmatprep.subr.mxu0 0.0
    %6573 = vmatpush1.msra.mxu0 0.0
    %6574 = vmatprep.subr.mxu0 0.0
    %6575 = vmatpush1.msra.mxu0 0.0
    %6576 = vmatprep.subr.mxu0 0.0
    %6577 = vmatpush1.msra.mxu0 0.0
    %6578 = vmatprep.subr.mxu0 0.0
    %6579 = vmatpush1.msra.mxu0 0.0
    %6580 = vmatprep.subr.mxu0 0.0
    %6581 = vmatpush1.msra.mxu0 0.0
    %6582 = vmatprep.subr.mxu0 0.0
    %6583 = vmatpush1.msra.mxu0 0.0
    %6584 = vmatprep.subr.mxu0 0.0
    %6585 = vmatpush1.msra.mxu0 0.0
    %6586 = vmatprep.subr.mxu0 0.0
    %6587 = vmatpush1.msra.mxu0 0.0
    %6588 = vmatprep.subr.mxu0 0.0
    %6589 = vmatpush1.msra.mxu0 0.0
    %6590 = vmatprep.subr.mxu0 0.0
    %6591 = vmatpush1.msra.mxu0 0.0
    %6592 = vmatprep.subr.mxu0 0.0
    %6593 = vmatpush1.msra.mxu0 0.0
    %6594 = vmatprep.subr.mxu0 0.0
    %6595 = vmatpush1.msra.mxu0 0.0
    %6596 = vmatprep.subr.mxu0 0.0
    %6597 = vmatpush1.msra.mxu0 0.0
    %6598 = vmatprep.subr.mxu0 0.0
    %6599 = vmatpush1.msra.mxu0 0.0
    %6600 = vmatprep.mubr.f32.mxu0 0.0
    %6601 = vmatmul.mubr.f32.gmra.mrb[0].mxu0 %v6534
    %v6602 = vpop.f32.mrb[0].mxu0
    %v6603 = vadd.f32 0.0, %v6602
    %v6604 = vpop.f32.mrb[0].mxu0
    %v6605 = vadd.f32 0.0, %v6604
    %6606 = vdwg.mxu0
    %v6608 = vsel %vm6532, %v6515, 0
    %6610 = vmatprep.subr.mxu0 %v6517
    %6611 = vmatpush1.msra.mxu0 %v6516
    %6612 = vmatprep.subr.mxu0 %v6519
    %6613 = vmatpush1.msra.mxu0 %v6518
    %6614 = vmatprep.subr.mxu0 %v6521
    %6615 = vmatpush1.msra.mxu0 %v6520
    %6616 = vmatprep.subr.mxu0 %v6523
    %6617 = vmatpush1.msra.mxu0 %v6522
    %6618 = vmatprep.subr.mxu0 %v6525
    %6619 = vmatpush1.msra.mxu0 %v6524
    %6620 = vmatprep.subr.mxu0 %v6527
    %6621 = vmatpush1.msra.mxu0 %v6526
    %6622 = vmatprep.subr.mxu0 %v6529
    %6623 = vmatpush1.msra.mxu0 %v6528
    %6624 = vmatprep.subr.mxu0 %v6531
    %6625 = vmatpush1.msra.mxu0 %v6530
    %6626 = vmatprep.subr.mxu0 0.0
    %6627 = vmatpush1.msra.mxu0 0.0
    %6628 = vmatprep.subr.mxu0 0.0
    %6629 = vmatpush1.msra.mxu0 0.0
    %6630 = vmatprep.subr.mxu0 0.0
    %6631 = vmatpush1.msra.mxu0 0.0
    %6632 = vmatprep.subr.mxu0 0.0
    %6633 = vmatpush1.msra.mxu0 0.0
    %6634 = vmatprep.subr.mxu0 0.0
    %6635 = vmatpush1.msra.mxu0 0.0
    %6636 = vmatprep.subr.mxu0 0.0
    %6637 = vmatpush1.msra.mxu0 0.0
    %6638 = vmatprep.subr.mxu0 0.0
    %6639 = vmatpush1.msra.mxu0 0.0
    %6640 = vmatprep.subr.mxu0 0.0
    %6641 = vmatpush1.msra.mxu0 0.0
    %6642 = vmatprep.subr.mxu0 0.0
    %6643 = vmatpush1.msra.mxu0 0.0
    %6644 = vmatprep.subr.mxu0 0.0
    %6645 = vmatpush1.msra.mxu0 0.0
    %6646 = vmatprep.subr.mxu0 0.0
    %6647 = vmatpush1.msra.mxu0 0.0
    %6648 = vmatprep.subr.mxu0 0.0
    %6649 = vmatpush1.msra.mxu0 0.0
    %6650 = vmatprep.subr.mxu0 0.0
    %6651 = vmatpush1.msra.mxu0 0.0
    %6652 = vmatprep.subr.mxu0 0.0
    %6653 = vmatpush1.msra.mxu0 0.0
    %6654 = vmatprep.subr.mxu0 0.0
    %6655 = vmatpush1.msra.mxu0 0.0
    %6656 = vmatprep.subr.mxu0 0.0
    %6657 = vmatpush1.msra.mxu0 0.0
    %6658 = vmatprep.subr.mxu0 0.0
    %6659 = vmatpush1.msra.mxu0 0.0
    %6660 = vmatprep.subr.mxu0 0.0
    %6661 = vmatpush1.msra.mxu0 0.0
    %6662 = vmatprep.subr.mxu0 0.0
    %6663 = vmatpush1.msra.mxu0 0.0
    %6664 = vmatprep.subr.mxu0 0.0
    %6665 = vmatpush1.msra.mxu0 0.0
    %6666 = vmatprep.subr.mxu0 0.0
    %6667 = vmatpush1.msra.mxu0 0.0
    %6668 = vmatprep.subr.mxu0 0.0
    %6669 = vmatpush1.msra.mxu0 0.0
    %6670 = vmatprep.subr.mxu0 0.0
    %6671 = vmatpush1.msra.mxu0 0.0
    %6672 = vmatprep.subr.mxu0 0.0
    %6673 = vmatpush1.msra.mxu0 0.0
    %6674 = vmatprep.mubr.f32.mxu0 0.0
    %6675 = vmatmul.mubr.f32.gmra.mrb[0].mxu0 %v6608
    %v6676 = vpop.f32.mrb[0].mxu0
    %v6677 = vadd.f32 0.0, %v6676
    %v6678 = vpop.f32.mrb[0].mxu0
    %v6679 = vadd.f32 0.0, %v6678
    %6680 = vdwg.mxu0
    %v6681 = vlaneseq
    %v6682 = vshrl.u32 %v6681, 7
    %v6683 = vsub.s32 0, %v6682
    %v6684 = vrot.slane %v6603, %v6683
    %v6685 = vlaneseq
    %v6686 = vshrl.u32 %v6685, 7
    %v6687 = vsub.s32 0, %v6686
    %v6688 = vrot.slane %v6605, %v6687
    %v6689 = vmul.f32 %v6296, %v6684
    %v6690 = vmul.f32 %v6298, %v6688
    %v6691 = vlaneseq
    %v6692 = vshrl.u32 %v6691, 7
    %v6693 = vsub.s32 0, %v6692
    %v6694 = vrot.slane %v6677, %v6693
    %v6695 = vlaneseq
    %v6696 = vshrl.u32 %v6695, 7
    %v6697 = vsub.s32 0, %v6696
    %v6698 = vrot.slane %v6679, %v6697
    %v6699 = vadd.f32 %v6689, %v6694
    %v6700 = vadd.f32 %v6690, %v6698
    %vm6701 = vcmp.ge.f32.partialorder %v6699, 0.0
    %vm6702 = vcmp.ge.f32.partialorder %v6700, 0.0
    %v6703 = vmul.f32 %v6699, 0.2
    %v6704 = vmul.f32 %v6700, 0.2
    %v6705 = vsel %vm6701, %v6699, %v6703
    %v6706 = vsel %vm6702, %v6700, %v6704
    %v6707 = vpack.c.bf16 %v6705, %v6705
    %v6708 = vpack.c.bf16 %v6706, %v6706
    %v6709 = vld [vmem:[#allocation19] sm:$0xf]
    %v6710 = vld [vmem:[#allocation19 + $0x4] sm:$0xf]
    %v6711 = vld [vmem:[#allocation19 + $0x8] sm:$0xf]
    %v6712 = vld [vmem:[#allocation19 + $0xc] sm:$0xf]
    %v6713 = vld [vmem:[#allocation19 + $0x10] sm:$0xf]
    %v6714 = vld [vmem:[#allocation19 + $0x14] sm:$0xf]
    %v6715 = vld [vmem:[#allocation19 + $0x18] sm:$0xf]
    %v6716 = vld [vmem:[#allocation19 + $0x1c] sm:$0xf]
    %v6717 = vld [vmem:[#allocation19 + $0x20] sm:$0xf]
    %v6718 = vld [vmem:[#allocation19 + $0x24] sm:$0xf]
    %v6719 = vld [vmem:[#allocation19 + $0x28] sm:$0xf]
    %v6720 = vld [vmem:[#allocation19 + $0x2c] sm:$0xf]
    %v6721 = vld [vmem:[#allocation19 + $0x30] sm:$0xf]
    %v6722 = vld [vmem:[#allocation19 + $0x34] sm:$0xf]
    %v6723 = vld [vmem:[#allocation19 + $0x38] sm:$0xf]
    %v6724 = vld [vmem:[#allocation19 + $0x3c] sm:$0xf]
    %v6725 = vld [vmem:[#allocation19 + $0x40] sm:$0xf]
    %v6726 = vld [vmem:[#allocation19 + $0x44] sm:$0xf]
    %v6727 = vld [vmem:[#allocation19 + $0x48] sm:$0xf]
    %v6728 = vld [vmem:[#allocation19 + $0x4c] sm:$0xf]
    %v6729 = vld [vmem:[#allocation19 + $0x50] sm:$0xf]
    %v6730 = vld [vmem:[#allocation19 + $0x54] sm:$0xf]
    %v6731 = vld [vmem:[#allocation19 + $0x58] sm:$0xf]
    %v6732 = vld [vmem:[#allocation19 + $0x5c] sm:$0xf]
    %v6733 = vld [vmem:[#allocation19 + $0x60] sm:$0xf]
    %v6734 = vld [vmem:[#allocation19 + $0x64] sm:$0xf]
    %v6735 = vld [vmem:[#allocation19 + $0x68] sm:$0xf]
    %v6736 = vld [vmem:[#allocation19 + $0x6c] sm:$0xf]
    %v6737 = vld [vmem:[#allocation19 + $0x70] sm:$0xf]
    %v6738 = vld [vmem:[#allocation19 + $0x74] sm:$0xf]
    %v6739 = vld [vmem:[#allocation19 + $0x78] sm:$0xf]
    %v6740 = vld [vmem:[#allocation19 + $0x7c] sm:$0xf]
    %v6773 = vunpack.c.l.b16 %v6709
    %v6774 = vunpack.c.l.b16 %v6710
    %v6775 = vunpack.c.l.b16 %v6711
    %v6776 = vunpack.c.l.b16 %v6712
    %v6777 = vunpack.c.l.b16 %v6713
    %v6778 = vunpack.c.l.b16 %v6714
    %v6779 = vunpack.c.l.b16 %v6715
    %v6780 = vunpack.c.l.b16 %v6716
    %v6781 = vunpack.c.l.b16 %v6717
    %v6782 = vunpack.c.l.b16 %v6718
    %v6783 = vunpack.c.l.b16 %v6719
    %v6784 = vunpack.c.l.b16 %v6720
    %v6785 = vunpack.c.l.b16 %v6721
    %v6786 = vunpack.c.l.b16 %v6722
    %v6787 = vunpack.c.l.b16 %v6723
    %v6788 = vunpack.c.l.b16 %v6724
    %v6789 = vunpack.c.l.b16 %v6725
    %v6790 = vunpack.c.l.b16 %v6726
    %v6791 = vunpack.c.l.b16 %v6727
    %v6792 = vunpack.c.l.b16 %v6728
    %v6793 = vunpack.c.l.b16 %v6729
    %v6794 = vunpack.c.l.b16 %v6730
    %v6795 = vunpack.c.l.b16 %v6731
    %v6796 = vunpack.c.l.b16 %v6732
    %v6797 = vunpack.c.l.b16 %v6733
    %v6798 = vunpack.c.l.b16 %v6734
    %v6799 = vunpack.c.l.b16 %v6735
    %v6800 = vunpack.c.l.b16 %v6736
    %v6801 = vunpack.c.l.b16 %v6737
    %v6802 = vunpack.c.l.b16 %v6738
    %v6803 = vunpack.c.l.b16 %v6739
    %v6804 = vunpack.c.l.b16 %v6740
    %v6805 = vpack.c.b16 %v6774, %v6773
    %v6806 = vpack.c.b16 %v6776, %v6775
    %v6807 = vpack.c.b16 %v6778, %v6777
    %v6808 = vpack.c.b16 %v6780, %v6779
    %v6809 = vpack.c.b16 %v6782, %v6781
    %v6810 = vpack.c.b16 %v6784, %v6783
    %v6811 = vpack.c.b16 %v6786, %v6785
    %v6812 = vpack.c.b16 %v6788, %v6787
    %v6813 = vpack.c.b16 %v6790, %v6789
    %v6814 = vpack.c.b16 %v6792, %v6791
    %v6815 = vpack.c.b16 %v6794, %v6793
    %v6816 = vpack.c.b16 %v6796, %v6795
    %v6817 = vpack.c.b16 %v6798, %v6797
    %v6818 = vpack.c.b16 %v6800, %v6799
    %v6819 = vpack.c.b16 %v6802, %v6801
    %v6820 = vpack.c.b16 %v6804, %v6803
    %6837 = vmatprep.subr.bf16.mxu0 0
    %6838 = vmatpush1.bf16.msra.mxu0 %v6805
    %6839 = vmatprep.subr.bf16.mxu0 0
    %6840 = vmatpush1.bf16.msra.mxu0 %v6806
    %6841 = vmatprep.subr.bf16.mxu0 0
    %6842 = vmatpush1.bf16.msra.mxu0 %v6807
    %6843 = vmatprep.subr.bf16.mxu0 0
    %6844 = vmatpush1.bf16.msra.mxu0 %v6808
    %6845 = vmatprep.subr.bf16.mxu0 0
    %6846 = vmatpush1.bf16.msra.mxu0 %v6809
    %6847 = vmatprep.subr.bf16.mxu0 0
    %6848 = vmatpush1.bf16.msra.mxu0 %v6810
    %6849 = vmatprep.subr.bf16.mxu0 0
    %6850 = vmatpush1.bf16.msra.mxu0 %v6811
    %6851 = vmatprep.subr.bf16.mxu0 0
    %6852 = vmatpush1.bf16.msra.mxu0 %v6812
    %6853 = vmatprep.subr.bf16.mxu0 0
    %6854 = vmatpush1.bf16.msra.mxu0 %v6813
    %6855 = vmatprep.subr.bf16.mxu0 0
    %6856 = vmatpush1.bf16.msra.mxu0 %v6814
    %6857 = vmatprep.subr.bf16.mxu0 0
    %6858 = vmatpush1.bf16.msra.mxu0 %v6815
    %6859 = vmatprep.subr.bf16.mxu0 0
    %6860 = vmatpush1.bf16.msra.mxu0 %v6816
    %6861 = vmatprep.subr.bf16.mxu0 0
    %6862 = vmatpush1.bf16.msra.mxu0 %v6817
    %6863 = vmatprep.subr.bf16.mxu0 0
    %6864 = vmatpush1.bf16.msra.mxu0 %v6818
    %6865 = vmatprep.subr.bf16.mxu0 0
    %6866 = vmatpush1.bf16.msra.mxu0 %v6819
    %6867 = vmatprep.subr.bf16.mxu0 0
    %6868 = vmatpush1.bf16.msra.mxu0 %v6820
    %6869 = vmatprep.mubr.bf16.mxu0 %v6708
    %6870 = vmatmul.mubr.bf16.gmra.mrb[0].mxu0 %v6707
    %v6871 = vpop.f32.mrb[0].mxu0
    %v6872 = vadd.f32 0.0, %v6871
    %v6873 = vpop.f32.mrb[0].mxu0
    %v6874 = vpop.f32.mrb[0].mxu0
    %v6875 = vpop.f32.mrb[0].mxu0
    %6876 = vdwg.mxu0
    %v6877 = vsel %vm5056, %v6872, 0.0
    %v6878 = vrot.slane %v6877, 4
    %v6879 = vadd.f32 %v6877, %v6878
    %v6880 = vrot.slane %v6879, 2
    %v6881 = vadd.f32 %v6879, %v6880
    %v6882 = vrot.slane %v6881, 1
    %v6883 = vadd.f32 %v6881, %v6882
    %v6884 = vmul.f32 %v6872, %v6872
    %v6885 = vsel %vm5056, %v6884, 0.0
    %v6886 = vrot.slane %v6885, 4
    %v6887 = vadd.f32 %v6885, %v6886
    %v6888 = vrot.slane %v6887, 2
    %v6889 = vadd.f32 %v6887, %v6888
    %v6890 = vrot.slane %v6889, 1
    %v6891 = vadd.f32 %v6889, %v6890
    %v6892 = vld [vmem:[#allocation23] sm:$0xff]
    %v6893 = vld [vmem:[#allocation23 + $0x8] sm:$0xff]
    %v6894 = vld [vmem:[#allocation23 + $0x10] sm:$0xff]
    %v6895 = vld [vmem:[#allocation23 + $0x18] sm:$0xff]
    %v6896 = vld [vmem:[#allocation23 + $0x20] sm:$0xff]
    %v6897 = vld [vmem:[#allocation23 + $0x28] sm:$0xff]
    %v6898 = vld [vmem:[#allocation23 + $0x30] sm:$0xff]
    %v6899 = vld [vmem:[#allocation23 + $0x38] sm:$0xff]
    %v6900 = vld [vmem:[#allocation23 + $0x40] sm:$0xff]
    %v6901 = vld [vmem:[#allocation23 + $0x48] sm:$0xff]
    %v6902 = vld [vmem:[#allocation23 + $0x50] sm:$0xff]
    %v6903 = vld [vmem:[#allocation23 + $0x58] sm:$0xff]
    %v6904 = vld [vmem:[#allocation23 + $0x60] sm:$0xff]
    %v6905 = vld [vmem:[#allocation23 + $0x68] sm:$0xff]
    %v6906 = vld [vmem:[#allocation23 + $0x70] sm:$0xff]
    %v6907 = vld [vmem:[#allocation23 + $0x78] sm:$0xff]
    %6908 = vmatprep.subr.mxu0 0.0
    %6909 = vmatpush1.msra.mxu0 %v6892
    %6910 = vmatprep.subr.mxu0 0.0
    %6911 = vmatpush1.msra.mxu0 %v6893
    %6912 = vmatprep.subr.mxu0 0.0
    %6913 = vmatpush1.msra.mxu0 %v6894
    %6914 = vmatprep.subr.mxu0 0.0
    %6915 = vmatpush1.msra.mxu0 %v6895
    %6916 = vmatprep.subr.mxu0 0.0
    %6917 = vmatpush1.msra.mxu0 %v6896
    %6918 = vmatprep.subr.mxu0 0.0
    %6919 = vmatpush1.msra.mxu0 %v6897
    %6920 = vmatprep.subr.mxu0 0.0
    %6921 = vmatpush1.msra.mxu0 %v6898
    %6922 = vmatprep.subr.mxu0 0.0
    %6923 = vmatpush1.msra.mxu0 %v6899
    %6924 = vmatprep.subr.mxu0 0.0
    %6925 = vmatpush1.msra.mxu0 %v6900
    %6926 = vmatprep.subr.mxu0 0.0
    %6927 = vmatpush1.msra.mxu0 %v6901
    %6928 = vmatprep.subr.mxu0 0.0
    %6929 = vmatpush1.msra.mxu0 %v6902
    %6930 = vmatprep.subr.mxu0 0.0
    %6931 = vmatpush1.msra.mxu0 %v6903
    %6932 = vmatprep.subr.mxu0 0.0
    %6933 = vmatpush1.msra.mxu0 %v6904
    %6934 = vmatprep.subr.mxu0 0.0
    %6935 = vmatpush1.msra.mxu0 %v6905
    %6936 = vmatprep.subr.mxu0 0.0
    %6937 = vmatpush1.msra.mxu0 %v6906
    %6938 = vmatprep.subr.mxu0 0.0
    %6939 = vmatpush1.msra.mxu0 %v6907
    %6940 = vmatprep.subr.mxu0 0.0
    %6941 = vmatpush1.msra.mxu0 0.0
    %6942 = vmatprep.subr.mxu0 0.0
    %6943 = vmatpush1.msra.mxu0 0.0
    %6944 = vmatprep.subr.mxu0 0.0
    %6945 = vmatpush1.msra.mxu0 0.0
    %6946 = vmatprep.subr.mxu0 0.0
    %6947 = vmatpush1.msra.mxu0 0.0
    %6948 = vmatprep.subr.mxu0 0.0
    %6949 = vmatpush1.msra.mxu0 0.0
    %6950 = vmatprep.subr.mxu0 0.0
    %6951 = vmatpush1.msra.mxu0 0.0
    %6952 = vmatprep.subr.mxu0 0.0
    %6953 = vmatpush1.msra.mxu0 0.0
    %6954 = vmatprep.subr.mxu0 0.0
    %6955 = vmatpush1.msra.mxu0 0.0
    %6956 = vmatprep.subr.mxu0 0.0
    %6957 = vmatpush1.msra.mxu0 0.0
    %6958 = vmatprep.subr.mxu0 0.0
    %6959 = vmatpush1.msra.mxu0 0.0
    %6960 = vmatprep.subr.mxu0 0.0
    %6961 = vmatpush1.msra.mxu0 0.0
    %6962 = vmatprep.subr.mxu0 0.0
    %6963 = vmatpush1.msra.mxu0 0.0
    %6964 = vmatprep.subr.mxu0 0.0
    %6965 = vmatpush1.msra.mxu0 0.0
    %6966 = vmatprep.subr.mxu0 0.0
    %6967 = vmatpush1.msra.mxu0 0.0
    %6968 = vmatprep.subr.mxu0 0.0
    %6969 = vmatpush1.msra.mxu0 0.0
    %6970 = vmatprep.subr.mxu0 0.0
    %6971 = vmatpush1.msra.mxu0 0.0
    %6972 = vmatprep.mubr.f32.mxu0 0.0
    %6973 = vmatmul.mubr.f32.gmra.mrb[0].mxu0 %v6883
    %v6974 = vpop.f32.mrb[0].mxu0
    %v6975 = vadd.f32 0.0, %v6974
    %v6976 = vpop.f32.mrb[0].mxu0
    %6977 = vdwg.mxu0
    %v6978 = vmul.f32 %v6975, 0.5
    %6979 = vmatprep.subr.mxu0 0.0
    %6980 = vmatpush1.msra.mxu0 %v6892
    %6981 = vmatprep.subr.mxu0 0.0
    %6982 = vmatpush1.msra.mxu0 %v6893
    %6983 = vmatprep.subr.mxu0 0.0
    %6984 = vmatpush1.msra.mxu0 %v6894
    %6985 = vmatprep.subr.mxu0 0.0
    %6986 = vmatpush1.msra.mxu0 %v6895
    %6987 = vmatprep.subr.mxu0 0.0
    %6988 = vmatpush1.msra.mxu0 %v6896
    %6989 = vmatprep.subr.mxu0 0.0
    %6990 = vmatpush1.msra.mxu0 %v6897
    %6991 = vmatprep.subr.mxu0 0.0
    %6992 = vmatpush1.msra.mxu0 %v6898
    %6993 = vmatprep.subr.mxu0 0.0
    %6994 = vmatpush1.msra.mxu0 %v6899
    %6995 = vmatprep.subr.mxu0 0.0
    %6996 = vmatpush1.msra.mxu0 %v6900
    %6997 = vmatprep.subr.mxu0 0.0
    %6998 = vmatpush1.msra.mxu0 %v6901
    %6999 = vmatprep.subr.mxu0 0.0
    %7000 = vmatpush1.msra.mxu0 %v6902
    %7001 = vmatprep.subr.mxu0 0.0
    %7002 = vmatpush1.msra.mxu0 %v6903
    %7003 = vmatprep.subr.mxu0 0.0
    %7004 = vmatpush1.msra.mxu0 %v6904
    %7005 = vmatprep.subr.mxu0 0.0
    %7006 = vmatpush1.msra.mxu0 %v6905
    %7007 = vmatprep.subr.mxu0 0.0
    %7008 = vmatpush1.msra.mxu0 %v6906
    %7009 = vmatprep.subr.mxu0 0.0
    %7010 = vmatpush1.msra.mxu0 %v6907
    %7011 = vmatprep.subr.mxu0 0.0
    %7012 = vmatpush1.msra.mxu0 0.0
    %7013 = vmatprep.subr.mxu0 0.0
    %7014 = vmatpush1.msra.mxu0 0.0
    %7015 = vmatprep.subr.mxu0 0.0
    %7016 = vmatpush1.msra.mxu0 0.0
    %7017 = vmatprep.subr.mxu0 0.0
    %7018 = vmatpush1.msra.mxu0 0.0
    %7019 = vmatprep.subr.mxu0 0.0
    %7020 = vmatpush1.msra.mxu0 0.0
    %7021 = vmatprep.subr.mxu0 0.0
    %7022 = vmatpush1.msra.mxu0 0.0
    %7023 = vmatprep.subr.mxu0 0.0
    %7024 = vmatpush1.msra.mxu0 0.0
    %7025 = vmatprep.subr.mxu0 0.0
    %7026 = vmatpush1.msra.mxu0 0.0
    %7027 = vmatprep.subr.mxu0 0.0
    %7028 = vmatpush1.msra.mxu0 0.0
    %7029 = vmatprep.subr.mxu0 0.0
    %7030 = vmatpush1.msra.mxu0 0.0
    %7031 = vmatprep.subr.mxu0 0.0
    %7032 = vmatpush1.msra.mxu0 0.0
    %7033 = vmatprep.subr.mxu0 0.0
    %7034 = vmatpush1.msra.mxu0 0.0
    %7035 = vmatprep.subr.mxu0 0.0
    %7036 = vmatpush1.msra.mxu0 0.0
    %7037 = vmatprep.subr.mxu0 0.0
    %7038 = vmatpush1.msra.mxu0 0.0
    %7039 = vmatprep.subr.mxu0 0.0
    %7040 = vmatpush1.msra.mxu0 0.0
    %7041 = vmatprep.subr.mxu0 0.0
    %7042 = vmatpush1.msra.mxu0 0.0
    %7043 = vmatprep.mubr.f32.mxu0 0.0
    %7044 = vmatmul.mubr.f32.gmra.mrb[0].mxu0 %v6891
    %v7045 = vpop.f32.mrb[0].mxu0
    %v7046 = vadd.f32 0.0, %v7045
    %v7047 = vpop.f32.mrb[0].mxu0
    %7048 = vdwg.mxu0
    %v7049 = vmul.f32 %v7046, 0.5
    %v7050 = vmul.f32 %v6978, %v6978
    %v7051 = vsub.f32 %v7049, %v7050
    %v7052 = vmax.f32 %v7051, 0.0
    %v7053 = vld [vmem:[#allocation20] sm:$0x1]
    %v7054 = vadd.f32 %v7052, 1e-05
    %v7055 = vrsqrt.pop %v7054
    %v7056 = vmul.f32 %v7053, %v7055
    %v7057 = vld [vmem:[#allocation22] sm:$0x1]
    %v7058 = vmul.f32 %v6978, %v7056
    %v7059 = vsub.f32 %v7057, %v7058
    %v7060 = vld [vmem:[#allocation25] sm:$0xff]
    %v7061 = vld [vmem:[#allocation25 + $0x8] sm:$0xff]
    %v7062 = vld [vmem:[#allocation25 + $0x10] sm:$0xff]
    %v7063 = vld [vmem:[#allocation25 + $0x18] sm:$0xff]
    %v7064 = vld [vmem:[#allocation25 + $0x20] sm:$0xff]
    %v7065 = vld [vmem:[#allocation25 + $0x28] sm:$0xff]
    %v7066 = vld [vmem:[#allocation25 + $0x30] sm:$0xff]
    %v7067 = vld [vmem:[#allocation25 + $0x38] sm:$0xff]
    %v7068 = vld [vmem:[#allocation25 + $0x40] sm:$0xff]
    %v7069 = vld [vmem:[#allocation25 + $0x48] sm:$0xff]
    %v7070 = vld [vmem:[#allocation25 + $0x50] sm:$0xff]
    %v7071 = vld [vmem:[#allocation25 + $0x58] sm:$0xff]
    %v7072 = vld [vmem:[#allocation25 + $0x60] sm:$0xff]
    %v7073 = vld [vmem:[#allocation25 + $0x68] sm:$0xff]
    %v7074 = vld [vmem:[#allocation25 + $0x70] sm:$0xff]
    %v7075 = vld [vmem:[#allocation25 + $0x78] sm:$0xff]
    %7076 = vmatprep.subr.mxu0 0.0
    %7077 = vmatpush1.msra.mxu0 %v7060
    %7078 = vmatprep.subr.mxu0 0.0
    %7079 = vmatpush1.msra.mxu0 %v7061
    %7080 = vmatprep.subr.mxu0 0.0
    %7081 = vmatpush1.msra.mxu0 %v7062
    %7082 = vmatprep.subr.mxu0 0.0
    %7083 = vmatpush1.msra.mxu0 %v7063
    %7084 = vmatprep.subr.mxu0 0.0
    %7085 = vmatpush1.msra.mxu0 %v7064
    %7086 = vmatprep.subr.mxu0 0.0
    %7087 = vmatpush1.msra.mxu0 %v7065
    %7088 = vmatprep.subr.mxu0 0.0
    %7089 = vmatpush1.msra.mxu0 %v7066
    %7090 = vmatprep.subr.mxu0 0.0
    %7091 = vmatpush1.msra.mxu0 %v7067
    %7092 = vmatprep.subr.mxu0 0.0
    %7093 = vmatpush1.msra.mxu0 %v7068
    %7094 = vmatprep.subr.mxu0 0.0
    %7095 = vmatpush1.msra.mxu0 %v7069
    %7096 = vmatprep.subr.mxu0 0.0
    %7097 = vmatpush1.msra.mxu0 %v7070
    %7098 = vmatprep.subr.mxu0 0.0
    %7099 = vmatpush1.msra.mxu0 %v7071
    %7100 = vmatprep.subr.mxu0 0.0
    %7101 = vmatpush1.msra.mxu0 %v7072
    %7102 = vmatprep.subr.mxu0 0.0
    %7103 = vmatpush1.msra.mxu0 %v7073
    %7104 = vmatprep.subr.mxu0 0.0
    %7105 = vmatpush1.msra.mxu0 %v7074
    %7106 = vmatprep.subr.mxu0 0.0
    %7107 = vmatpush1.msra.mxu0 %v7075
    %7108 = vmatprep.subr.mxu0 0.0
    %7109 = vmatpush1.msra.mxu0 0.0
    %7110 = vmatprep.subr.mxu0 0.0
    %7111 = vmatpush1.msra.mxu0 0.0
    %7112 = vmatprep.subr.mxu0 0.0
    %7113 = vmatpush1.msra.mxu0 0.0
    %7114 = vmatprep.subr.mxu0 0.0
    %7115 = vmatpush1.msra.mxu0 0.0
    %7116 = vmatprep.subr.mxu0 0.0
    %7117 = vmatpush1.msra.mxu0 0.0
    %7118 = vmatprep.subr.mxu0 0.0
    %7119 = vmatpush1.msra.mxu0 0.0
    %7120 = vmatprep.subr.mxu0 0.0
    %7121 = vmatpush1.msra.mxu0 0.0
    %7122 = vmatprep.subr.mxu0 0.0
    %7123 = vmatpush1.msra.mxu0 0.0
    %7124 = vmatprep.subr.mxu0 0.0
    %7125 = vmatpush1.msra.mxu0 0.0
    %7126 = vmatprep.subr.mxu0 0.0
    %7127 = vmatpush1.msra.mxu0 0.0
    %7128 = vmatprep.subr.mxu0 0.0
    %7129 = vmatpush1.msra.mxu0 0.0
    %7130 = vmatprep.subr.mxu0 0.0
    %7131 = vmatpush1.msra.mxu0 0.0
    %7132 = vmatprep.subr.mxu0 0.0
    %7133 = vmatpush1.msra.mxu0 0.0
    %7134 = vmatprep.subr.mxu0 0.0
    %7135 = vmatpush1.msra.mxu0 0.0
    %7136 = vmatprep.subr.mxu0 0.0
    %7137 = vmatpush1.msra.mxu0 0.0
    %7138 = vmatprep.subr.mxu0 0.0
    %7139 = vmatpush1.msra.mxu0 0.0
    %7140 = vmatprep.mubr.f32.mxu0 0.0
    %7141 = vmatmul.mubr.f32.gmra.mrb[0].mxu0 %v7056
    %v7142 = vpop.f32.mrb[0].mxu0
    %v7143 = vadd.f32 0.0, %v7142
    %v7144 = vpop.f32.mrb[0].mxu0
    %7145 = vdwg.mxu0
    %7146 = vmatprep.subr.mxu0 0.0
    %7147 = vmatpush1.msra.mxu0 %v7060
    %7148 = vmatprep.subr.mxu0 0.0
    %7149 = vmatpush1.msra.mxu0 %v7061
    %7150 = vmatprep.subr.mxu0 0.0
    %7151 = vmatpush1.msra.mxu0 %v7062
    %7152 = vmatprep.subr.mxu0 0.0
    %7153 = vmatpush1.msra.mxu0 %v7063
    %7154 = vmatprep.subr.mxu0 0.0
    %7155 = vmatpush1.msra.mxu0 %v7064
    %7156 = vmatprep.subr.mxu0 0.0
    %7157 = vmatpush1.msra.mxu0 %v7065
    %7158 = vmatprep.subr.mxu0 0.0
    %7159 = vmatpush1.msra.mxu0 %v7066
    %7160 = vmatprep.subr.mxu0 0.0
    %7161 = vmatpush1.msra.mxu0 %v7067
    %7162 = vmatprep.subr.mxu0 0.0
    %7163 = vmatpush1.msra.mxu0 %v7068
    %7164 = vmatprep.subr.mxu0 0.0
    %7165 = vmatpush1.msra.mxu0 %v7069
    %7166 = vmatprep.subr.mxu0 0.0
    %7167 = vmatpush1.msra.mxu0 %v7070
    %7168 = vmatprep.subr.mxu0 0.0
    %7169 = vmatpush1.msra.mxu0 %v7071
    %7170 = vmatprep.subr.mxu0 0.0
    %7171 = vmatpush1.msra.mxu0 %v7072
    %7172 = vmatprep.subr.mxu0 0.0
    %7173 = vmatpush1.msra.mxu0 %v7073
    %7174 = vmatprep.subr.mxu0 0.0
    %7175 = vmatpush1.msra.mxu0 %v7074
    %7176 = vmatprep.subr.mxu0 0.0
    %7177 = vmatpush1.msra.mxu0 %v7075
    %7178 = vmatprep.subr.mxu0 0.0
    %7179 = vmatpush1.msra.mxu0 0.0
    %7180 = vmatprep.subr.mxu0 0.0
    %7181 = vmatpush1.msra.mxu0 0.0
    %7182 = vmatprep.subr.mxu0 0.0
    %7183 = vmatpush1.msra.mxu0 0.0
    %7184 = vmatprep.subr.mxu0 0.0
    %7185 = vmatpush1.msra.mxu0 0.0
    %7186 = vmatprep.subr.mxu0 0.0
    %7187 = vmatpush1.msra.mxu0 0.0
    %7188 = vmatprep.subr.mxu0 0.0
    %7189 = vmatpush1.msra.mxu0 0.0
    %7190 = vmatprep.subr.mxu0 0.0
    %7191 = vmatpush1.msra.mxu0 0.0
    %7192 = vmatprep.subr.mxu0 0.0
    %7193 = vmatpush1.msra.mxu0 0.0
    %7194 = vmatprep.subr.mxu0 0.0
    %7195 = vmatpush1.msra.mxu0 0.0
    %7196 = vmatprep.subr.mxu0 0.0
    %7197 = vmatpush1.msra.mxu0 0.0
    %7198 = vmatprep.subr.mxu0 0.0
    %7199 = vmatpush1.msra.mxu0 0.0
    %7200 = vmatprep.subr.mxu0 0.0
    %7201 = vmatpush1.msra.mxu0 0.0
    %7202 = vmatprep.subr.mxu0 0.0
    %7203 = vmatpush1.msra.mxu0 0.0
    %7204 = vmatprep.subr.mxu0 0.0
    %7205 = vmatpush1.msra.mxu0 0.0
    %7206 = vmatprep.subr.mxu0 0.0
    %7207 = vmatpush1.msra.mxu0 0.0
    %7208 = vmatprep.subr.mxu0 0.0
    %7209 = vmatpush1.msra.mxu0 0.0
    %7210 = vmatprep.mubr.f32.mxu0 0.0
    %7211 = vmatmul.mubr.f32.gmra.mrb[0].mxu0 %v7059
    %v7212 = vpop.f32.mrb[0].mxu0
    %v7213 = vadd.f32 0.0, %v7212
    %v7214 = vpop.f32.mrb[0].mxu0
    %7215 = vdwg.mxu0
    %v7216 = vlaneseq
    %v7217 = vshrl.u32 %v7216, 7
    %v7218 = vsub.s32 0, %v7217
    %v7219 = vrot.slane %v7143, %v7218
    %v7220 = vmul.f32 %v6872, %v7219
    %v7221 = vlaneseq
    %v7222 = vshrl.u32 %v7221, 7
    %v7223 = vsub.s32 0, %v7222
    %v7224 = vrot.slane %v7213, %v7223
    %v7225 = vadd.f32 %v7220, %v7224
    %vm7226 = vcmp.ge.f32.partialorder %v7225, 0.0
    %v7227 = vmul.f32 %v7225, 0.2
    %v7228 = vsel %vm7226, %v7225, %v7227
    %v7229 = vpack.c.bf16 %v7228, %v7228
    %v7230 = vld [vmem:[%s18] sm:$0xf]
    %v7231 = vld [vmem:[%s18 + $0x4] sm:$0xf]
    %v7232 = vld [vmem:[%s18 + $0x8] sm:$0xf]
    %v7233 = vld [vmem:[%s18 + $0xc] sm:$0xf]
    %v7234 = vld [vmem:[%s18 + $0x10] sm:$0xf]
    %v7235 = vld [vmem:[%s18 + $0x14] sm:$0xf]
    %v7236 = vld [vmem:[%s18 + $0x18] sm:$0xf]
    %v7237 = vld [vmem:[%s18 + $0x1c] sm:$0xf]
    %v7238 = vld [vmem:[%s18 + $0x20] sm:$0xf]
    %v7239 = vld [vmem:[%s18 + $0x24] sm:$0xf]
    %v7240 = vld [vmem:[%s18 + $0x28] sm:$0xf]
    %v7241 = vld [vmem:[%s18 + $0x2c] sm:$0xf]
    %v7242 = vld [vmem:[%s18 + $0x30] sm:$0xf]
    %v7243 = vld [vmem:[%s18 + $0x34] sm:$0xf]
    %v7244 = vld [vmem:[%s18 + $0x38] sm:$0xf]
    %v7245 = vld [vmem:[%s18 + $0x3c] sm:$0xf]
    %v7246 = vld [vmem:[#allocation2] sm:$0x1]
    %v7248 = vlaneseq
    %v7249 = vshrl.u32 %v7248, 7
    %v7250 = vsub.s32 0, %v7249
    %v7251 = vrot.slane %v7246, %v7250
    %v7269 = vunpack.c.l.b16 %v7230
    %v7270 = vunpack.c.l.b16 %v7231
    %v7271 = vunpack.c.l.b16 %v7232
    %v7272 = vunpack.c.l.b16 %v7233
    %v7273 = vunpack.c.l.b16 %v7234
    %v7274 = vunpack.c.l.b16 %v7235
    %v7275 = vunpack.c.l.b16 %v7236
    %v7276 = vunpack.c.l.b16 %v7237
    %v7277 = vunpack.c.l.b16 %v7238
    %v7278 = vunpack.c.l.b16 %v7239
    %v7279 = vunpack.c.l.b16 %v7240
    %v7280 = vunpack.c.l.b16 %v7241
    %v7281 = vunpack.c.l.b16 %v7242
    %v7282 = vunpack.c.l.b16 %v7243
    %v7283 = vunpack.c.l.b16 %v7244
    %v7284 = vunpack.c.l.b16 %v7245
    %v7285 = vpack.c.b16 %v7270, %v7269
    %v7286 = vpack.c.b16 %v7272, %v7271
    %v7287 = vpack.c.b16 %v7274, %v7273
    %v7288 = vpack.c.b16 %v7276, %v7275
    %v7289 = vpack.c.b16 %v7278, %v7277
    %v7290 = vpack.c.b16 %v7280, %v7279
    %v7291 = vpack.c.b16 %v7282, %v7281
    %v7292 = vpack.c.b16 %v7284, %v7283
    %7301 = vmatprep.subr.bf16.mxu0 0
    %7302 = vmatpush1.bf16.msra.mxu0 %v7285
    %7303 = vmatprep.subr.bf16.mxu0 0
    %7304 = vmatpush1.bf16.msra.mxu0 %v7286
    %7305 = vmatprep.subr.bf16.mxu0 0
    %7306 = vmatpush1.bf16.msra.mxu0 %v7287
    %7307 = vmatprep.subr.bf16.mxu0 0
    %7308 = vmatpush1.bf16.msra.mxu0 %v7288
    %7309 = vmatprep.subr.bf16.mxu0 0
    %7310 = vmatpush1.bf16.msra.mxu0 %v7289
    %7311 = vmatprep.subr.bf16.mxu0 0
    %7312 = vmatpush1.bf16.msra.mxu0 %v7290
    %7313 = vmatprep.subr.bf16.mxu0 0
    %7314 = vmatpush1.bf16.msra.mxu0 %v7291
    %7315 = vmatprep.subr.bf16.mxu0 0
    %7316 = vmatpush1.bf16.msra.mxu0 %v7292
    %7317 = vmatprep.subr.bf16.mxu0 0
    %7318 = vmatpush1.bf16.msra.mxu0 0
    %7319 = vmatprep.subr.bf16.mxu0 0
    %7320 = vmatpush1.bf16.msra.mxu0 0
    %7321 = vmatprep.subr.bf16.mxu0 0
    %7322 = vmatpush1.bf16.msra.mxu0 0
    %7323 = vmatprep.subr.bf16.mxu0 0
    %7324 = vmatpush1.bf16.msra.mxu0 0
    %7325 = vmatprep.subr.bf16.mxu0 0
    %7326 = vmatpush1.bf16.msra.mxu0 0
    %7327 = vmatprep.subr.bf16.mxu0 0
    %7328 = vmatpush1.bf16.msra.mxu0 0
    %7329 = vmatprep.subr.bf16.mxu0 0
    %7330 = vmatpush1.bf16.msra.mxu0 0
    %7331 = vmatprep.subr.bf16.mxu0 0
    %7332 = vmatpush1.bf16.msra.mxu0 0
    %7333 = vmatprep.mubr.bf16.mxu0 0
    %7334 = vmatmul.mubr.bf16.gmra.mrb[0].mxu0 %v7229
    %v7335 = vpop.f32.mrb[0].mxu0
    %v7336 = vadd.f32 %v7251, %v7335
    %v7337 = vpop.f32.mrb[0].mxu0
    %v7338 = vpop.f32.mrb[0].mxu0
    %v7339 = vpop.f32.mrb[0].mxu0
    %7340 = vdwg.mxu0
    %v7341 = vsub.f32 0.0, %v7336
    %v7342 = vmul.f32 %v7341, 1.442695
    %v7343 = vpow.pop %v7342
    %v7344 = vadd.f32 %v7343, 1.0
    %v7345 = vrcp.pop %v7344
    %v7346 = vmul.f32 1.0, %v7345
    %vm7347 = vcmask 1024
    %7348 = vst.msk [vmem:[%s20] sm:$0x3] %vm7347, %v7346
    // Predicated region
    $region142: #{discriminator_forward.1} parent=1 // pred_check
      _
    $region143: #{discriminator_forward.1} parent=1 // pred_check_branch
      %7350 = sbr.rel (0) target = $region145
    $region144: #{discriminator_forward.1} parent=1 // pred_region
      _
    $region145: #{discriminator_forward.1} parent=1 // pred_fallthru
      _
    // Predicated region
    $region146: #{discriminator_forward.1} parent=1 // pred_check
      _
    $region147: #{discriminator_forward.1} parent=1 // pred_check_branch
      %7352 = sbr.rel (0) target = $region149
    $region148: #{discriminator_forward.1} parent=1 // pred_region
      _
    $region149: #{discriminator_forward.1} parent=1 // pred_fallthru
      _
    %7353 = vsyncpa [#allocation4], 1
    %7354 = vsyncpa [#allocation6], 1
    %7355 = vsyncpa [#allocation9], 1
    %7356 = vsyncpa [#allocation12], 1
    %7357 = vsyncpa [#allocation15], 1
    %7358 = vsyncpa [#allocation18], 1
    %7359 = vsyncpa [#allocation21], 1
    %7360 = vsyncpa [#allocation24], 1

</llo_original>
